<compile_context>
chip_gen: v5e
topology: v5e:2x2
jax: 0.10.0
libtpu: 0.0.40
codegen_flags: <defaults>
</compile_context>

<pallas_src>
import functools

import numpy as np
import jax
import jax.numpy as jnp
from jax import lax
from jax.experimental import pallas as pl
from jax.experimental.pallas import tpu as pltpu

NEG_SLOPE = 0.2
BN_EPS = 1e-5
KSIZE = 4      # conv kernel size (model_p default)
STRIDE = 2     # 'stride' downsample strategy
PAD = 1


def _leaky(v):
    return jnp.where(v >= 0, v, NEG_SLOPE * v)


# ---------------------------------------------------------------------------
# Fused whole-network kernel (runs once per batch chunk).
#   refs = [x0, (w, b) x depth, (w, b) x n_fc, out_ref, scratch x (depth-1)]
#   x0 / scratch layout: (2, (Hout/2+1)*Bc, cols) -- H-parity planes of the
#   H-padded rows; plane p, slot m*Bc+b holds padded row r = 2m + p.
# ---------------------------------------------------------------------------
def _fused_forward_kernel(*refs, batch, houts, n_fc):
    depth = len(houts)
    n_in = 1 + 2 * depth + 2 * n_fc
    x0_ref = refs[0]
    conv_refs = refs[1:1 + 2 * depth]
    fc_refs = refs[1 + 2 * depth:n_in]
    out_ref = refs[n_in]
    act_refs = refs[n_in + 1:]          # (depth-1) VMEM activation buffers

    def conv_block(src_ref, w_ref, b_ref, hout):
        # w_ref: (KSIZE*K, Wout*Cout) bf16 packed per-tap weights
        # b_ref: (1, Wout*Cout) f32 BN-folded bias tiled over Wout
        parts = []
        for kh in range(KSIZE):
            lo = (kh // 2) * batch
            parts.append(src_ref[kh % 2, lo:lo + hout * batch, :])
        lhs = jnp.concatenate(parts, axis=-1)        # (hout*Bc, KSIZE*K)
        acc = jnp.dot(lhs, w_ref[...], preferred_element_type=jnp.float32)
        return _leaky(acc + b_ref[...])              # (hout*Bc, Wout*Cout) f32

    def store_parity(y, dst_ref, hout):
        # Scatter conv output rows into the next layer's H-parity padded
        # storage with 2 bulk plane stores + 2 halo-slot zero stores.
        half = hout // 2
        n = y.shape[-1]
        yr = y.reshape(half, 2, batch, n).astype(dst_ref.dtype)
        # even output rows i=2m -> padded row 2m+1 -> plane 1, slot m
        dst_ref[1, 0:half * batch, :] = yr[:, 0].reshape(half * batch, n)
        # odd output rows i=2m+1 -> padded row 2m+2 -> plane 0, slot m+1
        dst_ref[0, batch:(half + 1) * batch, :] = yr[:, 1].reshape(half * batch, n)
        # zero halos: plane 0 slot 0 (padded row 0), plane 1 slot half (row hout+1)
        zero = jnp.zeros((batch, n), dst_ref.dtype)
        dst_ref[0, 0:batch, :] = zero
        dst_ref[1, half * batch:(half + 1) * batch, :] = zero

    src = x0_ref
    y = None
    for l in range(depth):
        y = conv_block(src, conv_refs[2 * l], conv_refs[2 * l + 1], houts[l])
        if l < depth - 1:
            store_parity(y, act_refs[l], houts[l])
            src = act_refs[l]

    # Final conv output is 1x1 spatial -> y is (Bc, C_last), identical to
    # torch's x.view(B, -1) flatten order.
    h = y
    for j in range(n_fc):
        w_ref, b_ref = fc_refs[2 * j], fc_refs[2 * j + 1]
        h = jnp.dot(h.astype(jnp.bfloat16), w_ref[...],
                    preferred_element_type=jnp.float32) + b_ref[...]
        if j < n_fc - 1:
            h = _leaky(h)
        # TODO(synk): Dropout(p=0.2) before the last Linear is eval-mode identity.
    out_ref[...] = h    # lane-dense (Bc, 128) store; wrapper slices [:, :1]


# ---------------------------------------------------------------------------
# Deterministic parameter init (shapes follow model_p.__init__ defaults)
# ---------------------------------------------------------------------------
def init_params(key, in_channels, spatial, hidden=16, kernel_size=4,
                cnn_depth=5, fc_params=(400, 100)):
    params = {"conv": [], "fc": []}
    c_in, h, size = in_channels, hidden, spatial
    for _ in range(cnn_depth):
        key, k1, k2, k3, k4, k5, k6 = jax.random.split(key, 7)
        w = 0.05 * jax.random.normal(k1, (h, c_in, kernel_size, kernel_size), jnp.float32)
        b = 0.05 * jax.random.normal(k2, (h,), jnp.float32)
        gamma = 1.0 + 0.1 * jax.random.normal(k3, (h,), jnp.float32)
        beta = 0.1 * jax.random.normal(k4, (h,), jnp.float32)
        rmean = 0.1 * jax.random.normal(k5, (h,), jnp.float32)
        rvar = 1.0 + 0.1 * jnp.abs(jax.random.normal(k6, (h,), jnp.float32))
        params["conv"].append((w, b, gamma, beta, rmean, rvar))
        c_in, h = h, h * 2
        size = (size + 2 * PAD - kernel_size) // STRIDE + 1
    flat = size * size * c_in
    dims = [flat] + list(fc_params) + [1]
    for j in range(len(dims) - 1):
        key, k1, k2 = jax.random.split(key, 3)
        w = 0.05 * jax.random.normal(k1, (dims[j + 1], dims[j]), jnp.float32)
        b = 0.05 * jax.random.normal(k2, (dims[j + 1],), jnp.float32)
        params["fc"].append((w, b))
    return params


# ---------------------------------------------------------------------------
# One-time parameter packing: fold BN, bake the stride-2 / W-padding geometry
# into per-tap matrices, pack the 4 taps into a single (4K, N) matmul weight,
# lane-pad the FC stack.  All numpy, executed once outside the hot path.
# ---------------------------------------------------------------------------
def _round_up(x, m):
    return (x + m - 1) // m * m


def prepare_params(params, in_channels, spatial):
    # TODO(synk): consider int8 conv/FC weights on v5e/v6e (halves weight DMA);
    # not drop-in on v7x (fp8-only MXU), so kept bf16 for portability.
    conv_w, conv_b, houts = [], [], []
    c_in, size = in_channels, spatial
    for li, (w, b, gamma, beta, rmean, rvar) in enumerate(params["conv"]):
        cout = w.shape[0]
        s = gamma / jnp.sqrt(rvar + BN_EPS)
        wf = np.asarray(jax.device_get(w * s[:, None, None, None]), np.float32)
        bf = np.asarray(jax.device_get((b - rmean) * s + beta), np.float32)
        win = size
        wout = (size + 2 * PAD - KSIZE) // STRIDE + 1
        # Layer 0 rows are channel-major (c*Win + wi) so the host-side packing
        # never permutes the minor dim; later layers are channel-minor
        # (wi*Cin + c), matching the previous layer's matmul output columns.
        chan_major = (li == 0)
        mats = np.zeros((KSIZE, win * c_in, wout * cout), np.float32)
        for kh in range(KSIZE):
            for kw in range(KSIZE):
                for wo in range(wout):
                    wi = STRIDE * wo + kw - PAD
                    if 0 <= wi < win:                 # OOB taps dropped (W-pad)
                        blk = wf[:, :, kh, kw].T      # (Cin, Cout)
                        if chan_major:
                            mats[kh, wi::win, wo * cout:(wo + 1) * cout] = blk
                        else:
                            mats[kh, wi * c_in:(wi + 1) * c_in,
                                 wo * cout:(wo + 1) * cout] = blk
        conv_w.append(jnp.asarray(
            mats.reshape(KSIZE * win * c_in, wout * cout), jnp.bfloat16))
        conv_b.append(jnp.asarray(np.tile(bf, wout)[None, :], jnp.float32))
        houts.append(wout)
        c_in, size = cout, wout

    # TODO(synk): the fused flatten assumes the last conv feature map is 1x1
    # (true for the default depth-5 / stride-2 config with 32x32 inputs).
    assert size == 1, "fused kernel requires the final conv output to be 1x1"
    assert all(h % 2 == 0 for h in houts[:-1]), houts

    fc_w, fc_b = [], []
    k_real = k_pad = c_in * size * size
    for (w, b) in params["fc"]:
        n_real, k_in = w.shape                      # torch Linear: (out, in)
        assert k_in == k_real
        n_pad = _round_up(n_real, 128)
        wmat = np.zeros((k_pad, n_pad), np.float32)
        wmat[:k_in, :n_real] = np.asarray(jax.device_get(w), np.float32).T
        bvec = np.zeros((1, n_pad), np.float32)
        bvec[0, :n_real] = np.asarray(jax.device_get(b), np.float32)
        fc_w.append(jnp.asarray(wmat, jnp.bfloat16))
        fc_b.append(jnp.asarray(bvec, jnp.float32))
        k_real, k_pad = n_real, n_pad

    return {"conv_w": conv_w, "conv_b": conv_b, "fc_w": fc_w, "fc_b": fc_b,
            "houts": tuple(houts)}


# ---------------------------------------------------------------------------
# Input packing: NCHW -> per-chunk, H-parity-split, H-padded, channel-major
# rows.  Minor dim (W) never moves, so the XLA transpose is a cheap
# major-dim copy that fuses with the surrounding jit.
# ---------------------------------------------------------------------------
def _prep_input(x_nchw, chunk):
    B, C, H, W = x_nchw.shape
    nc = B // chunk
    x = x_nchw.reshape(nc, chunk, C, H, W)
    x = jnp.transpose(x, (0, 3, 1, 2, 4))                # (nc, H, Bc, C, W)
    x = x.reshape(nc, H, chunk, C * W)
    x = jnp.pad(x, ((0, 0), (PAD, PAD), (0, 0), (0, 0)))
    hh = (H + 2 * PAD) // 2
    x = x.reshape(nc, hh, 2, chunk, C * W)
    x = jnp.transpose(x, (0, 2, 1, 3, 4))                # (nc, 2, hh, Bc, C*W)
    return x.reshape(nc, 2, hh * chunk, C * W).astype(jnp.bfloat16)


def _const_block(a):
    nd = a.ndim
    return pl.BlockSpec(a.shape, lambda i, _nd=nd: (0,) * _nd)


def forward(prepared, x_nchw, chunk=16):
    B, C, H, W = x_nchw.shape
    chunk = min(chunk, B)
    assert B % chunk == 0, "batch must be a multiple of the chunk size"
    nc = B // chunk
    houts = prepared["houts"]
    depth = len(houts)
    n_fc = len(prepared["fc_w"])

    x0 = _prep_input(x_nchw, chunk)          # (nc, 2, (H/2+1)*chunk, C*W)
    operands = [x0]
    for w, b in zip(prepared["conv_w"], prepared["conv_b"]):
        operands += [w, b]
    for w, b in zip(prepared["fc_w"], prepared["fc_b"]):
        operands += [w, b]

    # x0 is chunked along the leading grid axis; weights use constant
    # index_maps so they stay VMEM-resident across grid steps.
    in_specs = [pl.BlockSpec((None,) + x0.shape[1:],
                             lambda i: (i, 0, 0, 0))]
    in_specs += [_const_block(a) for a in operands[1:]]

    scratch = []
    for l in range(depth - 1):
        n_l = prepared["conv_w"][l].shape[1]          # Wout_l * Cout_l
        scratch.append(
            pltpu.VMEM((2, (houts[l] // 2 + 1) * chunk, n_l), jnp.bfloat16))

    n_last = prepared["fc_w"][-1].shape[1]            # lane-padded FC3 width
    kernel = functools.partial(_fused_forward_kernel, batch=chunk,
                               houts=houts, n_fc=n_fc)
    out = pl.pallas_call(
        kernel,
        out_shape=jax.ShapeDtypeStruct((B, n_last), jnp.float32),
        grid=(nc,),
        in_specs=in_specs,
        out_specs=pl.BlockSpec((chunk, n_last), lambda i: (i, 0)),
        scratch_shapes=scratch,
        compiler_params=pltpu.CompilerParams(
            dimension_semantics=("parallel",)),
    )(*operands)
    return out[:, :1]


# ---------------------------------------------------------------------------
# Pure-JAX reference (eval-mode model_p) used for a correctness smoke check.
# ---------------------------------------------------------------------------
def reference_forward(params, x_nchw):
    x = x_nchw.astype(jnp.float32)
    for (w, b, gamma, beta, rmean, rvar) in params["conv"]:
        x = lax.conv_general_dilated(
            x, w, window_strides=(STRIDE, STRIDE),
            padding=((PAD, PAD), (PAD, PAD)),
            dimension_numbers=("NCHW", "OIHW", "NCHW"))
        x = x + b[None, :, None, None]
        s = gamma / jnp.sqrt(rvar + BN_EPS)
        x = (x - rmean[None, :, None, None]) * s[None, :, None, None] \
            + beta[None, :, None, None]
        x = jnp.where(x >= 0, x, NEG_SLOPE * x)
    x = x.reshape(x.shape[0], -1)
    for j, (w, b) in enumerate(params["fc"]):
        x = x @ w.T + b[None, :]
        if j < len(params["fc"]) - 1:
            x = jnp.where(x >= 0, x, NEG_SLOPE * x)
    return x


if __name__ == "__main__":
    key = jax.random.PRNGKey(0)
    k_param, k_input = jax.random.split(key)

    # spatial 32: five stride-2 convs reduce 32 -> 1 (required by the fusion).
    # batch 32 with sublane-aligned chunks of 16 -> grid=(2,) batch tiling.
    B, C, S = 32, 4, 32
    CHUNK = 16
    params = init_params(k_param, in_channels=C, spatial=S)
    x = jax.random.normal(k_input, (B, C, S, S), jnp.float32)

    prepared = prepare_params(params, in_channels=C, spatial=S)
    fused_forward = jax.jit(lambda img: forward(prepared, img, chunk=CHUNK))

    out = jax.block_until_ready(fused_forward(x))
    assert out.shape == (B, 1), out.shape

    ref = jax.block_until_ready(reference_forward(params, x))
    np.testing.assert_allclose(np.asarray(out), np.asarray(ref, np.float32),
                               rtol=5e-2, atol=2e-2)
    print("KERNEL_OK")
</pallas_src>

<mosaic_0001>
module attributes {stable_mosaic.version = 11 : i64} {
  func.func @_fused_forward_kernel(%arg0: i32, %arg1: memref<1x2x272x128xbf16, #tpu.memory_space<vmem>>, %arg2: memref<512x256xbf16, #tpu.memory_space<vmem>>, %arg3: memref<1x256xf32, #tpu.memory_space<vmem>>, %arg4: memref<1024x256xbf16, #tpu.memory_space<vmem>>, %arg5: memref<1x256xf32, #tpu.memory_space<vmem>>, %arg6: memref<1024x256xbf16, #tpu.memory_space<vmem>>, %arg7: memref<1x256xf32, #tpu.memory_space<vmem>>, %arg8: memref<1024x256xbf16, #tpu.memory_space<vmem>>, %arg9: memref<1x256xf32, #tpu.memory_space<vmem>>, %arg10: memref<1024x256xbf16, #tpu.memory_space<vmem>>, %arg11: memref<1x256xf32, #tpu.memory_space<vmem>>, %arg12: memref<256x512xbf16, #tpu.memory_space<vmem>>, %arg13: memref<1x512xf32, #tpu.memory_space<vmem>>, %arg14: memref<512x128xbf16, #tpu.memory_space<vmem>>, %arg15: memref<1x128xf32, #tpu.memory_space<vmem>>, %arg16: memref<128x128xbf16, #tpu.memory_space<vmem>>, %arg17: memref<1x128xf32, #tpu.memory_space<vmem>>, %arg18: memref<16x128xf32, #tpu.memory_space<vmem>>, %arg19: memref<2x144x256xbf16, #tpu.memory_space<vmem>>, %arg20: memref<2x80x256xbf16, #tpu.memory_space<vmem>>, %arg21: memref<2x48x256xbf16, #tpu.memory_space<vmem>>, %arg22: memref<2x32x256xbf16, #tpu.memory_space<vmem>>) attributes {dimension_semantics = [#tpu.dimension_semantics<parallel>], iteration_bounds = array<i64: 2>, scalar_prefetch = 0 : i64, scratch_operands = 4 : i64, tpu.core_type = #tpu.core_type<tc>, window_params = [{transform_indices = @transform_0, window_bounds = array<i64: 1, 2, 272, 128>}, {pipeline_mode = #tpu.pipeline_mode<synchronous>, transform_indices = @transform_1, window_bounds = array<i64: 512, 256>}, {pipeline_mode = #tpu.pipeline_mode<synchronous>, transform_indices = @transform_2, window_bounds = array<i64: 1, 256>}, {pipeline_mode = #tpu.pipeline_mode<synchronous>, transform_indices = @transform_3, window_bounds = array<i64: 1024, 256>}, {pipeline_mode = #tpu.pipeline_mode<synchronous>, transform_indices = @transform_4, window_bounds = array<i64: 1, 256>}, {pipeline_mode = #tpu.pipeline_mode<synchronous>, transform_indices = @transform_5, window_bounds = array<i64: 1024, 256>}, {pipeline_mode = #tpu.pipeline_mode<synchronous>, transform_indices = @transform_6, window_bounds = array<i64: 1, 256>}, {pipeline_mode = #tpu.pipeline_mode<synchronous>, transform_indices = @transform_7, window_bounds = array<i64: 1024, 256>}, {pipeline_mode = #tpu.pipeline_mode<synchronous>, transform_indices = @transform_8, window_bounds = array<i64: 1, 256>}, {pipeline_mode = #tpu.pipeline_mode<synchronous>, transform_indices = @transform_9, window_bounds = array<i64: 1024, 256>}, {pipeline_mode = #tpu.pipeline_mode<synchronous>, transform_indices = @transform_10, window_bounds = array<i64: 1, 256>}, {pipeline_mode = #tpu.pipeline_mode<synchronous>, transform_indices = @transform_11, window_bounds = array<i64: 256, 512>}, {pipeline_mode = #tpu.pipeline_mode<synchronous>, transform_indices = @transform_12, window_bounds = array<i64: 1, 512>}, {pipeline_mode = #tpu.pipeline_mode<synchronous>, transform_indices = @transform_13, window_bounds = array<i64: 512, 128>}, {pipeline_mode = #tpu.pipeline_mode<synchronous>, transform_indices = @transform_14, window_bounds = array<i64: 1, 128>}, {pipeline_mode = #tpu.pipeline_mode<synchronous>, transform_indices = @transform_15, window_bounds = array<i64: 128, 128>}, {pipeline_mode = #tpu.pipeline_mode<synchronous>, transform_indices = @transform_16, window_bounds = array<i64: 1, 128>}, {transform_indices = @transform_17, window_bounds = array<i64: 16, 128>}]} {
    %c0 = arith.constant 0 : index
    %c0_0 = arith.constant 0 : index
    %c0_1 = arith.constant 0 : index
    %c0_2 = arith.constant 0 : index
    %0 = vector.load %arg1[%c0, %c0_0, %c0_1, %c0_2] : memref<1x2x272x128xbf16, #tpu.memory_space<vmem>>, vector<1x1x256x128xbf16>
    %1 = vector.shape_cast %0 : vector<1x1x256x128xbf16> to vector<256x128xbf16>
    %c0_3 = arith.constant 0 : index
    %c1 = arith.constant 1 : index
    %c0_4 = arith.constant 0 : index
    %c0_5 = arith.constant 0 : index
    %2 = vector.load %arg1[%c0_3, %c1, %c0_4, %c0_5] : memref<1x2x272x128xbf16, #tpu.memory_space<vmem>>, vector<1x1x256x128xbf16>
    %3 = vector.shape_cast %2 : vector<1x1x256x128xbf16> to vector<256x128xbf16>
    %c0_6 = arith.constant 0 : index
    %c0_7 = arith.constant 0 : index
    %c16 = arith.constant 16 : index
    %c0_8 = arith.constant 0 : index
    %4 = vector.load %arg1[%c0_6, %c0_7, %c16, %c0_8] : memref<1x2x272x128xbf16, #tpu.memory_space<vmem>>, vector<1x1x256x128xbf16>
    %5 = vector.shape_cast %4 : vector<1x1x256x128xbf16> to vector<256x128xbf16>
    %c0_9 = arith.constant 0 : index
    %c1_10 = arith.constant 1 : index
    %c16_11 = arith.constant 16 : index
    %c0_12 = arith.constant 0 : index
    %6 = vector.load %arg1[%c0_9, %c1_10, %c16_11, %c0_12] : memref<1x2x272x128xbf16, #tpu.memory_space<vmem>>, vector<1x1x256x128xbf16>
    %7 = vector.shape_cast %6 : vector<1x1x256x128xbf16> to vector<256x128xbf16>
    %8 = tpu.concatenate %1, %3, %5, %7 in 1 : vector<256x128xbf16>, vector<256x128xbf16>, vector<256x128xbf16>, vector<256x128xbf16> -> vector<256x512xbf16>
    %c0_13 = arith.constant 0 : index
    %c0_14 = arith.constant 0 : index
    %9 = vector.load %arg2[%c0_13, %c0_14] : memref<512x256xbf16, #tpu.memory_space<vmem>>, vector<512x256xbf16>
    %cst = arith.constant dense<0.000000e+00> : vector<256x256xf32>
    %10 = tpu.matmul %8, %9, %cst {dimension_numbers = #tpu.dot_dimension_numbers<[1], [0], [0], [1], [0, 0, 1, 1], [], []>} : vector<256x512xbf16>, vector<512x256xbf16>, vector<256x256xf32> -> vector<256x256xf32>
    %c0_15 = arith.constant 0 : index
    %c0_16 = arith.constant 0 : index
    %11 = vector.load %arg3[%c0_15, %c0_16] : memref<1x256xf32, #tpu.memory_space<vmem>>, vector<1x256xf32>
    %12 = vector.broadcast %11 : vector<1x256xf32> to vector<256x256xf32>
    %13 = arith.addf %10, %12 : vector<256x256xf32>
    %cst_17 = arith.constant 0.000000e+00 : f32
    %14 = vector.broadcast %cst_17 : f32 to vector<256x256xf32>
    %15 = arith.cmpf oge, %13, %14 : vector<256x256xf32>
    %cst_18 = arith.constant 2.000000e-01 : f32
    %16 = vector.broadcast %cst_18 : f32 to vector<256x256xf32>
    %17 = arith.mulf %16, %13 : vector<256x256xf32>
    %18 = arith.select %15, %13, %17 : vector<256x256xi1>, vector<256x256xf32>
    %19 = vector.shape_cast %18 : vector<256x256xf32> to vector<8x2x16x256xf32>
    %20 = arith.truncf %19 : vector<8x2x16x256xf32> to vector<8x2x16x256xbf16>
    %21 = vector.extract_strided_slice %20 {offsets = [0, 0, 0, 0], sizes = [8, 1, 16, 256], strides = [1, 1, 1, 1]} : vector<8x2x16x256xbf16> to vector<8x1x16x256xbf16>
    %22 = vector.shape_cast %21 : vector<8x1x16x256xbf16> to vector<8x16x256xbf16>
    %23 = vector.shape_cast %22 : vector<8x16x256xbf16> to vector<128x256xbf16>
    %c1_19 = arith.constant 1 : index
    %c0_20 = arith.constant 0 : index
    %c0_21 = arith.constant 0 : index
    %24 = vector.load %arg19[%c1_19, %c0_20, %c0_21] : memref<2x144x256xbf16, #tpu.memory_space<vmem>>, vector<1x128x256xbf16>
    %25 = vector.shape_cast %24 : vector<1x128x256xbf16> to vector<128x256xbf16>
    %26 = vector.shape_cast %23 : vector<128x256xbf16> to vector<1x128x256xbf16>
    tpu.vector_store %arg19[%c1_19, %c0_20, %c0_21], %26 {strides = array<i32>} : memref<2x144x256xbf16, #tpu.memory_space<vmem>>, vector<1x128x256xbf16>,
    %27 = vector.extract_strided_slice %20 {offsets = [0, 1, 0, 0], sizes = [8, 1, 16, 256], strides = [1, 1, 1, 1]} : vector<8x2x16x256xbf16> to vector<8x1x16x256xbf16>
    %28 = vector.shape_cast %27 : vector<8x1x16x256xbf16> to vector<8x16x256xbf16>
    %29 = vector.shape_cast %28 : vector<8x16x256xbf16> to vector<128x256xbf16>
    %c0_22 = arith.constant 0 : index
    %c16_23 = arith.constant 16 : index
    %c0_24 = arith.constant 0 : index
    %30 = vector.load %arg19[%c0_22, %c16_23, %c0_24] : memref<2x144x256xbf16, #tpu.memory_space<vmem>>, vector<1x128x256xbf16>
    %31 = vector.shape_cast %30 : vector<1x128x256xbf16> to vector<128x256xbf16>
    %32 = vector.shape_cast %29 : vector<128x256xbf16> to vector<1x128x256xbf16>
    tpu.vector_store %arg19[%c0_22, %c16_23, %c0_24], %32 {strides = array<i32>} : memref<2x144x256xbf16, #tpu.memory_space<vmem>>, vector<1x128x256xbf16>,
    %cst_25 = arith.constant 0.000000e+00 : bf16
    %33 = vector.broadcast %cst_25 : bf16 to vector<16x256xbf16>
    %c0_26 = arith.constant 0 : index
    %c0_27 = arith.constant 0 : index
    %c0_28 = arith.constant 0 : index
    %34 = vector.load %arg19[%c0_26, %c0_27, %c0_28] : memref<2x144x256xbf16, #tpu.memory_space<vmem>>, vector<1x16x256xbf16>
    %35 = vector.shape_cast %34 : vector<1x16x256xbf16> to vector<16x256xbf16>
    %36 = vector.shape_cast %33 : vector<16x256xbf16> to vector<1x16x256xbf16>
    tpu.vector_store %arg19[%c0_26, %c0_27, %c0_28], %36 {strides = array<i32>} : memref<2x144x256xbf16, #tpu.memory_space<vmem>>, vector<1x16x256xbf16>,
    %c1_29 = arith.constant 1 : index
    %c128 = arith.constant 128 : index
    %c0_30 = arith.constant 0 : index
    %37 = vector.load %arg19[%c1_29, %c128, %c0_30] : memref<2x144x256xbf16, #tpu.memory_space<vmem>>, vector<1x16x256xbf16>
    %38 = vector.shape_cast %37 : vector<1x16x256xbf16> to vector<16x256xbf16>
    %39 = vector.shape_cast %33 : vector<16x256xbf16> to vector<1x16x256xbf16>
    tpu.vector_store %arg19[%c1_29, %c128, %c0_30], %39 {strides = array<i32>} : memref<2x144x256xbf16, #tpu.memory_space<vmem>>, vector<1x16x256xbf16>,
    %c0_31 = arith.constant 0 : index
    %c0_32 = arith.constant 0 : index
    %c0_33 = arith.constant 0 : index
    %40 = vector.load %arg19[%c0_31, %c0_32, %c0_33] : memref<2x144x256xbf16, #tpu.memory_space<vmem>>, vector<1x128x256xbf16>
    %41 = vector.shape_cast %40 : vector<1x128x256xbf16> to vector<128x256xbf16>
    %c1_34 = arith.constant 1 : index
    %c0_35 = arith.constant 0 : index
    %c0_36 = arith.constant 0 : index
    %42 = vector.load %arg19[%c1_34, %c0_35, %c0_36] : memref<2x144x256xbf16, #tpu.memory_space<vmem>>, vector<1x128x256xbf16>
    %43 = vector.shape_cast %42 : vector<1x128x256xbf16> to vector<128x256xbf16>
    %c0_37 = arith.constant 0 : index
    %c16_38 = arith.constant 16 : index
    %c0_39 = arith.constant 0 : index
    %44 = vector.load %arg19[%c0_37, %c16_38, %c0_39] : memref<2x144x256xbf16, #tpu.memory_space<vmem>>, vector<1x128x256xbf16>
    %45 = vector.shape_cast %44 : vector<1x128x256xbf16> to vector<128x256xbf16>
    %c1_40 = arith.constant 1 : index
    %c16_41 = arith.constant 16 : index
    %c0_42 = arith.constant 0 : index
    %46 = vector.load %arg19[%c1_40, %c16_41, %c0_42] : memref<2x144x256xbf16, #tpu.memory_space<vmem>>, vector<1x128x256xbf16>
    %47 = vector.shape_cast %46 : vector<1x128x256xbf16> to vector<128x256xbf16>
    %48 = tpu.concatenate %41, %43, %45, %47 in 1 : vector<128x256xbf16>, vector<128x256xbf16>, vector<128x256xbf16>, vector<128x256xbf16> -> vector<128x1024xbf16>
    %c0_43 = arith.constant 0 : index
    %c0_44 = arith.constant 0 : index
    %49 = vector.load %arg4[%c0_43, %c0_44] : memref<1024x256xbf16, #tpu.memory_space<vmem>>, vector<1024x256xbf16>
    %cst_45 = arith.constant dense<0.000000e+00> : vector<128x256xf32>
    %50 = tpu.matmul %48, %49, %cst_45 {dimension_numbers = #tpu.dot_dimension_numbers<[1], [0], [0], [1], [0, 0, 1, 1], [], []>} : vector<128x1024xbf16>, vector<1024x256xbf16>, vector<128x256xf32> -> vector<128x256xf32>
    %c0_46 = arith.constant 0 : index
    %c0_47 = arith.constant 0 : index
    %51 = vector.load %arg5[%c0_46, %c0_47] : memref<1x256xf32, #tpu.memory_space<vmem>>, vector<1x256xf32>
    %52 = vector.broadcast %51 : vector<1x256xf32> to vector<128x256xf32>
    %53 = arith.addf %50, %52 : vector<128x256xf32>
    %cst_48 = arith.constant 0.000000e+00 : f32
    %54 = vector.broadcast %cst_48 : f32 to vector<128x256xf32>
    %55 = arith.cmpf oge, %53, %54 : vector<128x256xf32>
    %cst_49 = arith.constant 2.000000e-01 : f32
    %56 = vector.broadcast %cst_49 : f32 to vector<128x256xf32>
    %57 = arith.mulf %56, %53 : vector<128x256xf32>
    %58 = arith.select %55, %53, %57 : vector<128x256xi1>, vector<128x256xf32>
    %59 = vector.shape_cast %58 : vector<128x256xf32> to vector<4x2x16x256xf32>
    %60 = arith.truncf %59 : vector<4x2x16x256xf32> to vector<4x2x16x256xbf16>
    %61 = vector.extract_strided_slice %60 {offsets = [0, 0, 0, 0], sizes = [4, 1, 16, 256], strides = [1, 1, 1, 1]} : vector<4x2x16x256xbf16> to vector<4x1x16x256xbf16>
    %62 = vector.shape_cast %61 : vector<4x1x16x256xbf16> to vector<4x16x256xbf16>
    %63 = vector.shape_cast %62 : vector<4x16x256xbf16> to vector<64x256xbf16>
    %c1_50 = arith.constant 1 : index
    %c0_51 = arith.constant 0 : index
    %c0_52 = arith.constant 0 : index
    %64 = vector.load %arg20[%c1_50, %c0_51, %c0_52] : memref<2x80x256xbf16, #tpu.memory_space<vmem>>, vector<1x64x256xbf16>
    %65 = vector.shape_cast %64 : vector<1x64x256xbf16> to vector<64x256xbf16>
    %66 = vector.shape_cast %63 : vector<64x256xbf16> to vector<1x64x256xbf16>
    tpu.vector_store %arg20[%c1_50, %c0_51, %c0_52], %66 {strides = array<i32>} : memref<2x80x256xbf16, #tpu.memory_space<vmem>>, vector<1x64x256xbf16>,
    %67 = vector.extract_strided_slice %60 {offsets = [0, 1, 0, 0], sizes = [4, 1, 16, 256], strides = [1, 1, 1, 1]} : vector<4x2x16x256xbf16> to vector<4x1x16x256xbf16>
    %68 = vector.shape_cast %67 : vector<4x1x16x256xbf16> to vector<4x16x256xbf16>
    %69 = vector.shape_cast %68 : vector<4x16x256xbf16> to vector<64x256xbf16>
    %c0_53 = arith.constant 0 : index
    %c16_54 = arith.constant 16 : index
    %c0_55 = arith.constant 0 : index
    %70 = vector.load %arg20[%c0_53, %c16_54, %c0_55] : memref<2x80x256xbf16, #tpu.memory_space<vmem>>, vector<1x64x256xbf16>
    %71 = vector.shape_cast %70 : vector<1x64x256xbf16> to vector<64x256xbf16>
    %72 = vector.shape_cast %69 : vector<64x256xbf16> to vector<1x64x256xbf16>
    tpu.vector_store %arg20[%c0_53, %c16_54, %c0_55], %72 {strides = array<i32>} : memref<2x80x256xbf16, #tpu.memory_space<vmem>>, vector<1x64x256xbf16>,
    %cst_56 = arith.constant 0.000000e+00 : bf16
    %73 = vector.broadcast %cst_56 : bf16 to vector<16x256xbf16>
    %c0_57 = arith.constant 0 : index
    %c0_58 = arith.constant 0 : index
    %c0_59 = arith.constant 0 : index
    %74 = vector.load %arg20[%c0_57, %c0_58, %c0_59] : memref<2x80x256xbf16, #tpu.memory_space<vmem>>, vector<1x16x256xbf16>
    %75 = vector.shape_cast %74 : vector<1x16x256xbf16> to vector<16x256xbf16>
    %76 = vector.shape_cast %73 : vector<16x256xbf16> to vector<1x16x256xbf16>
    tpu.vector_store %arg20[%c0_57, %c0_58, %c0_59], %76 {strides = array<i32>} : memref<2x80x256xbf16, #tpu.memory_space<vmem>>, vector<1x16x256xbf16>,
    %c1_60 = arith.constant 1 : index
    %c64 = arith.constant 64 : index
    %c0_61 = arith.constant 0 : index
    %77 = vector.load %arg20[%c1_60, %c64, %c0_61] : memref<2x80x256xbf16, #tpu.memory_space<vmem>>, vector<1x16x256xbf16>
    %78 = vector.shape_cast %77 : vector<1x16x256xbf16> to vector<16x256xbf16>
    %79 = vector.shape_cast %73 : vector<16x256xbf16> to vector<1x16x256xbf16>
    tpu.vector_store %arg20[%c1_60, %c64, %c0_61], %79 {strides = array<i32>} : memref<2x80x256xbf16, #tpu.memory_space<vmem>>, vector<1x16x256xbf16>,
    %c0_62 = arith.constant 0 : index
    %c0_63 = arith.constant 0 : index
    %c0_64 = arith.constant 0 : index
    %80 = vector.load %arg20[%c0_62, %c0_63, %c0_64] : memref<2x80x256xbf16, #tpu.memory_space<vmem>>, vector<1x64x256xbf16>
    %81 = vector.shape_cast %80 : vector<1x64x256xbf16> to vector<64x256xbf16>
    %c1_65 = arith.constant 1 : index
    %c0_66 = arith.constant 0 : index
    %c0_67 = arith.constant 0 : index
    %82 = vector.load %arg20[%c1_65, %c0_66, %c0_67] : memref<2x80x256xbf16, #tpu.memory_space<vmem>>, vector<1x64x256xbf16>
    %83 = vector.shape_cast %82 : vector<1x64x256xbf16> to vector<64x256xbf16>
    %c0_68 = arith.constant 0 : index
    %c16_69 = arith.constant 16 : index
    %c0_70 = arith.constant 0 : index
    %84 = vector.load %arg20[%c0_68, %c16_69, %c0_70] : memref<2x80x256xbf16, #tpu.memory_space<vmem>>, vector<1x64x256xbf16>
    %85 = vector.shape_cast %84 : vector<1x64x256xbf16> to vector<64x256xbf16>
    %c1_71 = arith.constant 1 : index
    %c16_72 = arith.constant 16 : index
    %c0_73 = arith.constant 0 : index
    %86 = vector.load %arg20[%c1_71, %c16_72, %c0_73] : memref<2x80x256xbf16, #tpu.memory_space<vmem>>, vector<1x64x256xbf16>
    %87 = vector.shape_cast %86 : vector<1x64x256xbf16> to vector<64x256xbf16>
    %88 = tpu.concatenate %81, %83, %85, %87 in 1 : vector<64x256xbf16>, vector<64x256xbf16>, vector<64x256xbf16>, vector<64x256xbf16> -> vector<64x1024xbf16>
    %c0_74 = arith.constant 0 : index
    %c0_75 = arith.constant 0 : index
    %89 = vector.load %arg6[%c0_74, %c0_75] : memref<1024x256xbf16, #tpu.memory_space<vmem>>, vector<1024x256xbf16>
    %cst_76 = arith.constant dense<0.000000e+00> : vector<64x256xf32>
    %90 = tpu.matmul %88, %89, %cst_76 {dimension_numbers = #tpu.dot_dimension_numbers<[1], [0], [0], [1], [0, 0, 1, 1], [], []>} : vector<64x1024xbf16>, vector<1024x256xbf16>, vector<64x256xf32> -> vector<64x256xf32>
    %c0_77 = arith.constant 0 : index
    %c0_78 = arith.constant 0 : index
    %91 = vector.load %arg7[%c0_77, %c0_78] : memref<1x256xf32, #tpu.memory_space<vmem>>, vector<1x256xf32>
    %92 = vector.broadcast %91 : vector<1x256xf32> to vector<64x256xf32>
    %93 = arith.addf %90, %92 : vector<64x256xf32>
    %cst_79 = arith.constant 0.000000e+00 : f32
    %94 = vector.broadcast %cst_79 : f32 to vector<64x256xf32>
    %95 = arith.cmpf oge, %93, %94 : vector<64x256xf32>
    %cst_80 = arith.constant 2.000000e-01 : f32
    %96 = vector.broadcast %cst_80 : f32 to vector<64x256xf32>
    %97 = arith.mulf %96, %93 : vector<64x256xf32>
    %98 = arith.select %95, %93, %97 : vector<64x256xi1>, vector<64x256xf32>
    %99 = vector.shape_cast %98 : vector<64x256xf32> to vector<2x2x16x256xf32>
    %100 = arith.truncf %99 : vector<2x2x16x256xf32> to vector<2x2x16x256xbf16>
    %101 = vector.extract_strided_slice %100 {offsets = [0, 0, 0, 0], sizes = [2, 1, 16, 256], strides = [1, 1, 1, 1]} : vector<2x2x16x256xbf16> to vector<2x1x16x256xbf16>
    %102 = vector.shape_cast %101 : vector<2x1x16x256xbf16> to vector<2x16x256xbf16>
    %103 = vector.shape_cast %102 : vector<2x16x256xbf16> to vector<32x256xbf16>
    %c1_81 = arith.constant 1 : index
    %c0_82 = arith.constant 0 : index
    %c0_83 = arith.constant 0 : index
    %104 = vector.load %arg21[%c1_81, %c0_82, %c0_83] : memref<2x48x256xbf16, #tpu.memory_space<vmem>>, vector<1x32x256xbf16>
    %105 = vector.shape_cast %104 : vector<1x32x256xbf16> to vector<32x256xbf16>
    %106 = vector.shape_cast %103 : vector<32x256xbf16> to vector<1x32x256xbf16>
    tpu.vector_store %arg21[%c1_81, %c0_82, %c0_83], %106 {strides = array<i32>} : memref<2x48x256xbf16, #tpu.memory_space<vmem>>, vector<1x32x256xbf16>,
    %107 = vector.extract_strided_slice %100 {offsets = [0, 1, 0, 0], sizes = [2, 1, 16, 256], strides = [1, 1, 1, 1]} : vector<2x2x16x256xbf16> to vector<2x1x16x256xbf16>
    %108 = vector.shape_cast %107 : vector<2x1x16x256xbf16> to vector<2x16x256xbf16>
    %109 = vector.shape_cast %108 : vector<2x16x256xbf16> to vector<32x256xbf16>
    %c0_84 = arith.constant 0 : index
    %c16_85 = arith.constant 16 : index
    %c0_86 = arith.constant 0 : index
    %110 = vector.load %arg21[%c0_84, %c16_85, %c0_86] : memref<2x48x256xbf16, #tpu.memory_space<vmem>>, vector<1x32x256xbf16>
    %111 = vector.shape_cast %110 : vector<1x32x256xbf16> to vector<32x256xbf16>
    %112 = vector.shape_cast %109 : vector<32x256xbf16> to vector<1x32x256xbf16>
    tpu.vector_store %arg21[%c0_84, %c16_85, %c0_86], %112 {strides = array<i32>} : memref<2x48x256xbf16, #tpu.memory_space<vmem>>, vector<1x32x256xbf16>,
    %cst_87 = arith.constant 0.000000e+00 : bf16
    %113 = vector.broadcast %cst_87 : bf16 to vector<16x256xbf16>
    %c0_88 = arith.constant 0 : index
    %c0_89 = arith.constant 0 : index
    %c0_90 = arith.constant 0 : index
    %114 = vector.load %arg21[%c0_88, %c0_89, %c0_90] : memref<2x48x256xbf16, #tpu.memory_space<vmem>>, vector<1x16x256xbf16>
    %115 = vector.shape_cast %114 : vector<1x16x256xbf16> to vector<16x256xbf16>
    %116 = vector.shape_cast %113 : vector<16x256xbf16> to vector<1x16x256xbf16>
    tpu.vector_store %arg21[%c0_88, %c0_89, %c0_90], %116 {strides = array<i32>} : memref<2x48x256xbf16, #tpu.memory_space<vmem>>, vector<1x16x256xbf16>,
    %c1_91 = arith.constant 1 : index
    %c32 = arith.constant 32 : index
    %c0_92 = arith.constant 0 : index
    %117 = vector.load %arg21[%c1_91, %c32, %c0_92] : memref<2x48x256xbf16, #tpu.memory_space<vmem>>, vector<1x16x256xbf16>
    %118 = vector.shape_cast %117 : vector<1x16x256xbf16> to vector<16x256xbf16>
    %119 = vector.shape_cast %113 : vector<16x256xbf16> to vector<1x16x256xbf16>
    tpu.vector_store %arg21[%c1_91, %c32, %c0_92], %119 {strides = array<i32>} : memref<2x48x256xbf16, #tpu.memory_space<vmem>>, vector<1x16x256xbf16>,
    %c0_93 = arith.constant 0 : index
    %c0_94 = arith.constant 0 : index
    %c0_95 = arith.constant 0 : index
    %120 = vector.load %arg21[%c0_93, %c0_94, %c0_95] : memref<2x48x256xbf16, #tpu.memory_space<vmem>>, vector<1x32x256xbf16>
    %121 = vector.shape_cast %120 : vector<1x32x256xbf16> to vector<32x256xbf16>
    %c1_96 = arith.constant 1 : index
    %c0_97 = arith.constant 0 : index
    %c0_98 = arith.constant 0 : index
    %122 = vector.load %arg21[%c1_96, %c0_97, %c0_98] : memref<2x48x256xbf16, #tpu.memory_space<vmem>>, vector<1x32x256xbf16>
    %123 = vector.shape_cast %122 : vector<1x32x256xbf16> to vector<32x256xbf16>
    %c0_99 = arith.constant 0 : index
    %c16_100 = arith.constant 16 : index
    %c0_101 = arith.constant 0 : index
    %124 = vector.load %arg21[%c0_99, %c16_100, %c0_101] : memref<2x48x256xbf16, #tpu.memory_space<vmem>>, vector<1x32x256xbf16>
    %125 = vector.shape_cast %124 : vector<1x32x256xbf16> to vector<32x256xbf16>
    %c1_102 = arith.constant 1 : index
    %c16_103 = arith.constant 16 : index
    %c0_104 = arith.constant 0 : index
    %126 = vector.load %arg21[%c1_102, %c16_103, %c0_104] : memref<2x48x256xbf16, #tpu.memory_space<vmem>>, vector<1x32x256xbf16>
    %127 = vector.shape_cast %126 : vector<1x32x256xbf16> to vector<32x256xbf16>
    %128 = tpu.concatenate %121, %123, %125, %127 in 1 : vector<32x256xbf16>, vector<32x256xbf16>, vector<32x256xbf16>, vector<32x256xbf16> -> vector<32x1024xbf16>
    %c0_105 = arith.constant 0 : index
    %c0_106 = arith.constant 0 : index
    %129 = vector.load %arg8[%c0_105, %c0_106] : memref<1024x256xbf16, #tpu.memory_space<vmem>>, vector<1024x256xbf16>
    %cst_107 = arith.constant dense<0.000000e+00> : vector<32x256xf32>
    %130 = tpu.matmul %128, %129, %cst_107 {dimension_numbers = #tpu.dot_dimension_numbers<[1], [0], [0], [1], [0, 0, 1, 1], [], []>} : vector<32x1024xbf16>, vector<1024x256xbf16>, vector<32x256xf32> -> vector<32x256xf32>
    %c0_108 = arith.constant 0 : index
    %c0_109 = arith.constant 0 : index
    %131 = vector.load %arg9[%c0_108, %c0_109] : memref<1x256xf32, #tpu.memory_space<vmem>>, vector<1x256xf32>
    %132 = vector.broadcast %131 : vector<1x256xf32> to vector<32x256xf32>
    %133 = arith.addf %130, %132 : vector<32x256xf32>
    %cst_110 = arith.constant 0.000000e+00 : f32
    %134 = vector.broadcast %cst_110 : f32 to vector<32x256xf32>
    %135 = arith.cmpf oge, %133, %134 : vector<32x256xf32>
    %cst_111 = arith.constant 2.000000e-01 : f32
    %136 = vector.broadcast %cst_111 : f32 to vector<32x256xf32>
    %137 = arith.mulf %136, %133 : vector<32x256xf32>
    %138 = arith.select %135, %133, %137 : vector<32x256xi1>, vector<32x256xf32>
    %139 = vector.shape_cast %138 : vector<32x256xf32> to vector<1x2x16x256xf32>
    %140 = arith.truncf %139 : vector<1x2x16x256xf32> to vector<1x2x16x256xbf16>
    %141 = vector.extract_strided_slice %140 {offsets = [0, 0, 0, 0], sizes = [1, 1, 16, 256], strides = [1, 1, 1, 1]} : vector<1x2x16x256xbf16> to vector<1x1x16x256xbf16>
    %142 = vector.shape_cast %141 : vector<1x1x16x256xbf16> to vector<1x16x256xbf16>
    %143 = vector.shape_cast %142 : vector<1x16x256xbf16> to vector<16x256xbf16>
    %c1_112 = arith.constant 1 : index
    %c0_113 = arith.constant 0 : index
    %c0_114 = arith.constant 0 : index
    %144 = vector.load %arg22[%c1_112, %c0_113, %c0_114] : memref<2x32x256xbf16, #tpu.memory_space<vmem>>, vector<1x16x256xbf16>
    %145 = vector.shape_cast %144 : vector<1x16x256xbf16> to vector<16x256xbf16>
    %146 = vector.shape_cast %143 : vector<16x256xbf16> to vector<1x16x256xbf16>
    tpu.vector_store %arg22[%c1_112, %c0_113, %c0_114], %146 {strides = array<i32>} : memref<2x32x256xbf16, #tpu.memory_space<vmem>>, vector<1x16x256xbf16>,
    %147 = vector.extract_strided_slice %140 {offsets = [0, 1, 0, 0], sizes = [1, 1, 16, 256], strides = [1, 1, 1, 1]} : vector<1x2x16x256xbf16> to vector<1x1x16x256xbf16>
    %148 = vector.shape_cast %147 : vector<1x1x16x256xbf16> to vector<1x16x256xbf16>
    %149 = vector.shape_cast %148 : vector<1x16x256xbf16> to vector<16x256xbf16>
    %c0_115 = arith.constant 0 : index
    %c16_116 = arith.constant 16 : index
    %c0_117 = arith.constant 0 : index
    %150 = vector.load %arg22[%c0_115, %c16_116, %c0_117] : memref<2x32x256xbf16, #tpu.memory_space<vmem>>, vector<1x16x256xbf16>
    %151 = vector.shape_cast %150 : vector<1x16x256xbf16> to vector<16x256xbf16>
    %152 = vector.shape_cast %149 : vector<16x256xbf16> to vector<1x16x256xbf16>
    tpu.vector_store %arg22[%c0_115, %c16_116, %c0_117], %152 {strides = array<i32>} : memref<2x32x256xbf16, #tpu.memory_space<vmem>>, vector<1x16x256xbf16>,
    %cst_118 = arith.constant 0.000000e+00 : bf16
    %153 = vector.broadcast %cst_118 : bf16 to vector<16x256xbf16>
    %c0_119 = arith.constant 0 : index
    %c0_120 = arith.constant 0 : index
    %c0_121 = arith.constant 0 : index
    %154 = vector.load %arg22[%c0_119, %c0_120, %c0_121] : memref<2x32x256xbf16, #tpu.memory_space<vmem>>, vector<1x16x256xbf16>
    %155 = vector.shape_cast %154 : vector<1x16x256xbf16> to vector<16x256xbf16>
    %156 = vector.shape_cast %153 : vector<16x256xbf16> to vector<1x16x256xbf16>
    tpu.vector_store %arg22[%c0_119, %c0_120, %c0_121], %156 {strides = array<i32>} : memref<2x32x256xbf16, #tpu.memory_space<vmem>>, vector<1x16x256xbf16>,
    %c1_122 = arith.constant 1 : index
    %c16_123 = arith.constant 16 : index
    %c0_124 = arith.constant 0 : index
    %157 = vector.load %arg22[%c1_122, %c16_123, %c0_124] : memref<2x32x256xbf16, #tpu.memory_space<vmem>>, vector<1x16x256xbf16>
    %158 = vector.shape_cast %157 : vector<1x16x256xbf16> to vector<16x256xbf16>
    %159 = vector.shape_cast %153 : vector<16x256xbf16> to vector<1x16x256xbf16>
    tpu.vector_store %arg22[%c1_122, %c16_123, %c0_124], %159 {strides = array<i32>} : memref<2x32x256xbf16, #tpu.memory_space<vmem>>, vector<1x16x256xbf16>,
    %c0_125 = arith.constant 0 : index
    %c0_126 = arith.constant 0 : index
    %c0_127 = arith.constant 0 : index
    %160 = vector.load %arg22[%c0_125, %c0_126, %c0_127] : memref<2x32x256xbf16, #tpu.memory_space<vmem>>, vector<1x16x256xbf16>
    %161 = vector.shape_cast %160 : vector<1x16x256xbf16> to vector<16x256xbf16>
    %c1_128 = arith.constant 1 : index
    %c0_129 = arith.constant 0 : index
    %c0_130 = arith.constant 0 : index
    %162 = vector.load %arg22[%c1_128, %c0_129, %c0_130] : memref<2x32x256xbf16, #tpu.memory_space<vmem>>, vector<1x16x256xbf16>
    %163 = vector.shape_cast %162 : vector<1x16x256xbf16> to vector<16x256xbf16>
    %c0_131 = arith.constant 0 : index
    %c16_132 = arith.constant 16 : index
    %c0_133 = arith.constant 0 : index
    %164 = vector.load %arg22[%c0_131, %c16_132, %c0_133] : memref<2x32x256xbf16, #tpu.memory_space<vmem>>, vector<1x16x256xbf16>
    %165 = vector.shape_cast %164 : vector<1x16x256xbf16> to vector<16x256xbf16>
    %c1_134 = arith.constant 1 : index
    %c16_135 = arith.constant 16 : index
    %c0_136 = arith.constant 0 : index
    %166 = vector.load %arg22[%c1_134, %c16_135, %c0_136] : memref<2x32x256xbf16, #tpu.memory_space<vmem>>, vector<1x16x256xbf16>
    %167 = vector.shape_cast %166 : vector<1x16x256xbf16> to vector<16x256xbf16>
    %168 = tpu.concatenate %161, %163, %165, %167 in 1 : vector<16x256xbf16>, vector<16x256xbf16>, vector<16x256xbf16>, vector<16x256xbf16> -> vector<16x1024xbf16>
    %c0_137 = arith.constant 0 : index
    %c0_138 = arith.constant 0 : index
    %169 = vector.load %arg10[%c0_137, %c0_138] : memref<1024x256xbf16, #tpu.memory_space<vmem>>, vector<1024x256xbf16>
    %cst_139 = arith.constant dense<0.000000e+00> : vector<16x256xf32>
    %170 = tpu.matmul %168, %169, %cst_139 {dimension_numbers = #tpu.dot_dimension_numbers<[1], [0], [0], [1], [0, 0, 1, 1], [], []>} : vector<16x1024xbf16>, vector<1024x256xbf16>, vector<16x256xf32> -> vector<16x256xf32>
    %c0_140 = arith.constant 0 : index
    %c0_141 = arith.constant 0 : index
    %171 = vector.load %arg11[%c0_140, %c0_141] : memref<1x256xf32, #tpu.memory_space<vmem>>, vector<1x256xf32>
    %172 = vector.broadcast %171 : vector<1x256xf32> to vector<16x256xf32>
    %173 = arith.addf %170, %172 : vector<16x256xf32>
    %cst_142 = arith.constant 0.000000e+00 : f32
    %174 = vector.broadcast %cst_142 : f32 to vector<16x256xf32>
    %175 = arith.cmpf oge, %173, %174 : vector<16x256xf32>
    %cst_143 = arith.constant 2.000000e-01 : f32
    %176 = vector.broadcast %cst_143 : f32 to vector<16x256xf32>
    %177 = arith.mulf %176, %173 : vector<16x256xf32>
    %178 = arith.select %175, %173, %177 : vector<16x256xi1>, vector<16x256xf32>
    %179 = arith.truncf %178 : vector<16x256xf32> to vector<16x256xbf16>
    %c0_144 = arith.constant 0 : index
    %c0_145 = arith.constant 0 : index
    %180 = vector.load %arg12[%c0_144, %c0_145] : memref<256x512xbf16, #tpu.memory_space<vmem>>, vector<256x512xbf16>
    %cst_146 = arith.constant dense<0.000000e+00> : vector<16x512xf32>
    %181 = tpu.matmul %179, %180, %cst_146 {dimension_numbers = #tpu.dot_dimension_numbers<[1], [0], [0], [1], [0, 0, 1, 1], [], []>} : vector<16x256xbf16>, vector<256x512xbf16>, vector<16x512xf32> -> vector<16x512xf32>
    %c0_147 = arith.constant 0 : index
    %c0_148 = arith.constant 0 : index
    %182 = vector.load %arg13[%c0_147, %c0_148] : memref<1x512xf32, #tpu.memory_space<vmem>>, vector<1x512xf32>
    %183 = vector.broadcast %182 : vector<1x512xf32> to vector<16x512xf32>
    %184 = arith.addf %181, %183 : vector<16x512xf32>
    %cst_149 = arith.constant 0.000000e+00 : f32
    %185 = vector.broadcast %cst_149 : f32 to vector<16x512xf32>
    %186 = arith.cmpf oge, %184, %185 : vector<16x512xf32>
    %cst_150 = arith.constant 2.000000e-01 : f32
    %187 = vector.broadcast %cst_150 : f32 to vector<16x512xf32>
    %188 = arith.mulf %187, %184 : vector<16x512xf32>
    %189 = arith.select %186, %184, %188 : vector<16x512xi1>, vector<16x512xf32>
    %190 = arith.truncf %189 : vector<16x512xf32> to vector<16x512xbf16>
    %c0_151 = arith.constant 0 : index
    %c0_152 = arith.constant 0 : index
    %191 = vector.load %arg14[%c0_151, %c0_152] : memref<512x128xbf16, #tpu.memory_space<vmem>>, vector<512x128xbf16>
    %cst_153 = arith.constant dense<0.000000e+00> : vector<16x128xf32>
    %192 = tpu.matmul %190, %191, %cst_153 {dimension_numbers = #tpu.dot_dimension_numbers<[1], [0], [0], [1], [0, 0, 1, 1], [], []>} : vector<16x512xbf16>, vector<512x128xbf16>, vector<16x128xf32> -> vector<16x128xf32>
    %c0_154 = arith.constant 0 : index
    %c0_155 = arith.constant 0 : index
    %193 = vector.load %arg15[%c0_154, %c0_155] : memref<1x128xf32, #tpu.memory_space<vmem>>, vector<1x128xf32>
    %194 = vector.broadcast %193 : vector<1x128xf32> to vector<16x128xf32>
    %195 = arith.addf %192, %194 : vector<16x128xf32>
    %cst_156 = arith.constant 0.000000e+00 : f32
    %196 = vector.broadcast %cst_156 : f32 to vector<16x128xf32>
    %197 = arith.cmpf oge, %195, %196 : vector<16x128xf32>
    %cst_157 = arith.constant 2.000000e-01 : f32
    %198 = vector.broadcast %cst_157 : f32 to vector<16x128xf32>
    %199 = arith.mulf %198, %195 : vector<16x128xf32>
    %200 = arith.select %197, %195, %199 : vector<16x128xi1>, vector<16x128xf32>
    %201 = arith.truncf %200 : vector<16x128xf32> to vector<16x128xbf16>
    %c0_158 = arith.constant 0 : index
    %c0_159 = arith.constant 0 : index
    %202 = vector.load %arg16[%c0_158, %c0_159] : memref<128x128xbf16, #tpu.memory_space<vmem>>, vector<128x128xbf16>
    %cst_160 = arith.constant dense<0.000000e+00> : vector<16x128xf32>
    %203 = tpu.matmul %201, %202, %cst_160 {dimension_numbers = #tpu.dot_dimension_numbers<[1], [0], [0], [1], [0, 0, 1, 1], [], []>} : vector<16x128xbf16>, vector<128x128xbf16>, vector<16x128xf32> -> vector<16x128xf32>
    %c0_161 = arith.constant 0 : index
    %c0_162 = arith.constant 0 : index
    %204 = vector.load %arg17[%c0_161, %c0_162] : memref<1x128xf32, #tpu.memory_space<vmem>>, vector<1x128xf32>
    %205 = vector.broadcast %204 : vector<1x128xf32> to vector<16x128xf32>
    %206 = arith.addf %203, %205 : vector<16x128xf32>
    %c0_163 = arith.constant 0 : index
    %c0_164 = arith.constant 0 : index
    %207 = vector.load %arg18[%c0_163, %c0_164] : memref<16x128xf32, #tpu.memory_space<vmem>>, vector<16x128xf32>
    tpu.vector_store %arg18[%c0_163, %c0_164], %206 {strides = array<i32>} : memref<16x128xf32, #tpu.memory_space<vmem>>, vector<16x128xf32>,
    return
  }
  func.func @transform_0(%arg0: i32) -> (i32, i32, i32, i32) {
    %c0_i32 = arith.constant 0 : i32
    %c0_i32_0 = arith.constant 0 : i32
    %c0_i32_1 = arith.constant 0 : i32
    %c0_i32_2 = arith.constant 0 : i32
    return %arg0, %c0_i32, %c0_i32_0, %c0_i32_1 : i32, i32, i32, i32
  }
  func.func @transform_1(%arg0: i32) -> (i32, i32) {
    %c0_i32 = arith.constant 0 : i32
    %c0_i32_0 = arith.constant 0 : i32
    %c0_i32_1 = arith.constant 0 : i32
    return %c0_i32, %c0_i32_0 : i32, i32
  }
  func.func @transform_2(%arg0: i32) -> (i32, i32) {
    %c0_i32 = arith.constant 0 : i32
    %c0_i32_0 = arith.constant 0 : i32
    %c0_i32_1 = arith.constant 0 : i32
    return %c0_i32, %c0_i32_0 : i32, i32
  }
  func.func @transform_3(%arg0: i32) -> (i32, i32) {
    %c0_i32 = arith.constant 0 : i32
    %c0_i32_0 = arith.constant 0 : i32
    %c0_i32_1 = arith.constant 0 : i32
    return %c0_i32, %c0_i32_0 : i32, i32
  }
  func.func @transform_4(%arg0: i32) -> (i32, i32) {
    %c0_i32 = arith.constant 0 : i32
    %c0_i32_0 = arith.constant 0 : i32
    %c0_i32_1 = arith.constant 0 : i32
    return %c0_i32, %c0_i32_0 : i32, i32
  }
  func.func @transform_5(%arg0: i32) -> (i32, i32) {
    %c0_i32 = arith.constant 0 : i32
    %c0_i32_0 = arith.constant 0 : i32
    %c0_i32_1 = arith.constant 0 : i32
    return %c0_i32, %c0_i32_0 : i32, i32
  }
  func.func @transform_6(%arg0: i32) -> (i32, i32) {
    %c0_i32 = arith.constant 0 : i32
    %c0_i32_0 = arith.constant 0 : i32
    %c0_i32_1 = arith.constant 0 : i32
    return %c0_i32, %c0_i32_0 : i32, i32
  }
  func.func @transform_7(%arg0: i32) -> (i32, i32) {
    %c0_i32 = arith.constant 0 : i32
    %c0_i32_0 = arith.constant 0 : i32
    %c0_i32_1 = arith.constant 0 : i32
    return %c0_i32, %c0_i32_0 : i32, i32
  }
  func.func @transform_8(%arg0: i32) -> (i32, i32) {
    %c0_i32 = arith.constant 0 : i32
    %c0_i32_0 = arith.constant 0 : i32
    %c0_i32_1 = arith.constant 0 : i32
    return %c0_i32, %c0_i32_0 : i32, i32
  }
  func.func @transform_9(%arg0: i32) -> (i32, i32) {
    %c0_i32 = arith.constant 0 : i32
    %c0_i32_0 = arith.constant 0 : i32
    %c0_i32_1 = arith.constant 0 : i32
    return %c0_i32, %c0_i32_0 : i32, i32
  }
  func.func @transform_10(%arg0: i32) -> (i32, i32) {
    %c0_i32 = arith.constant 0 : i32
    %c0_i32_0 = arith.constant 0 : i32
    %c0_i32_1 = arith.constant 0 : i32
    return %c0_i32, %c0_i32_0 : i32, i32
  }
  func.func @transform_11(%arg0: i32) -> (i32, i32) {
    %c0_i32 = arith.constant 0 : i32
    %c0_i32_0 = arith.constant 0 : i32
    %c0_i32_1 = arith.constant 0 : i32
    return %c0_i32, %c0_i32_0 : i32, i32
  }
  func.func @transform_12(%arg0: i32) -> (i32, i32) {
    %c0_i32 = arith.constant 0 : i32
    %c0_i32_0 = arith.constant 0 : i32
    %c0_i32_1 = arith.constant 0 : i32
    return %c0_i32, %c0_i32_0 : i32, i32
  }
  func.func @transform_13(%arg0: i32) -> (i32, i32) {
    %c0_i32 = arith.constant 0 : i32
    %c0_i32_0 = arith.constant 0 : i32
    %c0_i32_1 = arith.constant 0 : i32
    return %c0_i32, %c0_i32_0 : i32, i32
  }
  func.func @transform_14(%arg0: i32) -> (i32, i32) {
    %c0_i32 = arith.constant 0 : i32
    %c0_i32_0 = arith.constant 0 : i32
    %c0_i32_1 = arith.constant 0 : i32
    return %c0_i32, %c0_i32_0 : i32, i32
  }
  func.func @transform_15(%arg0: i32) -> (i32, i32) {
    %c0_i32 = arith.constant 0 : i32
    %c0_i32_0 = arith.constant 0 : i32
    %c0_i32_1 = arith.constant 0 : i32
    return %c0_i32, %c0_i32_0 : i32, i32
  }
  func.func @transform_16(%arg0: i32) -> (i32, i32) {
    %c0_i32 = arith.constant 0 : i32
    %c0_i32_0 = arith.constant 0 : i32
    %c0_i32_1 = arith.constant 0 : i32
    return %c0_i32, %c0_i32_0 : i32, i32
  }
  func.func @transform_17(%arg0: i32) -> (i32, i32) {
    %c0_i32 = arith.constant 0 : i32
    %c0_i32_0 = arith.constant 0 : i32
    return %arg0, %c0_i32 : i32, i32
  }
}

</mosaic_0001>

<llo_original>
// kernel: _lambda_.1
$region0: #{_lambda_.1}
  #allocation0 [shape = 'u32[]', space=smem, size = 0x4, offset = 0x4, fixed_abs, tag = 'smem constant byte address 0x4 - core index']
  #allocation1 [shape = 'u32[72,128]{1,0:T(1,128)}', space=vmem, size = 0x9000, scoped, tag = 'internal scratch']
  #allocation2 [shape = 'bf16[2,144,256]{2,1,0:T(8,128)(2,1)}', space=vmem, size = 0x24000, scoped, tag = 'scratch operand']
  #allocation3 [shape = 'bf16[2,80,256]{2,1,0:T(8,128)(2,1)}', space=vmem, size = 0x14000, scoped, tag = 'scratch operand']
  #allocation4 [shape = 'bf16[2,48,256]{2,1,0:T(8,128)(2,1)}', space=vmem, size = 0xc000, scoped, tag = 'scratch operand']
  #allocation5 [shape = 'bf16[2,32,256]{2,1,0:T(8,128)(2,1)}', space=vmem, size = 0x8000, scoped, tag = 'scratch operand']
  %s0 = inlined_call_operand.vmem [shape: bf16[2,2,272,128], index: 0, kind: input, shape index: {}]
  %s1 = inlined_call_operand.vmem [shape: bf16[512,256], index: 1, kind: input, shape index: {}]
  %s2 = inlined_call_operand.vmem [shape: f32[1,256], index: 2, kind: input, shape index: {}]
  %s3 = inlined_call_operand.vmem [shape: bf16[1024,256], index: 3, kind: input, shape index: {}]
  %s4 = inlined_call_operand.vmem [shape: f32[1,256], index: 4, kind: input, shape index: {}]
  %s5 = inlined_call_operand.vmem [shape: bf16[1024,256], index: 5, kind: input, shape index: {}]
  %s6 = inlined_call_operand.vmem [shape: f32[1,256], index: 6, kind: input, shape index: {}]
  %s7 = inlined_call_operand.vmem [shape: bf16[1024,256], index: 7, kind: input, shape index: {}]
  %s8 = inlined_call_operand.vmem [shape: f32[1,256], index: 8, kind: input, shape index: {}]
  %s9 = inlined_call_operand.vmem [shape: bf16[1024,256], index: 9, kind: input, shape index: {}]
  %s10 = inlined_call_operand.vmem [shape: f32[1,256], index: 10, kind: input, shape index: {}]
  %s11 = inlined_call_operand.vmem [shape: bf16[256,512], index: 11, kind: input, shape index: {}]
  %s12 = inlined_call_operand.vmem [shape: f32[1,512], index: 12, kind: input, shape index: {}]
  %s13 = inlined_call_operand.vmem [shape: bf16[512,128], index: 13, kind: input, shape index: {}]
  %s14 = inlined_call_operand.vmem [shape: f32[1,128], index: 14, kind: input, shape index: {}]
  %s15 = inlined_call_operand.vmem [shape: bf16[128,128], index: 15, kind: input, shape index: {}]
  %s16 = inlined_call_operand.vmem [shape: f32[1,128], index: 16, kind: input, shape index: {}]
  %s17 = inlined_call_operand.vmem [shape: f32[32,128], index: 17, kind: output, shape index: {}]
  %s18 = sld [smem:[#allocation0]]
  $region101: #{_lambda_.1} parent=0
    _
  %s20 = ssub.s32 1, %s18
  %s21 = scalar_select 0, %s20, %s18
  loop: start=0, step=1, limit=4
  $region2: #{_lambda_.1} parent=0 // loop_pre_header
    _
  $region3: #{_lambda_.1} parent=0 // loop_header
    %s23 = sphi 0, %s27
    %p24 = scmp.ge.s32.totalorder %s23, 4
    %s33 = sphi 0, %s35
    %s36 = sphi 0, %s33
    %s37 = sphi 0, %s36
    %s53 = sphi 0, %s37
    %s57 = sphi 0, %s57
    %s59 = sphi 0, %s57
    %s60 = sphi 0, %s59
    %s74 = sphi 0, %s60
    %s78 = sphi 0, %s78
    %s80 = sphi 0, %s78
    %s81 = sphi 0, %s80
    %s95 = sphi 0, %s81
    %s99 = sphi 0, %s99
    %s101 = sphi 0, %s99
    %s102 = sphi 0, %s101
    %s116 = sphi 0, %s102
    %s120 = sphi 0, %s120
    %s122 = sphi 0, %s120
    %s123 = sphi 0, %s122
    %s137 = sphi 0, %s123
    %s141 = sphi 0, %s141
    %s143 = sphi 0, %s141
    %s144 = sphi 0, %s143
    %s158 = sphi 0, %s144
    %s162 = sphi 0, %s162
    %s164 = sphi 0, %s162
    %s165 = sphi 0, %s164
    %s179 = sphi 0, %s165
    %s183 = sphi 0, %s183
    %s185 = sphi 0, %s183
    %s186 = sphi 0, %s185
    %s200 = sphi 0, %s186
    %s204 = sphi 0, %s204
    %s206 = sphi 0, %s204
    %s207 = sphi 0, %s206
    %s221 = sphi 0, %s207
    %s225 = sphi 0, %s225
    %s227 = sphi 0, %s225
    %s228 = sphi 0, %s227
    %s242 = sphi 0, %s228
    %s246 = sphi 0, %s246
    %s248 = sphi 0, %s246
    %s249 = sphi 0, %s248
    %s263 = sphi 0, %s249
    %s267 = sphi 0, %s267
    %s269 = sphi 0, %s267
    %s270 = sphi 0, %s269
    %s284 = sphi 0, %s270
    %s288 = sphi 0, %s288
    %s290 = sphi 0, %s288
    %s291 = sphi 0, %s290
    %s305 = sphi 0, %s291
    %s309 = sphi 0, %s309
    %s311 = sphi 0, %s309
    %s312 = sphi 0, %s311
    %s326 = sphi 0, %s312
    %s330 = sphi 0, %s330
    %s332 = sphi 0, %s330
    %s333 = sphi 0, %s332
    %s347 = sphi 0, %s333
    %s351 = sphi 0, %s351
    %s353 = sphi 0, %s351
    %s354 = sphi 0, %s353
    %s368 = sphi 0, %s354
    %s372 = sphi 0, %s372
    %s374 = sphi 0, %s372
    %s375 = sphi 0, %s374
    %s389 = sphi 0, %s375
    %s395 = sphi 0, %s397
    %s398 = sphi 0, %s395
    %s399 = sphi 0, %s398
    %s415 = sphi 0, %s399
  $region4: #{_lambda_.1} parent=0 // loop_header_branch
    %26 = sbr.rel (%p24) target = $region8
  $region5: #{_lambda_.1} parent=0 // loop_body
    %s28 = ssub.s32 %s23, 1
    %s29 = ssub.s32 %s23, 2
    %s30 = sadd.s32 %s23, 1
    %s31 = ssub.s32 %s23, %s30
    %p32 = scmp.eq.s32.totalorder %s31, 0
    %s34 = sadd.s32 %s33, 1
    %s35 = scalar_select %p32, %s33, %s34
    %p38 = pneg %p32
    %p39 = scmp.eq.s32.totalorder %s23, 1
    %p40 = por %p38, %p39
    %p41 = scmp.ne.s32.totalorder %s33, %s36
    %p42 = scmp.eq.s32.totalorder %s23, 0
    %p43 = por %p41, %p42
    %p44 = scmp.ne.s32.totalorder %s33, %s36
    %p45 = scmp.eq.s32.totalorder %s28, 1
    %p46 = por %p44, %p45
    %p47 = scmp.ne.s32.totalorder %s36, %s37
    %p48 = scmp.eq.s32.totalorder %s28, 0
    %p49 = por %p47, %p48
    %p50 = scmp.ne.s32.totalorder %s36, %s37
    %p51 = scmp.eq.s32.totalorder %s29, 1
    %p52 = por %p50, %p51
    %p54 = scmp.ne.s32.totalorder %s37, %s53
    %p55 = scmp.eq.s32.totalorder %s29, 0
    %p56 = por %p54, %p55
    %s58 = sadd.s32 %s57, 1
    %p61 = scmp.eq.s32.totalorder %s23, 1
    %p62 = scmp.ne.s32.totalorder %s57, %s59
    %p63 = scmp.eq.s32.totalorder %s23, 0
    %p64 = por %p62, %p63
    %p65 = scmp.ne.s32.totalorder %s57, %s59
    %p66 = scmp.eq.s32.totalorder %s28, 1
    %p67 = por %p65, %p66
    %p68 = scmp.ne.s32.totalorder %s59, %s60
    %p69 = scmp.eq.s32.totalorder %s28, 0
    %p70 = por %p68, %p69
    %p71 = scmp.ne.s32.totalorder %s59, %s60
    %p72 = scmp.eq.s32.totalorder %s29, 1
    %p73 = por %p71, %p72
    %p75 = scmp.ne.s32.totalorder %s60, %s74
    %p76 = scmp.eq.s32.totalorder %s29, 0
    %p77 = por %p75, %p76
    %s79 = sadd.s32 %s78, 1
    %p82 = scmp.eq.s32.totalorder %s23, 1
    %p83 = scmp.ne.s32.totalorder %s78, %s80
    %p84 = scmp.eq.s32.totalorder %s23, 0
    %p85 = por %p83, %p84
    %p86 = scmp.ne.s32.totalorder %s78, %s80
    %p87 = scmp.eq.s32.totalorder %s28, 1
    %p88 = por %p86, %p87
    %p89 = scmp.ne.s32.totalorder %s80, %s81
    %p90 = scmp.eq.s32.totalorder %s28, 0
    %p91 = por %p89, %p90
    %p92 = scmp.ne.s32.totalorder %s80, %s81
    %p93 = scmp.eq.s32.totalorder %s29, 1
    %p94 = por %p92, %p93
    %p96 = scmp.ne.s32.totalorder %s81, %s95
    %p97 = scmp.eq.s32.totalorder %s29, 0
    %p98 = por %p96, %p97
    %s100 = sadd.s32 %s99, 1
    %p103 = scmp.eq.s32.totalorder %s23, 1
    %p104 = scmp.ne.s32.totalorder %s99, %s101
    %p105 = scmp.eq.s32.totalorder %s23, 0
    %p106 = por %p104, %p105
    %p107 = scmp.ne.s32.totalorder %s99, %s101
    %p108 = scmp.eq.s32.totalorder %s28, 1
    %p109 = por %p107, %p108
    %p110 = scmp.ne.s32.totalorder %s101, %s102
    %p111 = scmp.eq.s32.totalorder %s28, 0
    %p112 = por %p110, %p111
    %p113 = scmp.ne.s32.totalorder %s101, %s102
    %p114 = scmp.eq.s32.totalorder %s29, 1
    %p115 = por %p113, %p114
    %p117 = scmp.ne.s32.totalorder %s102, %s116
    %p118 = scmp.eq.s32.totalorder %s29, 0
    %p119 = por %p117, %p118
    %s121 = sadd.s32 %s120, 1
    %p124 = scmp.eq.s32.totalorder %s23, 1
    %p125 = scmp.ne.s32.totalorder %s120, %s122
    %p126 = scmp.eq.s32.totalorder %s23, 0
    %p127 = por %p125, %p126
    %p128 = scmp.ne.s32.totalorder %s120, %s122
    %p129 = scmp.eq.s32.totalorder %s28, 1
    %p130 = por %p128, %p129
    %p131 = scmp.ne.s32.totalorder %s122, %s123
    %p132 = scmp.eq.s32.totalorder %s28, 0
    %p133 = por %p131, %p132
    %p134 = scmp.ne.s32.totalorder %s122, %s123
    %p135 = scmp.eq.s32.totalorder %s29, 1
    %p136 = por %p134, %p135
    %p138 = scmp.ne.s32.totalorder %s123, %s137
    %p139 = scmp.eq.s32.totalorder %s29, 0
    %p140 = por %p138, %p139
    %s142 = sadd.s32 %s141, 1
    %p145 = scmp.eq.s32.totalorder %s23, 1
    %p146 = scmp.ne.s32.totalorder %s141, %s143
    %p147 = scmp.eq.s32.totalorder %s23, 0
    %p148 = por %p146, %p147
    %p149 = scmp.ne.s32.totalorder %s141, %s143
    %p150 = scmp.eq.s32.totalorder %s28, 1
    %p151 = por %p149, %p150
    %p152 = scmp.ne.s32.totalorder %s143, %s144
    %p153 = scmp.eq.s32.totalorder %s28, 0
    %p154 = por %p152, %p153
    %p155 = scmp.ne.s32.totalorder %s143, %s144
    %p156 = scmp.eq.s32.totalorder %s29, 1
    %p157 = por %p155, %p156
    %p159 = scmp.ne.s32.totalorder %s144, %s158
    %p160 = scmp.eq.s32.totalorder %s29, 0
    %p161 = por %p159, %p160
    %s163 = sadd.s32 %s162, 1
    %p166 = scmp.eq.s32.totalorder %s23, 1
    %p167 = scmp.ne.s32.totalorder %s162, %s164
    %p168 = scmp.eq.s32.totalorder %s23, 0
    %p169 = por %p167, %p168
    %p170 = scmp.ne.s32.totalorder %s162, %s164
    %p171 = scmp.eq.s32.totalorder %s28, 1
    %p172 = por %p170, %p171
    %p173 = scmp.ne.s32.totalorder %s164, %s165
    %p174 = scmp.eq.s32.totalorder %s28, 0
    %p175 = por %p173, %p174
    %p176 = scmp.ne.s32.totalorder %s164, %s165
    %p177 = scmp.eq.s32.totalorder %s29, 1
    %p178 = por %p176, %p177
    %p180 = scmp.ne.s32.totalorder %s165, %s179
    %p181 = scmp.eq.s32.totalorder %s29, 0
    %p182 = por %p180, %p181
    %s184 = sadd.s32 %s183, 1
    %p187 = scmp.eq.s32.totalorder %s23, 1
    %p188 = scmp.ne.s32.totalorder %s183, %s185
    %p189 = scmp.eq.s32.totalorder %s23, 0
    %p190 = por %p188, %p189
    %p191 = scmp.ne.s32.totalorder %s183, %s185
    %p192 = scmp.eq.s32.totalorder %s28, 1
    %p193 = por %p191, %p192
    %p194 = scmp.ne.s32.totalorder %s185, %s186
    %p195 = scmp.eq.s32.totalorder %s28, 0
    %p196 = por %p194, %p195
    %p197 = scmp.ne.s32.totalorder %s185, %s186
    %p198 = scmp.eq.s32.totalorder %s29, 1
    %p199 = por %p197, %p198
    %p201 = scmp.ne.s32.totalorder %s186, %s200
    %p202 = scmp.eq.s32.totalorder %s29, 0
    %p203 = por %p201, %p202
    %s205 = sadd.s32 %s204, 1
    %p208 = scmp.eq.s32.totalorder %s23, 1
    %p209 = scmp.ne.s32.totalorder %s204, %s206
    %p210 = scmp.eq.s32.totalorder %s23, 0
    %p211 = por %p209, %p210
    %p212 = scmp.ne.s32.totalorder %s204, %s206
    %p213 = scmp.eq.s32.totalorder %s28, 1
    %p214 = por %p212, %p213
    %p215 = scmp.ne.s32.totalorder %s206, %s207
    %p216 = scmp.eq.s32.totalorder %s28, 0
    %p217 = por %p215, %p216
    %p218 = scmp.ne.s32.totalorder %s206, %s207
    %p219 = scmp.eq.s32.totalorder %s29, 1
    %p220 = por %p218, %p219
    %p222 = scmp.ne.s32.totalorder %s207, %s221
    %p223 = scmp.eq.s32.totalorder %s29, 0
    %p224 = por %p222, %p223
    %s226 = sadd.s32 %s225, 1
    %p229 = scmp.eq.s32.totalorder %s23, 1
    %p230 = scmp.ne.s32.totalorder %s225, %s227
    %p231 = scmp.eq.s32.totalorder %s23, 0
    %p232 = por %p230, %p231
    %p233 = scmp.ne.s32.totalorder %s225, %s227
    %p234 = scmp.eq.s32.totalorder %s28, 1
    %p235 = por %p233, %p234
    %p236 = scmp.ne.s32.totalorder %s227, %s228
    %p237 = scmp.eq.s32.totalorder %s28, 0
    %p238 = por %p236, %p237
    %p239 = scmp.ne.s32.totalorder %s227, %s228
    %p240 = scmp.eq.s32.totalorder %s29, 1
    %p241 = por %p239, %p240
    %p243 = scmp.ne.s32.totalorder %s228, %s242
    %p244 = scmp.eq.s32.totalorder %s29, 0
    %p245 = por %p243, %p244
    %s247 = sadd.s32 %s246, 1
    %p250 = scmp.eq.s32.totalorder %s23, 1
    %p251 = scmp.ne.s32.totalorder %s246, %s248
    %p252 = scmp.eq.s32.totalorder %s23, 0
    %p253 = por %p251, %p252
    %p254 = scmp.ne.s32.totalorder %s246, %s248
    %p255 = scmp.eq.s32.totalorder %s28, 1
    %p256 = por %p254, %p255
    %p257 = scmp.ne.s32.totalorder %s248, %s249
    %p258 = scmp.eq.s32.totalorder %s28, 0
    %p259 = por %p257, %p258
    %p260 = scmp.ne.s32.totalorder %s248, %s249
    %p261 = scmp.eq.s32.totalorder %s29, 1
    %p262 = por %p260, %p261
    %p264 = scmp.ne.s32.totalorder %s249, %s263
    %p265 = scmp.eq.s32.totalorder %s29, 0
    %p266 = por %p264, %p265
    %s268 = sadd.s32 %s267, 1
    %p271 = scmp.eq.s32.totalorder %s23, 1
    %p272 = scmp.ne.s32.totalorder %s267, %s269
    %p273 = scmp.eq.s32.totalorder %s23, 0
    %p274 = por %p272, %p273
    %p275 = scmp.ne.s32.totalorder %s267, %s269
    %p276 = scmp.eq.s32.totalorder %s28, 1
    %p277 = por %p275, %p276
    %p278 = scmp.ne.s32.totalorder %s269, %s270
    %p279 = scmp.eq.s32.totalorder %s28, 0
    %p280 = por %p278, %p279
    %p281 = scmp.ne.s32.totalorder %s269, %s270
    %p282 = scmp.eq.s32.totalorder %s29, 1
    %p283 = por %p281, %p282
    %p285 = scmp.ne.s32.totalorder %s270, %s284
    %p286 = scmp.eq.s32.totalorder %s29, 0
    %p287 = por %p285, %p286
    %s289 = sadd.s32 %s288, 1
    %p292 = scmp.eq.s32.totalorder %s23, 1
    %p293 = scmp.ne.s32.totalorder %s288, %s290
    %p294 = scmp.eq.s32.totalorder %s23, 0
    %p295 = por %p293, %p294
    %p296 = scmp.ne.s32.totalorder %s288, %s290
    %p297 = scmp.eq.s32.totalorder %s28, 1
    %p298 = por %p296, %p297
    %p299 = scmp.ne.s32.totalorder %s290, %s291
    %p300 = scmp.eq.s32.totalorder %s28, 0
    %p301 = por %p299, %p300
    %p302 = scmp.ne.s32.totalorder %s290, %s291
    %p303 = scmp.eq.s32.totalorder %s29, 1
    %p304 = por %p302, %p303
    %p306 = scmp.ne.s32.totalorder %s291, %s305
    %p307 = scmp.eq.s32.totalorder %s29, 0
    %p308 = por %p306, %p307
    %s310 = sadd.s32 %s309, 1
    %p313 = scmp.eq.s32.totalorder %s23, 1
    %p314 = scmp.ne.s32.totalorder %s309, %s311
    %p315 = scmp.eq.s32.totalorder %s23, 0
    %p316 = por %p314, %p315
    %p317 = scmp.ne.s32.totalorder %s309, %s311
    %p318 = scmp.eq.s32.totalorder %s28, 1
    %p319 = por %p317, %p318
    %p320 = scmp.ne.s32.totalorder %s311, %s312
    %p321 = scmp.eq.s32.totalorder %s28, 0
    %p322 = por %p320, %p321
    %p323 = scmp.ne.s32.totalorder %s311, %s312
    %p324 = scmp.eq.s32.totalorder %s29, 1
    %p325 = por %p323, %p324
    %p327 = scmp.ne.s32.totalorder %s312, %s326
    %p328 = scmp.eq.s32.totalorder %s29, 0
    %p329 = por %p327, %p328
    %s331 = sadd.s32 %s330, 1
    %p334 = scmp.eq.s32.totalorder %s23, 1
    %p335 = scmp.ne.s32.totalorder %s330, %s332
    %p336 = scmp.eq.s32.totalorder %s23, 0
    %p337 = por %p335, %p336
    %p338 = scmp.ne.s32.totalorder %s330, %s332
    %p339 = scmp.eq.s32.totalorder %s28, 1
    %p340 = por %p338, %p339
    %p341 = scmp.ne.s32.totalorder %s332, %s333
    %p342 = scmp.eq.s32.totalorder %s28, 0
    %p343 = por %p341, %p342
    %p344 = scmp.ne.s32.totalorder %s332, %s333
    %p345 = scmp.eq.s32.totalorder %s29, 1
    %p346 = por %p344, %p345
    %p348 = scmp.ne.s32.totalorder %s333, %s347
    %p349 = scmp.eq.s32.totalorder %s29, 0
    %p350 = por %p348, %p349
    %s352 = sadd.s32 %s351, 1
    %p355 = scmp.eq.s32.totalorder %s23, 1
    %p356 = scmp.ne.s32.totalorder %s351, %s353
    %p357 = scmp.eq.s32.totalorder %s23, 0
    %p358 = por %p356, %p357
    %p359 = scmp.ne.s32.totalorder %s351, %s353
    %p360 = scmp.eq.s32.totalorder %s28, 1
    %p361 = por %p359, %p360
    %p362 = scmp.ne.s32.totalorder %s353, %s354
    %p363 = scmp.eq.s32.totalorder %s28, 0
    %p364 = por %p362, %p363
    %p365 = scmp.ne.s32.totalorder %s353, %s354
    %p366 = scmp.eq.s32.totalorder %s29, 1
    %p367 = por %p365, %p366
    %p369 = scmp.ne.s32.totalorder %s354, %s368
    %p370 = scmp.eq.s32.totalorder %s29, 0
    %p371 = por %p369, %p370
    %s373 = sadd.s32 %s372, 1
    %p376 = scmp.eq.s32.totalorder %s23, 1
    %p377 = scmp.ne.s32.totalorder %s372, %s374
    %p378 = scmp.eq.s32.totalorder %s23, 0
    %p379 = por %p377, %p378
    %p380 = scmp.ne.s32.totalorder %s372, %s374
    %p381 = scmp.eq.s32.totalorder %s28, 1
    %p382 = por %p380, %p381
    %p383 = scmp.ne.s32.totalorder %s374, %s375
    %p384 = scmp.eq.s32.totalorder %s28, 0
    %p385 = por %p383, %p384
    %p386 = scmp.ne.s32.totalorder %s374, %s375
    %p387 = scmp.eq.s32.totalorder %s29, 1
    %p388 = por %p386, %p387
    %p390 = scmp.ne.s32.totalorder %s375, %s389
    %p391 = scmp.eq.s32.totalorder %s29, 0
    %p392 = por %p390, %p391
    %s393 = ssub.s32 %s23, %s30
    %p394 = scmp.eq.s32.totalorder %s393, 0
    %s396 = sadd.s32 %s395, 1
    %s397 = scalar_select %p394, %s395, %s396
    %p400 = pneg %p394
    %p401 = scmp.eq.s32.totalorder %s23, 1
    %p402 = por %p400, %p401
    %p403 = scmp.ne.s32.totalorder %s395, %s398
    %p404 = scmp.eq.s32.totalorder %s23, 0
    %p405 = por %p403, %p404
    %p406 = scmp.ne.s32.totalorder %s395, %s398
    %p407 = scmp.eq.s32.totalorder %s28, 1
    %p408 = por %p406, %p407
    %p409 = scmp.ne.s32.totalorder %s398, %s399
    %p410 = scmp.eq.s32.totalorder %s28, 0
    %p411 = por %p409, %p410
    %p412 = scmp.ne.s32.totalorder %s398, %s399
    %p413 = scmp.eq.s32.totalorder %s29, 1
    %p414 = por %p412, %p413
    %p416 = scmp.ne.s32.totalorder %s399, %s415
    %p417 = scmp.eq.s32.totalorder %s29, 0
    %p418 = por %p416, %p417
    %p419 = scmp.le.s32.totalorder 1, %s23
    %p420 = scmp.lt.s32.totalorder %s23, 3
    %p421 = pnand %p419, %p420
    %p422 = pneg %p421
    // Predicated region
    $region9: #{_lambda_.1} parent=5 // pred_check
      _
    $region10: #{_lambda_.1} parent=5 // pred_check_branch
      %424 = sbr.rel (%p421) target = $region12
    $region11: #{_lambda_.1} parent=5 // pred_region
      %s425 = ssub.s32 %s23, 1
      // Predicated region
      $region13: #{_lambda_.1} parent=11 // pred_check
        %p426 = pneg %p70
      $region14: #{_lambda_.1} parent=11 // pred_check_branch
        %428 = sbr.rel (%p426) target = $region16
      $region15: #{_lambda_.1} parent=11 // pred_region
        _
      $region16: #{_lambda_.1} parent=11 // pred_fallthru
        _
      // Predicated region
      $region17: #{_lambda_.1} parent=11 // pred_check
        %p429 = pneg %p91
      $region18: #{_lambda_.1} parent=11 // pred_check_branch
        %431 = sbr.rel (%p429) target = $region20
      $region19: #{_lambda_.1} parent=11 // pred_region
        _
      $region20: #{_lambda_.1} parent=11 // pred_fallthru
        _
      // Predicated region
      $region21: #{_lambda_.1} parent=11 // pred_check
        %p432 = pneg %p112
      $region22: #{_lambda_.1} parent=11 // pred_check_branch
        %434 = sbr.rel (%p432) target = $region24
      $region23: #{_lambda_.1} parent=11 // pred_region
        _
      $region24: #{_lambda_.1} parent=11 // pred_fallthru
        _
      // Predicated region
      $region25: #{_lambda_.1} parent=11 // pred_check
        %p435 = pneg %p133
      $region26: #{_lambda_.1} parent=11 // pred_check_branch
        %437 = sbr.rel (%p435) target = $region28
      $region27: #{_lambda_.1} parent=11 // pred_region
        _
      $region28: #{_lambda_.1} parent=11 // pred_fallthru
        _
      // Predicated region
      $region29: #{_lambda_.1} parent=11 // pred_check
        %p438 = pneg %p154
      $region30: #{_lambda_.1} parent=11 // pred_check_branch
        %440 = sbr.rel (%p438) target = $region32
      $region31: #{_lambda_.1} parent=11 // pred_region
        _
      $region32: #{_lambda_.1} parent=11 // pred_fallthru
        _
      // Predicated region
      $region33: #{_lambda_.1} parent=11 // pred_check
        %p441 = pneg %p175
      $region34: #{_lambda_.1} parent=11 // pred_check_branch
        %443 = sbr.rel (%p441) target = $region36
      $region35: #{_lambda_.1} parent=11 // pred_region
        _
      $region36: #{_lambda_.1} parent=11 // pred_fallthru
        _
      // Predicated region
      $region37: #{_lambda_.1} parent=11 // pred_check
        %p444 = pneg %p196
      $region38: #{_lambda_.1} parent=11 // pred_check_branch
        %446 = sbr.rel (%p444) target = $region40
      $region39: #{_lambda_.1} parent=11 // pred_region
        _
      $region40: #{_lambda_.1} parent=11 // pred_fallthru
        _
      // Predicated region
      $region41: #{_lambda_.1} parent=11 // pred_check
        %p447 = pneg %p217
      $region42: #{_lambda_.1} parent=11 // pred_check_branch
        %449 = sbr.rel (%p447) target = $region44
      $region43: #{_lambda_.1} parent=11 // pred_region
        _
      $region44: #{_lambda_.1} parent=11 // pred_fallthru
        _
      // Predicated region
      $region45: #{_lambda_.1} parent=11 // pred_check
        %p450 = pneg %p238
      $region46: #{_lambda_.1} parent=11 // pred_check_branch
        %452 = sbr.rel (%p450) target = $region48
      $region47: #{_lambda_.1} parent=11 // pred_region
        _
      $region48: #{_lambda_.1} parent=11 // pred_fallthru
        _
      // Predicated region
      $region49: #{_lambda_.1} parent=11 // pred_check
        %p453 = pneg %p259
      $region50: #{_lambda_.1} parent=11 // pred_check_branch
        %455 = sbr.rel (%p453) target = $region52
      $region51: #{_lambda_.1} parent=11 // pred_region
        _
      $region52: #{_lambda_.1} parent=11 // pred_fallthru
        _
      // Predicated region
      $region53: #{_lambda_.1} parent=11 // pred_check
        %p456 = pneg %p280
      $region54: #{_lambda_.1} parent=11 // pred_check_branch
        %458 = sbr.rel (%p456) target = $region56
      $region55: #{_lambda_.1} parent=11 // pred_region
        _
      $region56: #{_lambda_.1} parent=11 // pred_fallthru
        _
      // Predicated region
      $region57: #{_lambda_.1} parent=11 // pred_check
        %p459 = pneg %p301
      $region58: #{_lambda_.1} parent=11 // pred_check_branch
        %461 = sbr.rel (%p459) target = $region60
      $region59: #{_lambda_.1} parent=11 // pred_region
        _
      $region60: #{_lambda_.1} parent=11 // pred_fallthru
        _
      // Predicated region
      $region61: #{_lambda_.1} parent=11 // pred_check
        %p462 = pneg %p322
      $region62: #{_lambda_.1} parent=11 // pred_check_branch
        %464 = sbr.rel (%p462) target = $region64
      $region63: #{_lambda_.1} parent=11 // pred_region
        _
      $region64: #{_lambda_.1} parent=11 // pred_fallthru
        _
      // Predicated region
      $region65: #{_lambda_.1} parent=11 // pred_check
        %p465 = pneg %p343
      $region66: #{_lambda_.1} parent=11 // pred_check_branch
        %467 = sbr.rel (%p465) target = $region68
      $region67: #{_lambda_.1} parent=11 // pred_region
        _
      $region68: #{_lambda_.1} parent=11 // pred_fallthru
        _
      // Predicated region
      $region69: #{_lambda_.1} parent=11 // pred_check
        %p468 = pneg %p364
      $region70: #{_lambda_.1} parent=11 // pred_check_branch
        %470 = sbr.rel (%p468) target = $region72
      $region71: #{_lambda_.1} parent=11 // pred_region
        _
      $region72: #{_lambda_.1} parent=11 // pred_fallthru
        _
      // Predicated region
      $region73: #{_lambda_.1} parent=11 // pred_check
        %p471 = pneg %p385
      $region74: #{_lambda_.1} parent=11 // pred_check_branch
        %473 = sbr.rel (%p471) target = $region76
      $region75: #{_lambda_.1} parent=11 // pred_region
        _
      $region76: #{_lambda_.1} parent=11 // pred_fallthru
        _
    $region12: #{_lambda_.1} parent=5 // pred_fallthru
      _
    %p474 = scmp.lt.s32.totalorder %s23, 2
    // Predicated region
    $region77: #{_lambda_.1} parent=5 // pred_check
      %p475 = pneg %p474
    $region78: #{_lambda_.1} parent=5 // pred_check_branch
      %477 = sbr.rel (%p475) target = $region80
    $region79: #{_lambda_.1} parent=5 // pred_region
      // Predicated region
      $region81: #{_lambda_.1} parent=79 // pred_check
        %p478 = pneg %p43
      $region82: #{_lambda_.1} parent=79 // pred_check_branch
        %480 = sbr.rel (%p478) target = $region84
      $region83: #{_lambda_.1} parent=79 // pred_region
        %p481 = scmp.lt.s32.totalorder %s23, 1
        %s482 = scalar_select %p481, %s23, 1
        %s483 = smul.addr %s482, 68
        %s484 = smul.addr %s483, 4
        %s485 = scalar_lea.vmem %s0, %s484
      $region84: #{_lambda_.1} parent=79 // pred_fallthru
        _
    $region80: #{_lambda_.1} parent=5 // pred_fallthru
      _
    %p486 = scmp.le.s32.totalorder 1, %s23
    %p487 = scmp.lt.s32.totalorder %s23, 3
    %p488 = pnand %p486, %p487
    %p489 = pneg %p488
    // Predicated region
    $region85: #{_lambda_.1} parent=5 // pred_check
      _
    $region86: #{_lambda_.1} parent=5 // pred_check_branch
      %491 = sbr.rel (%p488) target = $region88
    $region87: #{_lambda_.1} parent=5 // pred_region
      %s492 = ssub.s32 %s23, 1
      %p493 = scmp.lt.s32.totalorder %s28, 1
      %s494 = scalar_select %p493, %s28, 1
      %s495 = smul.addr %s494, 68
      %s496 = smul.addr %s495, 4
      %s497 = scalar_lea.vmem %s0, %s496
      %p498 = pneg %p49
      %p499 = pneg %p46
      %p500 = pneg %p70
      %p501 = pneg %p67
      %p502 = pneg %p91
      %p503 = pneg %p88
      %p504 = pneg %p112
      %p505 = pneg %p109
      %p506 = pneg %p133
      %p507 = pneg %p130
      %p508 = pneg %p154
      %p509 = pneg %p151
      %p510 = pneg %p175
      %p511 = pneg %p172
      %p512 = pneg %p196
      %p513 = pneg %p193
      %p514 = pneg %p217
      %p515 = pneg %p214
      %p516 = pneg %p238
      %p517 = pneg %p235
      %p518 = pneg %p259
      %p519 = pneg %p256
      %p520 = pneg %p280
      %p521 = pneg %p277
      %p522 = pneg %p301
      %p523 = pneg %p298
      %p524 = pneg %p322
      %p525 = pneg %p319
      %p526 = pneg %p343
      %p527 = pneg %p340
      %p528 = pneg %p364
      %p529 = pneg %p361
      %p530 = pneg %p385
      %p531 = pneg %p382
      %p532 = pneg %p411
      %p533 = pneg %p408
      %s534 = smul.u32 2, %s28
      %p535 = scmp.lt.s32.totalorder %s534, 3
      %s536 = scalar_select %p535, %s534, 3
      %s537 = smul.addr %s536, 8
      %s538 = scalar_lea.vmem %s17, %s537
      %p539 = scmp.lt.s32.totalorder %s28, 1
      %s540 = scalar_select %p539, %s28, 1
      %s541 = smul.addr %s540, 68
      %s542 = smul.addr %s541, 4
      %s543 = scalar_lea.vmem %s0, %s542
      %s544 = smul.u32 2, %s28
      %p545 = scmp.lt.s32.totalorder %s544, 3
      %s546 = scalar_select %p545, %s544, 3
      %s547 = smul.addr %s546, 8
      %s548 = scalar_lea.vmem %s17, %s547
      %s549 = smul.u32 2, %s28
      %v551 = vld [vmem:[%s543] sm:$0xf]
      %v552 = vld [vmem:[%s543 + $0x4] sm:$0xf]
      %v553 = vld [vmem:[%s543 + $0x8] sm:$0xf]
      %v554 = vld [vmem:[%s543 + $0xc] sm:$0xf]
      %v555 = vld [vmem:[%s543 + $0x10] sm:$0xf]
      %v556 = vld [vmem:[%s543 + $0x14] sm:$0xf]
      %v557 = vld [vmem:[%s543 + $0x18] sm:$0xf]
      %v558 = vld [vmem:[%s543 + $0x1c] sm:$0xf]
      %v559 = vld [vmem:[%s543 + $0x20] sm:$0xf]
      %v560 = vld [vmem:[%s543 + $0x24] sm:$0xf]
      %v561 = vld [vmem:[%s543 + $0x28] sm:$0xf]
      %v562 = vld [vmem:[%s543 + $0x2c] sm:$0xf]
      %v563 = vld [vmem:[%s543 + $0x30] sm:$0xf]
      %v564 = vld [vmem:[%s543 + $0x34] sm:$0xf]
      %v565 = vld [vmem:[%s543 + $0x38] sm:$0xf]
      %v566 = vld [vmem:[%s543 + $0x3c] sm:$0xf]
      %v567 = vld [vmem:[%s543 + $0x40] sm:$0xf]
      %v568 = vld [vmem:[%s543 + $0x44] sm:$0xf]
      %v569 = vld [vmem:[%s543 + $0x48] sm:$0xf]
      %v570 = vld [vmem:[%s543 + $0x4c] sm:$0xf]
      %v571 = vld [vmem:[%s543 + $0x50] sm:$0xf]
      %v572 = vld [vmem:[%s543 + $0x54] sm:$0xf]
      %v573 = vld [vmem:[%s543 + $0x58] sm:$0xf]
      %v574 = vld [vmem:[%s543 + $0x5c] sm:$0xf]
      %v575 = vld [vmem:[%s543 + $0x60] sm:$0xf]
      %v576 = vld [vmem:[%s543 + $0x64] sm:$0xf]
      %v577 = vld [vmem:[%s543 + $0x68] sm:$0xf]
      %v578 = vld [vmem:[%s543 + $0x6c] sm:$0xf]
      %v579 = vld [vmem:[%s543 + $0x70] sm:$0xf]
      %v580 = vld [vmem:[%s543 + $0x74] sm:$0xf]
      %v581 = vld [vmem:[%s543 + $0x78] sm:$0xf]
      %v582 = vld [vmem:[%s543 + $0x7c] sm:$0xf]
      %s583 = scalar_lea.vmem %s543, 136
      %v584 = vld [vmem:[%s583] sm:$0xf]
      %v585 = vld [vmem:[%s583 + $0x4] sm:$0xf]
      %v586 = vld [vmem:[%s583 + $0x8] sm:$0xf]
      %v587 = vld [vmem:[%s583 + $0xc] sm:$0xf]
      %v588 = vld [vmem:[%s583 + $0x10] sm:$0xf]
      %v589 = vld [vmem:[%s583 + $0x14] sm:$0xf]
      %v590 = vld [vmem:[%s583 + $0x18] sm:$0xf]
      %v591 = vld [vmem:[%s583 + $0x1c] sm:$0xf]
      %v592 = vld [vmem:[%s583 + $0x20] sm:$0xf]
      %v593 = vld [vmem:[%s583 + $0x24] sm:$0xf]
      %v594 = vld [vmem:[%s583 + $0x28] sm:$0xf]
      %v595 = vld [vmem:[%s583 + $0x2c] sm:$0xf]
      %v596 = vld [vmem:[%s583 + $0x30] sm:$0xf]
      %v597 = vld [vmem:[%s583 + $0x34] sm:$0xf]
      %v598 = vld [vmem:[%s583 + $0x38] sm:$0xf]
      %v599 = vld [vmem:[%s583 + $0x3c] sm:$0xf]
      %v600 = vld [vmem:[%s583 + $0x40] sm:$0xf]
      %v601 = vld [vmem:[%s583 + $0x44] sm:$0xf]
      %v602 = vld [vmem:[%s583 + $0x48] sm:$0xf]
      %v603 = vld [vmem:[%s583 + $0x4c] sm:$0xf]
      %v604 = vld [vmem:[%s583 + $0x50] sm:$0xf]
      %v605 = vld [vmem:[%s583 + $0x54] sm:$0xf]
      %v606 = vld [vmem:[%s583 + $0x58] sm:$0xf]
      %v607 = vld [vmem:[%s583 + $0x5c] sm:$0xf]
      %v608 = vld [vmem:[%s583 + $0x60] sm:$0xf]
      %v609 = vld [vmem:[%s583 + $0x64] sm:$0xf]
      %v610 = vld [vmem:[%s583 + $0x68] sm:$0xf]
      %v611 = vld [vmem:[%s583 + $0x6c] sm:$0xf]
      %v612 = vld [vmem:[%s583 + $0x70] sm:$0xf]
      %v613 = vld [vmem:[%s583 + $0x74] sm:$0xf]
      %v614 = vld [vmem:[%s583 + $0x78] sm:$0xf]
      %v615 = vld [vmem:[%s583 + $0x7c] sm:$0xf]
      %v616 = vld [vmem:[%s543 + $0x80] sm:$0xf]
      %v617 = vld [vmem:[%s543 + $0x84] sm:$0xf]
      %v618 = vld [vmem:[%s583 + $0x80] sm:$0xf]
      %v619 = vld [vmem:[%s583 + $0x84] sm:$0xf]
      %v652 = vunpack.c.l.b16 %v551
      %v653 = vunpack.c.l.b16 %v552
      %v654 = vunpack.c.l.b16 %v553
      %v655 = vunpack.c.l.b16 %v554
      %v656 = vunpack.c.l.b16 %v555
      %v657 = vunpack.c.l.b16 %v556
      %v658 = vunpack.c.l.b16 %v557
      %v659 = vunpack.c.l.b16 %v558
      %v660 = vunpack.c.l.b16 %v559
      %v661 = vunpack.c.l.b16 %v560
      %v662 = vunpack.c.l.b16 %v561
      %v663 = vunpack.c.l.b16 %v562
      %v664 = vunpack.c.l.b16 %v563
      %v665 = vunpack.c.l.b16 %v564
      %v666 = vunpack.c.l.b16 %v565
      %v667 = vunpack.c.l.b16 %v566
      %v668 = vunpack.c.l.b16 %v567
      %v669 = vunpack.c.l.b16 %v568
      %v670 = vunpack.c.l.b16 %v569
      %v671 = vunpack.c.l.b16 %v570
      %v672 = vunpack.c.l.b16 %v571
      %v673 = vunpack.c.l.b16 %v572
      %v674 = vunpack.c.l.b16 %v573
      %v675 = vunpack.c.l.b16 %v574
      %v676 = vunpack.c.l.b16 %v575
      %v677 = vunpack.c.l.b16 %v576
      %v678 = vunpack.c.l.b16 %v577
      %v679 = vunpack.c.l.b16 %v578
      %v680 = vunpack.c.l.b16 %v579
      %v681 = vunpack.c.l.b16 %v580
      %v682 = vunpack.c.l.b16 %v581
      %v683 = vunpack.c.l.b16 %v582
      %v684 = vpack.c.b16 %v653, %v652
      %v685 = vpack.c.b16 %v655, %v654
      %v686 = vpack.c.b16 %v657, %v656
      %v687 = vpack.c.b16 %v659, %v658
      %v688 = vpack.c.b16 %v661, %v660
      %v689 = vpack.c.b16 %v663, %v662
      %v690 = vpack.c.b16 %v665, %v664
      %v691 = vpack.c.b16 %v667, %v666
      %v692 = vpack.c.b16 %v669, %v668
      %v693 = vpack.c.b16 %v671, %v670
      %v694 = vpack.c.b16 %v673, %v672
      %v695 = vpack.c.b16 %v675, %v674
      %v696 = vpack.c.b16 %v677, %v676
      %v697 = vpack.c.b16 %v679, %v678
      %v698 = vpack.c.b16 %v681, %v680
      %v699 = vpack.c.b16 %v683, %v682
      %v748 = vunpack.c.l.b16 %v584
      %v749 = vunpack.c.l.b16 %v585
      %v750 = vunpack.c.l.b16 %v586
      %v751 = vunpack.c.l.b16 %v587
      %v752 = vunpack.c.l.b16 %v588
      %v753 = vunpack.c.l.b16 %v589
      %v754 = vunpack.c.l.b16 %v590
      %v755 = vunpack.c.l.b16 %v591
      %v756 = vunpack.c.l.b16 %v592
      %v757 = vunpack.c.l.b16 %v593
      %v758 = vunpack.c.l.b16 %v594
      %v759 = vunpack.c.l.b16 %v595
      %v760 = vunpack.c.l.b16 %v596
      %v761 = vunpack.c.l.b16 %v597
      %v762 = vunpack.c.l.b16 %v598
      %v763 = vunpack.c.l.b16 %v599
      %v764 = vunpack.c.l.b16 %v600
      %v765 = vunpack.c.l.b16 %v601
      %v766 = vunpack.c.l.b16 %v602
      %v767 = vunpack.c.l.b16 %v603
      %v768 = vunpack.c.l.b16 %v604
      %v769 = vunpack.c.l.b16 %v605
      %v770 = vunpack.c.l.b16 %v606
      %v771 = vunpack.c.l.b16 %v607
      %v772 = vunpack.c.l.b16 %v608
      %v773 = vunpack.c.l.b16 %v609
      %v774 = vunpack.c.l.b16 %v610
      %v775 = vunpack.c.l.b16 %v611
      %v776 = vunpack.c.l.b16 %v612
      %v777 = vunpack.c.l.b16 %v613
      %v778 = vunpack.c.l.b16 %v614
      %v779 = vunpack.c.l.b16 %v615
      %v780 = vpack.c.b16 %v749, %v748
      %v781 = vpack.c.b16 %v751, %v750
      %v782 = vpack.c.b16 %v753, %v752
      %v783 = vpack.c.b16 %v755, %v754
      %v784 = vpack.c.b16 %v757, %v756
      %v785 = vpack.c.b16 %v759, %v758
      %v786 = vpack.c.b16 %v761, %v760
      %v787 = vpack.c.b16 %v763, %v762
      %v788 = vpack.c.b16 %v765, %v764
      %v789 = vpack.c.b16 %v767, %v766
      %v790 = vpack.c.b16 %v769, %v768
      %v791 = vpack.c.b16 %v771, %v770
      %v792 = vpack.c.b16 %v773, %v772
      %v793 = vpack.c.b16 %v775, %v774
      %v794 = vpack.c.b16 %v777, %v776
      %v795 = vpack.c.b16 %v779, %v778
      %v814 = vunpack.c.l.b16 %v616
      %v815 = vunpack.c.l.b16 %v617
      %v816 = vpack.c.b16 %v815, %v814
      %v820 = vunpack.c.l.b16 %v618
      %v821 = vunpack.c.l.b16 %v619
      %v822 = vpack.c.b16 %v821, %v820
      %v824 = vld [vmem:[%s1] sm:$0xff]
      %v825 = vld [vmem:[%s1 + $0x8] sm:$0xff]
      %v826 = vld [vmem:[%s1 + $0x10] sm:$0xff]
      %v827 = vld [vmem:[%s1 + $0x18] sm:$0xff]
      %v828 = vld [vmem:[%s1 + $0x20] sm:$0xff]
      %v829 = vld [vmem:[%s1 + $0x28] sm:$0xff]
      %v830 = vld [vmem:[%s1 + $0x30] sm:$0xff]
      %v831 = vld [vmem:[%s1 + $0x38] sm:$0xff]
      %v832 = vld [vmem:[%s1 + $0x40] sm:$0xff]
      %v833 = vld [vmem:[%s1 + $0x48] sm:$0xff]
      %v834 = vld [vmem:[%s1 + $0x50] sm:$0xff]
      %v835 = vld [vmem:[%s1 + $0x58] sm:$0xff]
      %v836 = vld [vmem:[%s1 + $0x60] sm:$0xff]
      %v837 = vld [vmem:[%s1 + $0x68] sm:$0xff]
      %v838 = vld [vmem:[%s1 + $0x70] sm:$0xff]
      %v839 = vld [vmem:[%s1 + $0x78] sm:$0xff]
      %v840 = vld [vmem:[%s1 + $0x80] sm:$0xff]
      %v841 = vld [vmem:[%s1 + $0x88] sm:$0xff]
      %v842 = vld [vmem:[%s1 + $0x90] sm:$0xff]
      %v843 = vld [vmem:[%s1 + $0x98] sm:$0xff]
      %v844 = vld [vmem:[%s1 + $0xa0] sm:$0xff]
      %v845 = vld [vmem:[%s1 + $0xa8] sm:$0xff]
      %v846 = vld [vmem:[%s1 + $0xb0] sm:$0xff]
      %v847 = vld [vmem:[%s1 + $0xb8] sm:$0xff]
      %v848 = vld [vmem:[%s1 + $0xc0] sm:$0xff]
      %v849 = vld [vmem:[%s1 + $0xc8] sm:$0xff]
      %v850 = vld [vmem:[%s1 + $0xd0] sm:$0xff]
      %v851 = vld [vmem:[%s1 + $0xd8] sm:$0xff]
      %v852 = vld [vmem:[%s1 + $0xe0] sm:$0xff]
      %v853 = vld [vmem:[%s1 + $0xe8] sm:$0xff]
      %v854 = vld [vmem:[%s1 + $0xf0] sm:$0xff]
      %v855 = vld [vmem:[%s1 + $0xf8] sm:$0xff]
      %v856 = vld [vmem:[%s1 + $0x100] sm:$0xff]
      %v857 = vld [vmem:[%s1 + $0x108] sm:$0xff]
      %v858 = vld [vmem:[%s1 + $0x110] sm:$0xff]
      %v859 = vld [vmem:[%s1 + $0x118] sm:$0xff]
      %v860 = vld [vmem:[%s1 + $0x120] sm:$0xff]
      %v861 = vld [vmem:[%s1 + $0x128] sm:$0xff]
      %v862 = vld [vmem:[%s1 + $0x130] sm:$0xff]
      %v863 = vld [vmem:[%s1 + $0x138] sm:$0xff]
      %v864 = vld [vmem:[%s1 + $0x140] sm:$0xff]
      %v865 = vld [vmem:[%s1 + $0x148] sm:$0xff]
      %v866 = vld [vmem:[%s1 + $0x150] sm:$0xff]
      %v867 = vld [vmem:[%s1 + $0x158] sm:$0xff]
      %v868 = vld [vmem:[%s1 + $0x160] sm:$0xff]
      %v869 = vld [vmem:[%s1 + $0x168] sm:$0xff]
      %v870 = vld [vmem:[%s1 + $0x170] sm:$0xff]
      %v871 = vld [vmem:[%s1 + $0x178] sm:$0xff]
      %v872 = vld [vmem:[%s1 + $0x180] sm:$0xff]
      %v873 = vld [vmem:[%s1 + $0x188] sm:$0xff]
      %v874 = vld [vmem:[%s1 + $0x190] sm:$0xff]
      %v875 = vld [vmem:[%s1 + $0x198] sm:$0xff]
      %v876 = vld [vmem:[%s1 + $0x1a0] sm:$0xff]
      %v877 = vld [vmem:[%s1 + $0x1a8] sm:$0xff]
      %v878 = vld [vmem:[%s1 + $0x1b0] sm:$0xff]
      %v879 = vld [vmem:[%s1 + $0x1b8] sm:$0xff]
      %v880 = vld [vmem:[%s1 + $0x1c0] sm:$0xff]
      %v881 = vld [vmem:[%s1 + $0x1c8] sm:$0xff]
      %v882 = vld [vmem:[%s1 + $0x1d0] sm:$0xff]
      %v883 = vld [vmem:[%s1 + $0x1d8] sm:$0xff]
      %v884 = vld [vmem:[%s1 + $0x1e0] sm:$0xff]
      %v885 = vld [vmem:[%s1 + $0x1e8] sm:$0xff]
      %v886 = vld [vmem:[%s1 + $0x1f0] sm:$0xff]
      %v887 = vld [vmem:[%s1 + $0x1f8] sm:$0xff]
      %v888 = vld [vmem:[%s2] sm:$0x3]
      %v890 = vperm.slane %v888, 0
      %v891 = vperm.slane %v888, 1
      %v958 = vunpack.c.l.b16 %v824
      %v959 = vunpack.c.h.b16 %v824
      %v960 = vunpack.c.l.b16 %v825
      %v961 = vunpack.c.h.b16 %v825
      %v962 = vunpack.c.l.b16 %v826
      %v963 = vunpack.c.h.b16 %v826
      %v964 = vunpack.c.l.b16 %v827
      %v965 = vunpack.c.h.b16 %v827
      %v966 = vunpack.c.l.b16 %v828
      %v967 = vunpack.c.h.b16 %v828
      %v968 = vunpack.c.l.b16 %v829
      %v969 = vunpack.c.h.b16 %v829
      %v970 = vunpack.c.l.b16 %v830
      %v971 = vunpack.c.h.b16 %v830
      %v972 = vunpack.c.l.b16 %v831
      %v973 = vunpack.c.h.b16 %v831
      %v974 = vunpack.c.l.b16 %v832
      %v975 = vunpack.c.h.b16 %v832
      %v976 = vunpack.c.l.b16 %v833
      %v977 = vunpack.c.h.b16 %v833
      %v978 = vunpack.c.l.b16 %v834
      %v979 = vunpack.c.h.b16 %v834
      %v980 = vunpack.c.l.b16 %v835
      %v981 = vunpack.c.h.b16 %v835
      %v982 = vunpack.c.l.b16 %v836
      %v983 = vunpack.c.h.b16 %v836
      %v984 = vunpack.c.l.b16 %v837
      %v985 = vunpack.c.h.b16 %v837
      %v986 = vunpack.c.l.b16 %v838
      %v987 = vunpack.c.h.b16 %v838
      %v988 = vunpack.c.l.b16 %v839
      %v989 = vunpack.c.h.b16 %v839
      %v990 = vunpack.c.l.b16 %v840
      %v991 = vunpack.c.h.b16 %v840
      %v992 = vunpack.c.l.b16 %v841
      %v993 = vunpack.c.h.b16 %v841
      %v994 = vunpack.c.l.b16 %v842
      %v995 = vunpack.c.h.b16 %v842
      %v996 = vunpack.c.l.b16 %v843
      %v997 = vunpack.c.h.b16 %v843
      %v998 = vunpack.c.l.b16 %v844
      %v999 = vunpack.c.h.b16 %v844
      %v1000 = vunpack.c.l.b16 %v845
      %v1001 = vunpack.c.h.b16 %v845
      %v1002 = vunpack.c.l.b16 %v846
      %v1003 = vunpack.c.h.b16 %v846
      %v1004 = vunpack.c.l.b16 %v847
      %v1005 = vunpack.c.h.b16 %v847
      %v1006 = vunpack.c.l.b16 %v848
      %v1007 = vunpack.c.h.b16 %v848
      %v1008 = vunpack.c.l.b16 %v849
      %v1009 = vunpack.c.h.b16 %v849
      %v1010 = vunpack.c.l.b16 %v850
      %v1011 = vunpack.c.h.b16 %v850
      %v1012 = vunpack.c.l.b16 %v851
      %v1013 = vunpack.c.h.b16 %v851
      %v1014 = vunpack.c.l.b16 %v852
      %v1015 = vunpack.c.h.b16 %v852
      %v1016 = vunpack.c.l.b16 %v853
      %v1017 = vunpack.c.h.b16 %v853
      %v1018 = vunpack.c.l.b16 %v854
      %v1019 = vunpack.c.h.b16 %v854
      %v1020 = vunpack.c.l.b16 %v855
      %v1021 = vunpack.c.h.b16 %v855
      %v1022 = vunpack.c.l.b16 %v856
      %v1023 = vunpack.c.h.b16 %v856
      %v1024 = vunpack.c.l.b16 %v857
      %v1025 = vunpack.c.h.b16 %v857
      %v1026 = vunpack.c.l.b16 %v858
      %v1027 = vunpack.c.h.b16 %v858
      %v1028 = vunpack.c.l.b16 %v859
      %v1029 = vunpack.c.h.b16 %v859
      %v1030 = vunpack.c.l.b16 %v860
      %v1031 = vunpack.c.h.b16 %v860
      %v1032 = vunpack.c.l.b16 %v861
      %v1033 = vunpack.c.h.b16 %v861
      %v1034 = vunpack.c.l.b16 %v862
      %v1035 = vunpack.c.h.b16 %v862
      %v1036 = vunpack.c.l.b16 %v863
      %v1037 = vunpack.c.h.b16 %v863
      %v1038 = vunpack.c.l.b16 %v864
      %v1039 = vunpack.c.h.b16 %v864
      %v1040 = vunpack.c.l.b16 %v865
      %v1041 = vunpack.c.h.b16 %v865
      %v1042 = vunpack.c.l.b16 %v866
      %v1043 = vunpack.c.h.b16 %v866
      %v1044 = vunpack.c.l.b16 %v867
      %v1045 = vunpack.c.h.b16 %v867
      %v1046 = vunpack.c.l.b16 %v868
      %v1047 = vunpack.c.h.b16 %v868
      %v1048 = vunpack.c.l.b16 %v869
      %v1049 = vunpack.c.h.b16 %v869
      %v1050 = vunpack.c.l.b16 %v870
      %v1051 = vunpack.c.h.b16 %v870
      %v1052 = vunpack.c.l.b16 %v871
      %v1053 = vunpack.c.h.b16 %v871
      %v1054 = vunpack.c.l.b16 %v872
      %v1055 = vunpack.c.h.b16 %v872
      %v1056 = vunpack.c.l.b16 %v873
      %v1057 = vunpack.c.h.b16 %v873
      %v1058 = vunpack.c.l.b16 %v874
      %v1059 = vunpack.c.h.b16 %v874
      %v1060 = vunpack.c.l.b16 %v875
      %v1061 = vunpack.c.h.b16 %v875
      %v1062 = vunpack.c.l.b16 %v876
      %v1063 = vunpack.c.h.b16 %v876
      %v1064 = vunpack.c.l.b16 %v877
      %v1065 = vunpack.c.h.b16 %v877
      %v1066 = vunpack.c.l.b16 %v878
      %v1067 = vunpack.c.h.b16 %v878
      %v1068 = vunpack.c.l.b16 %v879
      %v1069 = vunpack.c.h.b16 %v879
      %v1070 = vunpack.c.l.b16 %v880
      %v1071 = vunpack.c.h.b16 %v880
      %v1072 = vunpack.c.l.b16 %v881
      %v1073 = vunpack.c.h.b16 %v881
      %v1074 = vunpack.c.l.b16 %v882
      %v1075 = vunpack.c.h.b16 %v882
      %v1076 = vunpack.c.l.b16 %v883
      %v1077 = vunpack.c.h.b16 %v883
      %v1078 = vunpack.c.l.b16 %v884
      %v1079 = vunpack.c.h.b16 %v884
      %v1080 = vunpack.c.l.b16 %v885
      %v1081 = vunpack.c.h.b16 %v885
      %v1082 = vunpack.c.l.b16 %v886
      %v1083 = vunpack.c.h.b16 %v886
      %v1084 = vunpack.c.l.b16 %v887
      %v1085 = vunpack.c.h.b16 %v887
      %v1086 = vpack.c.b16 %v960, %v958
      %v1087 = vpack.c.b16 %v961, %v959
      %v1088 = vpack.c.b16 %v964, %v962
      %v1089 = vpack.c.b16 %v965, %v963
      %v1090 = vpack.c.b16 %v968, %v966
      %v1091 = vpack.c.b16 %v969, %v967
      %v1092 = vpack.c.b16 %v972, %v970
      %v1093 = vpack.c.b16 %v973, %v971
      %v1094 = vpack.c.b16 %v976, %v974
      %v1095 = vpack.c.b16 %v977, %v975
      %v1096 = vpack.c.b16 %v980, %v978
      %v1097 = vpack.c.b16 %v981, %v979
      %v1098 = vpack.c.b16 %v984, %v982
      %v1099 = vpack.c.b16 %v985, %v983
      %v1100 = vpack.c.b16 %v988, %v986
      %v1101 = vpack.c.b16 %v989, %v987
      %v1102 = vpack.c.b16 %v992, %v990
      %v1103 = vpack.c.b16 %v993, %v991
      %v1104 = vpack.c.b16 %v996, %v994
      %v1105 = vpack.c.b16 %v997, %v995
      %v1106 = vpack.c.b16 %v1000, %v998
      %v1107 = vpack.c.b16 %v1001, %v999
      %v1108 = vpack.c.b16 %v1004, %v1002
      %v1109 = vpack.c.b16 %v1005, %v1003
      %v1110 = vpack.c.b16 %v1008, %v1006
      %v1111 = vpack.c.b16 %v1009, %v1007
      %v1112 = vpack.c.b16 %v1012, %v1010
      %v1113 = vpack.c.b16 %v1013, %v1011
      %v1114 = vpack.c.b16 %v1016, %v1014
      %v1115 = vpack.c.b16 %v1017, %v1015
      %v1116 = vpack.c.b16 %v1020, %v1018
      %v1117 = vpack.c.b16 %v1021, %v1019
      %v1118 = vpack.c.b16 %v1024, %v1022
      %v1119 = vpack.c.b16 %v1025, %v1023
      %v1120 = vpack.c.b16 %v1028, %v1026
      %v1121 = vpack.c.b16 %v1029, %v1027
      %v1122 = vpack.c.b16 %v1032, %v1030
      %v1123 = vpack.c.b16 %v1033, %v1031
      %v1124 = vpack.c.b16 %v1036, %v1034
      %v1125 = vpack.c.b16 %v1037, %v1035
      %v1126 = vpack.c.b16 %v1040, %v1038
      %v1127 = vpack.c.b16 %v1041, %v1039
      %v1128 = vpack.c.b16 %v1044, %v1042
      %v1129 = vpack.c.b16 %v1045, %v1043
      %v1130 = vpack.c.b16 %v1048, %v1046
      %v1131 = vpack.c.b16 %v1049, %v1047
      %v1132 = vpack.c.b16 %v1052, %v1050
      %v1133 = vpack.c.b16 %v1053, %v1051
      %v1134 = vpack.c.b16 %v1056, %v1054
      %v1135 = vpack.c.b16 %v1057, %v1055
      %v1136 = vpack.c.b16 %v1060, %v1058
      %v1137 = vpack.c.b16 %v1061, %v1059
      %v1138 = vpack.c.b16 %v1064, %v1062
      %v1139 = vpack.c.b16 %v1065, %v1063
      %v1140 = vpack.c.b16 %v1068, %v1066
      %v1141 = vpack.c.b16 %v1069, %v1067
      %v1142 = vpack.c.b16 %v1072, %v1070
      %v1143 = vpack.c.b16 %v1073, %v1071
      %v1144 = vpack.c.b16 %v1076, %v1074
      %v1145 = vpack.c.b16 %v1077, %v1075
      %v1146 = vpack.c.b16 %v1080, %v1078
      %v1147 = vpack.c.b16 %v1081, %v1079
      %v1148 = vpack.c.b16 %v1084, %v1082
      %v1149 = vpack.c.b16 %v1085, %v1083
      %1214 = vmatpush.bf16.msra.mxu0 %v1100
      %1215 = vmatpush.bf16.msra.mxu0 %v1098
      %1216 = vmatpush.bf16.msra.mxu0 %v1096
      %1217 = vmatpush.bf16.msra.mxu0 %v1094
      %1218 = vmatpush.bf16.msra.mxu0 %v1092
      %1219 = vmatpush.bf16.msra.mxu0 %v1090
      %1220 = vmatpush.bf16.msra.mxu0 %v1088
      %1221 = vmatpush.bf16.msra.mxu0 %v1086
      %1222 = vmatmul.bf16.gmra.mxu0 %v684
      %v1223 = vpop.f32.mrf.mxu0
      %v1224 = vadd.f32 %v890, %v1223
      %v1225 = vpop.f32.mrf.mxu0
      %v1226 = vadd.f32 %v890, %v1225
      %1227 = vmatmul.bf16.gmra.mxu0 %v685
      %v1228 = vpop.f32.mrf.mxu0
      %v1229 = vadd.f32 %v890, %v1228
      %v1230 = vpop.f32.mrf.mxu0
      %v1231 = vadd.f32 %v890, %v1230
      %1232 = vmatmul.bf16.gmra.mxu0 %v686
      %v1233 = vpop.f32.mrf.mxu0
      %v1234 = vadd.f32 %v890, %v1233
      %v1235 = vpop.f32.mrf.mxu0
      %v1236 = vadd.f32 %v890, %v1235
      %1237 = vmatmul.bf16.gmra.mxu0 %v687
      %v1238 = vpop.f32.mrf.mxu0
      %v1239 = vadd.f32 %v890, %v1238
      %v1240 = vpop.f32.mrf.mxu0
      %v1241 = vadd.f32 %v890, %v1240
      %1242 = vmatmul.bf16.gmra.mxu0 %v688
      %v1243 = vpop.f32.mrf.mxu0
      %v1244 = vadd.f32 %v890, %v1243
      %v1245 = vpop.f32.mrf.mxu0
      %v1246 = vadd.f32 %v890, %v1245
      %1247 = vmatmul.bf16.gmra.mxu0 %v689
      %v1248 = vpop.f32.mrf.mxu0
      %v1249 = vadd.f32 %v890, %v1248
      %v1250 = vpop.f32.mrf.mxu0
      %v1251 = vadd.f32 %v890, %v1250
      %1252 = vmatmul.bf16.gmra.mxu0 %v690
      %v1253 = vpop.f32.mrf.mxu0
      %v1254 = vadd.f32 %v890, %v1253
      %v1255 = vpop.f32.mrf.mxu0
      %v1256 = vadd.f32 %v890, %v1255
      %1257 = vmatmul.bf16.gmra.mxu0 %v691
      %v1258 = vpop.f32.mrf.mxu0
      %v1259 = vadd.f32 %v890, %v1258
      %v1260 = vpop.f32.mrf.mxu0
      %v1261 = vadd.f32 %v890, %v1260
      %1262 = vmatmul.bf16.gmra.mxu0 %v692
      %v1263 = vpop.f32.mrf.mxu0
      %v1264 = vadd.f32 %v890, %v1263
      %v1265 = vpop.f32.mrf.mxu0
      %v1266 = vadd.f32 %v890, %v1265
      %1267 = vmatmul.bf16.gmra.mxu0 %v693
      %v1268 = vpop.f32.mrf.mxu0
      %v1269 = vadd.f32 %v890, %v1268
      %v1270 = vpop.f32.mrf.mxu0
      %v1271 = vadd.f32 %v890, %v1270
      %1272 = vmatmul.bf16.gmra.mxu0 %v694
      %v1273 = vpop.f32.mrf.mxu0
      %v1274 = vadd.f32 %v890, %v1273
      %v1275 = vpop.f32.mrf.mxu0
      %v1276 = vadd.f32 %v890, %v1275
      %1277 = vmatmul.bf16.gmra.mxu0 %v695
      %v1278 = vpop.f32.mrf.mxu0
      %v1279 = vadd.f32 %v890, %v1278
      %v1280 = vpop.f32.mrf.mxu0
      %v1281 = vadd.f32 %v890, %v1280
      %1282 = vmatmul.bf16.gmra.mxu0 %v696
      %v1283 = vpop.f32.mrf.mxu0
      %v1284 = vadd.f32 %v890, %v1283
      %v1285 = vpop.f32.mrf.mxu0
      %v1286 = vadd.f32 %v890, %v1285
      %1287 = vmatmul.bf16.gmra.mxu0 %v697
      %v1288 = vpop.f32.mrf.mxu0
      %v1289 = vadd.f32 %v890, %v1288
      %v1290 = vpop.f32.mrf.mxu0
      %v1291 = vadd.f32 %v890, %v1290
      %1292 = vmatmul.bf16.gmra.mxu0 %v698
      %v1293 = vpop.f32.mrf.mxu0
      %v1294 = vadd.f32 %v890, %v1293
      %v1295 = vpop.f32.mrf.mxu0
      %v1296 = vadd.f32 %v890, %v1295
      %1297 = vmatmul.bf16.gmra.mxu0 %v699
      %v1298 = vpop.f32.mrf.mxu0
      %v1299 = vadd.f32 %v890, %v1298
      %v1300 = vpop.f32.mrf.mxu0
      %v1301 = vadd.f32 %v890, %v1300
      %1302 = vdwg.mxu0
      %1303 = vmatpush.bf16.msra.mxu0 %v1116
      %1304 = vmatpush.bf16.msra.mxu0 %v1114
      %1305 = vmatpush.bf16.msra.mxu0 %v1112
      %1306 = vmatpush.bf16.msra.mxu0 %v1110
      %1307 = vmatpush.bf16.msra.mxu0 %v1108
      %1308 = vmatpush.bf16.msra.mxu0 %v1106
      %1309 = vmatpush.bf16.msra.mxu0 %v1104
      %1310 = vmatpush.bf16.msra.mxu0 %v1102
      %1311 = vmatmul.bf16.gmra.mxu0 %v780
      %v1312 = vpop.f32.mrf.mxu0
      %v1313 = vadd.f32 %v1224, %v1312
      %v1314 = vpop.f32.mrf.mxu0
      %v1315 = vadd.f32 %v1226, %v1314
      %1316 = vmatmul.bf16.gmra.mxu0 %v781
      %v1317 = vpop.f32.mrf.mxu0
      %v1318 = vadd.f32 %v1229, %v1317
      %v1319 = vpop.f32.mrf.mxu0
      %v1320 = vadd.f32 %v1231, %v1319
      %1321 = vmatmul.bf16.gmra.mxu0 %v782
      %v1322 = vpop.f32.mrf.mxu0
      %v1323 = vadd.f32 %v1234, %v1322
      %v1324 = vpop.f32.mrf.mxu0
      %v1325 = vadd.f32 %v1236, %v1324
      %1326 = vmatmul.bf16.gmra.mxu0 %v783
      %v1327 = vpop.f32.mrf.mxu0
      %v1328 = vadd.f32 %v1239, %v1327
      %v1329 = vpop.f32.mrf.mxu0
      %v1330 = vadd.f32 %v1241, %v1329
      %1331 = vmatmul.bf16.gmra.mxu0 %v784
      %v1332 = vpop.f32.mrf.mxu0
      %v1333 = vadd.f32 %v1244, %v1332
      %v1334 = vpop.f32.mrf.mxu0
      %v1335 = vadd.f32 %v1246, %v1334
      %1336 = vmatmul.bf16.gmra.mxu0 %v785
      %v1337 = vpop.f32.mrf.mxu0
      %v1338 = vadd.f32 %v1249, %v1337
      %v1339 = vpop.f32.mrf.mxu0
      %v1340 = vadd.f32 %v1251, %v1339
      %1341 = vmatmul.bf16.gmra.mxu0 %v786
      %v1342 = vpop.f32.mrf.mxu0
      %v1343 = vadd.f32 %v1254, %v1342
      %v1344 = vpop.f32.mrf.mxu0
      %v1345 = vadd.f32 %v1256, %v1344
      %1346 = vmatmul.bf16.gmra.mxu0 %v787
      %v1347 = vpop.f32.mrf.mxu0
      %v1348 = vadd.f32 %v1259, %v1347
      %v1349 = vpop.f32.mrf.mxu0
      %v1350 = vadd.f32 %v1261, %v1349
      %1351 = vmatmul.bf16.gmra.mxu0 %v788
      %v1352 = vpop.f32.mrf.mxu0
      %v1353 = vadd.f32 %v1264, %v1352
      %v1354 = vpop.f32.mrf.mxu0
      %v1355 = vadd.f32 %v1266, %v1354
      %1356 = vmatmul.bf16.gmra.mxu0 %v789
      %v1357 = vpop.f32.mrf.mxu0
      %v1358 = vadd.f32 %v1269, %v1357
      %v1359 = vpop.f32.mrf.mxu0
      %v1360 = vadd.f32 %v1271, %v1359
      %1361 = vmatmul.bf16.gmra.mxu0 %v790
      %v1362 = vpop.f32.mrf.mxu0
      %v1363 = vadd.f32 %v1274, %v1362
      %v1364 = vpop.f32.mrf.mxu0
      %v1365 = vadd.f32 %v1276, %v1364
      %1366 = vmatmul.bf16.gmra.mxu0 %v791
      %v1367 = vpop.f32.mrf.mxu0
      %v1368 = vadd.f32 %v1279, %v1367
      %v1369 = vpop.f32.mrf.mxu0
      %v1370 = vadd.f32 %v1281, %v1369
      %1371 = vmatmul.bf16.gmra.mxu0 %v792
      %v1372 = vpop.f32.mrf.mxu0
      %v1373 = vadd.f32 %v1284, %v1372
      %v1374 = vpop.f32.mrf.mxu0
      %v1375 = vadd.f32 %v1286, %v1374
      %1376 = vmatmul.bf16.gmra.mxu0 %v793
      %v1377 = vpop.f32.mrf.mxu0
      %v1378 = vadd.f32 %v1289, %v1377
      %v1379 = vpop.f32.mrf.mxu0
      %v1380 = vadd.f32 %v1291, %v1379
      %1381 = vmatmul.bf16.gmra.mxu0 %v794
      %v1382 = vpop.f32.mrf.mxu0
      %v1383 = vadd.f32 %v1294, %v1382
      %v1384 = vpop.f32.mrf.mxu0
      %v1385 = vadd.f32 %v1296, %v1384
      %1386 = vmatmul.bf16.gmra.mxu0 %v795
      %v1387 = vpop.f32.mrf.mxu0
      %v1388 = vadd.f32 %v1299, %v1387
      %v1389 = vpop.f32.mrf.mxu0
      %v1390 = vadd.f32 %v1301, %v1389
      %1391 = vdwg.mxu0
      %1392 = vmatpush.bf16.msra.mxu0 %v1132
      %1393 = vmatpush.bf16.msra.mxu0 %v1130
      %1394 = vmatpush.bf16.msra.mxu0 %v1128
      %1395 = vmatpush.bf16.msra.mxu0 %v1126
      %1396 = vmatpush.bf16.msra.mxu0 %v1124
      %1397 = vmatpush.bf16.msra.mxu0 %v1122
      %1398 = vmatpush.bf16.msra.mxu0 %v1120
      %1399 = vmatpush.bf16.msra.mxu0 %v1118
      %1400 = vmatmul.bf16.gmra.mxu0 %v685
      %v1401 = vpop.f32.mrf.mxu0
      %v1402 = vadd.f32 %v1313, %v1401
      %v1403 = vpop.f32.mrf.mxu0
      %v1404 = vadd.f32 %v1315, %v1403
      %1405 = vmatmul.bf16.gmra.mxu0 %v686
      %v1406 = vpop.f32.mrf.mxu0
      %v1407 = vadd.f32 %v1318, %v1406
      %v1408 = vpop.f32.mrf.mxu0
      %v1409 = vadd.f32 %v1320, %v1408
      %1410 = vmatmul.bf16.gmra.mxu0 %v687
      %v1411 = vpop.f32.mrf.mxu0
      %v1412 = vadd.f32 %v1323, %v1411
      %v1413 = vpop.f32.mrf.mxu0
      %v1414 = vadd.f32 %v1325, %v1413
      %1415 = vmatmul.bf16.gmra.mxu0 %v688
      %v1416 = vpop.f32.mrf.mxu0
      %v1417 = vadd.f32 %v1328, %v1416
      %v1418 = vpop.f32.mrf.mxu0
      %v1419 = vadd.f32 %v1330, %v1418
      %1420 = vmatmul.bf16.gmra.mxu0 %v689
      %v1421 = vpop.f32.mrf.mxu0
      %v1422 = vadd.f32 %v1333, %v1421
      %v1423 = vpop.f32.mrf.mxu0
      %v1424 = vadd.f32 %v1335, %v1423
      %1425 = vmatmul.bf16.gmra.mxu0 %v690
      %v1426 = vpop.f32.mrf.mxu0
      %v1427 = vadd.f32 %v1338, %v1426
      %v1428 = vpop.f32.mrf.mxu0
      %v1429 = vadd.f32 %v1340, %v1428
      %1430 = vmatmul.bf16.gmra.mxu0 %v691
      %v1431 = vpop.f32.mrf.mxu0
      %v1432 = vadd.f32 %v1343, %v1431
      %v1433 = vpop.f32.mrf.mxu0
      %v1434 = vadd.f32 %v1345, %v1433
      %1435 = vmatmul.bf16.gmra.mxu0 %v692
      %v1436 = vpop.f32.mrf.mxu0
      %v1437 = vadd.f32 %v1348, %v1436
      %v1438 = vpop.f32.mrf.mxu0
      %v1439 = vadd.f32 %v1350, %v1438
      %1440 = vmatmul.bf16.gmra.mxu0 %v693
      %v1441 = vpop.f32.mrf.mxu0
      %v1442 = vadd.f32 %v1353, %v1441
      %v1443 = vpop.f32.mrf.mxu0
      %v1444 = vadd.f32 %v1355, %v1443
      %1445 = vmatmul.bf16.gmra.mxu0 %v694
      %v1446 = vpop.f32.mrf.mxu0
      %v1447 = vadd.f32 %v1358, %v1446
      %v1448 = vpop.f32.mrf.mxu0
      %v1449 = vadd.f32 %v1360, %v1448
      %1450 = vmatmul.bf16.gmra.mxu0 %v695
      %v1451 = vpop.f32.mrf.mxu0
      %v1452 = vadd.f32 %v1363, %v1451
      %v1453 = vpop.f32.mrf.mxu0
      %v1454 = vadd.f32 %v1365, %v1453
      %1455 = vmatmul.bf16.gmra.mxu0 %v696
      %v1456 = vpop.f32.mrf.mxu0
      %v1457 = vadd.f32 %v1368, %v1456
      %v1458 = vpop.f32.mrf.mxu0
      %v1459 = vadd.f32 %v1370, %v1458
      %1460 = vmatmul.bf16.gmra.mxu0 %v697
      %v1461 = vpop.f32.mrf.mxu0
      %v1462 = vadd.f32 %v1373, %v1461
      %v1463 = vpop.f32.mrf.mxu0
      %v1464 = vadd.f32 %v1375, %v1463
      %1465 = vmatmul.bf16.gmra.mxu0 %v698
      %v1466 = vpop.f32.mrf.mxu0
      %v1467 = vadd.f32 %v1378, %v1466
      %v1468 = vpop.f32.mrf.mxu0
      %v1469 = vadd.f32 %v1380, %v1468
      %1470 = vmatmul.bf16.gmra.mxu0 %v699
      %v1471 = vpop.f32.mrf.mxu0
      %v1472 = vadd.f32 %v1383, %v1471
      %v1473 = vpop.f32.mrf.mxu0
      %v1474 = vadd.f32 %v1385, %v1473
      %1475 = vmatmul.bf16.gmra.mxu0 %v816
      %v1476 = vpop.f32.mrf.mxu0
      %v1477 = vadd.f32 %v1388, %v1476
      %v1478 = vpop.f32.mrf.mxu0
      %v1479 = vadd.f32 %v1390, %v1478
      %1480 = vdwg.mxu0
      %1481 = vmatpush.bf16.msra.mxu0 %v1148
      %1482 = vmatpush.bf16.msra.mxu0 %v1146
      %1483 = vmatpush.bf16.msra.mxu0 %v1144
      %1484 = vmatpush.bf16.msra.mxu0 %v1142
      %1485 = vmatpush.bf16.msra.mxu0 %v1140
      %1486 = vmatpush.bf16.msra.mxu0 %v1138
      %1487 = vmatpush.bf16.msra.mxu0 %v1136
      %1488 = vmatpush.bf16.msra.mxu0 %v1134
      %1489 = vmatmul.bf16.gmra.mxu0 %v781
      %v1490 = vpop.f32.mrf.mxu0
      %v1491 = vadd.f32 %v1402, %v1490
      %v1492 = vpop.f32.mrf.mxu0
      %v1493 = vadd.f32 %v1404, %v1492
      %1494 = vmatmul.bf16.gmra.mxu0 %v782
      %v1495 = vpop.f32.mrf.mxu0
      %v1496 = vadd.f32 %v1407, %v1495
      %v1497 = vpop.f32.mrf.mxu0
      %v1498 = vadd.f32 %v1409, %v1497
      %1499 = vmatmul.bf16.gmra.mxu0 %v783
      %v1500 = vpop.f32.mrf.mxu0
      %v1501 = vadd.f32 %v1412, %v1500
      %v1502 = vpop.f32.mrf.mxu0
      %v1503 = vadd.f32 %v1414, %v1502
      %1504 = vmatmul.bf16.gmra.mxu0 %v784
      %v1505 = vpop.f32.mrf.mxu0
      %v1506 = vadd.f32 %v1417, %v1505
      %v1507 = vpop.f32.mrf.mxu0
      %v1508 = vadd.f32 %v1419, %v1507
      %1509 = vmatmul.bf16.gmra.mxu0 %v785
      %v1510 = vpop.f32.mrf.mxu0
      %v1511 = vadd.f32 %v1422, %v1510
      %v1512 = vpop.f32.mrf.mxu0
      %v1513 = vadd.f32 %v1424, %v1512
      %1514 = vmatmul.bf16.gmra.mxu0 %v786
      %v1515 = vpop.f32.mrf.mxu0
      %v1516 = vadd.f32 %v1427, %v1515
      %v1517 = vpop.f32.mrf.mxu0
      %v1518 = vadd.f32 %v1429, %v1517
      %1519 = vmatmul.bf16.gmra.mxu0 %v787
      %v1520 = vpop.f32.mrf.mxu0
      %v1521 = vadd.f32 %v1432, %v1520
      %v1522 = vpop.f32.mrf.mxu0
      %v1523 = vadd.f32 %v1434, %v1522
      %1524 = vmatmul.bf16.gmra.mxu0 %v788
      %v1525 = vpop.f32.mrf.mxu0
      %v1526 = vadd.f32 %v1437, %v1525
      %v1527 = vpop.f32.mrf.mxu0
      %v1528 = vadd.f32 %v1439, %v1527
      %1529 = vmatmul.bf16.gmra.mxu0 %v789
      %v1530 = vpop.f32.mrf.mxu0
      %v1531 = vadd.f32 %v1442, %v1530
      %v1532 = vpop.f32.mrf.mxu0
      %v1533 = vadd.f32 %v1444, %v1532
      %1534 = vmatmul.bf16.gmra.mxu0 %v790
      %v1535 = vpop.f32.mrf.mxu0
      %v1536 = vadd.f32 %v1447, %v1535
      %v1537 = vpop.f32.mrf.mxu0
      %v1538 = vadd.f32 %v1449, %v1537
      %1539 = vmatmul.bf16.gmra.mxu0 %v791
      %v1540 = vpop.f32.mrf.mxu0
      %v1541 = vadd.f32 %v1452, %v1540
      %v1542 = vpop.f32.mrf.mxu0
      %v1543 = vadd.f32 %v1454, %v1542
      %1544 = vmatmul.bf16.gmra.mxu0 %v792
      %v1545 = vpop.f32.mrf.mxu0
      %v1546 = vadd.f32 %v1457, %v1545
      %v1547 = vpop.f32.mrf.mxu0
      %v1548 = vadd.f32 %v1459, %v1547
      %1549 = vmatmul.bf16.gmra.mxu0 %v793
      %v1550 = vpop.f32.mrf.mxu0
      %v1551 = vadd.f32 %v1462, %v1550
      %v1552 = vpop.f32.mrf.mxu0
      %v1553 = vadd.f32 %v1464, %v1552
      %1554 = vmatmul.bf16.gmra.mxu0 %v794
      %v1555 = vpop.f32.mrf.mxu0
      %v1556 = vadd.f32 %v1467, %v1555
      %v1557 = vpop.f32.mrf.mxu0
      %v1558 = vadd.f32 %v1469, %v1557
      %1559 = vmatmul.bf16.gmra.mxu0 %v795
      %v1560 = vpop.f32.mrf.mxu0
      %v1561 = vadd.f32 %v1472, %v1560
      %v1562 = vpop.f32.mrf.mxu0
      %v1563 = vadd.f32 %v1474, %v1562
      %1564 = vmatmul.bf16.gmra.mxu0 %v822
      %v1565 = vpop.f32.mrf.mxu0
      %v1566 = vadd.f32 %v1477, %v1565
      %v1567 = vpop.f32.mrf.mxu0
      %v1568 = vadd.f32 %v1479, %v1567
      %1569 = vdwg.mxu0
      %1570 = vmatpush.bf16.msra.mxu0 %v1101
      %1571 = vmatpush.bf16.msra.mxu0 %v1099
      %1572 = vmatpush.bf16.msra.mxu0 %v1097
      %1573 = vmatpush.bf16.msra.mxu0 %v1095
      %1574 = vmatpush.bf16.msra.mxu0 %v1093
      %1575 = vmatpush.bf16.msra.mxu0 %v1091
      %1576 = vmatpush.bf16.msra.mxu0 %v1089
      %1577 = vmatpush.bf16.msra.mxu0 %v1087
      %1578 = vmatmul.bf16.gmra.mxu0 %v684
      %v1579 = vpop.f32.mrf.mxu0
      %v1580 = vadd.f32 %v891, %v1579
      %v1581 = vpop.f32.mrf.mxu0
      %v1582 = vadd.f32 %v891, %v1581
      %1583 = vmatmul.bf16.gmra.mxu0 %v685
      %v1584 = vpop.f32.mrf.mxu0
      %v1585 = vadd.f32 %v891, %v1584
      %v1586 = vpop.f32.mrf.mxu0
      %v1587 = vadd.f32 %v891, %v1586
      %1588 = vmatmul.bf16.gmra.mxu0 %v686
      %v1589 = vpop.f32.mrf.mxu0
      %v1590 = vadd.f32 %v891, %v1589
      %v1591 = vpop.f32.mrf.mxu0
      %v1592 = vadd.f32 %v891, %v1591
      %1593 = vmatmul.bf16.gmra.mxu0 %v687
      %v1594 = vpop.f32.mrf.mxu0
      %v1595 = vadd.f32 %v891, %v1594
      %v1596 = vpop.f32.mrf.mxu0
      %v1597 = vadd.f32 %v891, %v1596
      %1598 = vmatmul.bf16.gmra.mxu0 %v688
      %v1599 = vpop.f32.mrf.mxu0
      %v1600 = vadd.f32 %v891, %v1599
      %v1601 = vpop.f32.mrf.mxu0
      %v1602 = vadd.f32 %v891, %v1601
      %1603 = vmatmul.bf16.gmra.mxu0 %v689
      %v1604 = vpop.f32.mrf.mxu0
      %v1605 = vadd.f32 %v891, %v1604
      %v1606 = vpop.f32.mrf.mxu0
      %v1607 = vadd.f32 %v891, %v1606
      %1608 = vmatmul.bf16.gmra.mxu0 %v690
      %v1609 = vpop.f32.mrf.mxu0
      %v1610 = vadd.f32 %v891, %v1609
      %v1611 = vpop.f32.mrf.mxu0
      %v1612 = vadd.f32 %v891, %v1611
      %1613 = vmatmul.bf16.gmra.mxu0 %v691
      %v1614 = vpop.f32.mrf.mxu0
      %v1615 = vadd.f32 %v891, %v1614
      %v1616 = vpop.f32.mrf.mxu0
      %v1617 = vadd.f32 %v891, %v1616
      %1618 = vmatmul.bf16.gmra.mxu0 %v692
      %v1619 = vpop.f32.mrf.mxu0
      %v1620 = vadd.f32 %v891, %v1619
      %v1621 = vpop.f32.mrf.mxu0
      %v1622 = vadd.f32 %v891, %v1621
      %1623 = vmatmul.bf16.gmra.mxu0 %v693
      %v1624 = vpop.f32.mrf.mxu0
      %v1625 = vadd.f32 %v891, %v1624
      %v1626 = vpop.f32.mrf.mxu0
      %v1627 = vadd.f32 %v891, %v1626
      %1628 = vmatmul.bf16.gmra.mxu0 %v694
      %v1629 = vpop.f32.mrf.mxu0
      %v1630 = vadd.f32 %v891, %v1629
      %v1631 = vpop.f32.mrf.mxu0
      %v1632 = vadd.f32 %v891, %v1631
      %1633 = vmatmul.bf16.gmra.mxu0 %v695
      %v1634 = vpop.f32.mrf.mxu0
      %v1635 = vadd.f32 %v891, %v1634
      %v1636 = vpop.f32.mrf.mxu0
      %v1637 = vadd.f32 %v891, %v1636
      %1638 = vmatmul.bf16.gmra.mxu0 %v696
      %v1639 = vpop.f32.mrf.mxu0
      %v1640 = vadd.f32 %v891, %v1639
      %v1641 = vpop.f32.mrf.mxu0
      %v1642 = vadd.f32 %v891, %v1641
      %1643 = vmatmul.bf16.gmra.mxu0 %v697
      %v1644 = vpop.f32.mrf.mxu0
      %v1645 = vadd.f32 %v891, %v1644
      %v1646 = vpop.f32.mrf.mxu0
      %v1647 = vadd.f32 %v891, %v1646
      %1648 = vmatmul.bf16.gmra.mxu0 %v698
      %v1649 = vpop.f32.mrf.mxu0
      %v1650 = vadd.f32 %v891, %v1649
      %v1651 = vpop.f32.mrf.mxu0
      %v1652 = vadd.f32 %v891, %v1651
      %1653 = vmatmul.bf16.gmra.mxu0 %v699
      %v1654 = vpop.f32.mrf.mxu0
      %v1655 = vadd.f32 %v891, %v1654
      %v1656 = vpop.f32.mrf.mxu0
      %v1657 = vadd.f32 %v891, %v1656
      %1658 = vdwg.mxu0
      %1659 = vmatpush.bf16.msra.mxu0 %v1117
      %1660 = vmatpush.bf16.msra.mxu0 %v1115
      %1661 = vmatpush.bf16.msra.mxu0 %v1113
      %1662 = vmatpush.bf16.msra.mxu0 %v1111
      %1663 = vmatpush.bf16.msra.mxu0 %v1109
      %1664 = vmatpush.bf16.msra.mxu0 %v1107
      %1665 = vmatpush.bf16.msra.mxu0 %v1105
      %1666 = vmatpush.bf16.msra.mxu0 %v1103
      %1667 = vmatmul.bf16.gmra.mxu0 %v780
      %v1668 = vpop.f32.mrf.mxu0
      %v1669 = vadd.f32 %v1580, %v1668
      %v1670 = vpop.f32.mrf.mxu0
      %v1671 = vadd.f32 %v1582, %v1670
      %1672 = vmatmul.bf16.gmra.mxu0 %v781
      %v1673 = vpop.f32.mrf.mxu0
      %v1674 = vadd.f32 %v1585, %v1673
      %v1675 = vpop.f32.mrf.mxu0
      %v1676 = vadd.f32 %v1587, %v1675
      %1677 = vmatmul.bf16.gmra.mxu0 %v782
      %v1678 = vpop.f32.mrf.mxu0
      %v1679 = vadd.f32 %v1590, %v1678
      %v1680 = vpop.f32.mrf.mxu0
      %v1681 = vadd.f32 %v1592, %v1680
      %1682 = vmatmul.bf16.gmra.mxu0 %v783
      %v1683 = vpop.f32.mrf.mxu0
      %v1684 = vadd.f32 %v1595, %v1683
      %v1685 = vpop.f32.mrf.mxu0
      %v1686 = vadd.f32 %v1597, %v1685
      %1687 = vmatmul.bf16.gmra.mxu0 %v784
      %v1688 = vpop.f32.mrf.mxu0
      %v1689 = vadd.f32 %v1600, %v1688
      %v1690 = vpop.f32.mrf.mxu0
      %v1691 = vadd.f32 %v1602, %v1690
      %1692 = vmatmul.bf16.gmra.mxu0 %v785
      %v1693 = vpop.f32.mrf.mxu0
      %v1694 = vadd.f32 %v1605, %v1693
      %v1695 = vpop.f32.mrf.mxu0
      %v1696 = vadd.f32 %v1607, %v1695
      %1697 = vmatmul.bf16.gmra.mxu0 %v786
      %v1698 = vpop.f32.mrf.mxu0
      %v1699 = vadd.f32 %v1610, %v1698
      %v1700 = vpop.f32.mrf.mxu0
      %v1701 = vadd.f32 %v1612, %v1700
      %1702 = vmatmul.bf16.gmra.mxu0 %v787
      %v1703 = vpop.f32.mrf.mxu0
      %v1704 = vadd.f32 %v1615, %v1703
      %v1705 = vpop.f32.mrf.mxu0
      %v1706 = vadd.f32 %v1617, %v1705
      %1707 = vmatmul.bf16.gmra.mxu0 %v788
      %v1708 = vpop.f32.mrf.mxu0
      %v1709 = vadd.f32 %v1620, %v1708
      %v1710 = vpop.f32.mrf.mxu0
      %v1711 = vadd.f32 %v1622, %v1710
      %1712 = vmatmul.bf16.gmra.mxu0 %v789
      %v1713 = vpop.f32.mrf.mxu0
      %v1714 = vadd.f32 %v1625, %v1713
      %v1715 = vpop.f32.mrf.mxu0
      %v1716 = vadd.f32 %v1627, %v1715
      %1717 = vmatmul.bf16.gmra.mxu0 %v790
      %v1718 = vpop.f32.mrf.mxu0
      %v1719 = vadd.f32 %v1630, %v1718
      %v1720 = vpop.f32.mrf.mxu0
      %v1721 = vadd.f32 %v1632, %v1720
      %1722 = vmatmul.bf16.gmra.mxu0 %v791
      %v1723 = vpop.f32.mrf.mxu0
      %v1724 = vadd.f32 %v1635, %v1723
      %v1725 = vpop.f32.mrf.mxu0
      %v1726 = vadd.f32 %v1637, %v1725
      %1727 = vmatmul.bf16.gmra.mxu0 %v792
      %v1728 = vpop.f32.mrf.mxu0
      %v1729 = vadd.f32 %v1640, %v1728
      %v1730 = vpop.f32.mrf.mxu0
      %v1731 = vadd.f32 %v1642, %v1730
      %1732 = vmatmul.bf16.gmra.mxu0 %v793
      %v1733 = vpop.f32.mrf.mxu0
      %v1734 = vadd.f32 %v1645, %v1733
      %v1735 = vpop.f32.mrf.mxu0
      %v1736 = vadd.f32 %v1647, %v1735
      %1737 = vmatmul.bf16.gmra.mxu0 %v794
      %v1738 = vpop.f32.mrf.mxu0
      %v1739 = vadd.f32 %v1650, %v1738
      %v1740 = vpop.f32.mrf.mxu0
      %v1741 = vadd.f32 %v1652, %v1740
      %1742 = vmatmul.bf16.gmra.mxu0 %v795
      %v1743 = vpop.f32.mrf.mxu0
      %v1744 = vadd.f32 %v1655, %v1743
      %v1745 = vpop.f32.mrf.mxu0
      %v1746 = vadd.f32 %v1657, %v1745
      %1747 = vdwg.mxu0
      %1748 = vmatpush.bf16.msra.mxu0 %v1133
      %1749 = vmatpush.bf16.msra.mxu0 %v1131
      %1750 = vmatpush.bf16.msra.mxu0 %v1129
      %1751 = vmatpush.bf16.msra.mxu0 %v1127
      %1752 = vmatpush.bf16.msra.mxu0 %v1125
      %1753 = vmatpush.bf16.msra.mxu0 %v1123
      %1754 = vmatpush.bf16.msra.mxu0 %v1121
      %1755 = vmatpush.bf16.msra.mxu0 %v1119
      %1756 = vmatmul.bf16.gmra.mxu0 %v685
      %v1757 = vpop.f32.mrf.mxu0
      %v1758 = vadd.f32 %v1669, %v1757
      %v1759 = vpop.f32.mrf.mxu0
      %v1760 = vadd.f32 %v1671, %v1759
      %1761 = vmatmul.bf16.gmra.mxu0 %v686
      %v1762 = vpop.f32.mrf.mxu0
      %v1763 = vadd.f32 %v1674, %v1762
      %v1764 = vpop.f32.mrf.mxu0
      %v1765 = vadd.f32 %v1676, %v1764
      %1766 = vmatmul.bf16.gmra.mxu0 %v687
      %v1767 = vpop.f32.mrf.mxu0
      %v1768 = vadd.f32 %v1679, %v1767
      %v1769 = vpop.f32.mrf.mxu0
      %v1770 = vadd.f32 %v1681, %v1769
      %1771 = vmatmul.bf16.gmra.mxu0 %v688
      %v1772 = vpop.f32.mrf.mxu0
      %v1773 = vadd.f32 %v1684, %v1772
      %v1774 = vpop.f32.mrf.mxu0
      %v1775 = vadd.f32 %v1686, %v1774
      %1776 = vmatmul.bf16.gmra.mxu0 %v689
      %v1777 = vpop.f32.mrf.mxu0
      %v1778 = vadd.f32 %v1689, %v1777
      %v1779 = vpop.f32.mrf.mxu0
      %v1780 = vadd.f32 %v1691, %v1779
      %1781 = vmatmul.bf16.gmra.mxu0 %v690
      %v1782 = vpop.f32.mrf.mxu0
      %v1783 = vadd.f32 %v1694, %v1782
      %v1784 = vpop.f32.mrf.mxu0
      %v1785 = vadd.f32 %v1696, %v1784
      %1786 = vmatmul.bf16.gmra.mxu0 %v691
      %v1787 = vpop.f32.mrf.mxu0
      %v1788 = vadd.f32 %v1699, %v1787
      %v1789 = vpop.f32.mrf.mxu0
      %v1790 = vadd.f32 %v1701, %v1789
      %1791 = vmatmul.bf16.gmra.mxu0 %v692
      %v1792 = vpop.f32.mrf.mxu0
      %v1793 = vadd.f32 %v1704, %v1792
      %v1794 = vpop.f32.mrf.mxu0
      %v1795 = vadd.f32 %v1706, %v1794
      %1796 = vmatmul.bf16.gmra.mxu0 %v693
      %v1797 = vpop.f32.mrf.mxu0
      %v1798 = vadd.f32 %v1709, %v1797
      %v1799 = vpop.f32.mrf.mxu0
      %v1800 = vadd.f32 %v1711, %v1799
      %1801 = vmatmul.bf16.gmra.mxu0 %v694
      %v1802 = vpop.f32.mrf.mxu0
      %v1803 = vadd.f32 %v1714, %v1802
      %v1804 = vpop.f32.mrf.mxu0
      %v1805 = vadd.f32 %v1716, %v1804
      %1806 = vmatmul.bf16.gmra.mxu0 %v695
      %v1807 = vpop.f32.mrf.mxu0
      %v1808 = vadd.f32 %v1719, %v1807
      %v1809 = vpop.f32.mrf.mxu0
      %v1810 = vadd.f32 %v1721, %v1809
      %1811 = vmatmul.bf16.gmra.mxu0 %v696
      %v1812 = vpop.f32.mrf.mxu0
      %v1813 = vadd.f32 %v1724, %v1812
      %v1814 = vpop.f32.mrf.mxu0
      %v1815 = vadd.f32 %v1726, %v1814
      %1816 = vmatmul.bf16.gmra.mxu0 %v697
      %v1817 = vpop.f32.mrf.mxu0
      %v1818 = vadd.f32 %v1729, %v1817
      %v1819 = vpop.f32.mrf.mxu0
      %v1820 = vadd.f32 %v1731, %v1819
      %1821 = vmatmul.bf16.gmra.mxu0 %v698
      %v1822 = vpop.f32.mrf.mxu0
      %v1823 = vadd.f32 %v1734, %v1822
      %v1824 = vpop.f32.mrf.mxu0
      %v1825 = vadd.f32 %v1736, %v1824
      %1826 = vmatmul.bf16.gmra.mxu0 %v699
      %v1827 = vpop.f32.mrf.mxu0
      %v1828 = vadd.f32 %v1739, %v1827
      %v1829 = vpop.f32.mrf.mxu0
      %v1830 = vadd.f32 %v1741, %v1829
      %1831 = vmatmul.bf16.gmra.mxu0 %v816
      %v1832 = vpop.f32.mrf.mxu0
      %v1833 = vadd.f32 %v1744, %v1832
      %v1834 = vpop.f32.mrf.mxu0
      %v1835 = vadd.f32 %v1746, %v1834
      %1836 = vdwg.mxu0
      %1837 = vmatpush.bf16.msra.mxu0 %v1149
      %1838 = vmatpush.bf16.msra.mxu0 %v1147
      %1839 = vmatpush.bf16.msra.mxu0 %v1145
      %1840 = vmatpush.bf16.msra.mxu0 %v1143
      %1841 = vmatpush.bf16.msra.mxu0 %v1141
      %1842 = vmatpush.bf16.msra.mxu0 %v1139
      %1843 = vmatpush.bf16.msra.mxu0 %v1137
      %1844 = vmatpush.bf16.msra.mxu0 %v1135
      %1845 = vmatmul.bf16.gmra.mxu0 %v781
      %v1846 = vpop.f32.mrf.mxu0
      %v1847 = vadd.f32 %v1758, %v1846
      %v1848 = vpop.f32.mrf.mxu0
      %v1849 = vadd.f32 %v1760, %v1848
      %1850 = vmatmul.bf16.gmra.mxu0 %v782
      %v1851 = vpop.f32.mrf.mxu0
      %v1852 = vadd.f32 %v1763, %v1851
      %v1853 = vpop.f32.mrf.mxu0
      %v1854 = vadd.f32 %v1765, %v1853
      %1855 = vmatmul.bf16.gmra.mxu0 %v783
      %v1856 = vpop.f32.mrf.mxu0
      %v1857 = vadd.f32 %v1768, %v1856
      %v1858 = vpop.f32.mrf.mxu0
      %v1859 = vadd.f32 %v1770, %v1858
      %1860 = vmatmul.bf16.gmra.mxu0 %v784
      %v1861 = vpop.f32.mrf.mxu0
      %v1862 = vadd.f32 %v1773, %v1861
      %v1863 = vpop.f32.mrf.mxu0
      %v1864 = vadd.f32 %v1775, %v1863
      %1865 = vmatmul.bf16.gmra.mxu0 %v785
      %v1866 = vpop.f32.mrf.mxu0
      %v1867 = vadd.f32 %v1778, %v1866
      %v1868 = vpop.f32.mrf.mxu0
      %v1869 = vadd.f32 %v1780, %v1868
      %1870 = vmatmul.bf16.gmra.mxu0 %v786
      %v1871 = vpop.f32.mrf.mxu0
      %v1872 = vadd.f32 %v1783, %v1871
      %v1873 = vpop.f32.mrf.mxu0
      %v1874 = vadd.f32 %v1785, %v1873
      %1875 = vmatmul.bf16.gmra.mxu0 %v787
      %v1876 = vpop.f32.mrf.mxu0
      %v1877 = vadd.f32 %v1788, %v1876
      %v1878 = vpop.f32.mrf.mxu0
      %v1879 = vadd.f32 %v1790, %v1878
      %1880 = vmatmul.bf16.gmra.mxu0 %v788
      %v1881 = vpop.f32.mrf.mxu0
      %v1882 = vadd.f32 %v1793, %v1881
      %v1883 = vpop.f32.mrf.mxu0
      %v1884 = vadd.f32 %v1795, %v1883
      %1885 = vmatmul.bf16.gmra.mxu0 %v789
      %v1886 = vpop.f32.mrf.mxu0
      %v1887 = vadd.f32 %v1798, %v1886
      %v1888 = vpop.f32.mrf.mxu0
      %v1889 = vadd.f32 %v1800, %v1888
      %1890 = vmatmul.bf16.gmra.mxu0 %v790
      %v1891 = vpop.f32.mrf.mxu0
      %v1892 = vadd.f32 %v1803, %v1891
      %v1893 = vpop.f32.mrf.mxu0
      %v1894 = vadd.f32 %v1805, %v1893
      %1895 = vmatmul.bf16.gmra.mxu0 %v791
      %v1896 = vpop.f32.mrf.mxu0
      %v1897 = vadd.f32 %v1808, %v1896
      %v1898 = vpop.f32.mrf.mxu0
      %v1899 = vadd.f32 %v1810, %v1898
      %1900 = vmatmul.bf16.gmra.mxu0 %v792
      %v1901 = vpop.f32.mrf.mxu0
      %v1902 = vadd.f32 %v1813, %v1901
      %v1903 = vpop.f32.mrf.mxu0
      %v1904 = vadd.f32 %v1815, %v1903
      %1905 = vmatmul.bf16.gmra.mxu0 %v793
      %v1906 = vpop.f32.mrf.mxu0
      %v1907 = vadd.f32 %v1818, %v1906
      %v1908 = vpop.f32.mrf.mxu0
      %v1909 = vadd.f32 %v1820, %v1908
      %1910 = vmatmul.bf16.gmra.mxu0 %v794
      %v1911 = vpop.f32.mrf.mxu0
      %v1912 = vadd.f32 %v1823, %v1911
      %v1913 = vpop.f32.mrf.mxu0
      %v1914 = vadd.f32 %v1825, %v1913
      %1915 = vmatmul.bf16.gmra.mxu0 %v795
      %v1916 = vpop.f32.mrf.mxu0
      %v1917 = vadd.f32 %v1828, %v1916
      %v1918 = vpop.f32.mrf.mxu0
      %v1919 = vadd.f32 %v1830, %v1918
      %1920 = vmatmul.bf16.gmra.mxu0 %v822
      %v1921 = vpop.f32.mrf.mxu0
      %v1922 = vadd.f32 %v1833, %v1921
      %v1923 = vpop.f32.mrf.mxu0
      %v1924 = vadd.f32 %v1835, %v1923
      %1925 = vdwg.mxu0
      %vm1926 = vcmp.ge.f32.partialorder %v1491, 0.0
      %vm1927 = vcmp.ge.f32.partialorder %v1847, 0.0
      %vm1928 = vcmp.ge.f32.partialorder %v1493, 0.0
      %vm1929 = vcmp.ge.f32.partialorder %v1849, 0.0
      %vm1930 = vcmp.ge.f32.partialorder %v1496, 0.0
      %vm1931 = vcmp.ge.f32.partialorder %v1852, 0.0
      %vm1932 = vcmp.ge.f32.partialorder %v1498, 0.0
      %vm1933 = vcmp.ge.f32.partialorder %v1854, 0.0
      %vm1934 = vcmp.ge.f32.partialorder %v1501, 0.0
      %vm1935 = vcmp.ge.f32.partialorder %v1857, 0.0
      %vm1936 = vcmp.ge.f32.partialorder %v1503, 0.0
      %vm1937 = vcmp.ge.f32.partialorder %v1859, 0.0
      %vm1938 = vcmp.ge.f32.partialorder %v1506, 0.0
      %vm1939 = vcmp.ge.f32.partialorder %v1862, 0.0
      %vm1940 = vcmp.ge.f32.partialorder %v1508, 0.0
      %vm1941 = vcmp.ge.f32.partialorder %v1864, 0.0
      %vm1942 = vcmp.ge.f32.partialorder %v1511, 0.0
      %vm1943 = vcmp.ge.f32.partialorder %v1867, 0.0
      %vm1944 = vcmp.ge.f32.partialorder %v1513, 0.0
      %vm1945 = vcmp.ge.f32.partialorder %v1869, 0.0
      %vm1946 = vcmp.ge.f32.partialorder %v1516, 0.0
      %vm1947 = vcmp.ge.f32.partialorder %v1872, 0.0
      %vm1948 = vcmp.ge.f32.partialorder %v1518, 0.0
      %vm1949 = vcmp.ge.f32.partialorder %v1874, 0.0
      %vm1950 = vcmp.ge.f32.partialorder %v1521, 0.0
      %vm1951 = vcmp.ge.f32.partialorder %v1877, 0.0
      %vm1952 = vcmp.ge.f32.partialorder %v1523, 0.0
      %vm1953 = vcmp.ge.f32.partialorder %v1879, 0.0
      %vm1954 = vcmp.ge.f32.partialorder %v1526, 0.0
      %vm1955 = vcmp.ge.f32.partialorder %v1882, 0.0
      %vm1956 = vcmp.ge.f32.partialorder %v1528, 0.0
      %vm1957 = vcmp.ge.f32.partialorder %v1884, 0.0
      %vm1958 = vcmp.ge.f32.partialorder %v1531, 0.0
      %vm1959 = vcmp.ge.f32.partialorder %v1887, 0.0
      %vm1960 = vcmp.ge.f32.partialorder %v1533, 0.0
      %vm1961 = vcmp.ge.f32.partialorder %v1889, 0.0
      %vm1962 = vcmp.ge.f32.partialorder %v1536, 0.0
      %vm1963 = vcmp.ge.f32.partialorder %v1892, 0.0
      %vm1964 = vcmp.ge.f32.partialorder %v1538, 0.0
      %vm1965 = vcmp.ge.f32.partialorder %v1894, 0.0
      %vm1966 = vcmp.ge.f32.partialorder %v1541, 0.0
      %vm1967 = vcmp.ge.f32.partialorder %v1897, 0.0
      %vm1968 = vcmp.ge.f32.partialorder %v1543, 0.0
      %vm1969 = vcmp.ge.f32.partialorder %v1899, 0.0
      %vm1970 = vcmp.ge.f32.partialorder %v1546, 0.0
      %vm1971 = vcmp.ge.f32.partialorder %v1902, 0.0
      %vm1972 = vcmp.ge.f32.partialorder %v1548, 0.0
      %vm1973 = vcmp.ge.f32.partialorder %v1904, 0.0
      %vm1974 = vcmp.ge.f32.partialorder %v1551, 0.0
      %vm1975 = vcmp.ge.f32.partialorder %v1907, 0.0
      %vm1976 = vcmp.ge.f32.partialorder %v1553, 0.0
      %vm1977 = vcmp.ge.f32.partialorder %v1909, 0.0
      %vm1978 = vcmp.ge.f32.partialorder %v1556, 0.0
      %vm1979 = vcmp.ge.f32.partialorder %v1912, 0.0
      %vm1980 = vcmp.ge.f32.partialorder %v1558, 0.0
      %vm1981 = vcmp.ge.f32.partialorder %v1914, 0.0
      %vm1982 = vcmp.ge.f32.partialorder %v1561, 0.0
      %vm1983 = vcmp.ge.f32.partialorder %v1917, 0.0
      %vm1984 = vcmp.ge.f32.partialorder %v1563, 0.0
      %vm1985 = vcmp.ge.f32.partialorder %v1919, 0.0
      %vm1986 = vcmp.ge.f32.partialorder %v1566, 0.0
      %vm1987 = vcmp.ge.f32.partialorder %v1922, 0.0
      %vm1988 = vcmp.ge.f32.partialorder %v1568, 0.0
      %vm1989 = vcmp.ge.f32.partialorder %v1924, 0.0
      %v1990 = vmul.f32 %v1491, 0.2
      %v1991 = vmul.f32 %v1847, 0.2
      %v1992 = vmul.f32 %v1493, 0.2
      %v1993 = vmul.f32 %v1849, 0.2
      %v1994 = vmul.f32 %v1496, 0.2
      %v1995 = vmul.f32 %v1852, 0.2
      %v1996 = vmul.f32 %v1498, 0.2
      %v1997 = vmul.f32 %v1854, 0.2
      %v1998 = vmul.f32 %v1501, 0.2
      %v1999 = vmul.f32 %v1857, 0.2
      %v2000 = vmul.f32 %v1503, 0.2
      %v2001 = vmul.f32 %v1859, 0.2
      %v2002 = vmul.f32 %v1506, 0.2
      %v2003 = vmul.f32 %v1862, 0.2
      %v2004 = vmul.f32 %v1508, 0.2
      %v2005 = vmul.f32 %v1864, 0.2
      %v2006 = vmul.f32 %v1511, 0.2
      %v2007 = vmul.f32 %v1867, 0.2
      %v2008 = vmul.f32 %v1513, 0.2
      %v2009 = vmul.f32 %v1869, 0.2
      %v2010 = vmul.f32 %v1516, 0.2
      %v2011 = vmul.f32 %v1872, 0.2
      %v2012 = vmul.f32 %v1518, 0.2
      %v2013 = vmul.f32 %v1874, 0.2
      %v2014 = vmul.f32 %v1521, 0.2
      %v2015 = vmul.f32 %v1877, 0.2
      %v2016 = vmul.f32 %v1523, 0.2
      %v2017 = vmul.f32 %v1879, 0.2
      %v2018 = vmul.f32 %v1526, 0.2
      %v2019 = vmul.f32 %v1882, 0.2
      %v2020 = vmul.f32 %v1528, 0.2
      %v2021 = vmul.f32 %v1884, 0.2
      %v2022 = vmul.f32 %v1531, 0.2
      %v2023 = vmul.f32 %v1887, 0.2
      %v2024 = vmul.f32 %v1533, 0.2
      %v2025 = vmul.f32 %v1889, 0.2
      %v2026 = vmul.f32 %v1536, 0.2
      %v2027 = vmul.f32 %v1892, 0.2
      %v2028 = vmul.f32 %v1538, 0.2
      %v2029 = vmul.f32 %v1894, 0.2
      %v2030 = vmul.f32 %v1541, 0.2
      %v2031 = vmul.f32 %v1897, 0.2
      %v2032 = vmul.f32 %v1543, 0.2
      %v2033 = vmul.f32 %v1899, 0.2
      %v2034 = vmul.f32 %v1546, 0.2
      %v2035 = vmul.f32 %v1902, 0.2
      %v2036 = vmul.f32 %v1548, 0.2
      %v2037 = vmul.f32 %v1904, 0.2
      %v2038 = vmul.f32 %v1551, 0.2
      %v2039 = vmul.f32 %v1907, 0.2
      %v2040 = vmul.f32 %v1553, 0.2
      %v2041 = vmul.f32 %v1909, 0.2
      %v2042 = vmul.f32 %v1556, 0.2
      %v2043 = vmul.f32 %v1912, 0.2
      %v2044 = vmul.f32 %v1558, 0.2
      %v2045 = vmul.f32 %v1914, 0.2
      %v2046 = vmul.f32 %v1561, 0.2
      %v2047 = vmul.f32 %v1917, 0.2
      %v2048 = vmul.f32 %v1563, 0.2
      %v2049 = vmul.f32 %v1919, 0.2
      %v2050 = vmul.f32 %v1566, 0.2
      %v2051 = vmul.f32 %v1922, 0.2
      %v2052 = vmul.f32 %v1568, 0.2
      %v2053 = vmul.f32 %v1924, 0.2
      %v2054 = vsel %vm1926, %v1491, %v1990
      %v2055 = vsel %vm1927, %v1847, %v1991
      %v2056 = vsel %vm1928, %v1493, %v1992
      %v2057 = vsel %vm1929, %v1849, %v1993
      %v2058 = vsel %vm1930, %v1496, %v1994
      %v2059 = vsel %vm1931, %v1852, %v1995
      %v2060 = vsel %vm1932, %v1498, %v1996
      %v2061 = vsel %vm1933, %v1854, %v1997
      %v2062 = vsel %vm1934, %v1501, %v1998
      %v2063 = vsel %vm1935, %v1857, %v1999
      %v2064 = vsel %vm1936, %v1503, %v2000
      %v2065 = vsel %vm1937, %v1859, %v2001
      %v2066 = vsel %vm1938, %v1506, %v2002
      %v2067 = vsel %vm1939, %v1862, %v2003
      %v2068 = vsel %vm1940, %v1508, %v2004
      %v2069 = vsel %vm1941, %v1864, %v2005
      %v2070 = vsel %vm1942, %v1511, %v2006
      %v2071 = vsel %vm1943, %v1867, %v2007
      %v2072 = vsel %vm1944, %v1513, %v2008
      %v2073 = vsel %vm1945, %v1869, %v2009
      %v2074 = vsel %vm1946, %v1516, %v2010
      %v2075 = vsel %vm1947, %v1872, %v2011
      %v2076 = vsel %vm1948, %v1518, %v2012
      %v2077 = vsel %vm1949, %v1874, %v2013
      %v2078 = vsel %vm1950, %v1521, %v2014
      %v2079 = vsel %vm1951, %v1877, %v2015
      %v2080 = vsel %vm1952, %v1523, %v2016
      %v2081 = vsel %vm1953, %v1879, %v2017
      %v2082 = vsel %vm1954, %v1526, %v2018
      %v2083 = vsel %vm1955, %v1882, %v2019
      %v2084 = vsel %vm1956, %v1528, %v2020
      %v2085 = vsel %vm1957, %v1884, %v2021
      %v2086 = vsel %vm1958, %v1531, %v2022
      %v2087 = vsel %vm1959, %v1887, %v2023
      %v2088 = vsel %vm1960, %v1533, %v2024
      %v2089 = vsel %vm1961, %v1889, %v2025
      %v2090 = vsel %vm1962, %v1536, %v2026
      %v2091 = vsel %vm1963, %v1892, %v2027
      %v2092 = vsel %vm1964, %v1538, %v2028
      %v2093 = vsel %vm1965, %v1894, %v2029
      %v2094 = vsel %vm1966, %v1541, %v2030
      %v2095 = vsel %vm1967, %v1897, %v2031
      %v2096 = vsel %vm1968, %v1543, %v2032
      %v2097 = vsel %vm1969, %v1899, %v2033
      %v2098 = vsel %vm1970, %v1546, %v2034
      %v2099 = vsel %vm1971, %v1902, %v2035
      %v2100 = vsel %vm1972, %v1548, %v2036
      %v2101 = vsel %vm1973, %v1904, %v2037
      %v2102 = vsel %vm1974, %v1551, %v2038
      %v2103 = vsel %vm1975, %v1907, %v2039
      %v2104 = vsel %vm1976, %v1553, %v2040
      %v2105 = vsel %vm1977, %v1909, %v2041
      %v2106 = vsel %vm1978, %v1556, %v2042
      %v2107 = vsel %vm1979, %v1912, %v2043
      %v2108 = vsel %vm1980, %v1558, %v2044
      %v2109 = vsel %vm1981, %v1914, %v2045
      %v2110 = vsel %vm1982, %v1561, %v2046
      %v2111 = vsel %vm1983, %v1917, %v2047
      %v2112 = vsel %vm1984, %v1563, %v2048
      %v2113 = vsel %vm1985, %v1919, %v2049
      %v2114 = vsel %vm1986, %v1566, %v2050
      %v2115 = vsel %vm1987, %v1922, %v2051
      %v2116 = vsel %vm1988, %v1568, %v2052
      %v2117 = vsel %vm1989, %v1924, %v2053
      %v2118 = vpack.c.bf16 %v2055, %v2054
      %v2119 = vpack.c.bf16 %v2057, %v2056
      %v2120 = vpack.c.bf16 %v2059, %v2058
      %v2121 = vpack.c.bf16 %v2061, %v2060
      %v2122 = vpack.c.bf16 %v2063, %v2062
      %v2123 = vpack.c.bf16 %v2065, %v2064
      %v2124 = vpack.c.bf16 %v2067, %v2066
      %v2125 = vpack.c.bf16 %v2069, %v2068
      %v2126 = vpack.c.bf16 %v2071, %v2070
      %v2127 = vpack.c.bf16 %v2073, %v2072
      %v2128 = vpack.c.bf16 %v2075, %v2074
      %v2129 = vpack.c.bf16 %v2077, %v2076
      %v2130 = vpack.c.bf16 %v2079, %v2078
      %v2131 = vpack.c.bf16 %v2081, %v2080
      %v2132 = vpack.c.bf16 %v2083, %v2082
      %v2133 = vpack.c.bf16 %v2085, %v2084
      %v2134 = vpack.c.bf16 %v2087, %v2086
      %v2135 = vpack.c.bf16 %v2089, %v2088
      %v2136 = vpack.c.bf16 %v2091, %v2090
      %v2137 = vpack.c.bf16 %v2093, %v2092
      %v2138 = vpack.c.bf16 %v2095, %v2094
      %v2139 = vpack.c.bf16 %v2097, %v2096
      %v2140 = vpack.c.bf16 %v2099, %v2098
      %v2141 = vpack.c.bf16 %v2101, %v2100
      %v2142 = vpack.c.bf16 %v2103, %v2102
      %v2143 = vpack.c.bf16 %v2105, %v2104
      %v2144 = vpack.c.bf16 %v2107, %v2106
      %v2145 = vpack.c.bf16 %v2109, %v2108
      %v2146 = vpack.c.bf16 %v2111, %v2110
      %v2147 = vpack.c.bf16 %v2113, %v2112
      %v2148 = vpack.c.bf16 %v2115, %v2114
      %v2149 = vpack.c.bf16 %v2117, %v2116
      %s2150 = scalar_lea.vmem [#allocation2], 144
      %2151 = vst [vmem:[%s2150] sm:$0xff] %v2118
      %2152 = vst [vmem:[%s2150 + $0x8] sm:$0xff] %v2119
      %2153 = vst [vmem:[%s2150 + $0x10] sm:$0xff] %v2122
      %2154 = vst [vmem:[%s2150 + $0x18] sm:$0xff] %v2123
      %2155 = vst [vmem:[%s2150 + $0x20] sm:$0xff] %v2126
      %2156 = vst [vmem:[%s2150 + $0x28] sm:$0xff] %v2127
      %2157 = vst [vmem:[%s2150 + $0x30] sm:$0xff] %v2130
      %2158 = vst [vmem:[%s2150 + $0x38] sm:$0xff] %v2131
      %2159 = vst [vmem:[%s2150 + $0x40] sm:$0xff] %v2134
      %2160 = vst [vmem:[%s2150 + $0x48] sm:$0xff] %v2135
      %2161 = vst [vmem:[%s2150 + $0x50] sm:$0xff] %v2138
      %2162 = vst [vmem:[%s2150 + $0x58] sm:$0xff] %v2139
      %2163 = vst [vmem:[%s2150 + $0x60] sm:$0xff] %v2142
      %2164 = vst [vmem:[%s2150 + $0x68] sm:$0xff] %v2143
      %2165 = vst [vmem:[%s2150 + $0x70] sm:$0xff] %v2146
      %2166 = vst [vmem:[%s2150 + $0x78] sm:$0xff] %v2147
      %2167 = vst [vmem:[#allocation2 + $0x10] sm:$0xff] %v2120
      %2168 = vst [vmem:[#allocation2 + $0x18] sm:$0xff] %v2121
      %2169 = vst [vmem:[#allocation2 + $0x20] sm:$0xff] %v2124
      %2170 = vst [vmem:[#allocation2 + $0x28] sm:$0xff] %v2125
      %2171 = vst [vmem:[#allocation2 + $0x30] sm:$0xff] %v2128
      %2172 = vst [vmem:[#allocation2 + $0x38] sm:$0xff] %v2129
      %2173 = vst [vmem:[#allocation2 + $0x40] sm:$0xff] %v2132
      %2174 = vst [vmem:[#allocation2 + $0x48] sm:$0xff] %v2133
      %2175 = vst [vmem:[#allocation2 + $0x50] sm:$0xff] %v2136
      %2176 = vst [vmem:[#allocation2 + $0x58] sm:$0xff] %v2137
      %2177 = vst [vmem:[#allocation2 + $0x60] sm:$0xff] %v2140
      %2178 = vst [vmem:[#allocation2 + $0x68] sm:$0xff] %v2141
      %2179 = vst [vmem:[#allocation2 + $0x70] sm:$0xff] %v2144
      %2180 = vst [vmem:[#allocation2 + $0x78] sm:$0xff] %v2145
      %2181 = vst [vmem:[#allocation2 + $0x80] sm:$0xff] %v2148
      %2182 = vst [vmem:[#allocation2 + $0x88] sm:$0xff] %v2149
      %2183 = vst [vmem:[#allocation2] sm:$0xff] 0
      %2184 = vst [vmem:[#allocation2 + $0x8] sm:$0xff] 0
      %2185 = vst [vmem:[%s2150 + $0x80] sm:$0xff] 0
      %2186 = vst [vmem:[%s2150 + $0x88] sm:$0xff] 0
      %v2187 = vld [vmem:[#allocation2] sm:$0xff]
      %v2188 = vld [vmem:[#allocation2 + $0x8] sm:$0xff]
      %v2189 = vld [vmem:[#allocation2 + $0x10] sm:$0xff]
      %v2190 = vld [vmem:[#allocation2 + $0x18] sm:$0xff]
      %v2191 = vld [vmem:[#allocation2 + $0x20] sm:$0xff]
      %v2192 = vld [vmem:[#allocation2 + $0x28] sm:$0xff]
      %v2193 = vld [vmem:[#allocation2 + $0x30] sm:$0xff]
      %v2194 = vld [vmem:[#allocation2 + $0x38] sm:$0xff]
      %v2195 = vld [vmem:[#allocation2 + $0x40] sm:$0xff]
      %v2196 = vld [vmem:[#allocation2 + $0x48] sm:$0xff]
      %v2197 = vld [vmem:[#allocation2 + $0x50] sm:$0xff]
      %v2198 = vld [vmem:[#allocation2 + $0x58] sm:$0xff]
      %v2199 = vld [vmem:[#allocation2 + $0x60] sm:$0xff]
      %v2200 = vld [vmem:[#allocation2 + $0x68] sm:$0xff]
      %v2201 = vld [vmem:[#allocation2 + $0x70] sm:$0xff]
      %v2202 = vld [vmem:[#allocation2 + $0x78] sm:$0xff]
      %v2203 = vld [vmem:[%s2150] sm:$0xff]
      %v2204 = vld [vmem:[%s2150 + $0x8] sm:$0xff]
      %v2205 = vld [vmem:[%s2150 + $0x10] sm:$0xff]
      %v2206 = vld [vmem:[%s2150 + $0x18] sm:$0xff]
      %v2207 = vld [vmem:[%s2150 + $0x20] sm:$0xff]
      %v2208 = vld [vmem:[%s2150 + $0x28] sm:$0xff]
      %v2209 = vld [vmem:[%s2150 + $0x30] sm:$0xff]
      %v2210 = vld [vmem:[%s2150 + $0x38] sm:$0xff]
      %v2211 = vld [vmem:[%s2150 + $0x40] sm:$0xff]
      %v2212 = vld [vmem:[%s2150 + $0x48] sm:$0xff]
      %v2213 = vld [vmem:[%s2150 + $0x50] sm:$0xff]
      %v2214 = vld [vmem:[%s2150 + $0x58] sm:$0xff]
      %v2215 = vld [vmem:[%s2150 + $0x60] sm:$0xff]
      %v2216 = vld [vmem:[%s2150 + $0x68] sm:$0xff]
      %v2217 = vld [vmem:[%s2150 + $0x70] sm:$0xff]
      %v2218 = vld [vmem:[%s2150 + $0x78] sm:$0xff]
      %v2219 = vld [vmem:[#allocation2 + $0x80] sm:$0xff]
      %v2220 = vld [vmem:[#allocation2 + $0x88] sm:$0xff]
      %v2221 = vld [vmem:[%s2150 + $0x80] sm:$0xff]
      %v2222 = vld [vmem:[%s2150 + $0x88] sm:$0xff]
      %v2239 = vunpack.c.l.b16 %v2187
      %v2240 = vunpack.c.h.b16 %v2187
      %v2241 = vunpack.c.l.b16 %v2188
      %v2242 = vunpack.c.h.b16 %v2188
      %v2243 = vunpack.c.l.b16 %v2189
      %v2244 = vunpack.c.h.b16 %v2189
      %v2245 = vunpack.c.l.b16 %v2190
      %v2246 = vunpack.c.h.b16 %v2190
      %v2247 = vunpack.c.l.b16 %v2191
      %v2248 = vunpack.c.h.b16 %v2191
      %v2249 = vunpack.c.l.b16 %v2192
      %v2250 = vunpack.c.h.b16 %v2192
      %v2251 = vunpack.c.l.b16 %v2193
      %v2252 = vunpack.c.h.b16 %v2193
      %v2253 = vunpack.c.l.b16 %v2194
      %v2254 = vunpack.c.h.b16 %v2194
      %v2255 = vunpack.c.l.b16 %v2195
      %v2256 = vunpack.c.h.b16 %v2195
      %v2257 = vunpack.c.l.b16 %v2196
      %v2258 = vunpack.c.h.b16 %v2196
      %v2259 = vunpack.c.l.b16 %v2197
      %v2260 = vunpack.c.h.b16 %v2197
      %v2261 = vunpack.c.l.b16 %v2198
      %v2262 = vunpack.c.h.b16 %v2198
      %v2263 = vunpack.c.l.b16 %v2199
      %v2264 = vunpack.c.h.b16 %v2199
      %v2265 = vunpack.c.l.b16 %v2200
      %v2266 = vunpack.c.h.b16 %v2200
      %v2267 = vunpack.c.l.b16 %v2201
      %v2268 = vunpack.c.h.b16 %v2201
      %v2269 = vunpack.c.l.b16 %v2202
      %v2270 = vunpack.c.h.b16 %v2202
      %v2271 = vpack.c.b16 %v2241, %v2239
      %v2272 = vpack.c.b16 %v2242, %v2240
      %v2273 = vpack.c.b16 %v2245, %v2243
      %v2274 = vpack.c.b16 %v2246, %v2244
      %v2275 = vpack.c.b16 %v2249, %v2247
      %v2276 = vpack.c.b16 %v2250, %v2248
      %v2277 = vpack.c.b16 %v2253, %v2251
      %v2278 = vpack.c.b16 %v2254, %v2252
      %v2279 = vpack.c.b16 %v2257, %v2255
      %v2280 = vpack.c.b16 %v2258, %v2256
      %v2281 = vpack.c.b16 %v2261, %v2259
      %v2282 = vpack.c.b16 %v2262, %v2260
      %v2283 = vpack.c.b16 %v2265, %v2263
      %v2284 = vpack.c.b16 %v2266, %v2264
      %v2285 = vpack.c.b16 %v2269, %v2267
      %v2286 = vpack.c.b16 %v2270, %v2268
      %v2319 = vunpack.c.l.b16 %v2203
      %v2320 = vunpack.c.h.b16 %v2203
      %v2321 = vunpack.c.l.b16 %v2204
      %v2322 = vunpack.c.h.b16 %v2204
      %v2323 = vunpack.c.l.b16 %v2205
      %v2324 = vunpack.c.h.b16 %v2205
      %v2325 = vunpack.c.l.b16 %v2206
      %v2326 = vunpack.c.h.b16 %v2206
      %v2327 = vunpack.c.l.b16 %v2207
      %v2328 = vunpack.c.h.b16 %v2207
      %v2329 = vunpack.c.l.b16 %v2208
      %v2330 = vunpack.c.h.b16 %v2208
      %v2331 = vunpack.c.l.b16 %v2209
      %v2332 = vunpack.c.h.b16 %v2209
      %v2333 = vunpack.c.l.b16 %v2210
      %v2334 = vunpack.c.h.b16 %v2210
      %v2335 = vunpack.c.l.b16 %v2211
      %v2336 = vunpack.c.h.b16 %v2211
      %v2337 = vunpack.c.l.b16 %v2212
      %v2338 = vunpack.c.h.b16 %v2212
      %v2339 = vunpack.c.l.b16 %v2213
      %v2340 = vunpack.c.h.b16 %v2213
      %v2341 = vunpack.c.l.b16 %v2214
      %v2342 = vunpack.c.h.b16 %v2214
      %v2343 = vunpack.c.l.b16 %v2215
      %v2344 = vunpack.c.h.b16 %v2215
      %v2345 = vunpack.c.l.b16 %v2216
      %v2346 = vunpack.c.h.b16 %v2216
      %v2347 = vunpack.c.l.b16 %v2217
      %v2348 = vunpack.c.h.b16 %v2217
      %v2349 = vunpack.c.l.b16 %v2218
      %v2350 = vunpack.c.h.b16 %v2218
      %v2351 = vpack.c.b16 %v2321, %v2319
      %v2352 = vpack.c.b16 %v2322, %v2320
      %v2353 = vpack.c.b16 %v2325, %v2323
      %v2354 = vpack.c.b16 %v2326, %v2324
      %v2355 = vpack.c.b16 %v2329, %v2327
      %v2356 = vpack.c.b16 %v2330, %v2328
      %v2357 = vpack.c.b16 %v2333, %v2331
      %v2358 = vpack.c.b16 %v2334, %v2332
      %v2359 = vpack.c.b16 %v2337, %v2335
      %v2360 = vpack.c.b16 %v2338, %v2336
      %v2361 = vpack.c.b16 %v2341, %v2339
      %v2362 = vpack.c.b16 %v2342, %v2340
      %v2363 = vpack.c.b16 %v2345, %v2343
      %v2364 = vpack.c.b16 %v2346, %v2344
      %v2365 = vpack.c.b16 %v2349, %v2347
      %v2366 = vpack.c.b16 %v2350, %v2348
      %v2385 = vunpack.c.l.b16 %v2219
      %v2386 = vunpack.c.h.b16 %v2219
      %v2387 = vunpack.c.l.b16 %v2220
      %v2388 = vunpack.c.h.b16 %v2220
      %v2389 = vpack.c.b16 %v2387, %v2385
      %v2390 = vpack.c.b16 %v2388, %v2386
      %v2395 = vunpack.c.l.b16 %v2221
      %v2396 = vunpack.c.h.b16 %v2221
      %v2397 = vunpack.c.l.b16 %v2222
      %v2398 = vunpack.c.h.b16 %v2222
      %v2399 = vpack.c.b16 %v2397, %v2395
      %v2400 = vpack.c.b16 %v2398, %v2396
      %v2403 = vld [vmem:[%s3] sm:$0xff]
      %v2404 = vld [vmem:[%s3 + $0x8] sm:$0xff]
      %v2405 = vld [vmem:[%s3 + $0x10] sm:$0xff]
      %v2406 = vld [vmem:[%s3 + $0x18] sm:$0xff]
      %v2407 = vld [vmem:[%s3 + $0x20] sm:$0xff]
      %v2408 = vld [vmem:[%s3 + $0x28] sm:$0xff]
      %v2409 = vld [vmem:[%s3 + $0x30] sm:$0xff]
      %v2410 = vld [vmem:[%s3 + $0x38] sm:$0xff]
      %v2411 = vld [vmem:[%s3 + $0x40] sm:$0xff]
      %v2412 = vld [vmem:[%s3 + $0x48] sm:$0xff]
      %v2413 = vld [vmem:[%s3 + $0x50] sm:$0xff]
      %v2414 = vld [vmem:[%s3 + $0x58] sm:$0xff]
      %v2415 = vld [vmem:[%s3 + $0x60] sm:$0xff]
      %v2416 = vld [vmem:[%s3 + $0x68] sm:$0xff]
      %v2417 = vld [vmem:[%s3 + $0x70] sm:$0xff]
      %v2418 = vld [vmem:[%s3 + $0x78] sm:$0xff]
      %v2419 = vld [vmem:[%s3 + $0x80] sm:$0xff]
      %v2420 = vld [vmem:[%s3 + $0x88] sm:$0xff]
      %v2421 = vld [vmem:[%s3 + $0x90] sm:$0xff]
      %v2422 = vld [vmem:[%s3 + $0x98] sm:$0xff]
      %v2423 = vld [vmem:[%s3 + $0xa0] sm:$0xff]
      %v2424 = vld [vmem:[%s3 + $0xa8] sm:$0xff]
      %v2425 = vld [vmem:[%s3 + $0xb0] sm:$0xff]
      %v2426 = vld [vmem:[%s3 + $0xb8] sm:$0xff]
      %v2427 = vld [vmem:[%s3 + $0xc0] sm:$0xff]
      %v2428 = vld [vmem:[%s3 + $0xc8] sm:$0xff]
      %v2429 = vld [vmem:[%s3 + $0xd0] sm:$0xff]
      %v2430 = vld [vmem:[%s3 + $0xd8] sm:$0xff]
      %v2431 = vld [vmem:[%s3 + $0xe0] sm:$0xff]
      %v2432 = vld [vmem:[%s3 + $0xe8] sm:$0xff]
      %v2433 = vld [vmem:[%s3 + $0xf0] sm:$0xff]
      %v2434 = vld [vmem:[%s3 + $0xf8] sm:$0xff]
      %v2435 = vld [vmem:[%s3 + $0x100] sm:$0xff]
      %v2436 = vld [vmem:[%s3 + $0x108] sm:$0xff]
      %v2437 = vld [vmem:[%s3 + $0x110] sm:$0xff]
      %v2438 = vld [vmem:[%s3 + $0x118] sm:$0xff]
      %v2439 = vld [vmem:[%s3 + $0x120] sm:$0xff]
      %v2440 = vld [vmem:[%s3 + $0x128] sm:$0xff]
      %v2441 = vld [vmem:[%s3 + $0x130] sm:$0xff]
      %v2442 = vld [vmem:[%s3 + $0x138] sm:$0xff]
      %v2443 = vld [vmem:[%s3 + $0x140] sm:$0xff]
      %v2444 = vld [vmem:[%s3 + $0x148] sm:$0xff]
      %v2445 = vld [vmem:[%s3 + $0x150] sm:$0xff]
      %v2446 = vld [vmem:[%s3 + $0x158] sm:$0xff]
      %v2447 = vld [vmem:[%s3 + $0x160] sm:$0xff]
      %v2448 = vld [vmem:[%s3 + $0x168] sm:$0xff]
      %v2449 = vld [vmem:[%s3 + $0x170] sm:$0xff]
      %v2450 = vld [vmem:[%s3 + $0x178] sm:$0xff]
      %v2451 = vld [vmem:[%s3 + $0x180] sm:$0xff]
      %v2452 = vld [vmem:[%s3 + $0x188] sm:$0xff]
      %v2453 = vld [vmem:[%s3 + $0x190] sm:$0xff]
      %v2454 = vld [vmem:[%s3 + $0x198] sm:$0xff]
      %v2455 = vld [vmem:[%s3 + $0x1a0] sm:$0xff]
      %v2456 = vld [vmem:[%s3 + $0x1a8] sm:$0xff]
      %v2457 = vld [vmem:[%s3 + $0x1b0] sm:$0xff]
      %v2458 = vld [vmem:[%s3 + $0x1b8] sm:$0xff]
      %v2459 = vld [vmem:[%s3 + $0x1c0] sm:$0xff]
      %v2460 = vld [vmem:[%s3 + $0x1c8] sm:$0xff]
      %v2461 = vld [vmem:[%s3 + $0x1d0] sm:$0xff]
      %v2462 = vld [vmem:[%s3 + $0x1d8] sm:$0xff]
      %v2463 = vld [vmem:[%s3 + $0x1e0] sm:$0xff]
      %v2464 = vld [vmem:[%s3 + $0x1e8] sm:$0xff]
      %v2465 = vld [vmem:[%s3 + $0x1f0] sm:$0xff]
      %v2466 = vld [vmem:[%s3 + $0x1f8] sm:$0xff]
      %v2467 = vld [vmem:[%s3 + $0x200] sm:$0xff]
      %v2468 = vld [vmem:[%s3 + $0x208] sm:$0xff]
      %v2469 = vld [vmem:[%s3 + $0x210] sm:$0xff]
      %v2470 = vld [vmem:[%s3 + $0x218] sm:$0xff]
      %v2471 = vld [vmem:[%s3 + $0x220] sm:$0xff]
      %v2472 = vld [vmem:[%s3 + $0x228] sm:$0xff]
      %v2473 = vld [vmem:[%s3 + $0x230] sm:$0xff]
      %v2474 = vld [vmem:[%s3 + $0x238] sm:$0xff]
      %v2475 = vld [vmem:[%s3 + $0x240] sm:$0xff]
      %v2476 = vld [vmem:[%s3 + $0x248] sm:$0xff]
      %v2477 = vld [vmem:[%s3 + $0x250] sm:$0xff]
      %v2478 = vld [vmem:[%s3 + $0x258] sm:$0xff]
      %v2479 = vld [vmem:[%s3 + $0x260] sm:$0xff]
      %v2480 = vld [vmem:[%s3 + $0x268] sm:$0xff]
      %v2481 = vld [vmem:[%s3 + $0x270] sm:$0xff]
      %v2482 = vld [vmem:[%s3 + $0x278] sm:$0xff]
      %v2483 = vld [vmem:[%s3 + $0x280] sm:$0xff]
      %v2484 = vld [vmem:[%s3 + $0x288] sm:$0xff]
      %v2485 = vld [vmem:[%s3 + $0x290] sm:$0xff]
      %v2486 = vld [vmem:[%s3 + $0x298] sm:$0xff]
      %v2487 = vld [vmem:[%s3 + $0x2a0] sm:$0xff]
      %v2488 = vld [vmem:[%s3 + $0x2a8] sm:$0xff]
      %v2489 = vld [vmem:[%s3 + $0x2b0] sm:$0xff]
      %v2490 = vld [vmem:[%s3 + $0x2b8] sm:$0xff]
      %v2491 = vld [vmem:[%s3 + $0x2c0] sm:$0xff]
      %v2492 = vld [vmem:[%s3 + $0x2c8] sm:$0xff]
      %v2493 = vld [vmem:[%s3 + $0x2d0] sm:$0xff]
      %v2494 = vld [vmem:[%s3 + $0x2d8] sm:$0xff]
      %v2495 = vld [vmem:[%s3 + $0x2e0] sm:$0xff]
      %v2496 = vld [vmem:[%s3 + $0x2e8] sm:$0xff]
      %v2497 = vld [vmem:[%s3 + $0x2f0] sm:$0xff]
      %v2498 = vld [vmem:[%s3 + $0x2f8] sm:$0xff]
      %v2499 = vld [vmem:[%s3 + $0x300] sm:$0xff]
      %v2500 = vld [vmem:[%s3 + $0x308] sm:$0xff]
      %v2501 = vld [vmem:[%s3 + $0x310] sm:$0xff]
      %v2502 = vld [vmem:[%s3 + $0x318] sm:$0xff]
      %v2503 = vld [vmem:[%s3 + $0x320] sm:$0xff]
      %v2504 = vld [vmem:[%s3 + $0x328] sm:$0xff]
      %v2505 = vld [vmem:[%s3 + $0x330] sm:$0xff]
      %v2506 = vld [vmem:[%s3 + $0x338] sm:$0xff]
      %v2507 = vld [vmem:[%s3 + $0x340] sm:$0xff]
      %v2508 = vld [vmem:[%s3 + $0x348] sm:$0xff]
      %v2509 = vld [vmem:[%s3 + $0x350] sm:$0xff]
      %v2510 = vld [vmem:[%s3 + $0x358] sm:$0xff]
      %v2511 = vld [vmem:[%s3 + $0x360] sm:$0xff]
      %v2512 = vld [vmem:[%s3 + $0x368] sm:$0xff]
      %v2513 = vld [vmem:[%s3 + $0x370] sm:$0xff]
      %v2514 = vld [vmem:[%s3 + $0x378] sm:$0xff]
      %v2515 = vld [vmem:[%s3 + $0x380] sm:$0xff]
      %v2516 = vld [vmem:[%s3 + $0x388] sm:$0xff]
      %v2517 = vld [vmem:[%s3 + $0x390] sm:$0xff]
      %v2518 = vld [vmem:[%s3 + $0x398] sm:$0xff]
      %v2519 = vld [vmem:[%s3 + $0x3a0] sm:$0xff]
      %v2520 = vld [vmem:[%s3 + $0x3a8] sm:$0xff]
      %v2521 = vld [vmem:[%s3 + $0x3b0] sm:$0xff]
      %v2522 = vld [vmem:[%s3 + $0x3b8] sm:$0xff]
      %v2523 = vld [vmem:[%s3 + $0x3c0] sm:$0xff]
      %v2524 = vld [vmem:[%s3 + $0x3c8] sm:$0xff]
      %v2525 = vld [vmem:[%s3 + $0x3d0] sm:$0xff]
      %v2526 = vld [vmem:[%s3 + $0x3d8] sm:$0xff]
      %v2527 = vld [vmem:[%s3 + $0x3e0] sm:$0xff]
      %v2528 = vld [vmem:[%s3 + $0x3e8] sm:$0xff]
      %v2529 = vld [vmem:[%s3 + $0x3f0] sm:$0xff]
      %v2530 = vld [vmem:[%s3 + $0x3f8] sm:$0xff]
      %v2531 = vld [vmem:[%s4] sm:$0x3]
      %v2533 = vperm.slane %v2531, 0
      %v2534 = vperm.slane %v2531, 1
      %v2665 = vunpack.c.l.b16 %v2403
      %v2666 = vunpack.c.h.b16 %v2403
      %v2667 = vunpack.c.l.b16 %v2404
      %v2668 = vunpack.c.h.b16 %v2404
      %v2669 = vunpack.c.l.b16 %v2405
      %v2670 = vunpack.c.h.b16 %v2405
      %v2671 = vunpack.c.l.b16 %v2406
      %v2672 = vunpack.c.h.b16 %v2406
      %v2673 = vunpack.c.l.b16 %v2407
      %v2674 = vunpack.c.h.b16 %v2407
      %v2675 = vunpack.c.l.b16 %v2408
      %v2676 = vunpack.c.h.b16 %v2408
      %v2677 = vunpack.c.l.b16 %v2409
      %v2678 = vunpack.c.h.b16 %v2409
      %v2679 = vunpack.c.l.b16 %v2410
      %v2680 = vunpack.c.h.b16 %v2410
      %v2681 = vunpack.c.l.b16 %v2411
      %v2682 = vunpack.c.h.b16 %v2411
      %v2683 = vunpack.c.l.b16 %v2412
      %v2684 = vunpack.c.h.b16 %v2412
      %v2685 = vunpack.c.l.b16 %v2413
      %v2686 = vunpack.c.h.b16 %v2413
      %v2687 = vunpack.c.l.b16 %v2414
      %v2688 = vunpack.c.h.b16 %v2414
      %v2689 = vunpack.c.l.b16 %v2415
      %v2690 = vunpack.c.h.b16 %v2415
      %v2691 = vunpack.c.l.b16 %v2416
      %v2692 = vunpack.c.h.b16 %v2416
      %v2693 = vunpack.c.l.b16 %v2417
      %v2694 = vunpack.c.h.b16 %v2417
      %v2695 = vunpack.c.l.b16 %v2418
      %v2696 = vunpack.c.h.b16 %v2418
      %v2697 = vunpack.c.l.b16 %v2419
      %v2698 = vunpack.c.h.b16 %v2419
      %v2699 = vunpack.c.l.b16 %v2420
      %v2700 = vunpack.c.h.b16 %v2420
      %v2701 = vunpack.c.l.b16 %v2421
      %v2702 = vunpack.c.h.b16 %v2421
      %v2703 = vunpack.c.l.b16 %v2422
      %v2704 = vunpack.c.h.b16 %v2422
      %v2705 = vunpack.c.l.b16 %v2423
      %v2706 = vunpack.c.h.b16 %v2423
      %v2707 = vunpack.c.l.b16 %v2424
      %v2708 = vunpack.c.h.b16 %v2424
      %v2709 = vunpack.c.l.b16 %v2425
      %v2710 = vunpack.c.h.b16 %v2425
      %v2711 = vunpack.c.l.b16 %v2426
      %v2712 = vunpack.c.h.b16 %v2426
      %v2713 = vunpack.c.l.b16 %v2427
      %v2714 = vunpack.c.h.b16 %v2427
      %v2715 = vunpack.c.l.b16 %v2428
      %v2716 = vunpack.c.h.b16 %v2428
      %v2717 = vunpack.c.l.b16 %v2429
      %v2718 = vunpack.c.h.b16 %v2429
      %v2719 = vunpack.c.l.b16 %v2430
      %v2720 = vunpack.c.h.b16 %v2430
      %v2721 = vunpack.c.l.b16 %v2431
      %v2722 = vunpack.c.h.b16 %v2431
      %v2723 = vunpack.c.l.b16 %v2432
      %v2724 = vunpack.c.h.b16 %v2432
      %v2725 = vunpack.c.l.b16 %v2433
      %v2726 = vunpack.c.h.b16 %v2433
      %v2727 = vunpack.c.l.b16 %v2434
      %v2728 = vunpack.c.h.b16 %v2434
      %v2729 = vunpack.c.l.b16 %v2435
      %v2730 = vunpack.c.h.b16 %v2435
      %v2731 = vunpack.c.l.b16 %v2436
      %v2732 = vunpack.c.h.b16 %v2436
      %v2733 = vunpack.c.l.b16 %v2437
      %v2734 = vunpack.c.h.b16 %v2437
      %v2735 = vunpack.c.l.b16 %v2438
      %v2736 = vunpack.c.h.b16 %v2438
      %v2737 = vunpack.c.l.b16 %v2439
      %v2738 = vunpack.c.h.b16 %v2439
      %v2739 = vunpack.c.l.b16 %v2440
      %v2740 = vunpack.c.h.b16 %v2440
      %v2741 = vunpack.c.l.b16 %v2441
      %v2742 = vunpack.c.h.b16 %v2441
      %v2743 = vunpack.c.l.b16 %v2442
      %v2744 = vunpack.c.h.b16 %v2442
      %v2745 = vunpack.c.l.b16 %v2443
      %v2746 = vunpack.c.h.b16 %v2443
      %v2747 = vunpack.c.l.b16 %v2444
      %v2748 = vunpack.c.h.b16 %v2444
      %v2749 = vunpack.c.l.b16 %v2445
      %v2750 = vunpack.c.h.b16 %v2445
      %v2751 = vunpack.c.l.b16 %v2446
      %v2752 = vunpack.c.h.b16 %v2446
      %v2753 = vunpack.c.l.b16 %v2447
      %v2754 = vunpack.c.h.b16 %v2447
      %v2755 = vunpack.c.l.b16 %v2448
      %v2756 = vunpack.c.h.b16 %v2448
      %v2757 = vunpack.c.l.b16 %v2449
      %v2758 = vunpack.c.h.b16 %v2449
      %v2759 = vunpack.c.l.b16 %v2450
      %v2760 = vunpack.c.h.b16 %v2450
      %v2761 = vunpack.c.l.b16 %v2451
      %v2762 = vunpack.c.h.b16 %v2451
      %v2763 = vunpack.c.l.b16 %v2452
      %v2764 = vunpack.c.h.b16 %v2452
      %v2765 = vunpack.c.l.b16 %v2453
      %v2766 = vunpack.c.h.b16 %v2453
      %v2767 = vunpack.c.l.b16 %v2454
      %v2768 = vunpack.c.h.b16 %v2454
      %v2769 = vunpack.c.l.b16 %v2455
      %v2770 = vunpack.c.h.b16 %v2455
      %v2771 = vunpack.c.l.b16 %v2456
      %v2772 = vunpack.c.h.b16 %v2456
      %v2773 = vunpack.c.l.b16 %v2457
      %v2774 = vunpack.c.h.b16 %v2457
      %v2775 = vunpack.c.l.b16 %v2458
      %v2776 = vunpack.c.h.b16 %v2458
      %v2777 = vunpack.c.l.b16 %v2459
      %v2778 = vunpack.c.h.b16 %v2459
      %v2779 = vunpack.c.l.b16 %v2460
      %v2780 = vunpack.c.h.b16 %v2460
      %v2781 = vunpack.c.l.b16 %v2461
      %v2782 = vunpack.c.h.b16 %v2461
      %v2783 = vunpack.c.l.b16 %v2462
      %v2784 = vunpack.c.h.b16 %v2462
      %v2785 = vunpack.c.l.b16 %v2463
      %v2786 = vunpack.c.h.b16 %v2463
      %v2787 = vunpack.c.l.b16 %v2464
      %v2788 = vunpack.c.h.b16 %v2464
      %v2789 = vunpack.c.l.b16 %v2465
      %v2790 = vunpack.c.h.b16 %v2465
      %v2791 = vunpack.c.l.b16 %v2466
      %v2792 = vunpack.c.h.b16 %v2466
      %v2793 = vunpack.c.l.b16 %v2467
      %v2794 = vunpack.c.h.b16 %v2467
      %v2795 = vunpack.c.l.b16 %v2468
      %v2796 = vunpack.c.h.b16 %v2468
      %v2797 = vunpack.c.l.b16 %v2469
      %v2798 = vunpack.c.h.b16 %v2469
      %v2799 = vunpack.c.l.b16 %v2470
      %v2800 = vunpack.c.h.b16 %v2470
      %v2801 = vunpack.c.l.b16 %v2471
      %v2802 = vunpack.c.h.b16 %v2471
      %v2803 = vunpack.c.l.b16 %v2472
      %v2804 = vunpack.c.h.b16 %v2472
      %v2805 = vunpack.c.l.b16 %v2473
      %v2806 = vunpack.c.h.b16 %v2473
      %v2807 = vunpack.c.l.b16 %v2474
      %v2808 = vunpack.c.h.b16 %v2474
      %v2809 = vunpack.c.l.b16 %v2475
      %v2810 = vunpack.c.h.b16 %v2475
      %v2811 = vunpack.c.l.b16 %v2476
      %v2812 = vunpack.c.h.b16 %v2476
      %v2813 = vunpack.c.l.b16 %v2477
      %v2814 = vunpack.c.h.b16 %v2477
      %v2815 = vunpack.c.l.b16 %v2478
      %v2816 = vunpack.c.h.b16 %v2478
      %v2817 = vunpack.c.l.b16 %v2479
      %v2818 = vunpack.c.h.b16 %v2479
      %v2819 = vunpack.c.l.b16 %v2480
      %v2820 = vunpack.c.h.b16 %v2480
      %v2821 = vunpack.c.l.b16 %v2481
      %v2822 = vunpack.c.h.b16 %v2481
      %v2823 = vunpack.c.l.b16 %v2482
      %v2824 = vunpack.c.h.b16 %v2482
      %v2825 = vunpack.c.l.b16 %v2483
      %v2826 = vunpack.c.h.b16 %v2483
      %v2827 = vunpack.c.l.b16 %v2484
      %v2828 = vunpack.c.h.b16 %v2484
      %v2829 = vunpack.c.l.b16 %v2485
      %v2830 = vunpack.c.h.b16 %v2485
      %v2831 = vunpack.c.l.b16 %v2486
      %v2832 = vunpack.c.h.b16 %v2486
      %v2833 = vunpack.c.l.b16 %v2487
      %v2834 = vunpack.c.h.b16 %v2487
      %v2835 = vunpack.c.l.b16 %v2488
      %v2836 = vunpack.c.h.b16 %v2488
      %v2837 = vunpack.c.l.b16 %v2489
      %v2838 = vunpack.c.h.b16 %v2489
      %v2839 = vunpack.c.l.b16 %v2490
      %v2840 = vunpack.c.h.b16 %v2490
      %v2841 = vunpack.c.l.b16 %v2491
      %v2842 = vunpack.c.h.b16 %v2491
      %v2843 = vunpack.c.l.b16 %v2492
      %v2844 = vunpack.c.h.b16 %v2492
      %v2845 = vunpack.c.l.b16 %v2493
      %v2846 = vunpack.c.h.b16 %v2493
      %v2847 = vunpack.c.l.b16 %v2494
      %v2848 = vunpack.c.h.b16 %v2494
      %v2849 = vunpack.c.l.b16 %v2495
      %v2850 = vunpack.c.h.b16 %v2495
      %v2851 = vunpack.c.l.b16 %v2496
      %v2852 = vunpack.c.h.b16 %v2496
      %v2853 = vunpack.c.l.b16 %v2497
      %v2854 = vunpack.c.h.b16 %v2497
      %v2855 = vunpack.c.l.b16 %v2498
      %v2856 = vunpack.c.h.b16 %v2498
      %v2857 = vunpack.c.l.b16 %v2499
      %v2858 = vunpack.c.h.b16 %v2499
      %v2859 = vunpack.c.l.b16 %v2500
      %v2860 = vunpack.c.h.b16 %v2500
      %v2861 = vunpack.c.l.b16 %v2501
      %v2862 = vunpack.c.h.b16 %v2501
      %v2863 = vunpack.c.l.b16 %v2502
      %v2864 = vunpack.c.h.b16 %v2502
      %v2865 = vunpack.c.l.b16 %v2503
      %v2866 = vunpack.c.h.b16 %v2503
      %v2867 = vunpack.c.l.b16 %v2504
      %v2868 = vunpack.c.h.b16 %v2504
      %v2869 = vunpack.c.l.b16 %v2505
      %v2870 = vunpack.c.h.b16 %v2505
      %v2871 = vunpack.c.l.b16 %v2506
      %v2872 = vunpack.c.h.b16 %v2506
      %v2873 = vunpack.c.l.b16 %v2507
      %v2874 = vunpack.c.h.b16 %v2507
      %v2875 = vunpack.c.l.b16 %v2508
      %v2876 = vunpack.c.h.b16 %v2508
      %v2877 = vunpack.c.l.b16 %v2509
      %v2878 = vunpack.c.h.b16 %v2509
      %v2879 = vunpack.c.l.b16 %v2510
      %v2880 = vunpack.c.h.b16 %v2510
      %v2881 = vunpack.c.l.b16 %v2511
      %v2882 = vunpack.c.h.b16 %v2511
      %v2883 = vunpack.c.l.b16 %v2512
      %v2884 = vunpack.c.h.b16 %v2512
      %v2885 = vunpack.c.l.b16 %v2513
      %v2886 = vunpack.c.h.b16 %v2513
      %v2887 = vunpack.c.l.b16 %v2514
      %v2888 = vunpack.c.h.b16 %v2514
      %v2889 = vunpack.c.l.b16 %v2515
      %v2890 = vunpack.c.h.b16 %v2515
      %v2891 = vunpack.c.l.b16 %v2516
      %v2892 = vunpack.c.h.b16 %v2516
      %v2893 = vunpack.c.l.b16 %v2517
      %v2894 = vunpack.c.h.b16 %v2517
      %v2895 = vunpack.c.l.b16 %v2518
      %v2896 = vunpack.c.h.b16 %v2518
      %v2897 = vunpack.c.l.b16 %v2519
      %v2898 = vunpack.c.h.b16 %v2519
      %v2899 = vunpack.c.l.b16 %v2520
      %v2900 = vunpack.c.h.b16 %v2520
      %v2901 = vunpack.c.l.b16 %v2521
      %v2902 = vunpack.c.h.b16 %v2521
      %v2903 = vunpack.c.l.b16 %v2522
      %v2904 = vunpack.c.h.b16 %v2522
      %v2905 = vunpack.c.l.b16 %v2523
      %v2906 = vunpack.c.h.b16 %v2523
      %v2907 = vunpack.c.l.b16 %v2524
      %v2908 = vunpack.c.h.b16 %v2524
      %v2909 = vunpack.c.l.b16 %v2525
      %v2910 = vunpack.c.h.b16 %v2525
      %v2911 = vunpack.c.l.b16 %v2526
      %v2912 = vunpack.c.h.b16 %v2526
      %v2913 = vunpack.c.l.b16 %v2527
      %v2914 = vunpack.c.h.b16 %v2527
      %v2915 = vunpack.c.l.b16 %v2528
      %v2916 = vunpack.c.h.b16 %v2528
      %v2917 = vunpack.c.l.b16 %v2529
      %v2918 = vunpack.c.h.b16 %v2529
      %v2919 = vunpack.c.l.b16 %v2530
      %v2920 = vunpack.c.h.b16 %v2530
      %v2921 = vpack.c.b16 %v2667, %v2665
      %v2922 = vpack.c.b16 %v2668, %v2666
      %v2923 = vpack.c.b16 %v2671, %v2669
      %v2924 = vpack.c.b16 %v2672, %v2670
      %v2925 = vpack.c.b16 %v2675, %v2673
      %v2926 = vpack.c.b16 %v2676, %v2674
      %v2927 = vpack.c.b16 %v2679, %v2677
      %v2928 = vpack.c.b16 %v2680, %v2678
      %v2929 = vpack.c.b16 %v2683, %v2681
      %v2930 = vpack.c.b16 %v2684, %v2682
      %v2931 = vpack.c.b16 %v2687, %v2685
      %v2932 = vpack.c.b16 %v2688, %v2686
      %v2933 = vpack.c.b16 %v2691, %v2689
      %v2934 = vpack.c.b16 %v2692, %v2690
      %v2935 = vpack.c.b16 %v2695, %v2693
      %v2936 = vpack.c.b16 %v2696, %v2694
      %v2937 = vpack.c.b16 %v2699, %v2697
      %v2938 = vpack.c.b16 %v2700, %v2698
      %v2939 = vpack.c.b16 %v2703, %v2701
      %v2940 = vpack.c.b16 %v2704, %v2702
      %v2941 = vpack.c.b16 %v2707, %v2705
      %v2942 = vpack.c.b16 %v2708, %v2706
      %v2943 = vpack.c.b16 %v2711, %v2709
      %v2944 = vpack.c.b16 %v2712, %v2710
      %v2945 = vpack.c.b16 %v2715, %v2713
      %v2946 = vpack.c.b16 %v2716, %v2714
      %v2947 = vpack.c.b16 %v2719, %v2717
      %v2948 = vpack.c.b16 %v2720, %v2718
      %v2949 = vpack.c.b16 %v2723, %v2721
      %v2950 = vpack.c.b16 %v2724, %v2722
      %v2951 = vpack.c.b16 %v2727, %v2725
      %v2952 = vpack.c.b16 %v2728, %v2726
      %v2953 = vpack.c.b16 %v2731, %v2729
      %v2954 = vpack.c.b16 %v2732, %v2730
      %v2955 = vpack.c.b16 %v2735, %v2733
      %v2956 = vpack.c.b16 %v2736, %v2734
      %v2957 = vpack.c.b16 %v2739, %v2737
      %v2958 = vpack.c.b16 %v2740, %v2738
      %v2959 = vpack.c.b16 %v2743, %v2741
      %v2960 = vpack.c.b16 %v2744, %v2742
      %v2961 = vpack.c.b16 %v2747, %v2745
      %v2962 = vpack.c.b16 %v2748, %v2746
      %v2963 = vpack.c.b16 %v2751, %v2749
      %v2964 = vpack.c.b16 %v2752, %v2750
      %v2965 = vpack.c.b16 %v2755, %v2753
      %v2966 = vpack.c.b16 %v2756, %v2754
      %v2967 = vpack.c.b16 %v2759, %v2757
      %v2968 = vpack.c.b16 %v2760, %v2758
      %v2969 = vpack.c.b16 %v2763, %v2761
      %v2970 = vpack.c.b16 %v2764, %v2762
      %v2971 = vpack.c.b16 %v2767, %v2765
      %v2972 = vpack.c.b16 %v2768, %v2766
      %v2973 = vpack.c.b16 %v2771, %v2769
      %v2974 = vpack.c.b16 %v2772, %v2770
      %v2975 = vpack.c.b16 %v2775, %v2773
      %v2976 = vpack.c.b16 %v2776, %v2774
      %v2977 = vpack.c.b16 %v2779, %v2777
      %v2978 = vpack.c.b16 %v2780, %v2778
      %v2979 = vpack.c.b16 %v2783, %v2781
      %v2980 = vpack.c.b16 %v2784, %v2782
      %v2981 = vpack.c.b16 %v2787, %v2785
      %v2982 = vpack.c.b16 %v2788, %v2786
      %v2983 = vpack.c.b16 %v2791, %v2789
      %v2984 = vpack.c.b16 %v2792, %v2790
      %v2985 = vpack.c.b16 %v2795, %v2793
      %v2986 = vpack.c.b16 %v2796, %v2794
      %v2987 = vpack.c.b16 %v2799, %v2797
      %v2988 = vpack.c.b16 %v2800, %v2798
      %v2989 = vpack.c.b16 %v2803, %v2801
      %v2990 = vpack.c.b16 %v2804, %v2802
      %v2991 = vpack.c.b16 %v2807, %v2805
      %v2992 = vpack.c.b16 %v2808, %v2806
      %v2993 = vpack.c.b16 %v2811, %v2809
      %v2994 = vpack.c.b16 %v2812, %v2810
      %v2995 = vpack.c.b16 %v2815, %v2813
      %v2996 = vpack.c.b16 %v2816, %v2814
      %v2997 = vpack.c.b16 %v2819, %v2817
      %v2998 = vpack.c.b16 %v2820, %v2818
      %v2999 = vpack.c.b16 %v2823, %v2821
      %v3000 = vpack.c.b16 %v2824, %v2822
      %v3001 = vpack.c.b16 %v2827, %v2825
      %v3002 = vpack.c.b16 %v2828, %v2826
      %v3003 = vpack.c.b16 %v2831, %v2829
      %v3004 = vpack.c.b16 %v2832, %v2830
      %v3005 = vpack.c.b16 %v2835, %v2833
      %v3006 = vpack.c.b16 %v2836, %v2834
      %v3007 = vpack.c.b16 %v2839, %v2837
      %v3008 = vpack.c.b16 %v2840, %v2838
      %v3009 = vpack.c.b16 %v2843, %v2841
      %v3010 = vpack.c.b16 %v2844, %v2842
      %v3011 = vpack.c.b16 %v2847, %v2845
      %v3012 = vpack.c.b16 %v2848, %v2846
      %v3013 = vpack.c.b16 %v2851, %v2849
      %v3014 = vpack.c.b16 %v2852, %v2850
      %v3015 = vpack.c.b16 %v2855, %v2853
      %v3016 = vpack.c.b16 %v2856, %v2854
      %v3017 = vpack.c.b16 %v2859, %v2857
      %v3018 = vpack.c.b16 %v2860, %v2858
      %v3019 = vpack.c.b16 %v2863, %v2861
      %v3020 = vpack.c.b16 %v2864, %v2862
      %v3021 = vpack.c.b16 %v2867, %v2865
      %v3022 = vpack.c.b16 %v2868, %v2866
      %v3023 = vpack.c.b16 %v2871, %v2869
      %v3024 = vpack.c.b16 %v2872, %v2870
      %v3025 = vpack.c.b16 %v2875, %v2873
      %v3026 = vpack.c.b16 %v2876, %v2874
      %v3027 = vpack.c.b16 %v2879, %v2877
      %v3028 = vpack.c.b16 %v2880, %v2878
      %v3029 = vpack.c.b16 %v2883, %v2881
      %v3030 = vpack.c.b16 %v2884, %v2882
      %v3031 = vpack.c.b16 %v2887, %v2885
      %v3032 = vpack.c.b16 %v2888, %v2886
      %v3033 = vpack.c.b16 %v2891, %v2889
      %v3034 = vpack.c.b16 %v2892, %v2890
      %v3035 = vpack.c.b16 %v2895, %v2893
      %v3036 = vpack.c.b16 %v2896, %v2894
      %v3037 = vpack.c.b16 %v2899, %v2897
      %v3038 = vpack.c.b16 %v2900, %v2898
      %v3039 = vpack.c.b16 %v2903, %v2901
      %v3040 = vpack.c.b16 %v2904, %v2902
      %v3041 = vpack.c.b16 %v2907, %v2905
      %v3042 = vpack.c.b16 %v2908, %v2906
      %v3043 = vpack.c.b16 %v2911, %v2909
      %v3044 = vpack.c.b16 %v2912, %v2910
      %v3045 = vpack.c.b16 %v2915, %v2913
      %v3046 = vpack.c.b16 %v2916, %v2914
      %v3047 = vpack.c.b16 %v2919, %v2917
      %v3048 = vpack.c.b16 %v2920, %v2918
      %3177 = vmatpush.bf16.msra.mxu0 %v2935
      %3178 = vmatpush.bf16.msra.mxu0 %v2933
      %3179 = vmatpush.bf16.msra.mxu0 %v2931
      %3180 = vmatpush.bf16.msra.mxu0 %v2929
      %3181 = vmatpush.bf16.msra.mxu0 %v2927
      %3182 = vmatpush.bf16.msra.mxu0 %v2925
      %3183 = vmatpush.bf16.msra.mxu0 %v2923
      %3184 = vmatpush.bf16.msra.mxu0 %v2921
      %3185 = vmatmul.bf16.gmra.mxu0 %v2271
      %v3186 = vpop.f32.mrf.mxu0
      %v3187 = vadd.f32 %v2533, %v3186
      %v3188 = vpop.f32.mrf.mxu0
      %v3189 = vadd.f32 %v2533, %v3188
      %3190 = vmatmul.bf16.gmra.mxu0 %v2273
      %v3191 = vpop.f32.mrf.mxu0
      %v3192 = vadd.f32 %v2533, %v3191
      %v3193 = vpop.f32.mrf.mxu0
      %v3194 = vadd.f32 %v2533, %v3193
      %3195 = vmatmul.bf16.gmra.mxu0 %v2275
      %v3196 = vpop.f32.mrf.mxu0
      %v3197 = vadd.f32 %v2533, %v3196
      %v3198 = vpop.f32.mrf.mxu0
      %v3199 = vadd.f32 %v2533, %v3198
      %3200 = vmatmul.bf16.gmra.mxu0 %v2277
      %v3201 = vpop.f32.mrf.mxu0
      %v3202 = vadd.f32 %v2533, %v3201
      %v3203 = vpop.f32.mrf.mxu0
      %v3204 = vadd.f32 %v2533, %v3203
      %3205 = vmatmul.bf16.gmra.mxu0 %v2279
      %v3206 = vpop.f32.mrf.mxu0
      %v3207 = vadd.f32 %v2533, %v3206
      %v3208 = vpop.f32.mrf.mxu0
      %v3209 = vadd.f32 %v2533, %v3208
      %3210 = vmatmul.bf16.gmra.mxu0 %v2281
      %v3211 = vpop.f32.mrf.mxu0
      %v3212 = vadd.f32 %v2533, %v3211
      %v3213 = vpop.f32.mrf.mxu0
      %v3214 = vadd.f32 %v2533, %v3213
      %3215 = vmatmul.bf16.gmra.mxu0 %v2283
      %v3216 = vpop.f32.mrf.mxu0
      %v3217 = vadd.f32 %v2533, %v3216
      %v3218 = vpop.f32.mrf.mxu0
      %v3219 = vadd.f32 %v2533, %v3218
      %3220 = vmatmul.bf16.gmra.mxu0 %v2285
      %v3221 = vpop.f32.mrf.mxu0
      %v3222 = vadd.f32 %v2533, %v3221
      %v3223 = vpop.f32.mrf.mxu0
      %v3224 = vadd.f32 %v2533, %v3223
      %3225 = vdwg.mxu0
      %3226 = vmatpush.bf16.msra.mxu0 %v2951
      %3227 = vmatpush.bf16.msra.mxu0 %v2949
      %3228 = vmatpush.bf16.msra.mxu0 %v2947
      %3229 = vmatpush.bf16.msra.mxu0 %v2945
      %3230 = vmatpush.bf16.msra.mxu0 %v2943
      %3231 = vmatpush.bf16.msra.mxu0 %v2941
      %3232 = vmatpush.bf16.msra.mxu0 %v2939
      %3233 = vmatpush.bf16.msra.mxu0 %v2937
      %3234 = vmatmul.bf16.gmra.mxu0 %v2272
      %v3235 = vpop.f32.mrf.mxu0
      %v3236 = vadd.f32 %v3187, %v3235
      %v3237 = vpop.f32.mrf.mxu0
      %v3238 = vadd.f32 %v3189, %v3237
      %3239 = vmatmul.bf16.gmra.mxu0 %v2274
      %v3240 = vpop.f32.mrf.mxu0
      %v3241 = vadd.f32 %v3192, %v3240
      %v3242 = vpop.f32.mrf.mxu0
      %v3243 = vadd.f32 %v3194, %v3242
      %3244 = vmatmul.bf16.gmra.mxu0 %v2276
      %v3245 = vpop.f32.mrf.mxu0
      %v3246 = vadd.f32 %v3197, %v3245
      %v3247 = vpop.f32.mrf.mxu0
      %v3248 = vadd.f32 %v3199, %v3247
      %3249 = vmatmul.bf16.gmra.mxu0 %v2278
      %v3250 = vpop.f32.mrf.mxu0
      %v3251 = vadd.f32 %v3202, %v3250
      %v3252 = vpop.f32.mrf.mxu0
      %v3253 = vadd.f32 %v3204, %v3252
      %3254 = vmatmul.bf16.gmra.mxu0 %v2280
      %v3255 = vpop.f32.mrf.mxu0
      %v3256 = vadd.f32 %v3207, %v3255
      %v3257 = vpop.f32.mrf.mxu0
      %v3258 = vadd.f32 %v3209, %v3257
      %3259 = vmatmul.bf16.gmra.mxu0 %v2282
      %v3260 = vpop.f32.mrf.mxu0
      %v3261 = vadd.f32 %v3212, %v3260
      %v3262 = vpop.f32.mrf.mxu0
      %v3263 = vadd.f32 %v3214, %v3262
      %3264 = vmatmul.bf16.gmra.mxu0 %v2284
      %v3265 = vpop.f32.mrf.mxu0
      %v3266 = vadd.f32 %v3217, %v3265
      %v3267 = vpop.f32.mrf.mxu0
      %v3268 = vadd.f32 %v3219, %v3267
      %3269 = vmatmul.bf16.gmra.mxu0 %v2286
      %v3270 = vpop.f32.mrf.mxu0
      %v3271 = vadd.f32 %v3222, %v3270
      %v3272 = vpop.f32.mrf.mxu0
      %v3273 = vadd.f32 %v3224, %v3272
      %3274 = vdwg.mxu0
      %3275 = vmatpush.bf16.msra.mxu0 %v2967
      %3276 = vmatpush.bf16.msra.mxu0 %v2965
      %3277 = vmatpush.bf16.msra.mxu0 %v2963
      %3278 = vmatpush.bf16.msra.mxu0 %v2961
      %3279 = vmatpush.bf16.msra.mxu0 %v2959
      %3280 = vmatpush.bf16.msra.mxu0 %v2957
      %3281 = vmatpush.bf16.msra.mxu0 %v2955
      %3282 = vmatpush.bf16.msra.mxu0 %v2953
      %3283 = vmatmul.bf16.gmra.mxu0 %v2351
      %v3284 = vpop.f32.mrf.mxu0
      %v3285 = vadd.f32 %v3236, %v3284
      %v3286 = vpop.f32.mrf.mxu0
      %v3287 = vadd.f32 %v3238, %v3286
      %3288 = vmatmul.bf16.gmra.mxu0 %v2353
      %v3289 = vpop.f32.mrf.mxu0
      %v3290 = vadd.f32 %v3241, %v3289
      %v3291 = vpop.f32.mrf.mxu0
      %v3292 = vadd.f32 %v3243, %v3291
      %3293 = vmatmul.bf16.gmra.mxu0 %v2355
      %v3294 = vpop.f32.mrf.mxu0
      %v3295 = vadd.f32 %v3246, %v3294
      %v3296 = vpop.f32.mrf.mxu0
      %v3297 = vadd.f32 %v3248, %v3296
      %3298 = vmatmul.bf16.gmra.mxu0 %v2357
      %v3299 = vpop.f32.mrf.mxu0
      %v3300 = vadd.f32 %v3251, %v3299
      %v3301 = vpop.f32.mrf.mxu0
      %v3302 = vadd.f32 %v3253, %v3301
      %3303 = vmatmul.bf16.gmra.mxu0 %v2359
      %v3304 = vpop.f32.mrf.mxu0
      %v3305 = vadd.f32 %v3256, %v3304
      %v3306 = vpop.f32.mrf.mxu0
      %v3307 = vadd.f32 %v3258, %v3306
      %3308 = vmatmul.bf16.gmra.mxu0 %v2361
      %v3309 = vpop.f32.mrf.mxu0
      %v3310 = vadd.f32 %v3261, %v3309
      %v3311 = vpop.f32.mrf.mxu0
      %v3312 = vadd.f32 %v3263, %v3311
      %3313 = vmatmul.bf16.gmra.mxu0 %v2363
      %v3314 = vpop.f32.mrf.mxu0
      %v3315 = vadd.f32 %v3266, %v3314
      %v3316 = vpop.f32.mrf.mxu0
      %v3317 = vadd.f32 %v3268, %v3316
      %3318 = vmatmul.bf16.gmra.mxu0 %v2365
      %v3319 = vpop.f32.mrf.mxu0
      %v3320 = vadd.f32 %v3271, %v3319
      %v3321 = vpop.f32.mrf.mxu0
      %v3322 = vadd.f32 %v3273, %v3321
      %3323 = vdwg.mxu0
      %3324 = vmatpush.bf16.msra.mxu0 %v2983
      %3325 = vmatpush.bf16.msra.mxu0 %v2981
      %3326 = vmatpush.bf16.msra.mxu0 %v2979
      %3327 = vmatpush.bf16.msra.mxu0 %v2977
      %3328 = vmatpush.bf16.msra.mxu0 %v2975
      %3329 = vmatpush.bf16.msra.mxu0 %v2973
      %3330 = vmatpush.bf16.msra.mxu0 %v2971
      %3331 = vmatpush.bf16.msra.mxu0 %v2969
      %3332 = vmatmul.bf16.gmra.mxu0 %v2352
      %v3333 = vpop.f32.mrf.mxu0
      %v3334 = vadd.f32 %v3285, %v3333
      %v3335 = vpop.f32.mrf.mxu0
      %v3336 = vadd.f32 %v3287, %v3335
      %3337 = vmatmul.bf16.gmra.mxu0 %v2354
      %v3338 = vpop.f32.mrf.mxu0
      %v3339 = vadd.f32 %v3290, %v3338
      %v3340 = vpop.f32.mrf.mxu0
      %v3341 = vadd.f32 %v3292, %v3340
      %3342 = vmatmul.bf16.gmra.mxu0 %v2356
      %v3343 = vpop.f32.mrf.mxu0
      %v3344 = vadd.f32 %v3295, %v3343
      %v3345 = vpop.f32.mrf.mxu0
      %v3346 = vadd.f32 %v3297, %v3345
      %3347 = vmatmul.bf16.gmra.mxu0 %v2358
      %v3348 = vpop.f32.mrf.mxu0
      %v3349 = vadd.f32 %v3300, %v3348
      %v3350 = vpop.f32.mrf.mxu0
      %v3351 = vadd.f32 %v3302, %v3350
      %3352 = vmatmul.bf16.gmra.mxu0 %v2360
      %v3353 = vpop.f32.mrf.mxu0
      %v3354 = vadd.f32 %v3305, %v3353
      %v3355 = vpop.f32.mrf.mxu0
      %v3356 = vadd.f32 %v3307, %v3355
      %3357 = vmatmul.bf16.gmra.mxu0 %v2362
      %v3358 = vpop.f32.mrf.mxu0
      %v3359 = vadd.f32 %v3310, %v3358
      %v3360 = vpop.f32.mrf.mxu0
      %v3361 = vadd.f32 %v3312, %v3360
      %3362 = vmatmul.bf16.gmra.mxu0 %v2364
      %v3363 = vpop.f32.mrf.mxu0
      %v3364 = vadd.f32 %v3315, %v3363
      %v3365 = vpop.f32.mrf.mxu0
      %v3366 = vadd.f32 %v3317, %v3365
      %3367 = vmatmul.bf16.gmra.mxu0 %v2366
      %v3368 = vpop.f32.mrf.mxu0
      %v3369 = vadd.f32 %v3320, %v3368
      %v3370 = vpop.f32.mrf.mxu0
      %v3371 = vadd.f32 %v3322, %v3370
      %3372 = vdwg.mxu0
      %3373 = vmatpush.bf16.msra.mxu0 %v2999
      %3374 = vmatpush.bf16.msra.mxu0 %v2997
      %3375 = vmatpush.bf16.msra.mxu0 %v2995
      %3376 = vmatpush.bf16.msra.mxu0 %v2993
      %3377 = vmatpush.bf16.msra.mxu0 %v2991
      %3378 = vmatpush.bf16.msra.mxu0 %v2989
      %3379 = vmatpush.bf16.msra.mxu0 %v2987
      %3380 = vmatpush.bf16.msra.mxu0 %v2985
      %3381 = vmatmul.bf16.gmra.mxu0 %v2273
      %v3382 = vpop.f32.mrf.mxu0
      %v3383 = vadd.f32 %v3334, %v3382
      %v3384 = vpop.f32.mrf.mxu0
      %v3385 = vadd.f32 %v3336, %v3384
      %3386 = vmatmul.bf16.gmra.mxu0 %v2275
      %v3387 = vpop.f32.mrf.mxu0
      %v3388 = vadd.f32 %v3339, %v3387
      %v3389 = vpop.f32.mrf.mxu0
      %v3390 = vadd.f32 %v3341, %v3389
      %3391 = vmatmul.bf16.gmra.mxu0 %v2277
      %v3392 = vpop.f32.mrf.mxu0
      %v3393 = vadd.f32 %v3344, %v3392
      %v3394 = vpop.f32.mrf.mxu0
      %v3395 = vadd.f32 %v3346, %v3394
      %3396 = vmatmul.bf16.gmra.mxu0 %v2279
      %v3397 = vpop.f32.mrf.mxu0
      %v3398 = vadd.f32 %v3349, %v3397
      %v3399 = vpop.f32.mrf.mxu0
      %v3400 = vadd.f32 %v3351, %v3399
      %3401 = vmatmul.bf16.gmra.mxu0 %v2281
      %v3402 = vpop.f32.mrf.mxu0
      %v3403 = vadd.f32 %v3354, %v3402
      %v3404 = vpop.f32.mrf.mxu0
      %v3405 = vadd.f32 %v3356, %v3404
      %3406 = vmatmul.bf16.gmra.mxu0 %v2283
      %v3407 = vpop.f32.mrf.mxu0
      %v3408 = vadd.f32 %v3359, %v3407
      %v3409 = vpop.f32.mrf.mxu0
      %v3410 = vadd.f32 %v3361, %v3409
      %3411 = vmatmul.bf16.gmra.mxu0 %v2285
      %v3412 = vpop.f32.mrf.mxu0
      %v3413 = vadd.f32 %v3364, %v3412
      %v3414 = vpop.f32.mrf.mxu0
      %v3415 = vadd.f32 %v3366, %v3414
      %3416 = vmatmul.bf16.gmra.mxu0 %v2389
      %v3417 = vpop.f32.mrf.mxu0
      %v3418 = vadd.f32 %v3369, %v3417
      %v3419 = vpop.f32.mrf.mxu0
      %v3420 = vadd.f32 %v3371, %v3419
      %3421 = vdwg.mxu0
      %3422 = vmatpush.bf16.msra.mxu0 %v3015
      %3423 = vmatpush.bf16.msra.mxu0 %v3013
      %3424 = vmatpush.bf16.msra.mxu0 %v3011
      %3425 = vmatpush.bf16.msra.mxu0 %v3009
      %3426 = vmatpush.bf16.msra.mxu0 %v3007
      %3427 = vmatpush.bf16.msra.mxu0 %v3005
      %3428 = vmatpush.bf16.msra.mxu0 %v3003
      %3429 = vmatpush.bf16.msra.mxu0 %v3001
      %3430 = vmatmul.bf16.gmra.mxu0 %v2274
      %v3431 = vpop.f32.mrf.mxu0
      %v3432 = vadd.f32 %v3383, %v3431
      %v3433 = vpop.f32.mrf.mxu0
      %v3434 = vadd.f32 %v3385, %v3433
      %3435 = vmatmul.bf16.gmra.mxu0 %v2276
      %v3436 = vpop.f32.mrf.mxu0
      %v3437 = vadd.f32 %v3388, %v3436
      %v3438 = vpop.f32.mrf.mxu0
      %v3439 = vadd.f32 %v3390, %v3438
      %3440 = vmatmul.bf16.gmra.mxu0 %v2278
      %v3441 = vpop.f32.mrf.mxu0
      %v3442 = vadd.f32 %v3393, %v3441
      %v3443 = vpop.f32.mrf.mxu0
      %v3444 = vadd.f32 %v3395, %v3443
      %3445 = vmatmul.bf16.gmra.mxu0 %v2280
      %v3446 = vpop.f32.mrf.mxu0
      %v3447 = vadd.f32 %v3398, %v3446
      %v3448 = vpop.f32.mrf.mxu0
      %v3449 = vadd.f32 %v3400, %v3448
      %3450 = vmatmul.bf16.gmra.mxu0 %v2282
      %v3451 = vpop.f32.mrf.mxu0
      %v3452 = vadd.f32 %v3403, %v3451
      %v3453 = vpop.f32.mrf.mxu0
      %v3454 = vadd.f32 %v3405, %v3453
      %3455 = vmatmul.bf16.gmra.mxu0 %v2284
      %v3456 = vpop.f32.mrf.mxu0
      %v3457 = vadd.f32 %v3408, %v3456
      %v3458 = vpop.f32.mrf.mxu0
      %v3459 = vadd.f32 %v3410, %v3458
      %3460 = vmatmul.bf16.gmra.mxu0 %v2286
      %v3461 = vpop.f32.mrf.mxu0
      %v3462 = vadd.f32 %v3413, %v3461
      %v3463 = vpop.f32.mrf.mxu0
      %v3464 = vadd.f32 %v3415, %v3463
      %3465 = vmatmul.bf16.gmra.mxu0 %v2390
      %v3466 = vpop.f32.mrf.mxu0
      %v3467 = vadd.f32 %v3418, %v3466
      %v3468 = vpop.f32.mrf.mxu0
      %v3469 = vadd.f32 %v3420, %v3468
      %3470 = vdwg.mxu0
      %3471 = vmatpush.bf16.msra.mxu0 %v3031
      %3472 = vmatpush.bf16.msra.mxu0 %v3029
      %3473 = vmatpush.bf16.msra.mxu0 %v3027
      %3474 = vmatpush.bf16.msra.mxu0 %v3025
      %3475 = vmatpush.bf16.msra.mxu0 %v3023
      %3476 = vmatpush.bf16.msra.mxu0 %v3021
      %3477 = vmatpush.bf16.msra.mxu0 %v3019
      %3478 = vmatpush.bf16.msra.mxu0 %v3017
      %3479 = vmatmul.bf16.gmra.mxu0 %v2353
      %v3480 = vpop.f32.mrf.mxu0
      %v3481 = vadd.f32 %v3432, %v3480
      %v3482 = vpop.f32.mrf.mxu0
      %v3483 = vadd.f32 %v3434, %v3482
      %3484 = vmatmul.bf16.gmra.mxu0 %v2355
      %v3485 = vpop.f32.mrf.mxu0
      %v3486 = vadd.f32 %v3437, %v3485
      %v3487 = vpop.f32.mrf.mxu0
      %v3488 = vadd.f32 %v3439, %v3487
      %3489 = vmatmul.bf16.gmra.mxu0 %v2357
      %v3490 = vpop.f32.mrf.mxu0
      %v3491 = vadd.f32 %v3442, %v3490
      %v3492 = vpop.f32.mrf.mxu0
      %v3493 = vadd.f32 %v3444, %v3492
      %3494 = vmatmul.bf16.gmra.mxu0 %v2359
      %v3495 = vpop.f32.mrf.mxu0
      %v3496 = vadd.f32 %v3447, %v3495
      %v3497 = vpop.f32.mrf.mxu0
      %v3498 = vadd.f32 %v3449, %v3497
      %3499 = vmatmul.bf16.gmra.mxu0 %v2361
      %v3500 = vpop.f32.mrf.mxu0
      %v3501 = vadd.f32 %v3452, %v3500
      %v3502 = vpop.f32.mrf.mxu0
      %v3503 = vadd.f32 %v3454, %v3502
      %3504 = vmatmul.bf16.gmra.mxu0 %v2363
      %v3505 = vpop.f32.mrf.mxu0
      %v3506 = vadd.f32 %v3457, %v3505
      %v3507 = vpop.f32.mrf.mxu0
      %v3508 = vadd.f32 %v3459, %v3507
      %3509 = vmatmul.bf16.gmra.mxu0 %v2365
      %v3510 = vpop.f32.mrf.mxu0
      %v3511 = vadd.f32 %v3462, %v3510
      %v3512 = vpop.f32.mrf.mxu0
      %v3513 = vadd.f32 %v3464, %v3512
      %3514 = vmatmul.bf16.gmra.mxu0 %v2399
      %v3515 = vpop.f32.mrf.mxu0
      %v3516 = vadd.f32 %v3467, %v3515
      %v3517 = vpop.f32.mrf.mxu0
      %v3518 = vadd.f32 %v3469, %v3517
      %3519 = vdwg.mxu0
      %3520 = vmatpush.bf16.msra.mxu0 %v3047
      %3521 = vmatpush.bf16.msra.mxu0 %v3045
      %3522 = vmatpush.bf16.msra.mxu0 %v3043
      %3523 = vmatpush.bf16.msra.mxu0 %v3041
      %3524 = vmatpush.bf16.msra.mxu0 %v3039
      %3525 = vmatpush.bf16.msra.mxu0 %v3037
      %3526 = vmatpush.bf16.msra.mxu0 %v3035
      %3527 = vmatpush.bf16.msra.mxu0 %v3033
      %3528 = vmatmul.bf16.gmra.mxu0 %v2354
      %v3529 = vpop.f32.mrf.mxu0
      %v3530 = vadd.f32 %v3481, %v3529
      %v3531 = vpop.f32.mrf.mxu0
      %v3532 = vadd.f32 %v3483, %v3531
      %3533 = vmatmul.bf16.gmra.mxu0 %v2356
      %v3534 = vpop.f32.mrf.mxu0
      %v3535 = vadd.f32 %v3486, %v3534
      %v3536 = vpop.f32.mrf.mxu0
      %v3537 = vadd.f32 %v3488, %v3536
      %3538 = vmatmul.bf16.gmra.mxu0 %v2358
      %v3539 = vpop.f32.mrf.mxu0
      %v3540 = vadd.f32 %v3491, %v3539
      %v3541 = vpop.f32.mrf.mxu0
      %v3542 = vadd.f32 %v3493, %v3541
      %3543 = vmatmul.bf16.gmra.mxu0 %v2360
      %v3544 = vpop.f32.mrf.mxu0
      %v3545 = vadd.f32 %v3496, %v3544
      %v3546 = vpop.f32.mrf.mxu0
      %v3547 = vadd.f32 %v3498, %v3546
      %3548 = vmatmul.bf16.gmra.mxu0 %v2362
      %v3549 = vpop.f32.mrf.mxu0
      %v3550 = vadd.f32 %v3501, %v3549
      %v3551 = vpop.f32.mrf.mxu0
      %v3552 = vadd.f32 %v3503, %v3551
      %3553 = vmatmul.bf16.gmra.mxu0 %v2364
      %v3554 = vpop.f32.mrf.mxu0
      %v3555 = vadd.f32 %v3506, %v3554
      %v3556 = vpop.f32.mrf.mxu0
      %v3557 = vadd.f32 %v3508, %v3556
      %3558 = vmatmul.bf16.gmra.mxu0 %v2366
      %v3559 = vpop.f32.mrf.mxu0
      %v3560 = vadd.f32 %v3511, %v3559
      %v3561 = vpop.f32.mrf.mxu0
      %v3562 = vadd.f32 %v3513, %v3561
      %3563 = vmatmul.bf16.gmra.mxu0 %v2400
      %v3564 = vpop.f32.mrf.mxu0
      %v3565 = vadd.f32 %v3516, %v3564
      %v3566 = vpop.f32.mrf.mxu0
      %v3567 = vadd.f32 %v3518, %v3566
      %3568 = vdwg.mxu0
      %3569 = vmatpush.bf16.msra.mxu0 %v2936
      %3570 = vmatpush.bf16.msra.mxu0 %v2934
      %3571 = vmatpush.bf16.msra.mxu0 %v2932
      %3572 = vmatpush.bf16.msra.mxu0 %v2930
      %3573 = vmatpush.bf16.msra.mxu0 %v2928
      %3574 = vmatpush.bf16.msra.mxu0 %v2926
      %3575 = vmatpush.bf16.msra.mxu0 %v2924
      %3576 = vmatpush.bf16.msra.mxu0 %v2922
      %3577 = vmatmul.bf16.gmra.mxu0 %v2271
      %v3578 = vpop.f32.mrf.mxu0
      %v3579 = vadd.f32 %v2534, %v3578
      %v3580 = vpop.f32.mrf.mxu0
      %v3581 = vadd.f32 %v2534, %v3580
      %3582 = vmatmul.bf16.gmra.mxu0 %v2273
      %v3583 = vpop.f32.mrf.mxu0
      %v3584 = vadd.f32 %v2534, %v3583
      %v3585 = vpop.f32.mrf.mxu0
      %v3586 = vadd.f32 %v2534, %v3585
      %3587 = vmatmul.bf16.gmra.mxu0 %v2275
      %v3588 = vpop.f32.mrf.mxu0
      %v3589 = vadd.f32 %v2534, %v3588
      %v3590 = vpop.f32.mrf.mxu0
      %v3591 = vadd.f32 %v2534, %v3590
      %3592 = vmatmul.bf16.gmra.mxu0 %v2277
      %v3593 = vpop.f32.mrf.mxu0
      %v3594 = vadd.f32 %v2534, %v3593
      %v3595 = vpop.f32.mrf.mxu0
      %v3596 = vadd.f32 %v2534, %v3595
      %3597 = vmatmul.bf16.gmra.mxu0 %v2279
      %v3598 = vpop.f32.mrf.mxu0
      %v3599 = vadd.f32 %v2534, %v3598
      %v3600 = vpop.f32.mrf.mxu0
      %v3601 = vadd.f32 %v2534, %v3600
      %3602 = vmatmul.bf16.gmra.mxu0 %v2281
      %v3603 = vpop.f32.mrf.mxu0
      %v3604 = vadd.f32 %v2534, %v3603
      %v3605 = vpop.f32.mrf.mxu0
      %v3606 = vadd.f32 %v2534, %v3605
      %3607 = vmatmul.bf16.gmra.mxu0 %v2283
      %v3608 = vpop.f32.mrf.mxu0
      %v3609 = vadd.f32 %v2534, %v3608
      %v3610 = vpop.f32.mrf.mxu0
      %v3611 = vadd.f32 %v2534, %v3610
      %3612 = vmatmul.bf16.gmra.mxu0 %v2285
      %v3613 = vpop.f32.mrf.mxu0
      %v3614 = vadd.f32 %v2534, %v3613
      %v3615 = vpop.f32.mrf.mxu0
      %v3616 = vadd.f32 %v2534, %v3615
      %3617 = vdwg.mxu0
      %3618 = vmatpush.bf16.msra.mxu0 %v2952
      %3619 = vmatpush.bf16.msra.mxu0 %v2950
      %3620 = vmatpush.bf16.msra.mxu0 %v2948
      %3621 = vmatpush.bf16.msra.mxu0 %v2946
      %3622 = vmatpush.bf16.msra.mxu0 %v2944
      %3623 = vmatpush.bf16.msra.mxu0 %v2942
      %3624 = vmatpush.bf16.msra.mxu0 %v2940
      %3625 = vmatpush.bf16.msra.mxu0 %v2938
      %3626 = vmatmul.bf16.gmra.mxu0 %v2272
      %v3627 = vpop.f32.mrf.mxu0
      %v3628 = vadd.f32 %v3579, %v3627
      %v3629 = vpop.f32.mrf.mxu0
      %v3630 = vadd.f32 %v3581, %v3629
      %3631 = vmatmul.bf16.gmra.mxu0 %v2274
      %v3632 = vpop.f32.mrf.mxu0
      %v3633 = vadd.f32 %v3584, %v3632
      %v3634 = vpop.f32.mrf.mxu0
      %v3635 = vadd.f32 %v3586, %v3634
      %3636 = vmatmul.bf16.gmra.mxu0 %v2276
      %v3637 = vpop.f32.mrf.mxu0
      %v3638 = vadd.f32 %v3589, %v3637
      %v3639 = vpop.f32.mrf.mxu0
      %v3640 = vadd.f32 %v3591, %v3639
      %3641 = vmatmul.bf16.gmra.mxu0 %v2278
      %v3642 = vpop.f32.mrf.mxu0
      %v3643 = vadd.f32 %v3594, %v3642
      %v3644 = vpop.f32.mrf.mxu0
      %v3645 = vadd.f32 %v3596, %v3644
      %3646 = vmatmul.bf16.gmra.mxu0 %v2280
      %v3647 = vpop.f32.mrf.mxu0
      %v3648 = vadd.f32 %v3599, %v3647
      %v3649 = vpop.f32.mrf.mxu0
      %v3650 = vadd.f32 %v3601, %v3649
      %3651 = vmatmul.bf16.gmra.mxu0 %v2282
      %v3652 = vpop.f32.mrf.mxu0
      %v3653 = vadd.f32 %v3604, %v3652
      %v3654 = vpop.f32.mrf.mxu0
      %v3655 = vadd.f32 %v3606, %v3654
      %3656 = vmatmul.bf16.gmra.mxu0 %v2284
      %v3657 = vpop.f32.mrf.mxu0
      %v3658 = vadd.f32 %v3609, %v3657
      %v3659 = vpop.f32.mrf.mxu0
      %v3660 = vadd.f32 %v3611, %v3659
      %3661 = vmatmul.bf16.gmra.mxu0 %v2286
      %v3662 = vpop.f32.mrf.mxu0
      %v3663 = vadd.f32 %v3614, %v3662
      %v3664 = vpop.f32.mrf.mxu0
      %v3665 = vadd.f32 %v3616, %v3664
      %3666 = vdwg.mxu0
      %3667 = vmatpush.bf16.msra.mxu0 %v2968
      %3668 = vmatpush.bf16.msra.mxu0 %v2966
      %3669 = vmatpush.bf16.msra.mxu0 %v2964
      %3670 = vmatpush.bf16.msra.mxu0 %v2962
      %3671 = vmatpush.bf16.msra.mxu0 %v2960
      %3672 = vmatpush.bf16.msra.mxu0 %v2958
      %3673 = vmatpush.bf16.msra.mxu0 %v2956
      %3674 = vmatpush.bf16.msra.mxu0 %v2954
      %3675 = vmatmul.bf16.gmra.mxu0 %v2351
      %v3676 = vpop.f32.mrf.mxu0
      %v3677 = vadd.f32 %v3628, %v3676
      %v3678 = vpop.f32.mrf.mxu0
      %v3679 = vadd.f32 %v3630, %v3678
      %3680 = vmatmul.bf16.gmra.mxu0 %v2353
      %v3681 = vpop.f32.mrf.mxu0
      %v3682 = vadd.f32 %v3633, %v3681
      %v3683 = vpop.f32.mrf.mxu0
      %v3684 = vadd.f32 %v3635, %v3683
      %3685 = vmatmul.bf16.gmra.mxu0 %v2355
      %v3686 = vpop.f32.mrf.mxu0
      %v3687 = vadd.f32 %v3638, %v3686
      %v3688 = vpop.f32.mrf.mxu0
      %v3689 = vadd.f32 %v3640, %v3688
      %3690 = vmatmul.bf16.gmra.mxu0 %v2357
      %v3691 = vpop.f32.mrf.mxu0
      %v3692 = vadd.f32 %v3643, %v3691
      %v3693 = vpop.f32.mrf.mxu0
      %v3694 = vadd.f32 %v3645, %v3693
      %3695 = vmatmul.bf16.gmra.mxu0 %v2359
      %v3696 = vpop.f32.mrf.mxu0
      %v3697 = vadd.f32 %v3648, %v3696
      %v3698 = vpop.f32.mrf.mxu0
      %v3699 = vadd.f32 %v3650, %v3698
      %3700 = vmatmul.bf16.gmra.mxu0 %v2361
      %v3701 = vpop.f32.mrf.mxu0
      %v3702 = vadd.f32 %v3653, %v3701
      %v3703 = vpop.f32.mrf.mxu0
      %v3704 = vadd.f32 %v3655, %v3703
      %3705 = vmatmul.bf16.gmra.mxu0 %v2363
      %v3706 = vpop.f32.mrf.mxu0
      %v3707 = vadd.f32 %v3658, %v3706
      %v3708 = vpop.f32.mrf.mxu0
      %v3709 = vadd.f32 %v3660, %v3708
      %3710 = vmatmul.bf16.gmra.mxu0 %v2365
      %v3711 = vpop.f32.mrf.mxu0
      %v3712 = vadd.f32 %v3663, %v3711
      %v3713 = vpop.f32.mrf.mxu0
      %v3714 = vadd.f32 %v3665, %v3713
      %3715 = vdwg.mxu0
      %3716 = vmatpush.bf16.msra.mxu0 %v2984
      %3717 = vmatpush.bf16.msra.mxu0 %v2982
      %3718 = vmatpush.bf16.msra.mxu0 %v2980
      %3719 = vmatpush.bf16.msra.mxu0 %v2978
      %3720 = vmatpush.bf16.msra.mxu0 %v2976
      %3721 = vmatpush.bf16.msra.mxu0 %v2974
      %3722 = vmatpush.bf16.msra.mxu0 %v2972
      %3723 = vmatpush.bf16.msra.mxu0 %v2970
      %3724 = vmatmul.bf16.gmra.mxu0 %v2352
      %v3725 = vpop.f32.mrf.mxu0
      %v3726 = vadd.f32 %v3677, %v3725
      %v3727 = vpop.f32.mrf.mxu0
      %v3728 = vadd.f32 %v3679, %v3727
      %3729 = vmatmul.bf16.gmra.mxu0 %v2354
      %v3730 = vpop.f32.mrf.mxu0
      %v3731 = vadd.f32 %v3682, %v3730
      %v3732 = vpop.f32.mrf.mxu0
      %v3733 = vadd.f32 %v3684, %v3732
      %3734 = vmatmul.bf16.gmra.mxu0 %v2356
      %v3735 = vpop.f32.mrf.mxu0
      %v3736 = vadd.f32 %v3687, %v3735
      %v3737 = vpop.f32.mrf.mxu0
      %v3738 = vadd.f32 %v3689, %v3737
      %3739 = vmatmul.bf16.gmra.mxu0 %v2358
      %v3740 = vpop.f32.mrf.mxu0
      %v3741 = vadd.f32 %v3692, %v3740
      %v3742 = vpop.f32.mrf.mxu0
      %v3743 = vadd.f32 %v3694, %v3742
      %3744 = vmatmul.bf16.gmra.mxu0 %v2360
      %v3745 = vpop.f32.mrf.mxu0
      %v3746 = vadd.f32 %v3697, %v3745
      %v3747 = vpop.f32.mrf.mxu0
      %v3748 = vadd.f32 %v3699, %v3747
      %3749 = vmatmul.bf16.gmra.mxu0 %v2362
      %v3750 = vpop.f32.mrf.mxu0
      %v3751 = vadd.f32 %v3702, %v3750
      %v3752 = vpop.f32.mrf.mxu0
      %v3753 = vadd.f32 %v3704, %v3752
      %3754 = vmatmul.bf16.gmra.mxu0 %v2364
      %v3755 = vpop.f32.mrf.mxu0
      %v3756 = vadd.f32 %v3707, %v3755
      %v3757 = vpop.f32.mrf.mxu0
      %v3758 = vadd.f32 %v3709, %v3757
      %3759 = vmatmul.bf16.gmra.mxu0 %v2366
      %v3760 = vpop.f32.mrf.mxu0
      %v3761 = vadd.f32 %v3712, %v3760
      %v3762 = vpop.f32.mrf.mxu0
      %v3763 = vadd.f32 %v3714, %v3762
      %3764 = vdwg.mxu0
      %3765 = vmatpush.bf16.msra.mxu0 %v3000
      %3766 = vmatpush.bf16.msra.mxu0 %v2998
      %3767 = vmatpush.bf16.msra.mxu0 %v2996
      %3768 = vmatpush.bf16.msra.mxu0 %v2994
      %3769 = vmatpush.bf16.msra.mxu0 %v2992
      %3770 = vmatpush.bf16.msra.mxu0 %v2990
      %3771 = vmatpush.bf16.msra.mxu0 %v2988
      %3772 = vmatpush.bf16.msra.mxu0 %v2986
      %3773 = vmatmul.bf16.gmra.mxu0 %v2273
      %v3774 = vpop.f32.mrf.mxu0
      %v3775 = vadd.f32 %v3726, %v3774
      %v3776 = vpop.f32.mrf.mxu0
      %v3777 = vadd.f32 %v3728, %v3776
      %3778 = vmatmul.bf16.gmra.mxu0 %v2275
      %v3779 = vpop.f32.mrf.mxu0
      %v3780 = vadd.f32 %v3731, %v3779
      %v3781 = vpop.f32.mrf.mxu0
      %v3782 = vadd.f32 %v3733, %v3781
      %3783 = vmatmul.bf16.gmra.mxu0 %v2277
      %v3784 = vpop.f32.mrf.mxu0
      %v3785 = vadd.f32 %v3736, %v3784
      %v3786 = vpop.f32.mrf.mxu0
      %v3787 = vadd.f32 %v3738, %v3786
      %3788 = vmatmul.bf16.gmra.mxu0 %v2279
      %v3789 = vpop.f32.mrf.mxu0
      %v3790 = vadd.f32 %v3741, %v3789
      %v3791 = vpop.f32.mrf.mxu0
      %v3792 = vadd.f32 %v3743, %v3791
      %3793 = vmatmul.bf16.gmra.mxu0 %v2281
      %v3794 = vpop.f32.mrf.mxu0
      %v3795 = vadd.f32 %v3746, %v3794
      %v3796 = vpop.f32.mrf.mxu0
      %v3797 = vadd.f32 %v3748, %v3796
      %3798 = vmatmul.bf16.gmra.mxu0 %v2283
      %v3799 = vpop.f32.mrf.mxu0
      %v3800 = vadd.f32 %v3751, %v3799
      %v3801 = vpop.f32.mrf.mxu0
      %v3802 = vadd.f32 %v3753, %v3801
      %3803 = vmatmul.bf16.gmra.mxu0 %v2285
      %v3804 = vpop.f32.mrf.mxu0
      %v3805 = vadd.f32 %v3756, %v3804
      %v3806 = vpop.f32.mrf.mxu0
      %v3807 = vadd.f32 %v3758, %v3806
      %3808 = vmatmul.bf16.gmra.mxu0 %v2389
      %v3809 = vpop.f32.mrf.mxu0
      %v3810 = vadd.f32 %v3761, %v3809
      %v3811 = vpop.f32.mrf.mxu0
      %v3812 = vadd.f32 %v3763, %v3811
      %3813 = vdwg.mxu0
      %3814 = vmatpush.bf16.msra.mxu0 %v3016
      %3815 = vmatpush.bf16.msra.mxu0 %v3014
      %3816 = vmatpush.bf16.msra.mxu0 %v3012
      %3817 = vmatpush.bf16.msra.mxu0 %v3010
      %3818 = vmatpush.bf16.msra.mxu0 %v3008
      %3819 = vmatpush.bf16.msra.mxu0 %v3006
      %3820 = vmatpush.bf16.msra.mxu0 %v3004
      %3821 = vmatpush.bf16.msra.mxu0 %v3002
      %3822 = vmatmul.bf16.gmra.mxu0 %v2274
      %v3823 = vpop.f32.mrf.mxu0
      %v3824 = vadd.f32 %v3775, %v3823
      %v3825 = vpop.f32.mrf.mxu0
      %v3826 = vadd.f32 %v3777, %v3825
      %3827 = vmatmul.bf16.gmra.mxu0 %v2276
      %v3828 = vpop.f32.mrf.mxu0
      %v3829 = vadd.f32 %v3780, %v3828
      %v3830 = vpop.f32.mrf.mxu0
      %v3831 = vadd.f32 %v3782, %v3830
      %3832 = vmatmul.bf16.gmra.mxu0 %v2278
      %v3833 = vpop.f32.mrf.mxu0
      %v3834 = vadd.f32 %v3785, %v3833
      %v3835 = vpop.f32.mrf.mxu0
      %v3836 = vadd.f32 %v3787, %v3835
      %3837 = vmatmul.bf16.gmra.mxu0 %v2280
      %v3838 = vpop.f32.mrf.mxu0
      %v3839 = vadd.f32 %v3790, %v3838
      %v3840 = vpop.f32.mrf.mxu0
      %v3841 = vadd.f32 %v3792, %v3840
      %3842 = vmatmul.bf16.gmra.mxu0 %v2282
      %v3843 = vpop.f32.mrf.mxu0
      %v3844 = vadd.f32 %v3795, %v3843
      %v3845 = vpop.f32.mrf.mxu0
      %v3846 = vadd.f32 %v3797, %v3845
      %3847 = vmatmul.bf16.gmra.mxu0 %v2284
      %v3848 = vpop.f32.mrf.mxu0
      %v3849 = vadd.f32 %v3800, %v3848
      %v3850 = vpop.f32.mrf.mxu0
      %v3851 = vadd.f32 %v3802, %v3850
      %3852 = vmatmul.bf16.gmra.mxu0 %v2286
      %v3853 = vpop.f32.mrf.mxu0
      %v3854 = vadd.f32 %v3805, %v3853
      %v3855 = vpop.f32.mrf.mxu0
      %v3856 = vadd.f32 %v3807, %v3855
      %3857 = vmatmul.bf16.gmra.mxu0 %v2390
      %v3858 = vpop.f32.mrf.mxu0
      %v3859 = vadd.f32 %v3810, %v3858
      %v3860 = vpop.f32.mrf.mxu0
      %v3861 = vadd.f32 %v3812, %v3860
      %3862 = vdwg.mxu0
      %3863 = vmatpush.bf16.msra.mxu0 %v3032
      %3864 = vmatpush.bf16.msra.mxu0 %v3030
      %3865 = vmatpush.bf16.msra.mxu0 %v3028
      %3866 = vmatpush.bf16.msra.mxu0 %v3026
      %3867 = vmatpush.bf16.msra.mxu0 %v3024
      %3868 = vmatpush.bf16.msra.mxu0 %v3022
      %3869 = vmatpush.bf16.msra.mxu0 %v3020
      %3870 = vmatpush.bf16.msra.mxu0 %v3018
      %3871 = vmatmul.bf16.gmra.mxu0 %v2353
      %v3872 = vpop.f32.mrf.mxu0
      %v3873 = vadd.f32 %v3824, %v3872
      %v3874 = vpop.f32.mrf.mxu0
      %v3875 = vadd.f32 %v3826, %v3874
      %3876 = vmatmul.bf16.gmra.mxu0 %v2355
      %v3877 = vpop.f32.mrf.mxu0
      %v3878 = vadd.f32 %v3829, %v3877
      %v3879 = vpop.f32.mrf.mxu0
      %v3880 = vadd.f32 %v3831, %v3879
      %3881 = vmatmul.bf16.gmra.mxu0 %v2357
      %v3882 = vpop.f32.mrf.mxu0
      %v3883 = vadd.f32 %v3834, %v3882
      %v3884 = vpop.f32.mrf.mxu0
      %v3885 = vadd.f32 %v3836, %v3884
      %3886 = vmatmul.bf16.gmra.mxu0 %v2359
      %v3887 = vpop.f32.mrf.mxu0
      %v3888 = vadd.f32 %v3839, %v3887
      %v3889 = vpop.f32.mrf.mxu0
      %v3890 = vadd.f32 %v3841, %v3889
      %3891 = vmatmul.bf16.gmra.mxu0 %v2361
      %v3892 = vpop.f32.mrf.mxu0
      %v3893 = vadd.f32 %v3844, %v3892
      %v3894 = vpop.f32.mrf.mxu0
      %v3895 = vadd.f32 %v3846, %v3894
      %3896 = vmatmul.bf16.gmra.mxu0 %v2363
      %v3897 = vpop.f32.mrf.mxu0
      %v3898 = vadd.f32 %v3849, %v3897
      %v3899 = vpop.f32.mrf.mxu0
      %v3900 = vadd.f32 %v3851, %v3899
      %3901 = vmatmul.bf16.gmra.mxu0 %v2365
      %v3902 = vpop.f32.mrf.mxu0
      %v3903 = vadd.f32 %v3854, %v3902
      %v3904 = vpop.f32.mrf.mxu0
      %v3905 = vadd.f32 %v3856, %v3904
      %3906 = vmatmul.bf16.gmra.mxu0 %v2399
      %v3907 = vpop.f32.mrf.mxu0
      %v3908 = vadd.f32 %v3859, %v3907
      %v3909 = vpop.f32.mrf.mxu0
      %v3910 = vadd.f32 %v3861, %v3909
      %3911 = vdwg.mxu0
      %3912 = vmatpush.bf16.msra.mxu0 %v3048
      %3913 = vmatpush.bf16.msra.mxu0 %v3046
      %3914 = vmatpush.bf16.msra.mxu0 %v3044
      %3915 = vmatpush.bf16.msra.mxu0 %v3042
      %3916 = vmatpush.bf16.msra.mxu0 %v3040
      %3917 = vmatpush.bf16.msra.mxu0 %v3038
      %3918 = vmatpush.bf16.msra.mxu0 %v3036
      %3919 = vmatpush.bf16.msra.mxu0 %v3034
      %3920 = vmatmul.bf16.gmra.mxu0 %v2354
      %v3921 = vpop.f32.mrf.mxu0
      %v3922 = vadd.f32 %v3873, %v3921
      %v3923 = vpop.f32.mrf.mxu0
      %v3924 = vadd.f32 %v3875, %v3923
      %3925 = vmatmul.bf16.gmra.mxu0 %v2356
      %v3926 = vpop.f32.mrf.mxu0
      %v3927 = vadd.f32 %v3878, %v3926
      %v3928 = vpop.f32.mrf.mxu0
      %v3929 = vadd.f32 %v3880, %v3928
      %3930 = vmatmul.bf16.gmra.mxu0 %v2358
      %v3931 = vpop.f32.mrf.mxu0
      %v3932 = vadd.f32 %v3883, %v3931
      %v3933 = vpop.f32.mrf.mxu0
      %v3934 = vadd.f32 %v3885, %v3933
      %3935 = vmatmul.bf16.gmra.mxu0 %v2360
      %v3936 = vpop.f32.mrf.mxu0
      %v3937 = vadd.f32 %v3888, %v3936
      %v3938 = vpop.f32.mrf.mxu0
      %v3939 = vadd.f32 %v3890, %v3938
      %3940 = vmatmul.bf16.gmra.mxu0 %v2362
      %v3941 = vpop.f32.mrf.mxu0
      %v3942 = vadd.f32 %v3893, %v3941
      %v3943 = vpop.f32.mrf.mxu0
      %v3944 = vadd.f32 %v3895, %v3943
      %3945 = vmatmul.bf16.gmra.mxu0 %v2364
      %v3946 = vpop.f32.mrf.mxu0
      %v3947 = vadd.f32 %v3898, %v3946
      %v3948 = vpop.f32.mrf.mxu0
      %v3949 = vadd.f32 %v3900, %v3948
      %3950 = vmatmul.bf16.gmra.mxu0 %v2366
      %v3951 = vpop.f32.mrf.mxu0
      %v3952 = vadd.f32 %v3903, %v3951
      %v3953 = vpop.f32.mrf.mxu0
      %v3954 = vadd.f32 %v3905, %v3953
      %3955 = vmatmul.bf16.gmra.mxu0 %v2400
      %v3956 = vpop.f32.mrf.mxu0
      %v3957 = vadd.f32 %v3908, %v3956
      %v3958 = vpop.f32.mrf.mxu0
      %v3959 = vadd.f32 %v3910, %v3958
      %3960 = vdwg.mxu0
      %vm3961 = vcmp.ge.f32.partialorder %v3530, 0.0
      %vm3962 = vcmp.ge.f32.partialorder %v3922, 0.0
      %vm3963 = vcmp.ge.f32.partialorder %v3532, 0.0
      %vm3964 = vcmp.ge.f32.partialorder %v3924, 0.0
      %vm3965 = vcmp.ge.f32.partialorder %v3535, 0.0
      %vm3966 = vcmp.ge.f32.partialorder %v3927, 0.0
      %vm3967 = vcmp.ge.f32.partialorder %v3537, 0.0
      %vm3968 = vcmp.ge.f32.partialorder %v3929, 0.0
      %vm3969 = vcmp.ge.f32.partialorder %v3540, 0.0
      %vm3970 = vcmp.ge.f32.partialorder %v3932, 0.0
      %vm3971 = vcmp.ge.f32.partialorder %v3542, 0.0
      %vm3972 = vcmp.ge.f32.partialorder %v3934, 0.0
      %vm3973 = vcmp.ge.f32.partialorder %v3545, 0.0
      %vm3974 = vcmp.ge.f32.partialorder %v3937, 0.0
      %vm3975 = vcmp.ge.f32.partialorder %v3547, 0.0
      %vm3976 = vcmp.ge.f32.partialorder %v3939, 0.0
      %vm3977 = vcmp.ge.f32.partialorder %v3550, 0.0
      %vm3978 = vcmp.ge.f32.partialorder %v3942, 0.0
      %vm3979 = vcmp.ge.f32.partialorder %v3552, 0.0
      %vm3980 = vcmp.ge.f32.partialorder %v3944, 0.0
      %vm3981 = vcmp.ge.f32.partialorder %v3555, 0.0
      %vm3982 = vcmp.ge.f32.partialorder %v3947, 0.0
      %vm3983 = vcmp.ge.f32.partialorder %v3557, 0.0
      %vm3984 = vcmp.ge.f32.partialorder %v3949, 0.0
      %vm3985 = vcmp.ge.f32.partialorder %v3560, 0.0
      %vm3986 = vcmp.ge.f32.partialorder %v3952, 0.0
      %vm3987 = vcmp.ge.f32.partialorder %v3562, 0.0
      %vm3988 = vcmp.ge.f32.partialorder %v3954, 0.0
      %vm3989 = vcmp.ge.f32.partialorder %v3565, 0.0
      %vm3990 = vcmp.ge.f32.partialorder %v3957, 0.0
      %vm3991 = vcmp.ge.f32.partialorder %v3567, 0.0
      %vm3992 = vcmp.ge.f32.partialorder %v3959, 0.0
      %v3993 = vmul.f32 %v3530, 0.2
      %v3994 = vmul.f32 %v3922, 0.2
      %v3995 = vmul.f32 %v3532, 0.2
      %v3996 = vmul.f32 %v3924, 0.2
      %v3997 = vmul.f32 %v3535, 0.2
      %v3998 = vmul.f32 %v3927, 0.2
      %v3999 = vmul.f32 %v3537, 0.2
      %v4000 = vmul.f32 %v3929, 0.2
      %v4001 = vmul.f32 %v3540, 0.2
      %v4002 = vmul.f32 %v3932, 0.2
      %v4003 = vmul.f32 %v3542, 0.2
      %v4004 = vmul.f32 %v3934, 0.2
      %v4005 = vmul.f32 %v3545, 0.2
      %v4006 = vmul.f32 %v3937, 0.2
      %v4007 = vmul.f32 %v3547, 0.2
      %v4008 = vmul.f32 %v3939, 0.2
      %v4009 = vmul.f32 %v3550, 0.2
      %v4010 = vmul.f32 %v3942, 0.2
      %v4011 = vmul.f32 %v3552, 0.2
      %v4012 = vmul.f32 %v3944, 0.2
      %v4013 = vmul.f32 %v3555, 0.2
      %v4014 = vmul.f32 %v3947, 0.2
      %v4015 = vmul.f32 %v3557, 0.2
      %v4016 = vmul.f32 %v3949, 0.2
      %v4017 = vmul.f32 %v3560, 0.2
      %v4018 = vmul.f32 %v3952, 0.2
      %v4019 = vmul.f32 %v3562, 0.2
      %v4020 = vmul.f32 %v3954, 0.2
      %v4021 = vmul.f32 %v3565, 0.2
      %v4022 = vmul.f32 %v3957, 0.2
      %v4023 = vmul.f32 %v3567, 0.2
      %v4024 = vmul.f32 %v3959, 0.2
      %v4025 = vsel %vm3961, %v3530, %v3993
      %v4026 = vsel %vm3962, %v3922, %v3994
      %v4027 = vsel %vm3963, %v3532, %v3995
      %v4028 = vsel %vm3964, %v3924, %v3996
      %v4029 = vsel %vm3965, %v3535, %v3997
      %v4030 = vsel %vm3966, %v3927, %v3998
      %v4031 = vsel %vm3967, %v3537, %v3999
      %v4032 = vsel %vm3968, %v3929, %v4000
      %v4033 = vsel %vm3969, %v3540, %v4001
      %v4034 = vsel %vm3970, %v3932, %v4002
      %v4035 = vsel %vm3971, %v3542, %v4003
      %v4036 = vsel %vm3972, %v3934, %v4004
      %v4037 = vsel %vm3973, %v3545, %v4005
      %v4038 = vsel %vm3974, %v3937, %v4006
      %v4039 = vsel %vm3975, %v3547, %v4007
      %v4040 = vsel %vm3976, %v3939, %v4008
      %v4041 = vsel %vm3977, %v3550, %v4009
      %v4042 = vsel %vm3978, %v3942, %v4010
      %v4043 = vsel %vm3979, %v3552, %v4011
      %v4044 = vsel %vm3980, %v3944, %v4012
      %v4045 = vsel %vm3981, %v3555, %v4013
      %v4046 = vsel %vm3982, %v3947, %v4014
      %v4047 = vsel %vm3983, %v3557, %v4015
      %v4048 = vsel %vm3984, %v3949, %v4016
      %v4049 = vsel %vm3985, %v3560, %v4017
      %v4050 = vsel %vm3986, %v3952, %v4018
      %v4051 = vsel %vm3987, %v3562, %v4019
      %v4052 = vsel %vm3988, %v3954, %v4020
      %v4053 = vsel %vm3989, %v3565, %v4021
      %v4054 = vsel %vm3990, %v3957, %v4022
      %v4055 = vsel %vm3991, %v3567, %v4023
      %v4056 = vsel %vm3992, %v3959, %v4024
      %v4057 = vpack.c.bf16 %v4026, %v4025
      %v4058 = vpack.c.bf16 %v4028, %v4027
      %v4059 = vpack.c.bf16 %v4030, %v4029
      %v4060 = vpack.c.bf16 %v4032, %v4031
      %v4061 = vpack.c.bf16 %v4034, %v4033
      %v4062 = vpack.c.bf16 %v4036, %v4035
      %v4063 = vpack.c.bf16 %v4038, %v4037
      %v4064 = vpack.c.bf16 %v4040, %v4039
      %v4065 = vpack.c.bf16 %v4042, %v4041
      %v4066 = vpack.c.bf16 %v4044, %v4043
      %v4067 = vpack.c.bf16 %v4046, %v4045
      %v4068 = vpack.c.bf16 %v4048, %v4047
      %v4069 = vpack.c.bf16 %v4050, %v4049
      %v4070 = vpack.c.bf16 %v4052, %v4051
      %v4071 = vpack.c.bf16 %v4054, %v4053
      %v4072 = vpack.c.bf16 %v4056, %v4055
      %s4073 = scalar_lea.vmem [#allocation3], 80
      %4074 = vst [vmem:[%s4073] sm:$0xff] %v4057
      %4075 = vst [vmem:[%s4073 + $0x8] sm:$0xff] %v4058
      %4076 = vst [vmem:[%s4073 + $0x10] sm:$0xff] %v4061
      %4077 = vst [vmem:[%s4073 + $0x18] sm:$0xff] %v4062
      %4078 = vst [vmem:[%s4073 + $0x20] sm:$0xff] %v4065
      %4079 = vst [vmem:[%s4073 + $0x28] sm:$0xff] %v4066
      %4080 = vst [vmem:[%s4073 + $0x30] sm:$0xff] %v4069
      %4081 = vst [vmem:[%s4073 + $0x38] sm:$0xff] %v4070
      %4082 = vst [vmem:[#allocation3 + $0x10] sm:$0xff] %v4059
      %4083 = vst [vmem:[#allocation3 + $0x18] sm:$0xff] %v4060
      %4084 = vst [vmem:[#allocation3 + $0x20] sm:$0xff] %v4063
      %4085 = vst [vmem:[#allocation3 + $0x28] sm:$0xff] %v4064
      %4086 = vst [vmem:[#allocation3 + $0x30] sm:$0xff] %v4067
      %4087 = vst [vmem:[#allocation3 + $0x38] sm:$0xff] %v4068
      %4088 = vst [vmem:[#allocation3 + $0x40] sm:$0xff] %v4071
      %4089 = vst [vmem:[#allocation3 + $0x48] sm:$0xff] %v4072
      %4090 = vst [vmem:[#allocation3] sm:$0xff] 0
      %4091 = vst [vmem:[#allocation3 + $0x8] sm:$0xff] 0
      %4092 = vst [vmem:[%s4073 + $0x40] sm:$0xff] 0
      %4093 = vst [vmem:[%s4073 + $0x48] sm:$0xff] 0
      %v4094 = vld [vmem:[#allocation3] sm:$0xff]
      %v4095 = vld [vmem:[#allocation3 + $0x8] sm:$0xff]
      %v4096 = vld [vmem:[#allocation3 + $0x10] sm:$0xff]
      %v4097 = vld [vmem:[#allocation3 + $0x18] sm:$0xff]
      %v4098 = vld [vmem:[#allocation3 + $0x20] sm:$0xff]
      %v4099 = vld [vmem:[#allocation3 + $0x28] sm:$0xff]
      %v4100 = vld [vmem:[#allocation3 + $0x30] sm:$0xff]
      %v4101 = vld [vmem:[#allocation3 + $0x38] sm:$0xff]
      %v4102 = vld [vmem:[%s4073] sm:$0xff]
      %v4103 = vld [vmem:[%s4073 + $0x8] sm:$0xff]
      %v4104 = vld [vmem:[%s4073 + $0x10] sm:$0xff]
      %v4105 = vld [vmem:[%s4073 + $0x18] sm:$0xff]
      %v4106 = vld [vmem:[%s4073 + $0x20] sm:$0xff]
      %v4107 = vld [vmem:[%s4073 + $0x28] sm:$0xff]
      %v4108 = vld [vmem:[%s4073 + $0x30] sm:$0xff]
      %v4109 = vld [vmem:[%s4073 + $0x38] sm:$0xff]
      %v4110 = vld [vmem:[#allocation3 + $0x40] sm:$0xff]
      %v4111 = vld [vmem:[#allocation3 + $0x48] sm:$0xff]
      %v4112 = vld [vmem:[%s4073 + $0x40] sm:$0xff]
      %v4113 = vld [vmem:[%s4073 + $0x48] sm:$0xff]
      %v4122 = vunpack.c.l.b16 %v4094
      %v4123 = vunpack.c.h.b16 %v4094
      %v4124 = vunpack.c.l.b16 %v4095
      %v4125 = vunpack.c.h.b16 %v4095
      %v4126 = vunpack.c.l.b16 %v4096
      %v4127 = vunpack.c.h.b16 %v4096
      %v4128 = vunpack.c.l.b16 %v4097
      %v4129 = vunpack.c.h.b16 %v4097
      %v4130 = vunpack.c.l.b16 %v4098
      %v4131 = vunpack.c.h.b16 %v4098
      %v4132 = vunpack.c.l.b16 %v4099
      %v4133 = vunpack.c.h.b16 %v4099
      %v4134 = vunpack.c.l.b16 %v4100
      %v4135 = vunpack.c.h.b16 %v4100
      %v4136 = vunpack.c.l.b16 %v4101
      %v4137 = vunpack.c.h.b16 %v4101
      %v4138 = vpack.c.b16 %v4124, %v4122
      %v4139 = vpack.c.b16 %v4125, %v4123
      %v4140 = vpack.c.b16 %v4128, %v4126
      %v4141 = vpack.c.b16 %v4129, %v4127
      %v4142 = vpack.c.b16 %v4132, %v4130
      %v4143 = vpack.c.b16 %v4133, %v4131
      %v4144 = vpack.c.b16 %v4136, %v4134
      %v4145 = vpack.c.b16 %v4137, %v4135
      %v4162 = vunpack.c.l.b16 %v4102
      %v4163 = vunpack.c.h.b16 %v4102
      %v4164 = vunpack.c.l.b16 %v4103
      %v4165 = vunpack.c.h.b16 %v4103
      %v4166 = vunpack.c.l.b16 %v4104
      %v4167 = vunpack.c.h.b16 %v4104
      %v4168 = vunpack.c.l.b16 %v4105
      %v4169 = vunpack.c.h.b16 %v4105
      %v4170 = vunpack.c.l.b16 %v4106
      %v4171 = vunpack.c.h.b16 %v4106
      %v4172 = vunpack.c.l.b16 %v4107
      %v4173 = vunpack.c.h.b16 %v4107
      %v4174 = vunpack.c.l.b16 %v4108
      %v4175 = vunpack.c.h.b16 %v4108
      %v4176 = vunpack.c.l.b16 %v4109
      %v4177 = vunpack.c.h.b16 %v4109
      %v4178 = vpack.c.b16 %v4164, %v4162
      %v4179 = vpack.c.b16 %v4165, %v4163
      %v4180 = vpack.c.b16 %v4168, %v4166
      %v4181 = vpack.c.b16 %v4169, %v4167
      %v4182 = vpack.c.b16 %v4172, %v4170
      %v4183 = vpack.c.b16 %v4173, %v4171
      %v4184 = vpack.c.b16 %v4176, %v4174
      %v4185 = vpack.c.b16 %v4177, %v4175
      %v4196 = vunpack.c.l.b16 %v4110
      %v4197 = vunpack.c.h.b16 %v4110
      %v4198 = vunpack.c.l.b16 %v4111
      %v4199 = vunpack.c.h.b16 %v4111
      %v4200 = vpack.c.b16 %v4198, %v4196
      %v4201 = vpack.c.b16 %v4199, %v4197
      %v4206 = vunpack.c.l.b16 %v4112
      %v4207 = vunpack.c.h.b16 %v4112
      %v4208 = vunpack.c.l.b16 %v4113
      %v4209 = vunpack.c.h.b16 %v4113
      %v4210 = vpack.c.b16 %v4208, %v4206
      %v4211 = vpack.c.b16 %v4209, %v4207
      %v4214 = vld [vmem:[%s5] sm:$0xff]
      %v4215 = vld [vmem:[%s5 + $0x8] sm:$0xff]
      %v4216 = vld [vmem:[%s5 + $0x10] sm:$0xff]
      %v4217 = vld [vmem:[%s5 + $0x18] sm:$0xff]
      %v4218 = vld [vmem:[%s5 + $0x20] sm:$0xff]
      %v4219 = vld [vmem:[%s5 + $0x28] sm:$0xff]
      %v4220 = vld [vmem:[%s5 + $0x30] sm:$0xff]
      %v4221 = vld [vmem:[%s5 + $0x38] sm:$0xff]
      %v4222 = vld [vmem:[%s5 + $0x40] sm:$0xff]
      %v4223 = vld [vmem:[%s5 + $0x48] sm:$0xff]
      %v4224 = vld [vmem:[%s5 + $0x50] sm:$0xff]
      %v4225 = vld [vmem:[%s5 + $0x58] sm:$0xff]
      %v4226 = vld [vmem:[%s5 + $0x60] sm:$0xff]
      %v4227 = vld [vmem:[%s5 + $0x68] sm:$0xff]
      %v4228 = vld [vmem:[%s5 + $0x70] sm:$0xff]
      %v4229 = vld [vmem:[%s5 + $0x78] sm:$0xff]
      %v4230 = vld [vmem:[%s5 + $0x80] sm:$0xff]
      %v4231 = vld [vmem:[%s5 + $0x88] sm:$0xff]
      %v4232 = vld [vmem:[%s5 + $0x90] sm:$0xff]
      %v4233 = vld [vmem:[%s5 + $0x98] sm:$0xff]
      %v4234 = vld [vmem:[%s5 + $0xa0] sm:$0xff]
      %v4235 = vld [vmem:[%s5 + $0xa8] sm:$0xff]
      %v4236 = vld [vmem:[%s5 + $0xb0] sm:$0xff]
      %v4237 = vld [vmem:[%s5 + $0xb8] sm:$0xff]
      %v4238 = vld [vmem:[%s5 + $0xc0] sm:$0xff]
      %v4239 = vld [vmem:[%s5 + $0xc8] sm:$0xff]
      %v4240 = vld [vmem:[%s5 + $0xd0] sm:$0xff]
      %v4241 = vld [vmem:[%s5 + $0xd8] sm:$0xff]
      %v4242 = vld [vmem:[%s5 + $0xe0] sm:$0xff]
      %v4243 = vld [vmem:[%s5 + $0xe8] sm:$0xff]
      %v4244 = vld [vmem:[%s5 + $0xf0] sm:$0xff]
      %v4245 = vld [vmem:[%s5 + $0xf8] sm:$0xff]
      %v4246 = vld [vmem:[%s5 + $0x100] sm:$0xff]
      %v4247 = vld [vmem:[%s5 + $0x108] sm:$0xff]
      %v4248 = vld [vmem:[%s5 + $0x110] sm:$0xff]
      %v4249 = vld [vmem:[%s5 + $0x118] sm:$0xff]
      %v4250 = vld [vmem:[%s5 + $0x120] sm:$0xff]
      %v4251 = vld [vmem:[%s5 + $0x128] sm:$0xff]
      %v4252 = vld [vmem:[%s5 + $0x130] sm:$0xff]
      %v4253 = vld [vmem:[%s5 + $0x138] sm:$0xff]
      %v4254 = vld [vmem:[%s5 + $0x140] sm:$0xff]
      %v4255 = vld [vmem:[%s5 + $0x148] sm:$0xff]
      %v4256 = vld [vmem:[%s5 + $0x150] sm:$0xff]
      %v4257 = vld [vmem:[%s5 + $0x158] sm:$0xff]
      %v4258 = vld [vmem:[%s5 + $0x160] sm:$0xff]
      %v4259 = vld [vmem:[%s5 + $0x168] sm:$0xff]
      %v4260 = vld [vmem:[%s5 + $0x170] sm:$0xff]
      %v4261 = vld [vmem:[%s5 + $0x178] sm:$0xff]
      %v4262 = vld [vmem:[%s5 + $0x180] sm:$0xff]
      %v4263 = vld [vmem:[%s5 + $0x188] sm:$0xff]
      %v4264 = vld [vmem:[%s5 + $0x190] sm:$0xff]
      %v4265 = vld [vmem:[%s5 + $0x198] sm:$0xff]
      %v4266 = vld [vmem:[%s5 + $0x1a0] sm:$0xff]
      %v4267 = vld [vmem:[%s5 + $0x1a8] sm:$0xff]
      %v4268 = vld [vmem:[%s5 + $0x1b0] sm:$0xff]
      %v4269 = vld [vmem:[%s5 + $0x1b8] sm:$0xff]
      %v4270 = vld [vmem:[%s5 + $0x1c0] sm:$0xff]
      %v4271 = vld [vmem:[%s5 + $0x1c8] sm:$0xff]
      %v4272 = vld [vmem:[%s5 + $0x1d0] sm:$0xff]
      %v4273 = vld [vmem:[%s5 + $0x1d8] sm:$0xff]
      %v4274 = vld [vmem:[%s5 + $0x1e0] sm:$0xff]
      %v4275 = vld [vmem:[%s5 + $0x1e8] sm:$0xff]
      %v4276 = vld [vmem:[%s5 + $0x1f0] sm:$0xff]
      %v4277 = vld [vmem:[%s5 + $0x1f8] sm:$0xff]
      %v4278 = vld [vmem:[%s5 + $0x200] sm:$0xff]
      %v4279 = vld [vmem:[%s5 + $0x208] sm:$0xff]
      %v4280 = vld [vmem:[%s5 + $0x210] sm:$0xff]
      %v4281 = vld [vmem:[%s5 + $0x218] sm:$0xff]
      %v4282 = vld [vmem:[%s5 + $0x220] sm:$0xff]
      %v4283 = vld [vmem:[%s5 + $0x228] sm:$0xff]
      %v4284 = vld [vmem:[%s5 + $0x230] sm:$0xff]
      %v4285 = vld [vmem:[%s5 + $0x238] sm:$0xff]
      %v4286 = vld [vmem:[%s5 + $0x240] sm:$0xff]
      %v4287 = vld [vmem:[%s5 + $0x248] sm:$0xff]
      %v4288 = vld [vmem:[%s5 + $0x250] sm:$0xff]
      %v4289 = vld [vmem:[%s5 + $0x258] sm:$0xff]
      %v4290 = vld [vmem:[%s5 + $0x260] sm:$0xff]
      %v4291 = vld [vmem:[%s5 + $0x268] sm:$0xff]
      %v4292 = vld [vmem:[%s5 + $0x270] sm:$0xff]
      %v4293 = vld [vmem:[%s5 + $0x278] sm:$0xff]
      %v4294 = vld [vmem:[%s5 + $0x280] sm:$0xff]
      %v4295 = vld [vmem:[%s5 + $0x288] sm:$0xff]
      %v4296 = vld [vmem:[%s5 + $0x290] sm:$0xff]
      %v4297 = vld [vmem:[%s5 + $0x298] sm:$0xff]
      %v4298 = vld [vmem:[%s5 + $0x2a0] sm:$0xff]
      %v4299 = vld [vmem:[%s5 + $0x2a8] sm:$0xff]
      %v4300 = vld [vmem:[%s5 + $0x2b0] sm:$0xff]
      %v4301 = vld [vmem:[%s5 + $0x2b8] sm:$0xff]
      %v4302 = vld [vmem:[%s5 + $0x2c0] sm:$0xff]
      %v4303 = vld [vmem:[%s5 + $0x2c8] sm:$0xff]
      %v4304 = vld [vmem:[%s5 + $0x2d0] sm:$0xff]
      %v4305 = vld [vmem:[%s5 + $0x2d8] sm:$0xff]
      %v4306 = vld [vmem:[%s5 + $0x2e0] sm:$0xff]
      %v4307 = vld [vmem:[%s5 + $0x2e8] sm:$0xff]
      %v4308 = vld [vmem:[%s5 + $0x2f0] sm:$0xff]
      %v4309 = vld [vmem:[%s5 + $0x2f8] sm:$0xff]
      %v4310 = vld [vmem:[%s5 + $0x300] sm:$0xff]
      %v4311 = vld [vmem:[%s5 + $0x308] sm:$0xff]
      %v4312 = vld [vmem:[%s5 + $0x310] sm:$0xff]
      %v4313 = vld [vmem:[%s5 + $0x318] sm:$0xff]
      %v4314 = vld [vmem:[%s5 + $0x320] sm:$0xff]
      %v4315 = vld [vmem:[%s5 + $0x328] sm:$0xff]
      %v4316 = vld [vmem:[%s5 + $0x330] sm:$0xff]
      %v4317 = vld [vmem:[%s5 + $0x338] sm:$0xff]
      %v4318 = vld [vmem:[%s5 + $0x340] sm:$0xff]
      %v4319 = vld [vmem:[%s5 + $0x348] sm:$0xff]
      %v4320 = vld [vmem:[%s5 + $0x350] sm:$0xff]
      %v4321 = vld [vmem:[%s5 + $0x358] sm:$0xff]
      %v4322 = vld [vmem:[%s5 + $0x360] sm:$0xff]
      %v4323 = vld [vmem:[%s5 + $0x368] sm:$0xff]
      %v4324 = vld [vmem:[%s5 + $0x370] sm:$0xff]
      %v4325 = vld [vmem:[%s5 + $0x378] sm:$0xff]
      %v4326 = vld [vmem:[%s5 + $0x380] sm:$0xff]
      %v4327 = vld [vmem:[%s5 + $0x388] sm:$0xff]
      %v4328 = vld [vmem:[%s5 + $0x390] sm:$0xff]
      %v4329 = vld [vmem:[%s5 + $0x398] sm:$0xff]
      %v4330 = vld [vmem:[%s5 + $0x3a0] sm:$0xff]
      %v4331 = vld [vmem:[%s5 + $0x3a8] sm:$0xff]
      %v4332 = vld [vmem:[%s5 + $0x3b0] sm:$0xff]
      %v4333 = vld [vmem:[%s5 + $0x3b8] sm:$0xff]
      %v4334 = vld [vmem:[%s5 + $0x3c0] sm:$0xff]
      %v4335 = vld [vmem:[%s5 + $0x3c8] sm:$0xff]
      %v4336 = vld [vmem:[%s5 + $0x3d0] sm:$0xff]
      %v4337 = vld [vmem:[%s5 + $0x3d8] sm:$0xff]
      %v4338 = vld [vmem:[%s5 + $0x3e0] sm:$0xff]
      %v4339 = vld [vmem:[%s5 + $0x3e8] sm:$0xff]
      %v4340 = vld [vmem:[%s5 + $0x3f0] sm:$0xff]
      %v4341 = vld [vmem:[%s5 + $0x3f8] sm:$0xff]
      %v4342 = vld [vmem:[%s6] sm:$0x3]
      %v4344 = vperm.slane %v4342, 0
      %v4345 = vperm.slane %v4342, 1
      %v4476 = vunpack.c.l.b16 %v4214
      %v4477 = vunpack.c.h.b16 %v4214
      %v4478 = vunpack.c.l.b16 %v4215
      %v4479 = vunpack.c.h.b16 %v4215
      %v4480 = vunpack.c.l.b16 %v4216
      %v4481 = vunpack.c.h.b16 %v4216
      %v4482 = vunpack.c.l.b16 %v4217
      %v4483 = vunpack.c.h.b16 %v4217
      %v4484 = vunpack.c.l.b16 %v4218
      %v4485 = vunpack.c.h.b16 %v4218
      %v4486 = vunpack.c.l.b16 %v4219
      %v4487 = vunpack.c.h.b16 %v4219
      %v4488 = vunpack.c.l.b16 %v4220
      %v4489 = vunpack.c.h.b16 %v4220
      %v4490 = vunpack.c.l.b16 %v4221
      %v4491 = vunpack.c.h.b16 %v4221
      %v4492 = vunpack.c.l.b16 %v4222
      %v4493 = vunpack.c.h.b16 %v4222
      %v4494 = vunpack.c.l.b16 %v4223
      %v4495 = vunpack.c.h.b16 %v4223
      %v4496 = vunpack.c.l.b16 %v4224
      %v4497 = vunpack.c.h.b16 %v4224
      %v4498 = vunpack.c.l.b16 %v4225
      %v4499 = vunpack.c.h.b16 %v4225
      %v4500 = vunpack.c.l.b16 %v4226
      %v4501 = vunpack.c.h.b16 %v4226
      %v4502 = vunpack.c.l.b16 %v4227
      %v4503 = vunpack.c.h.b16 %v4227
      %v4504 = vunpack.c.l.b16 %v4228
      %v4505 = vunpack.c.h.b16 %v4228
      %v4506 = vunpack.c.l.b16 %v4229
      %v4507 = vunpack.c.h.b16 %v4229
      %v4508 = vunpack.c.l.b16 %v4230
      %v4509 = vunpack.c.h.b16 %v4230
      %v4510 = vunpack.c.l.b16 %v4231
      %v4511 = vunpack.c.h.b16 %v4231
      %v4512 = vunpack.c.l.b16 %v4232
      %v4513 = vunpack.c.h.b16 %v4232
      %v4514 = vunpack.c.l.b16 %v4233
      %v4515 = vunpack.c.h.b16 %v4233
      %v4516 = vunpack.c.l.b16 %v4234
      %v4517 = vunpack.c.h.b16 %v4234
      %v4518 = vunpack.c.l.b16 %v4235
      %v4519 = vunpack.c.h.b16 %v4235
      %v4520 = vunpack.c.l.b16 %v4236
      %v4521 = vunpack.c.h.b16 %v4236
      %v4522 = vunpack.c.l.b16 %v4237
      %v4523 = vunpack.c.h.b16 %v4237
      %v4524 = vunpack.c.l.b16 %v4238
      %v4525 = vunpack.c.h.b16 %v4238
      %v4526 = vunpack.c.l.b16 %v4239
      %v4527 = vunpack.c.h.b16 %v4239
      %v4528 = vunpack.c.l.b16 %v4240
      %v4529 = vunpack.c.h.b16 %v4240
      %v4530 = vunpack.c.l.b16 %v4241
      %v4531 = vunpack.c.h.b16 %v4241
      %v4532 = vunpack.c.l.b16 %v4242
      %v4533 = vunpack.c.h.b16 %v4242
      %v4534 = vunpack.c.l.b16 %v4243
      %v4535 = vunpack.c.h.b16 %v4243
      %v4536 = vunpack.c.l.b16 %v4244
      %v4537 = vunpack.c.h.b16 %v4244
      %v4538 = vunpack.c.l.b16 %v4245
      %v4539 = vunpack.c.h.b16 %v4245
      %v4540 = vunpack.c.l.b16 %v4246
      %v4541 = vunpack.c.h.b16 %v4246
      %v4542 = vunpack.c.l.b16 %v4247
      %v4543 = vunpack.c.h.b16 %v4247
      %v4544 = vunpack.c.l.b16 %v4248
      %v4545 = vunpack.c.h.b16 %v4248
      %v4546 = vunpack.c.l.b16 %v4249
      %v4547 = vunpack.c.h.b16 %v4249
      %v4548 = vunpack.c.l.b16 %v4250
      %v4549 = vunpack.c.h.b16 %v4250
      %v4550 = vunpack.c.l.b16 %v4251
      %v4551 = vunpack.c.h.b16 %v4251
      %v4552 = vunpack.c.l.b16 %v4252
      %v4553 = vunpack.c.h.b16 %v4252
      %v4554 = vunpack.c.l.b16 %v4253
      %v4555 = vunpack.c.h.b16 %v4253
      %v4556 = vunpack.c.l.b16 %v4254
      %v4557 = vunpack.c.h.b16 %v4254
      %v4558 = vunpack.c.l.b16 %v4255
      %v4559 = vunpack.c.h.b16 %v4255
      %v4560 = vunpack.c.l.b16 %v4256
      %v4561 = vunpack.c.h.b16 %v4256
      %v4562 = vunpack.c.l.b16 %v4257
      %v4563 = vunpack.c.h.b16 %v4257
      %v4564 = vunpack.c.l.b16 %v4258
      %v4565 = vunpack.c.h.b16 %v4258
      %v4566 = vunpack.c.l.b16 %v4259
      %v4567 = vunpack.c.h.b16 %v4259
      %v4568 = vunpack.c.l.b16 %v4260
      %v4569 = vunpack.c.h.b16 %v4260
      %v4570 = vunpack.c.l.b16 %v4261
      %v4571 = vunpack.c.h.b16 %v4261
      %v4572 = vunpack.c.l.b16 %v4262
      %v4573 = vunpack.c.h.b16 %v4262
      %v4574 = vunpack.c.l.b16 %v4263
      %v4575 = vunpack.c.h.b16 %v4263
      %v4576 = vunpack.c.l.b16 %v4264
      %v4577 = vunpack.c.h.b16 %v4264
      %v4578 = vunpack.c.l.b16 %v4265
      %v4579 = vunpack.c.h.b16 %v4265
      %v4580 = vunpack.c.l.b16 %v4266
      %v4581 = vunpack.c.h.b16 %v4266
      %v4582 = vunpack.c.l.b16 %v4267
      %v4583 = vunpack.c.h.b16 %v4267
      %v4584 = vunpack.c.l.b16 %v4268
      %v4585 = vunpack.c.h.b16 %v4268
      %v4586 = vunpack.c.l.b16 %v4269
      %v4587 = vunpack.c.h.b16 %v4269
      %v4588 = vunpack.c.l.b16 %v4270
      %v4589 = vunpack.c.h.b16 %v4270
      %v4590 = vunpack.c.l.b16 %v4271
      %v4591 = vunpack.c.h.b16 %v4271
      %v4592 = vunpack.c.l.b16 %v4272
      %v4593 = vunpack.c.h.b16 %v4272
      %v4594 = vunpack.c.l.b16 %v4273
      %v4595 = vunpack.c.h.b16 %v4273
      %v4596 = vunpack.c.l.b16 %v4274
      %v4597 = vunpack.c.h.b16 %v4274
      %v4598 = vunpack.c.l.b16 %v4275
      %v4599 = vunpack.c.h.b16 %v4275
      %v4600 = vunpack.c.l.b16 %v4276
      %v4601 = vunpack.c.h.b16 %v4276
      %v4602 = vunpack.c.l.b16 %v4277
      %v4603 = vunpack.c.h.b16 %v4277
      %v4604 = vunpack.c.l.b16 %v4278
      %v4605 = vunpack.c.h.b16 %v4278
      %v4606 = vunpack.c.l.b16 %v4279
      %v4607 = vunpack.c.h.b16 %v4279
      %v4608 = vunpack.c.l.b16 %v4280
      %v4609 = vunpack.c.h.b16 %v4280
      %v4610 = vunpack.c.l.b16 %v4281
      %v4611 = vunpack.c.h.b16 %v4281
      %v4612 = vunpack.c.l.b16 %v4282
      %v4613 = vunpack.c.h.b16 %v4282
      %v4614 = vunpack.c.l.b16 %v4283
      %v4615 = vunpack.c.h.b16 %v4283
      %v4616 = vunpack.c.l.b16 %v4284
      %v4617 = vunpack.c.h.b16 %v4284
      %v4618 = vunpack.c.l.b16 %v4285
      %v4619 = vunpack.c.h.b16 %v4285
      %v4620 = vunpack.c.l.b16 %v4286
      %v4621 = vunpack.c.h.b16 %v4286
      %v4622 = vunpack.c.l.b16 %v4287
      %v4623 = vunpack.c.h.b16 %v4287
      %v4624 = vunpack.c.l.b16 %v4288
      %v4625 = vunpack.c.h.b16 %v4288
      %v4626 = vunpack.c.l.b16 %v4289
      %v4627 = vunpack.c.h.b16 %v4289
      %v4628 = vunpack.c.l.b16 %v4290
      %v4629 = vunpack.c.h.b16 %v4290
      %v4630 = vunpack.c.l.b16 %v4291
      %v4631 = vunpack.c.h.b16 %v4291
      %v4632 = vunpack.c.l.b16 %v4292
      %v4633 = vunpack.c.h.b16 %v4292
      %v4634 = vunpack.c.l.b16 %v4293
      %v4635 = vunpack.c.h.b16 %v4293
      %v4636 = vunpack.c.l.b16 %v4294
      %v4637 = vunpack.c.h.b16 %v4294
      %v4638 = vunpack.c.l.b16 %v4295
      %v4639 = vunpack.c.h.b16 %v4295
      %v4640 = vunpack.c.l.b16 %v4296
      %v4641 = vunpack.c.h.b16 %v4296
      %v4642 = vunpack.c.l.b16 %v4297
      %v4643 = vunpack.c.h.b16 %v4297
      %v4644 = vunpack.c.l.b16 %v4298
      %v4645 = vunpack.c.h.b16 %v4298
      %v4646 = vunpack.c.l.b16 %v4299
      %v4647 = vunpack.c.h.b16 %v4299
      %v4648 = vunpack.c.l.b16 %v4300
      %v4649 = vunpack.c.h.b16 %v4300
      %v4650 = vunpack.c.l.b16 %v4301
      %v4651 = vunpack.c.h.b16 %v4301
      %v4652 = vunpack.c.l.b16 %v4302
      %v4653 = vunpack.c.h.b16 %v4302
      %v4654 = vunpack.c.l.b16 %v4303
      %v4655 = vunpack.c.h.b16 %v4303
      %v4656 = vunpack.c.l.b16 %v4304
      %v4657 = vunpack.c.h.b16 %v4304
      %v4658 = vunpack.c.l.b16 %v4305
      %v4659 = vunpack.c.h.b16 %v4305
      %v4660 = vunpack.c.l.b16 %v4306
      %v4661 = vunpack.c.h.b16 %v4306
      %v4662 = vunpack.c.l.b16 %v4307
      %v4663 = vunpack.c.h.b16 %v4307
      %v4664 = vunpack.c.l.b16 %v4308
      %v4665 = vunpack.c.h.b16 %v4308
      %v4666 = vunpack.c.l.b16 %v4309
      %v4667 = vunpack.c.h.b16 %v4309
      %v4668 = vunpack.c.l.b16 %v4310
      %v4669 = vunpack.c.h.b16 %v4310
      %v4670 = vunpack.c.l.b16 %v4311
      %v4671 = vunpack.c.h.b16 %v4311
      %v4672 = vunpack.c.l.b16 %v4312
      %v4673 = vunpack.c.h.b16 %v4312
      %v4674 = vunpack.c.l.b16 %v4313
      %v4675 = vunpack.c.h.b16 %v4313
      %v4676 = vunpack.c.l.b16 %v4314
      %v4677 = vunpack.c.h.b16 %v4314
      %v4678 = vunpack.c.l.b16 %v4315
      %v4679 = vunpack.c.h.b16 %v4315
      %v4680 = vunpack.c.l.b16 %v4316
      %v4681 = vunpack.c.h.b16 %v4316
      %v4682 = vunpack.c.l.b16 %v4317
      %v4683 = vunpack.c.h.b16 %v4317
      %v4684 = vunpack.c.l.b16 %v4318
      %v4685 = vunpack.c.h.b16 %v4318
      %v4686 = vunpack.c.l.b16 %v4319
      %v4687 = vunpack.c.h.b16 %v4319
      %v4688 = vunpack.c.l.b16 %v4320
      %v4689 = vunpack.c.h.b16 %v4320
      %v4690 = vunpack.c.l.b16 %v4321
      %v4691 = vunpack.c.h.b16 %v4321
      %v4692 = vunpack.c.l.b16 %v4322
      %v4693 = vunpack.c.h.b16 %v4322
      %v4694 = vunpack.c.l.b16 %v4323
      %v4695 = vunpack.c.h.b16 %v4323
      %v4696 = vunpack.c.l.b16 %v4324
      %v4697 = vunpack.c.h.b16 %v4324
      %v4698 = vunpack.c.l.b16 %v4325
      %v4699 = vunpack.c.h.b16 %v4325
      %v4700 = vunpack.c.l.b16 %v4326
      %v4701 = vunpack.c.h.b16 %v4326
      %v4702 = vunpack.c.l.b16 %v4327
      %v4703 = vunpack.c.h.b16 %v4327
      %v4704 = vunpack.c.l.b16 %v4328
      %v4705 = vunpack.c.h.b16 %v4328
      %v4706 = vunpack.c.l.b16 %v4329
      %v4707 = vunpack.c.h.b16 %v4329
      %v4708 = vunpack.c.l.b16 %v4330
      %v4709 = vunpack.c.h.b16 %v4330
      %v4710 = vunpack.c.l.b16 %v4331
      %v4711 = vunpack.c.h.b16 %v4331
      %v4712 = vunpack.c.l.b16 %v4332
      %v4713 = vunpack.c.h.b16 %v4332
      %v4714 = vunpack.c.l.b16 %v4333
      %v4715 = vunpack.c.h.b16 %v4333
      %v4716 = vunpack.c.l.b16 %v4334
      %v4717 = vunpack.c.h.b16 %v4334
      %v4718 = vunpack.c.l.b16 %v4335
      %v4719 = vunpack.c.h.b16 %v4335
      %v4720 = vunpack.c.l.b16 %v4336
      %v4721 = vunpack.c.h.b16 %v4336
      %v4722 = vunpack.c.l.b16 %v4337
      %v4723 = vunpack.c.h.b16 %v4337
      %v4724 = vunpack.c.l.b16 %v4338
      %v4725 = vunpack.c.h.b16 %v4338
      %v4726 = vunpack.c.l.b16 %v4339
      %v4727 = vunpack.c.h.b16 %v4339
      %v4728 = vunpack.c.l.b16 %v4340
      %v4729 = vunpack.c.h.b16 %v4340
      %v4730 = vunpack.c.l.b16 %v4341
      %v4731 = vunpack.c.h.b16 %v4341
      %v4732 = vpack.c.b16 %v4478, %v4476
      %v4733 = vpack.c.b16 %v4479, %v4477
      %v4734 = vpack.c.b16 %v4482, %v4480
      %v4735 = vpack.c.b16 %v4483, %v4481
      %v4736 = vpack.c.b16 %v4486, %v4484
      %v4737 = vpack.c.b16 %v4487, %v4485
      %v4738 = vpack.c.b16 %v4490, %v4488
      %v4739 = vpack.c.b16 %v4491, %v4489
      %v4740 = vpack.c.b16 %v4494, %v4492
      %v4741 = vpack.c.b16 %v4495, %v4493
      %v4742 = vpack.c.b16 %v4498, %v4496
      %v4743 = vpack.c.b16 %v4499, %v4497
      %v4744 = vpack.c.b16 %v4502, %v4500
      %v4745 = vpack.c.b16 %v4503, %v4501
      %v4746 = vpack.c.b16 %v4506, %v4504
      %v4747 = vpack.c.b16 %v4507, %v4505
      %v4748 = vpack.c.b16 %v4510, %v4508
      %v4749 = vpack.c.b16 %v4511, %v4509
      %v4750 = vpack.c.b16 %v4514, %v4512
      %v4751 = vpack.c.b16 %v4515, %v4513
      %v4752 = vpack.c.b16 %v4518, %v4516
      %v4753 = vpack.c.b16 %v4519, %v4517
      %v4754 = vpack.c.b16 %v4522, %v4520
      %v4755 = vpack.c.b16 %v4523, %v4521
      %v4756 = vpack.c.b16 %v4526, %v4524
      %v4757 = vpack.c.b16 %v4527, %v4525
      %v4758 = vpack.c.b16 %v4530, %v4528
      %v4759 = vpack.c.b16 %v4531, %v4529
      %v4760 = vpack.c.b16 %v4534, %v4532
      %v4761 = vpack.c.b16 %v4535, %v4533
      %v4762 = vpack.c.b16 %v4538, %v4536
      %v4763 = vpack.c.b16 %v4539, %v4537
      %v4764 = vpack.c.b16 %v4542, %v4540
      %v4765 = vpack.c.b16 %v4543, %v4541
      %v4766 = vpack.c.b16 %v4546, %v4544
      %v4767 = vpack.c.b16 %v4547, %v4545
      %v4768 = vpack.c.b16 %v4550, %v4548
      %v4769 = vpack.c.b16 %v4551, %v4549
      %v4770 = vpack.c.b16 %v4554, %v4552
      %v4771 = vpack.c.b16 %v4555, %v4553
      %v4772 = vpack.c.b16 %v4558, %v4556
      %v4773 = vpack.c.b16 %v4559, %v4557
      %v4774 = vpack.c.b16 %v4562, %v4560
      %v4775 = vpack.c.b16 %v4563, %v4561
      %v4776 = vpack.c.b16 %v4566, %v4564
      %v4777 = vpack.c.b16 %v4567, %v4565
      %v4778 = vpack.c.b16 %v4570, %v4568
      %v4779 = vpack.c.b16 %v4571, %v4569
      %v4780 = vpack.c.b16 %v4574, %v4572
      %v4781 = vpack.c.b16 %v4575, %v4573
      %v4782 = vpack.c.b16 %v4578, %v4576
      %v4783 = vpack.c.b16 %v4579, %v4577
      %v4784 = vpack.c.b16 %v4582, %v4580
      %v4785 = vpack.c.b16 %v4583, %v4581
      %v4786 = vpack.c.b16 %v4586, %v4584
      %v4787 = vpack.c.b16 %v4587, %v4585
      %v4788 = vpack.c.b16 %v4590, %v4588
      %v4789 = vpack.c.b16 %v4591, %v4589
      %v4790 = vpack.c.b16 %v4594, %v4592
      %v4791 = vpack.c.b16 %v4595, %v4593
      %v4792 = vpack.c.b16 %v4598, %v4596
      %v4793 = vpack.c.b16 %v4599, %v4597
      %v4794 = vpack.c.b16 %v4602, %v4600
      %v4795 = vpack.c.b16 %v4603, %v4601
      %v4796 = vpack.c.b16 %v4606, %v4604
      %v4797 = vpack.c.b16 %v4607, %v4605
      %v4798 = vpack.c.b16 %v4610, %v4608
      %v4799 = vpack.c.b16 %v4611, %v4609
      %v4800 = vpack.c.b16 %v4614, %v4612
      %v4801 = vpack.c.b16 %v4615, %v4613
      %v4802 = vpack.c.b16 %v4618, %v4616
      %v4803 = vpack.c.b16 %v4619, %v4617
      %v4804 = vpack.c.b16 %v4622, %v4620
      %v4805 = vpack.c.b16 %v4623, %v4621
      %v4806 = vpack.c.b16 %v4626, %v4624
      %v4807 = vpack.c.b16 %v4627, %v4625
      %v4808 = vpack.c.b16 %v4630, %v4628
      %v4809 = vpack.c.b16 %v4631, %v4629
      %v4810 = vpack.c.b16 %v4634, %v4632
      %v4811 = vpack.c.b16 %v4635, %v4633
      %v4812 = vpack.c.b16 %v4638, %v4636
      %v4813 = vpack.c.b16 %v4639, %v4637
      %v4814 = vpack.c.b16 %v4642, %v4640
      %v4815 = vpack.c.b16 %v4643, %v4641
      %v4816 = vpack.c.b16 %v4646, %v4644
      %v4817 = vpack.c.b16 %v4647, %v4645
      %v4818 = vpack.c.b16 %v4650, %v4648
      %v4819 = vpack.c.b16 %v4651, %v4649
      %v4820 = vpack.c.b16 %v4654, %v4652
      %v4821 = vpack.c.b16 %v4655, %v4653
      %v4822 = vpack.c.b16 %v4658, %v4656
      %v4823 = vpack.c.b16 %v4659, %v4657
      %v4824 = vpack.c.b16 %v4662, %v4660
      %v4825 = vpack.c.b16 %v4663, %v4661
      %v4826 = vpack.c.b16 %v4666, %v4664
      %v4827 = vpack.c.b16 %v4667, %v4665
      %v4828 = vpack.c.b16 %v4670, %v4668
      %v4829 = vpack.c.b16 %v4671, %v4669
      %v4830 = vpack.c.b16 %v4674, %v4672
      %v4831 = vpack.c.b16 %v4675, %v4673
      %v4832 = vpack.c.b16 %v4678, %v4676
      %v4833 = vpack.c.b16 %v4679, %v4677
      %v4834 = vpack.c.b16 %v4682, %v4680
      %v4835 = vpack.c.b16 %v4683, %v4681
      %v4836 = vpack.c.b16 %v4686, %v4684
      %v4837 = vpack.c.b16 %v4687, %v4685
      %v4838 = vpack.c.b16 %v4690, %v4688
      %v4839 = vpack.c.b16 %v4691, %v4689
      %v4840 = vpack.c.b16 %v4694, %v4692
      %v4841 = vpack.c.b16 %v4695, %v4693
      %v4842 = vpack.c.b16 %v4698, %v4696
      %v4843 = vpack.c.b16 %v4699, %v4697
      %v4844 = vpack.c.b16 %v4702, %v4700
      %v4845 = vpack.c.b16 %v4703, %v4701
      %v4846 = vpack.c.b16 %v4706, %v4704
      %v4847 = vpack.c.b16 %v4707, %v4705
      %v4848 = vpack.c.b16 %v4710, %v4708
      %v4849 = vpack.c.b16 %v4711, %v4709
      %v4850 = vpack.c.b16 %v4714, %v4712
      %v4851 = vpack.c.b16 %v4715, %v4713
      %v4852 = vpack.c.b16 %v4718, %v4716
      %v4853 = vpack.c.b16 %v4719, %v4717
      %v4854 = vpack.c.b16 %v4722, %v4720
      %v4855 = vpack.c.b16 %v4723, %v4721
      %v4856 = vpack.c.b16 %v4726, %v4724
      %v4857 = vpack.c.b16 %v4727, %v4725
      %v4858 = vpack.c.b16 %v4730, %v4728
      %v4859 = vpack.c.b16 %v4731, %v4729
      %4988 = vmatpush.bf16.msra.mxu0 %v4746
      %4989 = vmatpush.bf16.msra.mxu0 %v4744
      %4990 = vmatpush.bf16.msra.mxu0 %v4742
      %4991 = vmatpush.bf16.msra.mxu0 %v4740
      %4992 = vmatpush.bf16.msra.mxu0 %v4738
      %4993 = vmatpush.bf16.msra.mxu0 %v4736
      %4994 = vmatpush.bf16.msra.mxu0 %v4734
      %4995 = vmatpush.bf16.msra.mxu0 %v4732
      %4996 = vmatmul.bf16.gmra.mxu0 %v4138
      %v4997 = vpop.f32.mrf.mxu0
      %v4998 = vadd.f32 %v4344, %v4997
      %v4999 = vpop.f32.mrf.mxu0
      %v5000 = vadd.f32 %v4344, %v4999
      %5001 = vmatmul.bf16.gmra.mxu0 %v4140
      %v5002 = vpop.f32.mrf.mxu0
      %v5003 = vadd.f32 %v4344, %v5002
      %v5004 = vpop.f32.mrf.mxu0
      %v5005 = vadd.f32 %v4344, %v5004
      %5006 = vmatmul.bf16.gmra.mxu0 %v4142
      %v5007 = vpop.f32.mrf.mxu0
      %v5008 = vadd.f32 %v4344, %v5007
      %v5009 = vpop.f32.mrf.mxu0
      %v5010 = vadd.f32 %v4344, %v5009
      %5011 = vmatmul.bf16.gmra.mxu0 %v4144
      %v5012 = vpop.f32.mrf.mxu0
      %v5013 = vadd.f32 %v4344, %v5012
      %v5014 = vpop.f32.mrf.mxu0
      %v5015 = vadd.f32 %v4344, %v5014
      %5016 = vdwg.mxu0
      %5017 = vmatpush.bf16.msra.mxu0 %v4762
      %5018 = vmatpush.bf16.msra.mxu0 %v4760
      %5019 = vmatpush.bf16.msra.mxu0 %v4758
      %5020 = vmatpush.bf16.msra.mxu0 %v4756
      %5021 = vmatpush.bf16.msra.mxu0 %v4754
      %5022 = vmatpush.bf16.msra.mxu0 %v4752
      %5023 = vmatpush.bf16.msra.mxu0 %v4750
      %5024 = vmatpush.bf16.msra.mxu0 %v4748
      %5025 = vmatmul.bf16.gmra.mxu0 %v4139
      %v5026 = vpop.f32.mrf.mxu0
      %v5027 = vadd.f32 %v4998, %v5026
      %v5028 = vpop.f32.mrf.mxu0
      %v5029 = vadd.f32 %v5000, %v5028
      %5030 = vmatmul.bf16.gmra.mxu0 %v4141
      %v5031 = vpop.f32.mrf.mxu0
      %v5032 = vadd.f32 %v5003, %v5031
      %v5033 = vpop.f32.mrf.mxu0
      %v5034 = vadd.f32 %v5005, %v5033
      %5035 = vmatmul.bf16.gmra.mxu0 %v4143
      %v5036 = vpop.f32.mrf.mxu0
      %v5037 = vadd.f32 %v5008, %v5036
      %v5038 = vpop.f32.mrf.mxu0
      %v5039 = vadd.f32 %v5010, %v5038
      %5040 = vmatmul.bf16.gmra.mxu0 %v4145
      %v5041 = vpop.f32.mrf.mxu0
      %v5042 = vadd.f32 %v5013, %v5041
      %v5043 = vpop.f32.mrf.mxu0
      %v5044 = vadd.f32 %v5015, %v5043
      %5045 = vdwg.mxu0
      %5046 = vmatpush.bf16.msra.mxu0 %v4778
      %5047 = vmatpush.bf16.msra.mxu0 %v4776
      %5048 = vmatpush.bf16.msra.mxu0 %v4774
      %5049 = vmatpush.bf16.msra.mxu0 %v4772
      %5050 = vmatpush.bf16.msra.mxu0 %v4770
      %5051 = vmatpush.bf16.msra.mxu0 %v4768
      %5052 = vmatpush.bf16.msra.mxu0 %v4766
      %5053 = vmatpush.bf16.msra.mxu0 %v4764
      %5054 = vmatmul.bf16.gmra.mxu0 %v4178
      %v5055 = vpop.f32.mrf.mxu0
      %v5056 = vadd.f32 %v5027, %v5055
      %v5057 = vpop.f32.mrf.mxu0
      %v5058 = vadd.f32 %v5029, %v5057
      %5059 = vmatmul.bf16.gmra.mxu0 %v4180
      %v5060 = vpop.f32.mrf.mxu0
      %v5061 = vadd.f32 %v5032, %v5060
      %v5062 = vpop.f32.mrf.mxu0
      %v5063 = vadd.f32 %v5034, %v5062
      %5064 = vmatmul.bf16.gmra.mxu0 %v4182
      %v5065 = vpop.f32.mrf.mxu0
      %v5066 = vadd.f32 %v5037, %v5065
      %v5067 = vpop.f32.mrf.mxu0
      %v5068 = vadd.f32 %v5039, %v5067
      %5069 = vmatmul.bf16.gmra.mxu0 %v4184
      %v5070 = vpop.f32.mrf.mxu0
      %v5071 = vadd.f32 %v5042, %v5070
      %v5072 = vpop.f32.mrf.mxu0
      %v5073 = vadd.f32 %v5044, %v5072
      %5074 = vdwg.mxu0
      %5075 = vmatpush.bf16.msra.mxu0 %v4794
      %5076 = vmatpush.bf16.msra.mxu0 %v4792
      %5077 = vmatpush.bf16.msra.mxu0 %v4790
      %5078 = vmatpush.bf16.msra.mxu0 %v4788
      %5079 = vmatpush.bf16.msra.mxu0 %v4786
      %5080 = vmatpush.bf16.msra.mxu0 %v4784
      %5081 = vmatpush.bf16.msra.mxu0 %v4782
      %5082 = vmatpush.bf16.msra.mxu0 %v4780
      %5083 = vmatmul.bf16.gmra.mxu0 %v4179
      %v5084 = vpop.f32.mrf.mxu0
      %v5085 = vadd.f32 %v5056, %v5084
      %v5086 = vpop.f32.mrf.mxu0
      %v5087 = vadd.f32 %v5058, %v5086
      %5088 = vmatmul.bf16.gmra.mxu0 %v4181
      %v5089 = vpop.f32.mrf.mxu0
      %v5090 = vadd.f32 %v5061, %v5089
      %v5091 = vpop.f32.mrf.mxu0
      %v5092 = vadd.f32 %v5063, %v5091
      %5093 = vmatmul.bf16.gmra.mxu0 %v4183
      %v5094 = vpop.f32.mrf.mxu0
      %v5095 = vadd.f32 %v5066, %v5094
      %v5096 = vpop.f32.mrf.mxu0
      %v5097 = vadd.f32 %v5068, %v5096
      %5098 = vmatmul.bf16.gmra.mxu0 %v4185
      %v5099 = vpop.f32.mrf.mxu0
      %v5100 = vadd.f32 %v5071, %v5099
      %v5101 = vpop.f32.mrf.mxu0
      %v5102 = vadd.f32 %v5073, %v5101
      %5103 = vdwg.mxu0
      %5104 = vmatpush.bf16.msra.mxu0 %v4810
      %5105 = vmatpush.bf16.msra.mxu0 %v4808
      %5106 = vmatpush.bf16.msra.mxu0 %v4806
      %5107 = vmatpush.bf16.msra.mxu0 %v4804
      %5108 = vmatpush.bf16.msra.mxu0 %v4802
      %5109 = vmatpush.bf16.msra.mxu0 %v4800
      %5110 = vmatpush.bf16.msra.mxu0 %v4798
      %5111 = vmatpush.bf16.msra.mxu0 %v4796
      %5112 = vmatmul.bf16.gmra.mxu0 %v4140
      %v5113 = vpop.f32.mrf.mxu0
      %v5114 = vadd.f32 %v5085, %v5113
      %v5115 = vpop.f32.mrf.mxu0
      %v5116 = vadd.f32 %v5087, %v5115
      %5117 = vmatmul.bf16.gmra.mxu0 %v4142
      %v5118 = vpop.f32.mrf.mxu0
      %v5119 = vadd.f32 %v5090, %v5118
      %v5120 = vpop.f32.mrf.mxu0
      %v5121 = vadd.f32 %v5092, %v5120
      %5122 = vmatmul.bf16.gmra.mxu0 %v4144
      %v5123 = vpop.f32.mrf.mxu0
      %v5124 = vadd.f32 %v5095, %v5123
      %v5125 = vpop.f32.mrf.mxu0
      %v5126 = vadd.f32 %v5097, %v5125
      %5127 = vmatmul.bf16.gmra.mxu0 %v4200
      %v5128 = vpop.f32.mrf.mxu0
      %v5129 = vadd.f32 %v5100, %v5128
      %v5130 = vpop.f32.mrf.mxu0
      %v5131 = vadd.f32 %v5102, %v5130
      %5132 = vdwg.mxu0
      %5133 = vmatpush.bf16.msra.mxu0 %v4826
      %5134 = vmatpush.bf16.msra.mxu0 %v4824
      %5135 = vmatpush.bf16.msra.mxu0 %v4822
      %5136 = vmatpush.bf16.msra.mxu0 %v4820
      %5137 = vmatpush.bf16.msra.mxu0 %v4818
      %5138 = vmatpush.bf16.msra.mxu0 %v4816
      %5139 = vmatpush.bf16.msra.mxu0 %v4814
      %5140 = vmatpush.bf16.msra.mxu0 %v4812
      %5141 = vmatmul.bf16.gmra.mxu0 %v4141
      %v5142 = vpop.f32.mrf.mxu0
      %v5143 = vadd.f32 %v5114, %v5142
      %v5144 = vpop.f32.mrf.mxu0
      %v5145 = vadd.f32 %v5116, %v5144
      %5146 = vmatmul.bf16.gmra.mxu0 %v4143
      %v5147 = vpop.f32.mrf.mxu0
      %v5148 = vadd.f32 %v5119, %v5147
      %v5149 = vpop.f32.mrf.mxu0
      %v5150 = vadd.f32 %v5121, %v5149
      %5151 = vmatmul.bf16.gmra.mxu0 %v4145
      %v5152 = vpop.f32.mrf.mxu0
      %v5153 = vadd.f32 %v5124, %v5152
      %v5154 = vpop.f32.mrf.mxu0
      %v5155 = vadd.f32 %v5126, %v5154
      %5156 = vmatmul.bf16.gmra.mxu0 %v4201
      %v5157 = vpop.f32.mrf.mxu0
      %v5158 = vadd.f32 %v5129, %v5157
      %v5159 = vpop.f32.mrf.mxu0
      %v5160 = vadd.f32 %v5131, %v5159
      %5161 = vdwg.mxu0
      %5162 = vmatpush.bf16.msra.mxu0 %v4842
      %5163 = vmatpush.bf16.msra.mxu0 %v4840
      %5164 = vmatpush.bf16.msra.mxu0 %v4838
      %5165 = vmatpush.bf16.msra.mxu0 %v4836
      %5166 = vmatpush.bf16.msra.mxu0 %v4834
      %5167 = vmatpush.bf16.msra.mxu0 %v4832
      %5168 = vmatpush.bf16.msra.mxu0 %v4830
      %5169 = vmatpush.bf16.msra.mxu0 %v4828
      %5170 = vmatmul.bf16.gmra.mxu0 %v4180
      %v5171 = vpop.f32.mrf.mxu0
      %v5172 = vadd.f32 %v5143, %v5171
      %v5173 = vpop.f32.mrf.mxu0
      %v5174 = vadd.f32 %v5145, %v5173
      %5175 = vmatmul.bf16.gmra.mxu0 %v4182
      %v5176 = vpop.f32.mrf.mxu0
      %v5177 = vadd.f32 %v5148, %v5176
      %v5178 = vpop.f32.mrf.mxu0
      %v5179 = vadd.f32 %v5150, %v5178
      %5180 = vmatmul.bf16.gmra.mxu0 %v4184
      %v5181 = vpop.f32.mrf.mxu0
      %v5182 = vadd.f32 %v5153, %v5181
      %v5183 = vpop.f32.mrf.mxu0
      %v5184 = vadd.f32 %v5155, %v5183
      %5185 = vmatmul.bf16.gmra.mxu0 %v4210
      %v5186 = vpop.f32.mrf.mxu0
      %v5187 = vadd.f32 %v5158, %v5186
      %v5188 = vpop.f32.mrf.mxu0
      %v5189 = vadd.f32 %v5160, %v5188
      %5190 = vdwg.mxu0
      %5191 = vmatpush.bf16.msra.mxu0 %v4858
      %5192 = vmatpush.bf16.msra.mxu0 %v4856
      %5193 = vmatpush.bf16.msra.mxu0 %v4854
      %5194 = vmatpush.bf16.msra.mxu0 %v4852
      %5195 = vmatpush.bf16.msra.mxu0 %v4850
      %5196 = vmatpush.bf16.msra.mxu0 %v4848
      %5197 = vmatpush.bf16.msra.mxu0 %v4846
      %5198 = vmatpush.bf16.msra.mxu0 %v4844
      %5199 = vmatmul.bf16.gmra.mxu0 %v4181
      %v5200 = vpop.f32.mrf.mxu0
      %v5201 = vadd.f32 %v5172, %v5200
      %v5202 = vpop.f32.mrf.mxu0
      %v5203 = vadd.f32 %v5174, %v5202
      %5204 = vmatmul.bf16.gmra.mxu0 %v4183
      %v5205 = vpop.f32.mrf.mxu0
      %v5206 = vadd.f32 %v5177, %v5205
      %v5207 = vpop.f32.mrf.mxu0
      %v5208 = vadd.f32 %v5179, %v5207
      %5209 = vmatmul.bf16.gmra.mxu0 %v4185
      %v5210 = vpop.f32.mrf.mxu0
      %v5211 = vadd.f32 %v5182, %v5210
      %v5212 = vpop.f32.mrf.mxu0
      %v5213 = vadd.f32 %v5184, %v5212
      %5214 = vmatmul.bf16.gmra.mxu0 %v4211
      %v5215 = vpop.f32.mrf.mxu0
      %v5216 = vadd.f32 %v5187, %v5215
      %v5217 = vpop.f32.mrf.mxu0
      %v5218 = vadd.f32 %v5189, %v5217
      %5219 = vdwg.mxu0
      %5220 = vmatpush.bf16.msra.mxu0 %v4747
      %5221 = vmatpush.bf16.msra.mxu0 %v4745
      %5222 = vmatpush.bf16.msra.mxu0 %v4743
      %5223 = vmatpush.bf16.msra.mxu0 %v4741
      %5224 = vmatpush.bf16.msra.mxu0 %v4739
      %5225 = vmatpush.bf16.msra.mxu0 %v4737
      %5226 = vmatpush.bf16.msra.mxu0 %v4735
      %5227 = vmatpush.bf16.msra.mxu0 %v4733
      %5228 = vmatmul.bf16.gmra.mxu0 %v4138
      %v5229 = vpop.f32.mrf.mxu0
      %v5230 = vadd.f32 %v4345, %v5229
      %v5231 = vpop.f32.mrf.mxu0
      %v5232 = vadd.f32 %v4345, %v5231
      %5233 = vmatmul.bf16.gmra.mxu0 %v4140
      %v5234 = vpop.f32.mrf.mxu0
      %v5235 = vadd.f32 %v4345, %v5234
      %v5236 = vpop.f32.mrf.mxu0
      %v5237 = vadd.f32 %v4345, %v5236
      %5238 = vmatmul.bf16.gmra.mxu0 %v4142
      %v5239 = vpop.f32.mrf.mxu0
      %v5240 = vadd.f32 %v4345, %v5239
      %v5241 = vpop.f32.mrf.mxu0
      %v5242 = vadd.f32 %v4345, %v5241
      %5243 = vmatmul.bf16.gmra.mxu0 %v4144
      %v5244 = vpop.f32.mrf.mxu0
      %v5245 = vadd.f32 %v4345, %v5244
      %v5246 = vpop.f32.mrf.mxu0
      %v5247 = vadd.f32 %v4345, %v5246
      %5248 = vdwg.mxu0
      %5249 = vmatpush.bf16.msra.mxu0 %v4763
      %5250 = vmatpush.bf16.msra.mxu0 %v4761
      %5251 = vmatpush.bf16.msra.mxu0 %v4759
      %5252 = vmatpush.bf16.msra.mxu0 %v4757
      %5253 = vmatpush.bf16.msra.mxu0 %v4755
      %5254 = vmatpush.bf16.msra.mxu0 %v4753
      %5255 = vmatpush.bf16.msra.mxu0 %v4751
      %5256 = vmatpush.bf16.msra.mxu0 %v4749
      %5257 = vmatmul.bf16.gmra.mxu0 %v4139
      %v5258 = vpop.f32.mrf.mxu0
      %v5259 = vadd.f32 %v5230, %v5258
      %v5260 = vpop.f32.mrf.mxu0
      %v5261 = vadd.f32 %v5232, %v5260
      %5262 = vmatmul.bf16.gmra.mxu0 %v4141
      %v5263 = vpop.f32.mrf.mxu0
      %v5264 = vadd.f32 %v5235, %v5263
      %v5265 = vpop.f32.mrf.mxu0
      %v5266 = vadd.f32 %v5237, %v5265
      %5267 = vmatmul.bf16.gmra.mxu0 %v4143
      %v5268 = vpop.f32.mrf.mxu0
      %v5269 = vadd.f32 %v5240, %v5268
      %v5270 = vpop.f32.mrf.mxu0
      %v5271 = vadd.f32 %v5242, %v5270
      %5272 = vmatmul.bf16.gmra.mxu0 %v4145
      %v5273 = vpop.f32.mrf.mxu0
      %v5274 = vadd.f32 %v5245, %v5273
      %v5275 = vpop.f32.mrf.mxu0
      %v5276 = vadd.f32 %v5247, %v5275
      %5277 = vdwg.mxu0
      %5278 = vmatpush.bf16.msra.mxu0 %v4779
      %5279 = vmatpush.bf16.msra.mxu0 %v4777
      %5280 = vmatpush.bf16.msra.mxu0 %v4775
      %5281 = vmatpush.bf16.msra.mxu0 %v4773
      %5282 = vmatpush.bf16.msra.mxu0 %v4771
      %5283 = vmatpush.bf16.msra.mxu0 %v4769
      %5284 = vmatpush.bf16.msra.mxu0 %v4767
      %5285 = vmatpush.bf16.msra.mxu0 %v4765
      %5286 = vmatmul.bf16.gmra.mxu0 %v4178
      %v5287 = vpop.f32.mrf.mxu0
      %v5288 = vadd.f32 %v5259, %v5287
      %v5289 = vpop.f32.mrf.mxu0
      %v5290 = vadd.f32 %v5261, %v5289
      %5291 = vmatmul.bf16.gmra.mxu0 %v4180
      %v5292 = vpop.f32.mrf.mxu0
      %v5293 = vadd.f32 %v5264, %v5292
      %v5294 = vpop.f32.mrf.mxu0
      %v5295 = vadd.f32 %v5266, %v5294
      %5296 = vmatmul.bf16.gmra.mxu0 %v4182
      %v5297 = vpop.f32.mrf.mxu0
      %v5298 = vadd.f32 %v5269, %v5297
      %v5299 = vpop.f32.mrf.mxu0
      %v5300 = vadd.f32 %v5271, %v5299
      %5301 = vmatmul.bf16.gmra.mxu0 %v4184
      %v5302 = vpop.f32.mrf.mxu0
      %v5303 = vadd.f32 %v5274, %v5302
      %v5304 = vpop.f32.mrf.mxu0
      %v5305 = vadd.f32 %v5276, %v5304
      %5306 = vdwg.mxu0
      %5307 = vmatpush.bf16.msra.mxu0 %v4795
      %5308 = vmatpush.bf16.msra.mxu0 %v4793
      %5309 = vmatpush.bf16.msra.mxu0 %v4791
      %5310 = vmatpush.bf16.msra.mxu0 %v4789
      %5311 = vmatpush.bf16.msra.mxu0 %v4787
      %5312 = vmatpush.bf16.msra.mxu0 %v4785
      %5313 = vmatpush.bf16.msra.mxu0 %v4783
      %5314 = vmatpush.bf16.msra.mxu0 %v4781
      %5315 = vmatmul.bf16.gmra.mxu0 %v4179
      %v5316 = vpop.f32.mrf.mxu0
      %v5317 = vadd.f32 %v5288, %v5316
      %v5318 = vpop.f32.mrf.mxu0
      %v5319 = vadd.f32 %v5290, %v5318
      %5320 = vmatmul.bf16.gmra.mxu0 %v4181
      %v5321 = vpop.f32.mrf.mxu0
      %v5322 = vadd.f32 %v5293, %v5321
      %v5323 = vpop.f32.mrf.mxu0
      %v5324 = vadd.f32 %v5295, %v5323
      %5325 = vmatmul.bf16.gmra.mxu0 %v4183
      %v5326 = vpop.f32.mrf.mxu0
      %v5327 = vadd.f32 %v5298, %v5326
      %v5328 = vpop.f32.mrf.mxu0
      %v5329 = vadd.f32 %v5300, %v5328
      %5330 = vmatmul.bf16.gmra.mxu0 %v4185
      %v5331 = vpop.f32.mrf.mxu0
      %v5332 = vadd.f32 %v5303, %v5331
      %v5333 = vpop.f32.mrf.mxu0
      %v5334 = vadd.f32 %v5305, %v5333
      %5335 = vdwg.mxu0
      %5336 = vmatpush.bf16.msra.mxu0 %v4811
      %5337 = vmatpush.bf16.msra.mxu0 %v4809
      %5338 = vmatpush.bf16.msra.mxu0 %v4807
      %5339 = vmatpush.bf16.msra.mxu0 %v4805
      %5340 = vmatpush.bf16.msra.mxu0 %v4803
      %5341 = vmatpush.bf16.msra.mxu0 %v4801
      %5342 = vmatpush.bf16.msra.mxu0 %v4799
      %5343 = vmatpush.bf16.msra.mxu0 %v4797
      %5344 = vmatmul.bf16.gmra.mxu0 %v4140
      %v5345 = vpop.f32.mrf.mxu0
      %v5346 = vadd.f32 %v5317, %v5345
      %v5347 = vpop.f32.mrf.mxu0
      %v5348 = vadd.f32 %v5319, %v5347
      %5349 = vmatmul.bf16.gmra.mxu0 %v4142
      %v5350 = vpop.f32.mrf.mxu0
      %v5351 = vadd.f32 %v5322, %v5350
      %v5352 = vpop.f32.mrf.mxu0
      %v5353 = vadd.f32 %v5324, %v5352
      %5354 = vmatmul.bf16.gmra.mxu0 %v4144
      %v5355 = vpop.f32.mrf.mxu0
      %v5356 = vadd.f32 %v5327, %v5355
      %v5357 = vpop.f32.mrf.mxu0
      %v5358 = vadd.f32 %v5329, %v5357
      %5359 = vmatmul.bf16.gmra.mxu0 %v4200
      %v5360 = vpop.f32.mrf.mxu0
      %v5361 = vadd.f32 %v5332, %v5360
      %v5362 = vpop.f32.mrf.mxu0
      %v5363 = vadd.f32 %v5334, %v5362
      %5364 = vdwg.mxu0
      %5365 = vmatpush.bf16.msra.mxu0 %v4827
      %5366 = vmatpush.bf16.msra.mxu0 %v4825
      %5367 = vmatpush.bf16.msra.mxu0 %v4823
      %5368 = vmatpush.bf16.msra.mxu0 %v4821
      %5369 = vmatpush.bf16.msra.mxu0 %v4819
      %5370 = vmatpush.bf16.msra.mxu0 %v4817
      %5371 = vmatpush.bf16.msra.mxu0 %v4815
      %5372 = vmatpush.bf16.msra.mxu0 %v4813
      %5373 = vmatmul.bf16.gmra.mxu0 %v4141
      %v5374 = vpop.f32.mrf.mxu0
      %v5375 = vadd.f32 %v5346, %v5374
      %v5376 = vpop.f32.mrf.mxu0
      %v5377 = vadd.f32 %v5348, %v5376
      %5378 = vmatmul.bf16.gmra.mxu0 %v4143
      %v5379 = vpop.f32.mrf.mxu0
      %v5380 = vadd.f32 %v5351, %v5379
      %v5381 = vpop.f32.mrf.mxu0
      %v5382 = vadd.f32 %v5353, %v5381
      %5383 = vmatmul.bf16.gmra.mxu0 %v4145
      %v5384 = vpop.f32.mrf.mxu0
      %v5385 = vadd.f32 %v5356, %v5384
      %v5386 = vpop.f32.mrf.mxu0
      %v5387 = vadd.f32 %v5358, %v5386
      %5388 = vmatmul.bf16.gmra.mxu0 %v4201
      %v5389 = vpop.f32.mrf.mxu0
      %v5390 = vadd.f32 %v5361, %v5389
      %v5391 = vpop.f32.mrf.mxu0
      %v5392 = vadd.f32 %v5363, %v5391
      %5393 = vdwg.mxu0
      %5394 = vmatpush.bf16.msra.mxu0 %v4843
      %5395 = vmatpush.bf16.msra.mxu0 %v4841
      %5396 = vmatpush.bf16.msra.mxu0 %v4839
      %5397 = vmatpush.bf16.msra.mxu0 %v4837
      %5398 = vmatpush.bf16.msra.mxu0 %v4835
      %5399 = vmatpush.bf16.msra.mxu0 %v4833
      %5400 = vmatpush.bf16.msra.mxu0 %v4831
      %5401 = vmatpush.bf16.msra.mxu0 %v4829
      %5402 = vmatmul.bf16.gmra.mxu0 %v4180
      %v5403 = vpop.f32.mrf.mxu0
      %v5404 = vadd.f32 %v5375, %v5403
      %v5405 = vpop.f32.mrf.mxu0
      %v5406 = vadd.f32 %v5377, %v5405
      %5407 = vmatmul.bf16.gmra.mxu0 %v4182
      %v5408 = vpop.f32.mrf.mxu0
      %v5409 = vadd.f32 %v5380, %v5408
      %v5410 = vpop.f32.mrf.mxu0
      %v5411 = vadd.f32 %v5382, %v5410
      %5412 = vmatmul.bf16.gmra.mxu0 %v4184
      %v5413 = vpop.f32.mrf.mxu0
      %v5414 = vadd.f32 %v5385, %v5413
      %v5415 = vpop.f32.mrf.mxu0
      %v5416 = vadd.f32 %v5387, %v5415
      %5417 = vmatmul.bf16.gmra.mxu0 %v4210
      %v5418 = vpop.f32.mrf.mxu0
      %v5419 = vadd.f32 %v5390, %v5418
      %v5420 = vpop.f32.mrf.mxu0
      %v5421 = vadd.f32 %v5392, %v5420
      %5422 = vdwg.mxu0
      %5423 = vmatpush.bf16.msra.mxu0 %v4859
      %5424 = vmatpush.bf16.msra.mxu0 %v4857
      %5425 = vmatpush.bf16.msra.mxu0 %v4855
      %5426 = vmatpush.bf16.msra.mxu0 %v4853
      %5427 = vmatpush.bf16.msra.mxu0 %v4851
      %5428 = vmatpush.bf16.msra.mxu0 %v4849
      %5429 = vmatpush.bf16.msra.mxu0 %v4847
      %5430 = vmatpush.bf16.msra.mxu0 %v4845
      %5431 = vmatmul.bf16.gmra.mxu0 %v4181
      %v5432 = vpop.f32.mrf.mxu0
      %v5433 = vadd.f32 %v5404, %v5432
      %v5434 = vpop.f32.mrf.mxu0
      %v5435 = vadd.f32 %v5406, %v5434
      %5436 = vmatmul.bf16.gmra.mxu0 %v4183
      %v5437 = vpop.f32.mrf.mxu0
      %v5438 = vadd.f32 %v5409, %v5437
      %v5439 = vpop.f32.mrf.mxu0
      %v5440 = vadd.f32 %v5411, %v5439
      %5441 = vmatmul.bf16.gmra.mxu0 %v4185
      %v5442 = vpop.f32.mrf.mxu0
      %v5443 = vadd.f32 %v5414, %v5442
      %v5444 = vpop.f32.mrf.mxu0
      %v5445 = vadd.f32 %v5416, %v5444
      %5446 = vmatmul.bf16.gmra.mxu0 %v4211
      %v5447 = vpop.f32.mrf.mxu0
      %v5448 = vadd.f32 %v5419, %v5447
      %v5449 = vpop.f32.mrf.mxu0
      %v5450 = vadd.f32 %v5421, %v5449
      %5451 = vdwg.mxu0
      %vm5452 = vcmp.ge.f32.partialorder %v5201, 0.0
      %vm5453 = vcmp.ge.f32.partialorder %v5433, 0.0
      %vm5454 = vcmp.ge.f32.partialorder %v5203, 0.0
      %vm5455 = vcmp.ge.f32.partialorder %v5435, 0.0
      %vm5456 = vcmp.ge.f32.partialorder %v5206, 0.0
      %vm5457 = vcmp.ge.f32.partialorder %v5438, 0.0
      %vm5458 = vcmp.ge.f32.partialorder %v5208, 0.0
      %vm5459 = vcmp.ge.f32.partialorder %v5440, 0.0
      %vm5460 = vcmp.ge.f32.partialorder %v5211, 0.0
      %vm5461 = vcmp.ge.f32.partialorder %v5443, 0.0
      %vm5462 = vcmp.ge.f32.partialorder %v5213, 0.0
      %vm5463 = vcmp.ge.f32.partialorder %v5445, 0.0
      %vm5464 = vcmp.ge.f32.partialorder %v5216, 0.0
      %vm5465 = vcmp.ge.f32.partialorder %v5448, 0.0
      %vm5466 = vcmp.ge.f32.partialorder %v5218, 0.0
      %vm5467 = vcmp.ge.f32.partialorder %v5450, 0.0
      %v5468 = vmul.f32 %v5201, 0.2
      %v5469 = vmul.f32 %v5433, 0.2
      %v5470 = vmul.f32 %v5203, 0.2
      %v5471 = vmul.f32 %v5435, 0.2
      %v5472 = vmul.f32 %v5206, 0.2
      %v5473 = vmul.f32 %v5438, 0.2
      %v5474 = vmul.f32 %v5208, 0.2
      %v5475 = vmul.f32 %v5440, 0.2
      %v5476 = vmul.f32 %v5211, 0.2
      %v5477 = vmul.f32 %v5443, 0.2
      %v5478 = vmul.f32 %v5213, 0.2
      %v5479 = vmul.f32 %v5445, 0.2
      %v5480 = vmul.f32 %v5216, 0.2
      %v5481 = vmul.f32 %v5448, 0.2
      %v5482 = vmul.f32 %v5218, 0.2
      %v5483 = vmul.f32 %v5450, 0.2
      %v5484 = vsel %vm5452, %v5201, %v5468
      %v5485 = vsel %vm5453, %v5433, %v5469
      %v5486 = vsel %vm5454, %v5203, %v5470
      %v5487 = vsel %vm5455, %v5435, %v5471
      %v5488 = vsel %vm5456, %v5206, %v5472
      %v5489 = vsel %vm5457, %v5438, %v5473
      %v5490 = vsel %vm5458, %v5208, %v5474
      %v5491 = vsel %vm5459, %v5440, %v5475
      %v5492 = vsel %vm5460, %v5211, %v5476
      %v5493 = vsel %vm5461, %v5443, %v5477
      %v5494 = vsel %vm5462, %v5213, %v5478
      %v5495 = vsel %vm5463, %v5445, %v5479
      %v5496 = vsel %vm5464, %v5216, %v5480
      %v5497 = vsel %vm5465, %v5448, %v5481
      %v5498 = vsel %vm5466, %v5218, %v5482
      %v5499 = vsel %vm5467, %v5450, %v5483
      %v5500 = vpack.c.bf16 %v5485, %v5484
      %v5501 = vpack.c.bf16 %v5487, %v5486
      %v5502 = vpack.c.bf16 %v5489, %v5488
      %v5503 = vpack.c.bf16 %v5491, %v5490
      %v5504 = vpack.c.bf16 %v5493, %v5492
      %v5505 = vpack.c.bf16 %v5495, %v5494
      %v5506 = vpack.c.bf16 %v5497, %v5496
      %v5507 = vpack.c.bf16 %v5499, %v5498
      %s5508 = scalar_lea.vmem [#allocation4], 48
      %5509 = vst [vmem:[%s5508] sm:$0xff] %v5500
      %5510 = vst [vmem:[%s5508 + $0x8] sm:$0xff] %v5501
      %5511 = vst [vmem:[%s5508 + $0x10] sm:$0xff] %v5504
      %5512 = vst [vmem:[%s5508 + $0x18] sm:$0xff] %v5505
      %5513 = vst [vmem:[#allocation4 + $0x10] sm:$0xff] %v5502
      %5514 = vst [vmem:[#allocation4 + $0x18] sm:$0xff] %v5503
      %5515 = vst [vmem:[#allocation4 + $0x20] sm:$0xff] %v5506
      %5516 = vst [vmem:[#allocation4 + $0x28] sm:$0xff] %v5507
      %5517 = vst [vmem:[#allocation4] sm:$0xff] 0
      %5518 = vst [vmem:[#allocation4 + $0x8] sm:$0xff] 0
      %5519 = vst [vmem:[%s5508 + $0x20] sm:$0xff] 0
      %5520 = vst [vmem:[%s5508 + $0x28] sm:$0xff] 0
      %v5521 = vld [vmem:[#allocation4] sm:$0xff]
      %v5522 = vld [vmem:[#allocation4 + $0x8] sm:$0xff]
      %v5523 = vld [vmem:[#allocation4 + $0x10] sm:$0xff]
      %v5524 = vld [vmem:[#allocation4 + $0x18] sm:$0xff]
      %v5525 = vld [vmem:[%s5508] sm:$0xff]
      %v5526 = vld [vmem:[%s5508 + $0x8] sm:$0xff]
      %v5527 = vld [vmem:[%s5508 + $0x10] sm:$0xff]
      %v5528 = vld [vmem:[%s5508 + $0x18] sm:$0xff]
      %v5529 = vld [vmem:[#allocation4 + $0x20] sm:$0xff]
      %v5530 = vld [vmem:[#allocation4 + $0x28] sm:$0xff]
      %v5531 = vld [vmem:[%s5508 + $0x20] sm:$0xff]
      %v5532 = vld [vmem:[%s5508 + $0x28] sm:$0xff]
      %v5537 = vunpack.c.l.b16 %v5521
      %v5538 = vunpack.c.h.b16 %v5521
      %v5539 = vunpack.c.l.b16 %v5522
      %v5540 = vunpack.c.h.b16 %v5522
      %v5541 = vunpack.c.l.b16 %v5523
      %v5542 = vunpack.c.h.b16 %v5523
      %v5543 = vunpack.c.l.b16 %v5524
      %v5544 = vunpack.c.h.b16 %v5524
      %v5545 = vpack.c.b16 %v5539, %v5537
      %v5546 = vpack.c.b16 %v5540, %v5538
      %v5547 = vpack.c.b16 %v5543, %v5541
      %v5548 = vpack.c.b16 %v5544, %v5542
      %v5557 = vunpack.c.l.b16 %v5525
      %v5558 = vunpack.c.h.b16 %v5525
      %v5559 = vunpack.c.l.b16 %v5526
      %v5560 = vunpack.c.h.b16 %v5526
      %v5561 = vunpack.c.l.b16 %v5527
      %v5562 = vunpack.c.h.b16 %v5527
      %v5563 = vunpack.c.l.b16 %v5528
      %v5564 = vunpack.c.h.b16 %v5528
      %v5565 = vpack.c.b16 %v5559, %v5557
      %v5566 = vpack.c.b16 %v5560, %v5558
      %v5567 = vpack.c.b16 %v5563, %v5561
      %v5568 = vpack.c.b16 %v5564, %v5562
      %v5575 = vunpack.c.l.b16 %v5529
      %v5576 = vunpack.c.h.b16 %v5529
      %v5577 = vunpack.c.l.b16 %v5530
      %v5578 = vunpack.c.h.b16 %v5530
      %v5579 = vpack.c.b16 %v5577, %v5575
      %v5580 = vpack.c.b16 %v5578, %v5576
      %v5585 = vunpack.c.l.b16 %v5531
      %v5586 = vunpack.c.h.b16 %v5531
      %v5587 = vunpack.c.l.b16 %v5532
      %v5588 = vunpack.c.h.b16 %v5532
      %v5589 = vpack.c.b16 %v5587, %v5585
      %v5590 = vpack.c.b16 %v5588, %v5586
      %v5593 = vld [vmem:[%s7] sm:$0xff]
      %v5594 = vld [vmem:[%s7 + $0x8] sm:$0xff]
      %v5595 = vld [vmem:[%s7 + $0x10] sm:$0xff]
      %v5596 = vld [vmem:[%s7 + $0x18] sm:$0xff]
      %v5597 = vld [vmem:[%s7 + $0x20] sm:$0xff]
      %v5598 = vld [vmem:[%s7 + $0x28] sm:$0xff]
      %v5599 = vld [vmem:[%s7 + $0x30] sm:$0xff]
      %v5600 = vld [vmem:[%s7 + $0x38] sm:$0xff]
      %v5601 = vld [vmem:[%s7 + $0x40] sm:$0xff]
      %v5602 = vld [vmem:[%s7 + $0x48] sm:$0xff]
      %v5603 = vld [vmem:[%s7 + $0x50] sm:$0xff]
      %v5604 = vld [vmem:[%s7 + $0x58] sm:$0xff]
      %v5605 = vld [vmem:[%s7 + $0x60] sm:$0xff]
      %v5606 = vld [vmem:[%s7 + $0x68] sm:$0xff]
      %v5607 = vld [vmem:[%s7 + $0x70] sm:$0xff]
      %v5608 = vld [vmem:[%s7 + $0x78] sm:$0xff]
      %v5609 = vld [vmem:[%s7 + $0x80] sm:$0xff]
      %v5610 = vld [vmem:[%s7 + $0x88] sm:$0xff]
      %v5611 = vld [vmem:[%s7 + $0x90] sm:$0xff]
      %v5612 = vld [vmem:[%s7 + $0x98] sm:$0xff]
      %v5613 = vld [vmem:[%s7 + $0xa0] sm:$0xff]
      %v5614 = vld [vmem:[%s7 + $0xa8] sm:$0xff]
      %v5615 = vld [vmem:[%s7 + $0xb0] sm:$0xff]
      %v5616 = vld [vmem:[%s7 + $0xb8] sm:$0xff]
      %v5617 = vld [vmem:[%s7 + $0xc0] sm:$0xff]
      %v5618 = vld [vmem:[%s7 + $0xc8] sm:$0xff]
      %v5619 = vld [vmem:[%s7 + $0xd0] sm:$0xff]
      %v5620 = vld [vmem:[%s7 + $0xd8] sm:$0xff]
      %v5621 = vld [vmem:[%s7 + $0xe0] sm:$0xff]
      %v5622 = vld [vmem:[%s7 + $0xe8] sm:$0xff]
      %v5623 = vld [vmem:[%s7 + $0xf0] sm:$0xff]
      %v5624 = vld [vmem:[%s7 + $0xf8] sm:$0xff]
      %v5625 = vld [vmem:[%s7 + $0x100] sm:$0xff]
      %v5626 = vld [vmem:[%s7 + $0x108] sm:$0xff]
      %v5627 = vld [vmem:[%s7 + $0x110] sm:$0xff]
      %v5628 = vld [vmem:[%s7 + $0x118] sm:$0xff]
      %v5629 = vld [vmem:[%s7 + $0x120] sm:$0xff]
      %v5630 = vld [vmem:[%s7 + $0x128] sm:$0xff]
      %v5631 = vld [vmem:[%s7 + $0x130] sm:$0xff]
      %v5632 = vld [vmem:[%s7 + $0x138] sm:$0xff]
      %v5633 = vld [vmem:[%s7 + $0x140] sm:$0xff]
      %v5634 = vld [vmem:[%s7 + $0x148] sm:$0xff]
      %v5635 = vld [vmem:[%s7 + $0x150] sm:$0xff]
      %v5636 = vld [vmem:[%s7 + $0x158] sm:$0xff]
      %v5637 = vld [vmem:[%s7 + $0x160] sm:$0xff]
      %v5638 = vld [vmem:[%s7 + $0x168] sm:$0xff]
      %v5639 = vld [vmem:[%s7 + $0x170] sm:$0xff]
      %v5640 = vld [vmem:[%s7 + $0x178] sm:$0xff]
      %v5641 = vld [vmem:[%s7 + $0x180] sm:$0xff]
      %v5642 = vld [vmem:[%s7 + $0x188] sm:$0xff]
      %v5643 = vld [vmem:[%s7 + $0x190] sm:$0xff]
      %v5644 = vld [vmem:[%s7 + $0x198] sm:$0xff]
      %v5645 = vld [vmem:[%s7 + $0x1a0] sm:$0xff]
      %v5646 = vld [vmem:[%s7 + $0x1a8] sm:$0xff]
      %v5647 = vld [vmem:[%s7 + $0x1b0] sm:$0xff]
      %v5648 = vld [vmem:[%s7 + $0x1b8] sm:$0xff]
      %v5649 = vld [vmem:[%s7 + $0x1c0] sm:$0xff]
      %v5650 = vld [vmem:[%s7 + $0x1c8] sm:$0xff]
      %v5651 = vld [vmem:[%s7 + $0x1d0] sm:$0xff]
      %v5652 = vld [vmem:[%s7 + $0x1d8] sm:$0xff]
      %v5653 = vld [vmem:[%s7 + $0x1e0] sm:$0xff]
      %v5654 = vld [vmem:[%s7 + $0x1e8] sm:$0xff]
      %v5655 = vld [vmem:[%s7 + $0x1f0] sm:$0xff]
      %v5656 = vld [vmem:[%s7 + $0x1f8] sm:$0xff]
      %v5657 = vld [vmem:[%s7 + $0x200] sm:$0xff]
      %v5658 = vld [vmem:[%s7 + $0x208] sm:$0xff]
      %v5659 = vld [vmem:[%s7 + $0x210] sm:$0xff]
      %v5660 = vld [vmem:[%s7 + $0x218] sm:$0xff]
      %v5661 = vld [vmem:[%s7 + $0x220] sm:$0xff]
      %v5662 = vld [vmem:[%s7 + $0x228] sm:$0xff]
      %v5663 = vld [vmem:[%s7 + $0x230] sm:$0xff]
      %v5664 = vld [vmem:[%s7 + $0x238] sm:$0xff]
      %v5665 = vld [vmem:[%s7 + $0x240] sm:$0xff]
      %v5666 = vld [vmem:[%s7 + $0x248] sm:$0xff]
      %v5667 = vld [vmem:[%s7 + $0x250] sm:$0xff]
      %v5668 = vld [vmem:[%s7 + $0x258] sm:$0xff]
      %v5669 = vld [vmem:[%s7 + $0x260] sm:$0xff]
      %v5670 = vld [vmem:[%s7 + $0x268] sm:$0xff]
      %v5671 = vld [vmem:[%s7 + $0x270] sm:$0xff]
      %v5672 = vld [vmem:[%s7 + $0x278] sm:$0xff]
      %v5673 = vld [vmem:[%s7 + $0x280] sm:$0xff]
      %v5674 = vld [vmem:[%s7 + $0x288] sm:$0xff]
      %v5675 = vld [vmem:[%s7 + $0x290] sm:$0xff]
      %v5676 = vld [vmem:[%s7 + $0x298] sm:$0xff]
      %v5677 = vld [vmem:[%s7 + $0x2a0] sm:$0xff]
      %v5678 = vld [vmem:[%s7 + $0x2a8] sm:$0xff]
      %v5679 = vld [vmem:[%s7 + $0x2b0] sm:$0xff]
      %v5680 = vld [vmem:[%s7 + $0x2b8] sm:$0xff]
      %v5681 = vld [vmem:[%s7 + $0x2c0] sm:$0xff]
      %v5682 = vld [vmem:[%s7 + $0x2c8] sm:$0xff]
      %v5683 = vld [vmem:[%s7 + $0x2d0] sm:$0xff]
      %v5684 = vld [vmem:[%s7 + $0x2d8] sm:$0xff]
      %v5685 = vld [vmem:[%s7 + $0x2e0] sm:$0xff]
      %v5686 = vld [vmem:[%s7 + $0x2e8] sm:$0xff]
      %v5687 = vld [vmem:[%s7 + $0x2f0] sm:$0xff]
      %v5688 = vld [vmem:[%s7 + $0x2f8] sm:$0xff]
      %v5689 = vld [vmem:[%s7 + $0x300] sm:$0xff]
      %v5690 = vld [vmem:[%s7 + $0x308] sm:$0xff]
      %v5691 = vld [vmem:[%s7 + $0x310] sm:$0xff]
      %v5692 = vld [vmem:[%s7 + $0x318] sm:$0xff]
      %v5693 = vld [vmem:[%s7 + $0x320] sm:$0xff]
      %v5694 = vld [vmem:[%s7 + $0x328] sm:$0xff]
      %v5695 = vld [vmem:[%s7 + $0x330] sm:$0xff]
      %v5696 = vld [vmem:[%s7 + $0x338] sm:$0xff]
      %v5697 = vld [vmem:[%s7 + $0x340] sm:$0xff]
      %v5698 = vld [vmem:[%s7 + $0x348] sm:$0xff]
      %v5699 = vld [vmem:[%s7 + $0x350] sm:$0xff]
      %v5700 = vld [vmem:[%s7 + $0x358] sm:$0xff]
      %v5701 = vld [vmem:[%s7 + $0x360] sm:$0xff]
      %v5702 = vld [vmem:[%s7 + $0x368] sm:$0xff]
      %v5703 = vld [vmem:[%s7 + $0x370] sm:$0xff]
      %v5704 = vld [vmem:[%s7 + $0x378] sm:$0xff]
      %v5705 = vld [vmem:[%s7 + $0x380] sm:$0xff]
      %v5706 = vld [vmem:[%s7 + $0x388] sm:$0xff]
      %v5707 = vld [vmem:[%s7 + $0x390] sm:$0xff]
      %v5708 = vld [vmem:[%s7 + $0x398] sm:$0xff]
      %v5709 = vld [vmem:[%s7 + $0x3a0] sm:$0xff]
      %v5710 = vld [vmem:[%s7 + $0x3a8] sm:$0xff]
      %v5711 = vld [vmem:[%s7 + $0x3b0] sm:$0xff]
      %v5712 = vld [vmem:[%s7 + $0x3b8] sm:$0xff]
      %v5713 = vld [vmem:[%s7 + $0x3c0] sm:$0xff]
      %v5714 = vld [vmem:[%s7 + $0x3c8] sm:$0xff]
      %v5715 = vld [vmem:[%s7 + $0x3d0] sm:$0xff]
      %v5716 = vld [vmem:[%s7 + $0x3d8] sm:$0xff]
      %v5717 = vld [vmem:[%s7 + $0x3e0] sm:$0xff]
      %v5718 = vld [vmem:[%s7 + $0x3e8] sm:$0xff]
      %v5719 = vld [vmem:[%s7 + $0x3f0] sm:$0xff]
      %v5720 = vld [vmem:[%s7 + $0x3f8] sm:$0xff]
      %v5721 = vld [vmem:[%s8] sm:$0x3]
      %v5723 = vperm.slane %v5721, 0
      %v5724 = vperm.slane %v5721, 1
      %v5855 = vunpack.c.l.b16 %v5593
      %v5856 = vunpack.c.h.b16 %v5593
      %v5857 = vunpack.c.l.b16 %v5594
      %v5858 = vunpack.c.h.b16 %v5594
      %v5859 = vunpack.c.l.b16 %v5595
      %v5860 = vunpack.c.h.b16 %v5595
      %v5861 = vunpack.c.l.b16 %v5596
      %v5862 = vunpack.c.h.b16 %v5596
      %v5863 = vunpack.c.l.b16 %v5597
      %v5864 = vunpack.c.h.b16 %v5597
      %v5865 = vunpack.c.l.b16 %v5598
      %v5866 = vunpack.c.h.b16 %v5598
      %v5867 = vunpack.c.l.b16 %v5599
      %v5868 = vunpack.c.h.b16 %v5599
      %v5869 = vunpack.c.l.b16 %v5600
      %v5870 = vunpack.c.h.b16 %v5600
      %v5871 = vunpack.c.l.b16 %v5601
      %v5872 = vunpack.c.h.b16 %v5601
      %v5873 = vunpack.c.l.b16 %v5602
      %v5874 = vunpack.c.h.b16 %v5602
      %v5875 = vunpack.c.l.b16 %v5603
      %v5876 = vunpack.c.h.b16 %v5603
      %v5877 = vunpack.c.l.b16 %v5604
      %v5878 = vunpack.c.h.b16 %v5604
      %v5879 = vunpack.c.l.b16 %v5605
      %v5880 = vunpack.c.h.b16 %v5605
      %v5881 = vunpack.c.l.b16 %v5606
      %v5882 = vunpack.c.h.b16 %v5606
      %v5883 = vunpack.c.l.b16 %v5607
      %v5884 = vunpack.c.h.b16 %v5607
      %v5885 = vunpack.c.l.b16 %v5608
      %v5886 = vunpack.c.h.b16 %v5608
      %v5887 = vunpack.c.l.b16 %v5609
      %v5888 = vunpack.c.h.b16 %v5609
      %v5889 = vunpack.c.l.b16 %v5610
      %v5890 = vunpack.c.h.b16 %v5610
      %v5891 = vunpack.c.l.b16 %v5611
      %v5892 = vunpack.c.h.b16 %v5611
      %v5893 = vunpack.c.l.b16 %v5612
      %v5894 = vunpack.c.h.b16 %v5612
      %v5895 = vunpack.c.l.b16 %v5613
      %v5896 = vunpack.c.h.b16 %v5613
      %v5897 = vunpack.c.l.b16 %v5614
      %v5898 = vunpack.c.h.b16 %v5614
      %v5899 = vunpack.c.l.b16 %v5615
      %v5900 = vunpack.c.h.b16 %v5615
      %v5901 = vunpack.c.l.b16 %v5616
      %v5902 = vunpack.c.h.b16 %v5616
      %v5903 = vunpack.c.l.b16 %v5617
      %v5904 = vunpack.c.h.b16 %v5617
      %v5905 = vunpack.c.l.b16 %v5618
      %v5906 = vunpack.c.h.b16 %v5618
      %v5907 = vunpack.c.l.b16 %v5619
      %v5908 = vunpack.c.h.b16 %v5619
      %v5909 = vunpack.c.l.b16 %v5620
      %v5910 = vunpack.c.h.b16 %v5620
      %v5911 = vunpack.c.l.b16 %v5621
      %v5912 = vunpack.c.h.b16 %v5621
      %v5913 = vunpack.c.l.b16 %v5622
      %v5914 = vunpack.c.h.b16 %v5622
      %v5915 = vunpack.c.l.b16 %v5623
      %v5916 = vunpack.c.h.b16 %v5623
      %v5917 = vunpack.c.l.b16 %v5624
      %v5918 = vunpack.c.h.b16 %v5624
      %v5919 = vunpack.c.l.b16 %v5625
      %v5920 = vunpack.c.h.b16 %v5625
      %v5921 = vunpack.c.l.b16 %v5626
      %v5922 = vunpack.c.h.b16 %v5626
      %v5923 = vunpack.c.l.b16 %v5627
      %v5924 = vunpack.c.h.b16 %v5627
      %v5925 = vunpack.c.l.b16 %v5628
      %v5926 = vunpack.c.h.b16 %v5628
      %v5927 = vunpack.c.l.b16 %v5629
      %v5928 = vunpack.c.h.b16 %v5629
      %v5929 = vunpack.c.l.b16 %v5630
      %v5930 = vunpack.c.h.b16 %v5630
      %v5931 = vunpack.c.l.b16 %v5631
      %v5932 = vunpack.c.h.b16 %v5631
      %v5933 = vunpack.c.l.b16 %v5632
      %v5934 = vunpack.c.h.b16 %v5632
      %v5935 = vunpack.c.l.b16 %v5633
      %v5936 = vunpack.c.h.b16 %v5633
      %v5937 = vunpack.c.l.b16 %v5634
      %v5938 = vunpack.c.h.b16 %v5634
      %v5939 = vunpack.c.l.b16 %v5635
      %v5940 = vunpack.c.h.b16 %v5635
      %v5941 = vunpack.c.l.b16 %v5636
      %v5942 = vunpack.c.h.b16 %v5636
      %v5943 = vunpack.c.l.b16 %v5637
      %v5944 = vunpack.c.h.b16 %v5637
      %v5945 = vunpack.c.l.b16 %v5638
      %v5946 = vunpack.c.h.b16 %v5638
      %v5947 = vunpack.c.l.b16 %v5639
      %v5948 = vunpack.c.h.b16 %v5639
      %v5949 = vunpack.c.l.b16 %v5640
      %v5950 = vunpack.c.h.b16 %v5640
      %v5951 = vunpack.c.l.b16 %v5641
      %v5952 = vunpack.c.h.b16 %v5641
      %v5953 = vunpack.c.l.b16 %v5642
      %v5954 = vunpack.c.h.b16 %v5642
      %v5955 = vunpack.c.l.b16 %v5643
      %v5956 = vunpack.c.h.b16 %v5643
      %v5957 = vunpack.c.l.b16 %v5644
      %v5958 = vunpack.c.h.b16 %v5644
      %v5959 = vunpack.c.l.b16 %v5645
      %v5960 = vunpack.c.h.b16 %v5645
      %v5961 = vunpack.c.l.b16 %v5646
      %v5962 = vunpack.c.h.b16 %v5646
      %v5963 = vunpack.c.l.b16 %v5647
      %v5964 = vunpack.c.h.b16 %v5647
      %v5965 = vunpack.c.l.b16 %v5648
      %v5966 = vunpack.c.h.b16 %v5648
      %v5967 = vunpack.c.l.b16 %v5649
      %v5968 = vunpack.c.h.b16 %v5649
      %v5969 = vunpack.c.l.b16 %v5650
      %v5970 = vunpack.c.h.b16 %v5650
      %v5971 = vunpack.c.l.b16 %v5651
      %v5972 = vunpack.c.h.b16 %v5651
      %v5973 = vunpack.c.l.b16 %v5652
      %v5974 = vunpack.c.h.b16 %v5652
      %v5975 = vunpack.c.l.b16 %v5653
      %v5976 = vunpack.c.h.b16 %v5653
      %v5977 = vunpack.c.l.b16 %v5654
      %v5978 = vunpack.c.h.b16 %v5654
      %v5979 = vunpack.c.l.b16 %v5655
      %v5980 = vunpack.c.h.b16 %v5655
      %v5981 = vunpack.c.l.b16 %v5656
      %v5982 = vunpack.c.h.b16 %v5656
      %v5983 = vunpack.c.l.b16 %v5657
      %v5984 = vunpack.c.h.b16 %v5657
      %v5985 = vunpack.c.l.b16 %v5658
      %v5986 = vunpack.c.h.b16 %v5658
      %v5987 = vunpack.c.l.b16 %v5659
      %v5988 = vunpack.c.h.b16 %v5659
      %v5989 = vunpack.c.l.b16 %v5660
      %v5990 = vunpack.c.h.b16 %v5660
      %v5991 = vunpack.c.l.b16 %v5661
      %v5992 = vunpack.c.h.b16 %v5661
      %v5993 = vunpack.c.l.b16 %v5662
      %v5994 = vunpack.c.h.b16 %v5662
      %v5995 = vunpack.c.l.b16 %v5663
      %v5996 = vunpack.c.h.b16 %v5663
      %v5997 = vunpack.c.l.b16 %v5664
      %v5998 = vunpack.c.h.b16 %v5664
      %v5999 = vunpack.c.l.b16 %v5665
      %v6000 = vunpack.c.h.b16 %v5665
      %v6001 = vunpack.c.l.b16 %v5666
      %v6002 = vunpack.c.h.b16 %v5666
      %v6003 = vunpack.c.l.b16 %v5667
      %v6004 = vunpack.c.h.b16 %v5667
      %v6005 = vunpack.c.l.b16 %v5668
      %v6006 = vunpack.c.h.b16 %v5668
      %v6007 = vunpack.c.l.b16 %v5669
      %v6008 = vunpack.c.h.b16 %v5669
      %v6009 = vunpack.c.l.b16 %v5670
      %v6010 = vunpack.c.h.b16 %v5670
      %v6011 = vunpack.c.l.b16 %v5671
      %v6012 = vunpack.c.h.b16 %v5671
      %v6013 = vunpack.c.l.b16 %v5672
      %v6014 = vunpack.c.h.b16 %v5672
      %v6015 = vunpack.c.l.b16 %v5673
      %v6016 = vunpack.c.h.b16 %v5673
      %v6017 = vunpack.c.l.b16 %v5674
      %v6018 = vunpack.c.h.b16 %v5674
      %v6019 = vunpack.c.l.b16 %v5675
      %v6020 = vunpack.c.h.b16 %v5675
      %v6021 = vunpack.c.l.b16 %v5676
      %v6022 = vunpack.c.h.b16 %v5676
      %v6023 = vunpack.c.l.b16 %v5677
      %v6024 = vunpack.c.h.b16 %v5677
      %v6025 = vunpack.c.l.b16 %v5678
      %v6026 = vunpack.c.h.b16 %v5678
      %v6027 = vunpack.c.l.b16 %v5679
      %v6028 = vunpack.c.h.b16 %v5679
      %v6029 = vunpack.c.l.b16 %v5680
      %v6030 = vunpack.c.h.b16 %v5680
      %v6031 = vunpack.c.l.b16 %v5681
      %v6032 = vunpack.c.h.b16 %v5681
      %v6033 = vunpack.c.l.b16 %v5682
      %v6034 = vunpack.c.h.b16 %v5682
      %v6035 = vunpack.c.l.b16 %v5683
      %v6036 = vunpack.c.h.b16 %v5683
      %v6037 = vunpack.c.l.b16 %v5684
      %v6038 = vunpack.c.h.b16 %v5684
      %v6039 = vunpack.c.l.b16 %v5685
      %v6040 = vunpack.c.h.b16 %v5685
      %v6041 = vunpack.c.l.b16 %v5686
      %v6042 = vunpack.c.h.b16 %v5686
      %v6043 = vunpack.c.l.b16 %v5687
      %v6044 = vunpack.c.h.b16 %v5687
      %v6045 = vunpack.c.l.b16 %v5688
      %v6046 = vunpack.c.h.b16 %v5688
      %v6047 = vunpack.c.l.b16 %v5689
      %v6048 = vunpack.c.h.b16 %v5689
      %v6049 = vunpack.c.l.b16 %v5690
      %v6050 = vunpack.c.h.b16 %v5690
      %v6051 = vunpack.c.l.b16 %v5691
      %v6052 = vunpack.c.h.b16 %v5691
      %v6053 = vunpack.c.l.b16 %v5692
      %v6054 = vunpack.c.h.b16 %v5692
      %v6055 = vunpack.c.l.b16 %v5693
      %v6056 = vunpack.c.h.b16 %v5693
      %v6057 = vunpack.c.l.b16 %v5694
      %v6058 = vunpack.c.h.b16 %v5694
      %v6059 = vunpack.c.l.b16 %v5695
      %v6060 = vunpack.c.h.b16 %v5695
      %v6061 = vunpack.c.l.b16 %v5696
      %v6062 = vunpack.c.h.b16 %v5696
      %v6063 = vunpack.c.l.b16 %v5697
      %v6064 = vunpack.c.h.b16 %v5697
      %v6065 = vunpack.c.l.b16 %v5698
      %v6066 = vunpack.c.h.b16 %v5698
      %v6067 = vunpack.c.l.b16 %v5699
      %v6068 = vunpack.c.h.b16 %v5699
      %v6069 = vunpack.c.l.b16 %v5700
      %v6070 = vunpack.c.h.b16 %v5700
      %v6071 = vunpack.c.l.b16 %v5701
      %v6072 = vunpack.c.h.b16 %v5701
      %v6073 = vunpack.c.l.b16 %v5702
      %v6074 = vunpack.c.h.b16 %v5702
      %v6075 = vunpack.c.l.b16 %v5703
      %v6076 = vunpack.c.h.b16 %v5703
      %v6077 = vunpack.c.l.b16 %v5704
      %v6078 = vunpack.c.h.b16 %v5704
      %v6079 = vunpack.c.l.b16 %v5705
      %v6080 = vunpack.c.h.b16 %v5705
      %v6081 = vunpack.c.l.b16 %v5706
      %v6082 = vunpack.c.h.b16 %v5706
      %v6083 = vunpack.c.l.b16 %v5707
      %v6084 = vunpack.c.h.b16 %v5707
      %v6085 = vunpack.c.l.b16 %v5708
      %v6086 = vunpack.c.h.b16 %v5708
      %v6087 = vunpack.c.l.b16 %v5709
      %v6088 = vunpack.c.h.b16 %v5709
      %v6089 = vunpack.c.l.b16 %v5710
      %v6090 = vunpack.c.h.b16 %v5710
      %v6091 = vunpack.c.l.b16 %v5711
      %v6092 = vunpack.c.h.b16 %v5711
      %v6093 = vunpack.c.l.b16 %v5712
      %v6094 = vunpack.c.h.b16 %v5712
      %v6095 = vunpack.c.l.b16 %v5713
      %v6096 = vunpack.c.h.b16 %v5713
      %v6097 = vunpack.c.l.b16 %v5714
      %v6098 = vunpack.c.h.b16 %v5714
      %v6099 = vunpack.c.l.b16 %v5715
      %v6100 = vunpack.c.h.b16 %v5715
      %v6101 = vunpack.c.l.b16 %v5716
      %v6102 = vunpack.c.h.b16 %v5716
      %v6103 = vunpack.c.l.b16 %v5717
      %v6104 = vunpack.c.h.b16 %v5717
      %v6105 = vunpack.c.l.b16 %v5718
      %v6106 = vunpack.c.h.b16 %v5718
      %v6107 = vunpack.c.l.b16 %v5719
      %v6108 = vunpack.c.h.b16 %v5719
      %v6109 = vunpack.c.l.b16 %v5720
      %v6110 = vunpack.c.h.b16 %v5720
      %v6111 = vpack.c.b16 %v5857, %v5855
      %v6112 = vpack.c.b16 %v5858, %v5856
      %v6113 = vpack.c.b16 %v5861, %v5859
      %v6114 = vpack.c.b16 %v5862, %v5860
      %v6115 = vpack.c.b16 %v5865, %v5863
      %v6116 = vpack.c.b16 %v5866, %v5864
      %v6117 = vpack.c.b16 %v5869, %v5867
      %v6118 = vpack.c.b16 %v5870, %v5868
      %v6119 = vpack.c.b16 %v5873, %v5871
      %v6120 = vpack.c.b16 %v5874, %v5872
      %v6121 = vpack.c.b16 %v5877, %v5875
      %v6122 = vpack.c.b16 %v5878, %v5876
      %v6123 = vpack.c.b16 %v5881, %v5879
      %v6124 = vpack.c.b16 %v5882, %v5880
      %v6125 = vpack.c.b16 %v5885, %v5883
      %v6126 = vpack.c.b16 %v5886, %v5884
      %v6127 = vpack.c.b16 %v5889, %v5887
      %v6128 = vpack.c.b16 %v5890, %v5888
      %v6129 = vpack.c.b16 %v5893, %v5891
      %v6130 = vpack.c.b16 %v5894, %v5892
      %v6131 = vpack.c.b16 %v5897, %v5895
      %v6132 = vpack.c.b16 %v5898, %v5896
      %v6133 = vpack.c.b16 %v5901, %v5899
      %v6134 = vpack.c.b16 %v5902, %v5900
      %v6135 = vpack.c.b16 %v5905, %v5903
      %v6136 = vpack.c.b16 %v5906, %v5904
      %v6137 = vpack.c.b16 %v5909, %v5907
      %v6138 = vpack.c.b16 %v5910, %v5908
      %v6139 = vpack.c.b16 %v5913, %v5911
      %v6140 = vpack.c.b16 %v5914, %v5912
      %v6141 = vpack.c.b16 %v5917, %v5915
      %v6142 = vpack.c.b16 %v5918, %v5916
      %v6143 = vpack.c.b16 %v5921, %v5919
      %v6144 = vpack.c.b16 %v5922, %v5920
      %v6145 = vpack.c.b16 %v5925, %v5923
      %v6146 = vpack.c.b16 %v5926, %v5924
      %v6147 = vpack.c.b16 %v5929, %v5927
      %v6148 = vpack.c.b16 %v5930, %v5928
      %v6149 = vpack.c.b16 %v5933, %v5931
      %v6150 = vpack.c.b16 %v5934, %v5932
      %v6151 = vpack.c.b16 %v5937, %v5935
      %v6152 = vpack.c.b16 %v5938, %v5936
      %v6153 = vpack.c.b16 %v5941, %v5939
      %v6154 = vpack.c.b16 %v5942, %v5940
      %v6155 = vpack.c.b16 %v5945, %v5943
      %v6156 = vpack.c.b16 %v5946, %v5944
      %v6157 = vpack.c.b16 %v5949, %v5947
      %v6158 = vpack.c.b16 %v5950, %v5948
      %v6159 = vpack.c.b16 %v5953, %v5951
      %v6160 = vpack.c.b16 %v5954, %v5952
      %v6161 = vpack.c.b16 %v5957, %v5955
      %v6162 = vpack.c.b16 %v5958, %v5956
      %v6163 = vpack.c.b16 %v5961, %v5959
      %v6164 = vpack.c.b16 %v5962, %v5960
      %v6165 = vpack.c.b16 %v5965, %v5963
      %v6166 = vpack.c.b16 %v5966, %v5964
      %v6167 = vpack.c.b16 %v5969, %v5967
      %v6168 = vpack.c.b16 %v5970, %v5968
      %v6169 = vpack.c.b16 %v5973, %v5971
      %v6170 = vpack.c.b16 %v5974, %v5972
      %v6171 = vpack.c.b16 %v5977, %v5975
      %v6172 = vpack.c.b16 %v5978, %v5976
      %v6173 = vpack.c.b16 %v5981, %v5979
      %v6174 = vpack.c.b16 %v5982, %v5980
      %v6175 = vpack.c.b16 %v5985, %v5983
      %v6176 = vpack.c.b16 %v5986, %v5984
      %v6177 = vpack.c.b16 %v5989, %v5987
      %v6178 = vpack.c.b16 %v5990, %v5988
      %v6179 = vpack.c.b16 %v5993, %v5991
      %v6180 = vpack.c.b16 %v5994, %v5992
      %v6181 = vpack.c.b16 %v5997, %v5995
      %v6182 = vpack.c.b16 %v5998, %v5996
      %v6183 = vpack.c.b16 %v6001, %v5999
      %v6184 = vpack.c.b16 %v6002, %v6000
      %v6185 = vpack.c.b16 %v6005, %v6003
      %v6186 = vpack.c.b16 %v6006, %v6004
      %v6187 = vpack.c.b16 %v6009, %v6007
      %v6188 = vpack.c.b16 %v6010, %v6008
      %v6189 = vpack.c.b16 %v6013, %v6011
      %v6190 = vpack.c.b16 %v6014, %v6012
      %v6191 = vpack.c.b16 %v6017, %v6015
      %v6192 = vpack.c.b16 %v6018, %v6016
      %v6193 = vpack.c.b16 %v6021, %v6019
      %v6194 = vpack.c.b16 %v6022, %v6020
      %v6195 = vpack.c.b16 %v6025, %v6023
      %v6196 = vpack.c.b16 %v6026, %v6024
      %v6197 = vpack.c.b16 %v6029, %v6027
      %v6198 = vpack.c.b16 %v6030, %v6028
      %v6199 = vpack.c.b16 %v6033, %v6031
      %v6200 = vpack.c.b16 %v6034, %v6032
      %v6201 = vpack.c.b16 %v6037, %v6035
      %v6202 = vpack.c.b16 %v6038, %v6036
      %v6203 = vpack.c.b16 %v6041, %v6039
      %v6204 = vpack.c.b16 %v6042, %v6040
      %v6205 = vpack.c.b16 %v6045, %v6043
      %v6206 = vpack.c.b16 %v6046, %v6044
      %v6207 = vpack.c.b16 %v6049, %v6047
      %v6208 = vpack.c.b16 %v6050, %v6048
      %v6209 = vpack.c.b16 %v6053, %v6051
      %v6210 = vpack.c.b16 %v6054, %v6052
      %v6211 = vpack.c.b16 %v6057, %v6055
      %v6212 = vpack.c.b16 %v6058, %v6056
      %v6213 = vpack.c.b16 %v6061, %v6059
      %v6214 = vpack.c.b16 %v6062, %v6060
      %v6215 = vpack.c.b16 %v6065, %v6063
      %v6216 = vpack.c.b16 %v6066, %v6064
      %v6217 = vpack.c.b16 %v6069, %v6067
      %v6218 = vpack.c.b16 %v6070, %v6068
      %v6219 = vpack.c.b16 %v6073, %v6071
      %v6220 = vpack.c.b16 %v6074, %v6072
      %v6221 = vpack.c.b16 %v6077, %v6075
      %v6222 = vpack.c.b16 %v6078, %v6076
      %v6223 = vpack.c.b16 %v6081, %v6079
      %v6224 = vpack.c.b16 %v6082, %v6080
      %v6225 = vpack.c.b16 %v6085, %v6083
      %v6226 = vpack.c.b16 %v6086, %v6084
      %v6227 = vpack.c.b16 %v6089, %v6087
      %v6228 = vpack.c.b16 %v6090, %v6088
      %v6229 = vpack.c.b16 %v6093, %v6091
      %v6230 = vpack.c.b16 %v6094, %v6092
      %v6231 = vpack.c.b16 %v6097, %v6095
      %v6232 = vpack.c.b16 %v6098, %v6096
      %v6233 = vpack.c.b16 %v6101, %v6099
      %v6234 = vpack.c.b16 %v6102, %v6100
      %v6235 = vpack.c.b16 %v6105, %v6103
      %v6236 = vpack.c.b16 %v6106, %v6104
      %v6237 = vpack.c.b16 %v6109, %v6107
      %v6238 = vpack.c.b16 %v6110, %v6108
      %6367 = vmatpush.bf16.msra.mxu0 %v6125
      %6368 = vmatpush.bf16.msra.mxu0 %v6123
      %6369 = vmatpush.bf16.msra.mxu0 %v6121
      %6370 = vmatpush.bf16.msra.mxu0 %v6119
      %6371 = vmatpush.bf16.msra.mxu0 %v6117
      %6372 = vmatpush.bf16.msra.mxu0 %v6115
      %6373 = vmatpush.bf16.msra.mxu0 %v6113
      %6374 = vmatpush.bf16.msra.mxu0 %v6111
      %6375 = vmatmul.bf16.gmra.mxu0 %v5545
      %v6376 = vpop.f32.mrf.mxu0
      %v6377 = vadd.f32 %v5723, %v6376
      %v6378 = vpop.f32.mrf.mxu0
      %v6379 = vadd.f32 %v5723, %v6378
      %6380 = vmatmul.bf16.gmra.mxu0 %v5547
      %v6381 = vpop.f32.mrf.mxu0
      %v6382 = vadd.f32 %v5723, %v6381
      %v6383 = vpop.f32.mrf.mxu0
      %v6384 = vadd.f32 %v5723, %v6383
      %6385 = vdwg.mxu0
      %6386 = vmatpush.bf16.msra.mxu0 %v6141
      %6387 = vmatpush.bf16.msra.mxu0 %v6139
      %6388 = vmatpush.bf16.msra.mxu0 %v6137
      %6389 = vmatpush.bf16.msra.mxu0 %v6135
      %6390 = vmatpush.bf16.msra.mxu0 %v6133
      %6391 = vmatpush.bf16.msra.mxu0 %v6131
      %6392 = vmatpush.bf16.msra.mxu0 %v6129
      %6393 = vmatpush.bf16.msra.mxu0 %v6127
      %6394 = vmatmul.bf16.gmra.mxu0 %v5546
      %v6395 = vpop.f32.mrf.mxu0
      %v6396 = vadd.f32 %v6377, %v6395
      %v6397 = vpop.f32.mrf.mxu0
      %v6398 = vadd.f32 %v6379, %v6397
      %6399 = vmatmul.bf16.gmra.mxu0 %v5548
      %v6400 = vpop.f32.mrf.mxu0
      %v6401 = vadd.f32 %v6382, %v6400
      %v6402 = vpop.f32.mrf.mxu0
      %v6403 = vadd.f32 %v6384, %v6402
      %6404 = vdwg.mxu0
      %6405 = vmatpush.bf16.msra.mxu0 %v6157
      %6406 = vmatpush.bf16.msra.mxu0 %v6155
      %6407 = vmatpush.bf16.msra.mxu0 %v6153
      %6408 = vmatpush.bf16.msra.mxu0 %v6151
      %6409 = vmatpush.bf16.msra.mxu0 %v6149
      %6410 = vmatpush.bf16.msra.mxu0 %v6147
      %6411 = vmatpush.bf16.msra.mxu0 %v6145
      %6412 = vmatpush.bf16.msra.mxu0 %v6143
      %6413 = vmatmul.bf16.gmra.mxu0 %v5565
      %v6414 = vpop.f32.mrf.mxu0
      %v6415 = vadd.f32 %v6396, %v6414
      %v6416 = vpop.f32.mrf.mxu0
      %v6417 = vadd.f32 %v6398, %v6416
      %6418 = vmatmul.bf16.gmra.mxu0 %v5567
      %v6419 = vpop.f32.mrf.mxu0
      %v6420 = vadd.f32 %v6401, %v6419
      %v6421 = vpop.f32.mrf.mxu0
      %v6422 = vadd.f32 %v6403, %v6421
      %6423 = vdwg.mxu0
      %6424 = vmatpush.bf16.msra.mxu0 %v6173
      %6425 = vmatpush.bf16.msra.mxu0 %v6171
      %6426 = vmatpush.bf16.msra.mxu0 %v6169
      %6427 = vmatpush.bf16.msra.mxu0 %v6167
      %6428 = vmatpush.bf16.msra.mxu0 %v6165
      %6429 = vmatpush.bf16.msra.mxu0 %v6163
      %6430 = vmatpush.bf16.msra.mxu0 %v6161
      %6431 = vmatpush.bf16.msra.mxu0 %v6159
      %6432 = vmatmul.bf16.gmra.mxu0 %v5566
      %v6433 = vpop.f32.mrf.mxu0
      %v6434 = vadd.f32 %v6415, %v6433
      %v6435 = vpop.f32.mrf.mxu0
      %v6436 = vadd.f32 %v6417, %v6435
      %6437 = vmatmul.bf16.gmra.mxu0 %v5568
      %v6438 = vpop.f32.mrf.mxu0
      %v6439 = vadd.f32 %v6420, %v6438
      %v6440 = vpop.f32.mrf.mxu0
      %v6441 = vadd.f32 %v6422, %v6440
      %6442 = vdwg.mxu0
      %6443 = vmatpush.bf16.msra.mxu0 %v6189
      %6444 = vmatpush.bf16.msra.mxu0 %v6187
      %6445 = vmatpush.bf16.msra.mxu0 %v6185
      %6446 = vmatpush.bf16.msra.mxu0 %v6183
      %6447 = vmatpush.bf16.msra.mxu0 %v6181
      %6448 = vmatpush.bf16.msra.mxu0 %v6179
      %6449 = vmatpush.bf16.msra.mxu0 %v6177
      %6450 = vmatpush.bf16.msra.mxu0 %v6175
      %6451 = vmatmul.bf16.gmra.mxu0 %v5547
      %v6452 = vpop.f32.mrf.mxu0
      %v6453 = vadd.f32 %v6434, %v6452
      %v6454 = vpop.f32.mrf.mxu0
      %v6455 = vadd.f32 %v6436, %v6454
      %6456 = vmatmul.bf16.gmra.mxu0 %v5579
      %v6457 = vpop.f32.mrf.mxu0
      %v6458 = vadd.f32 %v6439, %v6457
      %v6459 = vpop.f32.mrf.mxu0
      %v6460 = vadd.f32 %v6441, %v6459
      %6461 = vdwg.mxu0
      %6462 = vmatpush.bf16.msra.mxu0 %v6205
      %6463 = vmatpush.bf16.msra.mxu0 %v6203
      %6464 = vmatpush.bf16.msra.mxu0 %v6201
      %6465 = vmatpush.bf16.msra.mxu0 %v6199
      %6466 = vmatpush.bf16.msra.mxu0 %v6197
      %6467 = vmatpush.bf16.msra.mxu0 %v6195
      %6468 = vmatpush.bf16.msra.mxu0 %v6193
      %6469 = vmatpush.bf16.msra.mxu0 %v6191
      %6470 = vmatmul.bf16.gmra.mxu0 %v5548
      %v6471 = vpop.f32.mrf.mxu0
      %v6472 = vadd.f32 %v6453, %v6471
      %v6473 = vpop.f32.mrf.mxu0
      %v6474 = vadd.f32 %v6455, %v6473
      %6475 = vmatmul.bf16.gmra.mxu0 %v5580
      %v6476 = vpop.f32.mrf.mxu0
      %v6477 = vadd.f32 %v6458, %v6476
      %v6478 = vpop.f32.mrf.mxu0
      %v6479 = vadd.f32 %v6460, %v6478
      %6480 = vdwg.mxu0
      %6481 = vmatpush.bf16.msra.mxu0 %v6221
      %6482 = vmatpush.bf16.msra.mxu0 %v6219
      %6483 = vmatpush.bf16.msra.mxu0 %v6217
      %6484 = vmatpush.bf16.msra.mxu0 %v6215
      %6485 = vmatpush.bf16.msra.mxu0 %v6213
      %6486 = vmatpush.bf16.msra.mxu0 %v6211
      %6487 = vmatpush.bf16.msra.mxu0 %v6209
      %6488 = vmatpush.bf16.msra.mxu0 %v6207
      %6489 = vmatmul.bf16.gmra.mxu0 %v5567
      %v6490 = vpop.f32.mrf.mxu0
      %v6491 = vadd.f32 %v6472, %v6490
      %v6492 = vpop.f32.mrf.mxu0
      %v6493 = vadd.f32 %v6474, %v6492
      %6494 = vmatmul.bf16.gmra.mxu0 %v5589
      %v6495 = vpop.f32.mrf.mxu0
      %v6496 = vadd.f32 %v6477, %v6495
      %v6497 = vpop.f32.mrf.mxu0
      %v6498 = vadd.f32 %v6479, %v6497
      %6499 = vdwg.mxu0
      %6500 = vmatpush.bf16.msra.mxu0 %v6237
      %6501 = vmatpush.bf16.msra.mxu0 %v6235
      %6502 = vmatpush.bf16.msra.mxu0 %v6233
      %6503 = vmatpush.bf16.msra.mxu0 %v6231
      %6504 = vmatpush.bf16.msra.mxu0 %v6229
      %6505 = vmatpush.bf16.msra.mxu0 %v6227
      %6506 = vmatpush.bf16.msra.mxu0 %v6225
      %6507 = vmatpush.bf16.msra.mxu0 %v6223
      %6508 = vmatmul.bf16.gmra.mxu0 %v5568
      %v6509 = vpop.f32.mrf.mxu0
      %v6510 = vadd.f32 %v6491, %v6509
      %v6511 = vpop.f32.mrf.mxu0
      %v6512 = vadd.f32 %v6493, %v6511
      %6513 = vmatmul.bf16.gmra.mxu0 %v5590
      %v6514 = vpop.f32.mrf.mxu0
      %v6515 = vadd.f32 %v6496, %v6514
      %v6516 = vpop.f32.mrf.mxu0
      %v6517 = vadd.f32 %v6498, %v6516
      %6518 = vdwg.mxu0
      %6519 = vmatpush.bf16.msra.mxu0 %v6126
      %6520 = vmatpush.bf16.msra.mxu0 %v6124
      %6521 = vmatpush.bf16.msra.mxu0 %v6122
      %6522 = vmatpush.bf16.msra.mxu0 %v6120
      %6523 = vmatpush.bf16.msra.mxu0 %v6118
      %6524 = vmatpush.bf16.msra.mxu0 %v6116
      %6525 = vmatpush.bf16.msra.mxu0 %v6114
      %6526 = vmatpush.bf16.msra.mxu0 %v6112
      %6527 = vmatmul.bf16.gmra.mxu0 %v5545
      %v6528 = vpop.f32.mrf.mxu0
      %v6529 = vadd.f32 %v5724, %v6528
      %v6530 = vpop.f32.mrf.mxu0
      %v6531 = vadd.f32 %v5724, %v6530
      %6532 = vmatmul.bf16.gmra.mxu0 %v5547
      %v6533 = vpop.f32.mrf.mxu0
      %v6534 = vadd.f32 %v5724, %v6533
      %v6535 = vpop.f32.mrf.mxu0
      %v6536 = vadd.f32 %v5724, %v6535
      %6537 = vdwg.mxu0
      %6538 = vmatpush.bf16.msra.mxu0 %v6142
      %6539 = vmatpush.bf16.msra.mxu0 %v6140
      %6540 = vmatpush.bf16.msra.mxu0 %v6138
      %6541 = vmatpush.bf16.msra.mxu0 %v6136
      %6542 = vmatpush.bf16.msra.mxu0 %v6134
      %6543 = vmatpush.bf16.msra.mxu0 %v6132
      %6544 = vmatpush.bf16.msra.mxu0 %v6130
      %6545 = vmatpush.bf16.msra.mxu0 %v6128
      %6546 = vmatmul.bf16.gmra.mxu0 %v5546
      %v6547 = vpop.f32.mrf.mxu0
      %v6548 = vadd.f32 %v6529, %v6547
      %v6549 = vpop.f32.mrf.mxu0
      %v6550 = vadd.f32 %v6531, %v6549
      %6551 = vmatmul.bf16.gmra.mxu0 %v5548
      %v6552 = vpop.f32.mrf.mxu0
      %v6553 = vadd.f32 %v6534, %v6552
      %v6554 = vpop.f32.mrf.mxu0
      %v6555 = vadd.f32 %v6536, %v6554
      %6556 = vdwg.mxu0
      %6557 = vmatpush.bf16.msra.mxu0 %v6158
      %6558 = vmatpush.bf16.msra.mxu0 %v6156
      %6559 = vmatpush.bf16.msra.mxu0 %v6154
      %6560 = vmatpush.bf16.msra.mxu0 %v6152
      %6561 = vmatpush.bf16.msra.mxu0 %v6150
      %6562 = vmatpush.bf16.msra.mxu0 %v6148
      %6563 = vmatpush.bf16.msra.mxu0 %v6146
      %6564 = vmatpush.bf16.msra.mxu0 %v6144
      %6565 = vmatmul.bf16.gmra.mxu0 %v5565
      %v6566 = vpop.f32.mrf.mxu0
      %v6567 = vadd.f32 %v6548, %v6566
      %v6568 = vpop.f32.mrf.mxu0
      %v6569 = vadd.f32 %v6550, %v6568
      %6570 = vmatmul.bf16.gmra.mxu0 %v5567
      %v6571 = vpop.f32.mrf.mxu0
      %v6572 = vadd.f32 %v6553, %v6571
      %v6573 = vpop.f32.mrf.mxu0
      %v6574 = vadd.f32 %v6555, %v6573
      %6575 = vdwg.mxu0
      %6576 = vmatpush.bf16.msra.mxu0 %v6174
      %6577 = vmatpush.bf16.msra.mxu0 %v6172
      %6578 = vmatpush.bf16.msra.mxu0 %v6170
      %6579 = vmatpush.bf16.msra.mxu0 %v6168
      %6580 = vmatpush.bf16.msra.mxu0 %v6166
      %6581 = vmatpush.bf16.msra.mxu0 %v6164
      %6582 = vmatpush.bf16.msra.mxu0 %v6162
      %6583 = vmatpush.bf16.msra.mxu0 %v6160
      %6584 = vmatmul.bf16.gmra.mxu0 %v5566
      %v6585 = vpop.f32.mrf.mxu0
      %v6586 = vadd.f32 %v6567, %v6585
      %v6587 = vpop.f32.mrf.mxu0
      %v6588 = vadd.f32 %v6569, %v6587
      %6589 = vmatmul.bf16.gmra.mxu0 %v5568
      %v6590 = vpop.f32.mrf.mxu0
      %v6591 = vadd.f32 %v6572, %v6590
      %v6592 = vpop.f32.mrf.mxu0
      %v6593 = vadd.f32 %v6574, %v6592
      %6594 = vdwg.mxu0
      %6595 = vmatpush.bf16.msra.mxu0 %v6190
      %6596 = vmatpush.bf16.msra.mxu0 %v6188
      %6597 = vmatpush.bf16.msra.mxu0 %v6186
      %6598 = vmatpush.bf16.msra.mxu0 %v6184
      %6599 = vmatpush.bf16.msra.mxu0 %v6182
      %6600 = vmatpush.bf16.msra.mxu0 %v6180
      %6601 = vmatpush.bf16.msra.mxu0 %v6178
      %6602 = vmatpush.bf16.msra.mxu0 %v6176
      %6603 = vmatmul.bf16.gmra.mxu0 %v5547
      %v6604 = vpop.f32.mrf.mxu0
      %v6605 = vadd.f32 %v6586, %v6604
      %v6606 = vpop.f32.mrf.mxu0
      %v6607 = vadd.f32 %v6588, %v6606
      %6608 = vmatmul.bf16.gmra.mxu0 %v5579
      %v6609 = vpop.f32.mrf.mxu0
      %v6610 = vadd.f32 %v6591, %v6609
      %v6611 = vpop.f32.mrf.mxu0
      %v6612 = vadd.f32 %v6593, %v6611
      %6613 = vdwg.mxu0
      %6614 = vmatpush.bf16.msra.mxu0 %v6206
      %6615 = vmatpush.bf16.msra.mxu0 %v6204
      %6616 = vmatpush.bf16.msra.mxu0 %v6202
      %6617 = vmatpush.bf16.msra.mxu0 %v6200
      %6618 = vmatpush.bf16.msra.mxu0 %v6198
      %6619 = vmatpush.bf16.msra.mxu0 %v6196
      %6620 = vmatpush.bf16.msra.mxu0 %v6194
      %6621 = vmatpush.bf16.msra.mxu0 %v6192
      %6622 = vmatmul.bf16.gmra.mxu0 %v5548
      %v6623 = vpop.f32.mrf.mxu0
      %v6624 = vadd.f32 %v6605, %v6623
      %v6625 = vpop.f32.mrf.mxu0
      %v6626 = vadd.f32 %v6607, %v6625
      %6627 = vmatmul.bf16.gmra.mxu0 %v5580
      %v6628 = vpop.f32.mrf.mxu0
      %v6629 = vadd.f32 %v6610, %v6628
      %v6630 = vpop.f32.mrf.mxu0
      %v6631 = vadd.f32 %v6612, %v6630
      %6632 = vdwg.mxu0
      %6633 = vmatpush.bf16.msra.mxu0 %v6222
      %6634 = vmatpush.bf16.msra.mxu0 %v6220
      %6635 = vmatpush.bf16.msra.mxu0 %v6218
      %6636 = vmatpush.bf16.msra.mxu0 %v6216
      %6637 = vmatpush.bf16.msra.mxu0 %v6214
      %6638 = vmatpush.bf16.msra.mxu0 %v6212
      %6639 = vmatpush.bf16.msra.mxu0 %v6210
      %6640 = vmatpush.bf16.msra.mxu0 %v6208
      %6641 = vmatmul.bf16.gmra.mxu0 %v5567
      %v6642 = vpop.f32.mrf.mxu0
      %v6643 = vadd.f32 %v6624, %v6642
      %v6644 = vpop.f32.mrf.mxu0
      %v6645 = vadd.f32 %v6626, %v6644
      %6646 = vmatmul.bf16.gmra.mxu0 %v5589
      %v6647 = vpop.f32.mrf.mxu0
      %v6648 = vadd.f32 %v6629, %v6647
      %v6649 = vpop.f32.mrf.mxu0
      %v6650 = vadd.f32 %v6631, %v6649
      %6651 = vdwg.mxu0
      %6652 = vmatpush.bf16.msra.mxu0 %v6238
      %6653 = vmatpush.bf16.msra.mxu0 %v6236
      %6654 = vmatpush.bf16.msra.mxu0 %v6234
      %6655 = vmatpush.bf16.msra.mxu0 %v6232
      %6656 = vmatpush.bf16.msra.mxu0 %v6230
      %6657 = vmatpush.bf16.msra.mxu0 %v6228
      %6658 = vmatpush.bf16.msra.mxu0 %v6226
      %6659 = vmatpush.bf16.msra.mxu0 %v6224
      %6660 = vmatmul.bf16.gmra.mxu0 %v5568
      %v6661 = vpop.f32.mrf.mxu0
      %v6662 = vadd.f32 %v6643, %v6661
      %v6663 = vpop.f32.mrf.mxu0
      %v6664 = vadd.f32 %v6645, %v6663
      %6665 = vmatmul.bf16.gmra.mxu0 %v5590
      %v6666 = vpop.f32.mrf.mxu0
      %v6667 = vadd.f32 %v6648, %v6666
      %v6668 = vpop.f32.mrf.mxu0
      %v6669 = vadd.f32 %v6650, %v6668
      %6670 = vdwg.mxu0
      %vm6671 = vcmp.ge.f32.partialorder %v6510, 0.0
      %vm6672 = vcmp.ge.f32.partialorder %v6662, 0.0
      %vm6673 = vcmp.ge.f32.partialorder %v6512, 0.0
      %vm6674 = vcmp.ge.f32.partialorder %v6664, 0.0
      %vm6675 = vcmp.ge.f32.partialorder %v6515, 0.0
      %vm6676 = vcmp.ge.f32.partialorder %v6667, 0.0
      %vm6677 = vcmp.ge.f32.partialorder %v6517, 0.0
      %vm6678 = vcmp.ge.f32.partialorder %v6669, 0.0
      %v6679 = vmul.f32 %v6510, 0.2
      %v6680 = vmul.f32 %v6662, 0.2
      %v6681 = vmul.f32 %v6512, 0.2
      %v6682 = vmul.f32 %v6664, 0.2
      %v6683 = vmul.f32 %v6515, 0.2
      %v6684 = vmul.f32 %v6667, 0.2
      %v6685 = vmul.f32 %v6517, 0.2
      %v6686 = vmul.f32 %v6669, 0.2
      %v6687 = vsel %vm6671, %v6510, %v6679
      %v6688 = vsel %vm6672, %v6662, %v6680
      %v6689 = vsel %vm6673, %v6512, %v6681
      %v6690 = vsel %vm6674, %v6664, %v6682
      %v6691 = vsel %vm6675, %v6515, %v6683
      %v6692 = vsel %vm6676, %v6667, %v6684
      %v6693 = vsel %vm6677, %v6517, %v6685
      %v6694 = vsel %vm6678, %v6669, %v6686
      %v6695 = vpack.c.bf16 %v6688, %v6687
      %v6696 = vpack.c.bf16 %v6690, %v6689
      %v6697 = vpack.c.bf16 %v6692, %v6691
      %v6698 = vpack.c.bf16 %v6694, %v6693
      %s6699 = scalar_lea.vmem [#allocation5], 32
      %6700 = vst [vmem:[%s6699] sm:$0xff] %v6695
      %6701 = vst [vmem:[%s6699 + $0x8] sm:$0xff] %v6696
      %6702 = vst [vmem:[#allocation5 + $0x10] sm:$0xff] %v6697
      %6703 = vst [vmem:[#allocation5 + $0x18] sm:$0xff] %v6698
      %6704 = vst [vmem:[#allocation5] sm:$0xff] 0
      %6705 = vst [vmem:[#allocation5 + $0x8] sm:$0xff] 0
      %6706 = vst [vmem:[%s6699 + $0x10] sm:$0xff] 0
      %6707 = vst [vmem:[%s6699 + $0x18] sm:$0xff] 0
      %v6708 = vld [vmem:[#allocation5] sm:$0xff]
      %v6709 = vld [vmem:[#allocation5 + $0x8] sm:$0xff]
      %v6710 = vld [vmem:[%s6699] sm:$0xff]
      %v6711 = vld [vmem:[%s6699 + $0x8] sm:$0xff]
      %v6712 = vld [vmem:[#allocation5 + $0x10] sm:$0xff]
      %v6713 = vld [vmem:[#allocation5 + $0x18] sm:$0xff]
      %v6714 = vld [vmem:[%s6699 + $0x10] sm:$0xff]
      %v6715 = vld [vmem:[%s6699 + $0x18] sm:$0xff]
      %v6718 = vunpack.c.l.b16 %v6708
      %v6719 = vunpack.c.h.b16 %v6708
      %v6720 = vunpack.c.l.b16 %v6709
      %v6721 = vunpack.c.h.b16 %v6709
      %v6722 = vpack.c.b16 %v6720, %v6718
      %v6723 = vpack.c.b16 %v6721, %v6719
      %v6728 = vunpack.c.l.b16 %v6710
      %v6729 = vunpack.c.h.b16 %v6710
      %v6730 = vunpack.c.l.b16 %v6711
      %v6731 = vunpack.c.h.b16 %v6711
      %v6732 = vpack.c.b16 %v6730, %v6728
      %v6733 = vpack.c.b16 %v6731, %v6729
      %v6738 = vunpack.c.l.b16 %v6712
      %v6739 = vunpack.c.h.b16 %v6712
      %v6740 = vunpack.c.l.b16 %v6713
      %v6741 = vunpack.c.h.b16 %v6713
      %v6742 = vpack.c.b16 %v6740, %v6738
      %v6743 = vpack.c.b16 %v6741, %v6739
      %v6748 = vunpack.c.l.b16 %v6714
      %v6749 = vunpack.c.h.b16 %v6714
      %v6750 = vunpack.c.l.b16 %v6715
      %v6751 = vunpack.c.h.b16 %v6715
      %v6752 = vpack.c.b16 %v6750, %v6748
      %v6753 = vpack.c.b16 %v6751, %v6749
      %v6756 = vld [vmem:[%s9] sm:$0xff]
      %v6757 = vld [vmem:[%s9 + $0x8] sm:$0xff]
      %v6758 = vld [vmem:[%s9 + $0x10] sm:$0xff]
      %v6759 = vld [vmem:[%s9 + $0x18] sm:$0xff]
      %v6760 = vld [vmem:[%s9 + $0x20] sm:$0xff]
      %v6761 = vld [vmem:[%s9 + $0x28] sm:$0xff]
      %v6762 = vld [vmem:[%s9 + $0x30] sm:$0xff]
      %v6763 = vld [vmem:[%s9 + $0x38] sm:$0xff]
      %v6764 = vld [vmem:[%s9 + $0x40] sm:$0xff]
      %v6765 = vld [vmem:[%s9 + $0x48] sm:$0xff]
      %v6766 = vld [vmem:[%s9 + $0x50] sm:$0xff]
      %v6767 = vld [vmem:[%s9 + $0x58] sm:$0xff]
      %v6768 = vld [vmem:[%s9 + $0x60] sm:$0xff]
      %v6769 = vld [vmem:[%s9 + $0x68] sm:$0xff]
      %v6770 = vld [vmem:[%s9 + $0x70] sm:$0xff]
      %v6771 = vld [vmem:[%s9 + $0x78] sm:$0xff]
      %v6772 = vld [vmem:[%s9 + $0x80] sm:$0xff]
      %v6773 = vld [vmem:[%s9 + $0x88] sm:$0xff]
      %v6774 = vld [vmem:[%s9 + $0x90] sm:$0xff]
      %v6775 = vld [vmem:[%s9 + $0x98] sm:$0xff]
      %v6776 = vld [vmem:[%s9 + $0xa0] sm:$0xff]
      %v6777 = vld [vmem:[%s9 + $0xa8] sm:$0xff]
      %v6778 = vld [vmem:[%s9 + $0xb0] sm:$0xff]
      %v6779 = vld [vmem:[%s9 + $0xb8] sm:$0xff]
      %v6780 = vld [vmem:[%s9 + $0xc0] sm:$0xff]
      %v6781 = vld [vmem:[%s9 + $0xc8] sm:$0xff]
      %v6782 = vld [vmem:[%s9 + $0xd0] sm:$0xff]
      %v6783 = vld [vmem:[%s9 + $0xd8] sm:$0xff]
      %v6784 = vld [vmem:[%s9 + $0xe0] sm:$0xff]
      %v6785 = vld [vmem:[%s9 + $0xe8] sm:$0xff]
      %v6786 = vld [vmem:[%s9 + $0xf0] sm:$0xff]
      %v6787 = vld [vmem:[%s9 + $0xf8] sm:$0xff]
      %v6788 = vld [vmem:[%s9 + $0x100] sm:$0xff]
      %v6789 = vld [vmem:[%s9 + $0x108] sm:$0xff]
      %v6790 = vld [vmem:[%s9 + $0x110] sm:$0xff]
      %v6791 = vld [vmem:[%s9 + $0x118] sm:$0xff]
      %v6792 = vld [vmem:[%s9 + $0x120] sm:$0xff]
      %v6793 = vld [vmem:[%s9 + $0x128] sm:$0xff]
      %v6794 = vld [vmem:[%s9 + $0x130] sm:$0xff]
      %v6795 = vld [vmem:[%s9 + $0x138] sm:$0xff]
      %v6796 = vld [vmem:[%s9 + $0x140] sm:$0xff]
      %v6797 = vld [vmem:[%s9 + $0x148] sm:$0xff]
      %v6798 = vld [vmem:[%s9 + $0x150] sm:$0xff]
      %v6799 = vld [vmem:[%s9 + $0x158] sm:$0xff]
      %v6800 = vld [vmem:[%s9 + $0x160] sm:$0xff]
      %v6801 = vld [vmem:[%s9 + $0x168] sm:$0xff]
      %v6802 = vld [vmem:[%s9 + $0x170] sm:$0xff]
      %v6803 = vld [vmem:[%s9 + $0x178] sm:$0xff]
      %v6804 = vld [vmem:[%s9 + $0x180] sm:$0xff]
      %v6805 = vld [vmem:[%s9 + $0x188] sm:$0xff]
      %v6806 = vld [vmem:[%s9 + $0x190] sm:$0xff]
      %v6807 = vld [vmem:[%s9 + $0x198] sm:$0xff]
      %v6808 = vld [vmem:[%s9 + $0x1a0] sm:$0xff]
      %v6809 = vld [vmem:[%s9 + $0x1a8] sm:$0xff]
      %v6810 = vld [vmem:[%s9 + $0x1b0] sm:$0xff]
      %v6811 = vld [vmem:[%s9 + $0x1b8] sm:$0xff]
      %v6812 = vld [vmem:[%s9 + $0x1c0] sm:$0xff]
      %v6813 = vld [vmem:[%s9 + $0x1c8] sm:$0xff]
      %v6814 = vld [vmem:[%s9 + $0x1d0] sm:$0xff]
      %v6815 = vld [vmem:[%s9 + $0x1d8] sm:$0xff]
      %v6816 = vld [vmem:[%s9 + $0x1e0] sm:$0xff]
      %v6817 = vld [vmem:[%s9 + $0x1e8] sm:$0xff]
      %v6818 = vld [vmem:[%s9 + $0x1f0] sm:$0xff]
      %v6819 = vld [vmem:[%s9 + $0x1f8] sm:$0xff]
      %v6820 = vld [vmem:[%s9 + $0x200] sm:$0xff]
      %v6821 = vld [vmem:[%s9 + $0x208] sm:$0xff]
      %v6822 = vld [vmem:[%s9 + $0x210] sm:$0xff]
      %v6823 = vld [vmem:[%s9 + $0x218] sm:$0xff]
      %v6824 = vld [vmem:[%s9 + $0x220] sm:$0xff]
      %v6825 = vld [vmem:[%s9 + $0x228] sm:$0xff]
      %v6826 = vld [vmem:[%s9 + $0x230] sm:$0xff]
      %v6827 = vld [vmem:[%s9 + $0x238] sm:$0xff]
      %v6828 = vld [vmem:[%s9 + $0x240] sm:$0xff]
      %v6829 = vld [vmem:[%s9 + $0x248] sm:$0xff]
      %v6830 = vld [vmem:[%s9 + $0x250] sm:$0xff]
      %v6831 = vld [vmem:[%s9 + $0x258] sm:$0xff]
      %v6832 = vld [vmem:[%s9 + $0x260] sm:$0xff]
      %v6833 = vld [vmem:[%s9 + $0x268] sm:$0xff]
      %v6834 = vld [vmem:[%s9 + $0x270] sm:$0xff]
      %v6835 = vld [vmem:[%s9 + $0x278] sm:$0xff]
      %v6836 = vld [vmem:[%s9 + $0x280] sm:$0xff]
      %v6837 = vld [vmem:[%s9 + $0x288] sm:$0xff]
      %v6838 = vld [vmem:[%s9 + $0x290] sm:$0xff]
      %v6839 = vld [vmem:[%s9 + $0x298] sm:$0xff]
      %v6840 = vld [vmem:[%s9 + $0x2a0] sm:$0xff]
      %v6841 = vld [vmem:[%s9 + $0x2a8] sm:$0xff]
      %v6842 = vld [vmem:[%s9 + $0x2b0] sm:$0xff]
      %v6843 = vld [vmem:[%s9 + $0x2b8] sm:$0xff]
      %v6844 = vld [vmem:[%s9 + $0x2c0] sm:$0xff]
      %v6845 = vld [vmem:[%s9 + $0x2c8] sm:$0xff]
      %v6846 = vld [vmem:[%s9 + $0x2d0] sm:$0xff]
      %v6847 = vld [vmem:[%s9 + $0x2d8] sm:$0xff]
      %v6848 = vld [vmem:[%s9 + $0x2e0] sm:$0xff]
      %v6849 = vld [vmem:[%s9 + $0x2e8] sm:$0xff]
      %v6850 = vld [vmem:[%s9 + $0x2f0] sm:$0xff]
      %v6851 = vld [vmem:[%s9 + $0x2f8] sm:$0xff]
      %v6852 = vld [vmem:[%s9 + $0x300] sm:$0xff]
      %v6853 = vld [vmem:[%s9 + $0x308] sm:$0xff]
      %v6854 = vld [vmem:[%s9 + $0x310] sm:$0xff]
      %v6855 = vld [vmem:[%s9 + $0x318] sm:$0xff]
      %v6856 = vld [vmem:[%s9 + $0x320] sm:$0xff]
      %v6857 = vld [vmem:[%s9 + $0x328] sm:$0xff]
      %v6858 = vld [vmem:[%s9 + $0x330] sm:$0xff]
      %v6859 = vld [vmem:[%s9 + $0x338] sm:$0xff]
      %v6860 = vld [vmem:[%s9 + $0x340] sm:$0xff]
      %v6861 = vld [vmem:[%s9 + $0x348] sm:$0xff]
      %v6862 = vld [vmem:[%s9 + $0x350] sm:$0xff]
      %v6863 = vld [vmem:[%s9 + $0x358] sm:$0xff]
      %v6864 = vld [vmem:[%s9 + $0x360] sm:$0xff]
      %v6865 = vld [vmem:[%s9 + $0x368] sm:$0xff]
      %v6866 = vld [vmem:[%s9 + $0x370] sm:$0xff]
      %v6867 = vld [vmem:[%s9 + $0x378] sm:$0xff]
      %v6868 = vld [vmem:[%s9 + $0x380] sm:$0xff]
      %v6869 = vld [vmem:[%s9 + $0x388] sm:$0xff]
      %v6870 = vld [vmem:[%s9 + $0x390] sm:$0xff]
      %v6871 = vld [vmem:[%s9 + $0x398] sm:$0xff]
      %v6872 = vld [vmem:[%s9 + $0x3a0] sm:$0xff]
      %v6873 = vld [vmem:[%s9 + $0x3a8] sm:$0xff]
      %v6874 = vld [vmem:[%s9 + $0x3b0] sm:$0xff]
      %v6875 = vld [vmem:[%s9 + $0x3b8] sm:$0xff]
      %v6876 = vld [vmem:[%s9 + $0x3c0] sm:$0xff]
      %v6877 = vld [vmem:[%s9 + $0x3c8] sm:$0xff]
      %v6878 = vld [vmem:[%s9 + $0x3d0] sm:$0xff]
      %v6879 = vld [vmem:[%s9 + $0x3d8] sm:$0xff]
      %v6880 = vld [vmem:[%s9 + $0x3e0] sm:$0xff]
      %v6881 = vld [vmem:[%s9 + $0x3e8] sm:$0xff]
      %v6882 = vld [vmem:[%s9 + $0x3f0] sm:$0xff]
      %v6883 = vld [vmem:[%s9 + $0x3f8] sm:$0xff]
      %v6884 = vld [vmem:[%s10] sm:$0x3]
      %v6886 = vperm.slane %v6884, 0
      %v6887 = vperm.slane %v6884, 1
      %v7018 = vunpack.c.l.b16 %v6756
      %v7019 = vunpack.c.h.b16 %v6756
      %v7020 = vunpack.c.l.b16 %v6757
      %v7021 = vunpack.c.h.b16 %v6757
      %v7022 = vunpack.c.l.b16 %v6758
      %v7023 = vunpack.c.h.b16 %v6758
      %v7024 = vunpack.c.l.b16 %v6759
      %v7025 = vunpack.c.h.b16 %v6759
      %v7026 = vunpack.c.l.b16 %v6760
      %v7027 = vunpack.c.h.b16 %v6760
      %v7028 = vunpack.c.l.b16 %v6761
      %v7029 = vunpack.c.h.b16 %v6761
      %v7030 = vunpack.c.l.b16 %v6762
      %v7031 = vunpack.c.h.b16 %v6762
      %v7032 = vunpack.c.l.b16 %v6763
      %v7033 = vunpack.c.h.b16 %v6763
      %v7034 = vunpack.c.l.b16 %v6764
      %v7035 = vunpack.c.h.b16 %v6764
      %v7036 = vunpack.c.l.b16 %v6765
      %v7037 = vunpack.c.h.b16 %v6765
      %v7038 = vunpack.c.l.b16 %v6766
      %v7039 = vunpack.c.h.b16 %v6766
      %v7040 = vunpack.c.l.b16 %v6767
      %v7041 = vunpack.c.h.b16 %v6767
      %v7042 = vunpack.c.l.b16 %v6768
      %v7043 = vunpack.c.h.b16 %v6768
      %v7044 = vunpack.c.l.b16 %v6769
      %v7045 = vunpack.c.h.b16 %v6769
      %v7046 = vunpack.c.l.b16 %v6770
      %v7047 = vunpack.c.h.b16 %v6770
      %v7048 = vunpack.c.l.b16 %v6771
      %v7049 = vunpack.c.h.b16 %v6771
      %v7050 = vunpack.c.l.b16 %v6772
      %v7051 = vunpack.c.h.b16 %v6772
      %v7052 = vunpack.c.l.b16 %v6773
      %v7053 = vunpack.c.h.b16 %v6773
      %v7054 = vunpack.c.l.b16 %v6774
      %v7055 = vunpack.c.h.b16 %v6774
      %v7056 = vunpack.c.l.b16 %v6775
      %v7057 = vunpack.c.h.b16 %v6775
      %v7058 = vunpack.c.l.b16 %v6776
      %v7059 = vunpack.c.h.b16 %v6776
      %v7060 = vunpack.c.l.b16 %v6777
      %v7061 = vunpack.c.h.b16 %v6777
      %v7062 = vunpack.c.l.b16 %v6778
      %v7063 = vunpack.c.h.b16 %v6778
      %v7064 = vunpack.c.l.b16 %v6779
      %v7065 = vunpack.c.h.b16 %v6779
      %v7066 = vunpack.c.l.b16 %v6780
      %v7067 = vunpack.c.h.b16 %v6780
      %v7068 = vunpack.c.l.b16 %v6781
      %v7069 = vunpack.c.h.b16 %v6781
      %v7070 = vunpack.c.l.b16 %v6782
      %v7071 = vunpack.c.h.b16 %v6782
      %v7072 = vunpack.c.l.b16 %v6783
      %v7073 = vunpack.c.h.b16 %v6783
      %v7074 = vunpack.c.l.b16 %v6784
      %v7075 = vunpack.c.h.b16 %v6784
      %v7076 = vunpack.c.l.b16 %v6785
      %v7077 = vunpack.c.h.b16 %v6785
      %v7078 = vunpack.c.l.b16 %v6786
      %v7079 = vunpack.c.h.b16 %v6786
      %v7080 = vunpack.c.l.b16 %v6787
      %v7081 = vunpack.c.h.b16 %v6787
      %v7082 = vunpack.c.l.b16 %v6788
      %v7083 = vunpack.c.h.b16 %v6788
      %v7084 = vunpack.c.l.b16 %v6789
      %v7085 = vunpack.c.h.b16 %v6789
      %v7086 = vunpack.c.l.b16 %v6790
      %v7087 = vunpack.c.h.b16 %v6790
      %v7088 = vunpack.c.l.b16 %v6791
      %v7089 = vunpack.c.h.b16 %v6791
      %v7090 = vunpack.c.l.b16 %v6792
      %v7091 = vunpack.c.h.b16 %v6792
      %v7092 = vunpack.c.l.b16 %v6793
      %v7093 = vunpack.c.h.b16 %v6793
      %v7094 = vunpack.c.l.b16 %v6794
      %v7095 = vunpack.c.h.b16 %v6794
      %v7096 = vunpack.c.l.b16 %v6795
      %v7097 = vunpack.c.h.b16 %v6795
      %v7098 = vunpack.c.l.b16 %v6796
      %v7099 = vunpack.c.h.b16 %v6796
      %v7100 = vunpack.c.l.b16 %v6797
      %v7101 = vunpack.c.h.b16 %v6797
      %v7102 = vunpack.c.l.b16 %v6798
      %v7103 = vunpack.c.h.b16 %v6798
      %v7104 = vunpack.c.l.b16 %v6799
      %v7105 = vunpack.c.h.b16 %v6799
      %v7106 = vunpack.c.l.b16 %v6800
      %v7107 = vunpack.c.h.b16 %v6800
      %v7108 = vunpack.c.l.b16 %v6801
      %v7109 = vunpack.c.h.b16 %v6801
      %v7110 = vunpack.c.l.b16 %v6802
      %v7111 = vunpack.c.h.b16 %v6802
      %v7112 = vunpack.c.l.b16 %v6803
      %v7113 = vunpack.c.h.b16 %v6803
      %v7114 = vunpack.c.l.b16 %v6804
      %v7115 = vunpack.c.h.b16 %v6804
      %v7116 = vunpack.c.l.b16 %v6805
      %v7117 = vunpack.c.h.b16 %v6805
      %v7118 = vunpack.c.l.b16 %v6806
      %v7119 = vunpack.c.h.b16 %v6806
      %v7120 = vunpack.c.l.b16 %v6807
      %v7121 = vunpack.c.h.b16 %v6807
      %v7122 = vunpack.c.l.b16 %v6808
      %v7123 = vunpack.c.h.b16 %v6808
      %v7124 = vunpack.c.l.b16 %v6809
      %v7125 = vunpack.c.h.b16 %v6809
      %v7126 = vunpack.c.l.b16 %v6810
      %v7127 = vunpack.c.h.b16 %v6810
      %v7128 = vunpack.c.l.b16 %v6811
      %v7129 = vunpack.c.h.b16 %v6811
      %v7130 = vunpack.c.l.b16 %v6812
      %v7131 = vunpack.c.h.b16 %v6812
      %v7132 = vunpack.c.l.b16 %v6813
      %v7133 = vunpack.c.h.b16 %v6813
      %v7134 = vunpack.c.l.b16 %v6814
      %v7135 = vunpack.c.h.b16 %v6814
      %v7136 = vunpack.c.l.b16 %v6815
      %v7137 = vunpack.c.h.b16 %v6815
      %v7138 = vunpack.c.l.b16 %v6816
      %v7139 = vunpack.c.h.b16 %v6816
      %v7140 = vunpack.c.l.b16 %v6817
      %v7141 = vunpack.c.h.b16 %v6817
      %v7142 = vunpack.c.l.b16 %v6818
      %v7143 = vunpack.c.h.b16 %v6818
      %v7144 = vunpack.c.l.b16 %v6819
      %v7145 = vunpack.c.h.b16 %v6819
      %v7146 = vunpack.c.l.b16 %v6820
      %v7147 = vunpack.c.h.b16 %v6820
      %v7148 = vunpack.c.l.b16 %v6821
      %v7149 = vunpack.c.h.b16 %v6821
      %v7150 = vunpack.c.l.b16 %v6822
      %v7151 = vunpack.c.h.b16 %v6822
      %v7152 = vunpack.c.l.b16 %v6823
      %v7153 = vunpack.c.h.b16 %v6823
      %v7154 = vunpack.c.l.b16 %v6824
      %v7155 = vunpack.c.h.b16 %v6824
      %v7156 = vunpack.c.l.b16 %v6825
      %v7157 = vunpack.c.h.b16 %v6825
      %v7158 = vunpack.c.l.b16 %v6826
      %v7159 = vunpack.c.h.b16 %v6826
      %v7160 = vunpack.c.l.b16 %v6827
      %v7161 = vunpack.c.h.b16 %v6827
      %v7162 = vunpack.c.l.b16 %v6828
      %v7163 = vunpack.c.h.b16 %v6828
      %v7164 = vunpack.c.l.b16 %v6829
      %v7165 = vunpack.c.h.b16 %v6829
      %v7166 = vunpack.c.l.b16 %v6830
      %v7167 = vunpack.c.h.b16 %v6830
      %v7168 = vunpack.c.l.b16 %v6831
      %v7169 = vunpack.c.h.b16 %v6831
      %v7170 = vunpack.c.l.b16 %v6832
      %v7171 = vunpack.c.h.b16 %v6832
      %v7172 = vunpack.c.l.b16 %v6833
      %v7173 = vunpack.c.h.b16 %v6833
      %v7174 = vunpack.c.l.b16 %v6834
      %v7175 = vunpack.c.h.b16 %v6834
      %v7176 = vunpack.c.l.b16 %v6835
      %v7177 = vunpack.c.h.b16 %v6835
      %v7178 = vunpack.c.l.b16 %v6836
      %v7179 = vunpack.c.h.b16 %v6836
      %v7180 = vunpack.c.l.b16 %v6837
      %v7181 = vunpack.c.h.b16 %v6837
      %v7182 = vunpack.c.l.b16 %v6838
      %v7183 = vunpack.c.h.b16 %v6838
      %v7184 = vunpack.c.l.b16 %v6839
      %v7185 = vunpack.c.h.b16 %v6839
      %v7186 = vunpack.c.l.b16 %v6840
      %v7187 = vunpack.c.h.b16 %v6840
      %v7188 = vunpack.c.l.b16 %v6841
      %v7189 = vunpack.c.h.b16 %v6841
      %v7190 = vunpack.c.l.b16 %v6842
      %v7191 = vunpack.c.h.b16 %v6842
      %v7192 = vunpack.c.l.b16 %v6843
      %v7193 = vunpack.c.h.b16 %v6843
      %v7194 = vunpack.c.l.b16 %v6844
      %v7195 = vunpack.c.h.b16 %v6844
      %v7196 = vunpack.c.l.b16 %v6845
      %v7197 = vunpack.c.h.b16 %v6845
      %v7198 = vunpack.c.l.b16 %v6846
      %v7199 = vunpack.c.h.b16 %v6846
      %v7200 = vunpack.c.l.b16 %v6847
      %v7201 = vunpack.c.h.b16 %v6847
      %v7202 = vunpack.c.l.b16 %v6848
      %v7203 = vunpack.c.h.b16 %v6848
      %v7204 = vunpack.c.l.b16 %v6849
      %v7205 = vunpack.c.h.b16 %v6849
      %v7206 = vunpack.c.l.b16 %v6850
      %v7207 = vunpack.c.h.b16 %v6850
      %v7208 = vunpack.c.l.b16 %v6851
      %v7209 = vunpack.c.h.b16 %v6851
      %v7210 = vunpack.c.l.b16 %v6852
      %v7211 = vunpack.c.h.b16 %v6852
      %v7212 = vunpack.c.l.b16 %v6853
      %v7213 = vunpack.c.h.b16 %v6853
      %v7214 = vunpack.c.l.b16 %v6854
      %v7215 = vunpack.c.h.b16 %v6854
      %v7216 = vunpack.c.l.b16 %v6855
      %v7217 = vunpack.c.h.b16 %v6855
      %v7218 = vunpack.c.l.b16 %v6856
      %v7219 = vunpack.c.h.b16 %v6856
      %v7220 = vunpack.c.l.b16 %v6857
      %v7221 = vunpack.c.h.b16 %v6857
      %v7222 = vunpack.c.l.b16 %v6858
      %v7223 = vunpack.c.h.b16 %v6858
      %v7224 = vunpack.c.l.b16 %v6859
      %v7225 = vunpack.c.h.b16 %v6859
      %v7226 = vunpack.c.l.b16 %v6860
      %v7227 = vunpack.c.h.b16 %v6860
      %v7228 = vunpack.c.l.b16 %v6861
      %v7229 = vunpack.c.h.b16 %v6861
      %v7230 = vunpack.c.l.b16 %v6862
      %v7231 = vunpack.c.h.b16 %v6862
      %v7232 = vunpack.c.l.b16 %v6863
      %v7233 = vunpack.c.h.b16 %v6863
      %v7234 = vunpack.c.l.b16 %v6864
      %v7235 = vunpack.c.h.b16 %v6864
      %v7236 = vunpack.c.l.b16 %v6865
      %v7237 = vunpack.c.h.b16 %v6865
      %v7238 = vunpack.c.l.b16 %v6866
      %v7239 = vunpack.c.h.b16 %v6866
      %v7240 = vunpack.c.l.b16 %v6867
      %v7241 = vunpack.c.h.b16 %v6867
      %v7242 = vunpack.c.l.b16 %v6868
      %v7243 = vunpack.c.h.b16 %v6868
      %v7244 = vunpack.c.l.b16 %v6869
      %v7245 = vunpack.c.h.b16 %v6869
      %v7246 = vunpack.c.l.b16 %v6870
      %v7247 = vunpack.c.h.b16 %v6870
      %v7248 = vunpack.c.l.b16 %v6871
      %v7249 = vunpack.c.h.b16 %v6871
      %v7250 = vunpack.c.l.b16 %v6872
      %v7251 = vunpack.c.h.b16 %v6872
      %v7252 = vunpack.c.l.b16 %v6873
      %v7253 = vunpack.c.h.b16 %v6873
      %v7254 = vunpack.c.l.b16 %v6874
      %v7255 = vunpack.c.h.b16 %v6874
      %v7256 = vunpack.c.l.b16 %v6875
      %v7257 = vunpack.c.h.b16 %v6875
      %v7258 = vunpack.c.l.b16 %v6876
      %v7259 = vunpack.c.h.b16 %v6876
      %v7260 = vunpack.c.l.b16 %v6877
      %v7261 = vunpack.c.h.b16 %v6877
      %v7262 = vunpack.c.l.b16 %v6878
      %v7263 = vunpack.c.h.b16 %v6878
      %v7264 = vunpack.c.l.b16 %v6879
      %v7265 = vunpack.c.h.b16 %v6879
      %v7266 = vunpack.c.l.b16 %v6880
      %v7267 = vunpack.c.h.b16 %v6880
      %v7268 = vunpack.c.l.b16 %v6881
      %v7269 = vunpack.c.h.b16 %v6881
      %v7270 = vunpack.c.l.b16 %v6882
      %v7271 = vunpack.c.h.b16 %v6882
      %v7272 = vunpack.c.l.b16 %v6883
      %v7273 = vunpack.c.h.b16 %v6883
      %v7274 = vpack.c.b16 %v7020, %v7018
      %v7275 = vpack.c.b16 %v7021, %v7019
      %v7276 = vpack.c.b16 %v7024, %v7022
      %v7277 = vpack.c.b16 %v7025, %v7023
      %v7278 = vpack.c.b16 %v7028, %v7026
      %v7279 = vpack.c.b16 %v7029, %v7027
      %v7280 = vpack.c.b16 %v7032, %v7030
      %v7281 = vpack.c.b16 %v7033, %v7031
      %v7282 = vpack.c.b16 %v7036, %v7034
      %v7283 = vpack.c.b16 %v7037, %v7035
      %v7284 = vpack.c.b16 %v7040, %v7038
      %v7285 = vpack.c.b16 %v7041, %v7039
      %v7286 = vpack.c.b16 %v7044, %v7042
      %v7287 = vpack.c.b16 %v7045, %v7043
      %v7288 = vpack.c.b16 %v7048, %v7046
      %v7289 = vpack.c.b16 %v7049, %v7047
      %v7290 = vpack.c.b16 %v7052, %v7050
      %v7291 = vpack.c.b16 %v7053, %v7051
      %v7292 = vpack.c.b16 %v7056, %v7054
      %v7293 = vpack.c.b16 %v7057, %v7055
      %v7294 = vpack.c.b16 %v7060, %v7058
      %v7295 = vpack.c.b16 %v7061, %v7059
      %v7296 = vpack.c.b16 %v7064, %v7062
      %v7297 = vpack.c.b16 %v7065, %v7063
      %v7298 = vpack.c.b16 %v7068, %v7066
      %v7299 = vpack.c.b16 %v7069, %v7067
      %v7300 = vpack.c.b16 %v7072, %v7070
      %v7301 = vpack.c.b16 %v7073, %v7071
      %v7302 = vpack.c.b16 %v7076, %v7074
      %v7303 = vpack.c.b16 %v7077, %v7075
      %v7304 = vpack.c.b16 %v7080, %v7078
      %v7305 = vpack.c.b16 %v7081, %v7079
      %v7306 = vpack.c.b16 %v7084, %v7082
      %v7307 = vpack.c.b16 %v7085, %v7083
      %v7308 = vpack.c.b16 %v7088, %v7086
      %v7309 = vpack.c.b16 %v7089, %v7087
      %v7310 = vpack.c.b16 %v7092, %v7090
      %v7311 = vpack.c.b16 %v7093, %v7091
      %v7312 = vpack.c.b16 %v7096, %v7094
      %v7313 = vpack.c.b16 %v7097, %v7095
      %v7314 = vpack.c.b16 %v7100, %v7098
      %v7315 = vpack.c.b16 %v7101, %v7099
      %v7316 = vpack.c.b16 %v7104, %v7102
      %v7317 = vpack.c.b16 %v7105, %v7103
      %v7318 = vpack.c.b16 %v7108, %v7106
      %v7319 = vpack.c.b16 %v7109, %v7107
      %v7320 = vpack.c.b16 %v7112, %v7110
      %v7321 = vpack.c.b16 %v7113, %v7111
      %v7322 = vpack.c.b16 %v7116, %v7114
      %v7323 = vpack.c.b16 %v7117, %v7115
      %v7324 = vpack.c.b16 %v7120, %v7118
      %v7325 = vpack.c.b16 %v7121, %v7119
      %v7326 = vpack.c.b16 %v7124, %v7122
      %v7327 = vpack.c.b16 %v7125, %v7123
      %v7328 = vpack.c.b16 %v7128, %v7126
      %v7329 = vpack.c.b16 %v7129, %v7127
      %v7330 = vpack.c.b16 %v7132, %v7130
      %v7331 = vpack.c.b16 %v7133, %v7131
      %v7332 = vpack.c.b16 %v7136, %v7134
      %v7333 = vpack.c.b16 %v7137, %v7135
      %v7334 = vpack.c.b16 %v7140, %v7138
      %v7335 = vpack.c.b16 %v7141, %v7139
      %v7336 = vpack.c.b16 %v7144, %v7142
      %v7337 = vpack.c.b16 %v7145, %v7143
      %v7338 = vpack.c.b16 %v7148, %v7146
      %v7339 = vpack.c.b16 %v7149, %v7147
      %v7340 = vpack.c.b16 %v7152, %v7150
      %v7341 = vpack.c.b16 %v7153, %v7151
      %v7342 = vpack.c.b16 %v7156, %v7154
      %v7343 = vpack.c.b16 %v7157, %v7155
      %v7344 = vpack.c.b16 %v7160, %v7158
      %v7345 = vpack.c.b16 %v7161, %v7159
      %v7346 = vpack.c.b16 %v7164, %v7162
      %v7347 = vpack.c.b16 %v7165, %v7163
      %v7348 = vpack.c.b16 %v7168, %v7166
      %v7349 = vpack.c.b16 %v7169, %v7167
      %v7350 = vpack.c.b16 %v7172, %v7170
      %v7351 = vpack.c.b16 %v7173, %v7171
      %v7352 = vpack.c.b16 %v7176, %v7174
      %v7353 = vpack.c.b16 %v7177, %v7175
      %v7354 = vpack.c.b16 %v7180, %v7178
      %v7355 = vpack.c.b16 %v7181, %v7179
      %v7356 = vpack.c.b16 %v7184, %v7182
      %v7357 = vpack.c.b16 %v7185, %v7183
      %v7358 = vpack.c.b16 %v7188, %v7186
      %v7359 = vpack.c.b16 %v7189, %v7187
      %v7360 = vpack.c.b16 %v7192, %v7190
      %v7361 = vpack.c.b16 %v7193, %v7191
      %v7362 = vpack.c.b16 %v7196, %v7194
      %v7363 = vpack.c.b16 %v7197, %v7195
      %v7364 = vpack.c.b16 %v7200, %v7198
      %v7365 = vpack.c.b16 %v7201, %v7199
      %v7366 = vpack.c.b16 %v7204, %v7202
      %v7367 = vpack.c.b16 %v7205, %v7203
      %v7368 = vpack.c.b16 %v7208, %v7206
      %v7369 = vpack.c.b16 %v7209, %v7207
      %v7370 = vpack.c.b16 %v7212, %v7210
      %v7371 = vpack.c.b16 %v7213, %v7211
      %v7372 = vpack.c.b16 %v7216, %v7214
      %v7373 = vpack.c.b16 %v7217, %v7215
      %v7374 = vpack.c.b16 %v7220, %v7218
      %v7375 = vpack.c.b16 %v7221, %v7219
      %v7376 = vpack.c.b16 %v7224, %v7222
      %v7377 = vpack.c.b16 %v7225, %v7223
      %v7378 = vpack.c.b16 %v7228, %v7226
      %v7379 = vpack.c.b16 %v7229, %v7227
      %v7380 = vpack.c.b16 %v7232, %v7230
      %v7381 = vpack.c.b16 %v7233, %v7231
      %v7382 = vpack.c.b16 %v7236, %v7234
      %v7383 = vpack.c.b16 %v7237, %v7235
      %v7384 = vpack.c.b16 %v7240, %v7238
      %v7385 = vpack.c.b16 %v7241, %v7239
      %v7386 = vpack.c.b16 %v7244, %v7242
      %v7387 = vpack.c.b16 %v7245, %v7243
      %v7388 = vpack.c.b16 %v7248, %v7246
      %v7389 = vpack.c.b16 %v7249, %v7247
      %v7390 = vpack.c.b16 %v7252, %v7250
      %v7391 = vpack.c.b16 %v7253, %v7251
      %v7392 = vpack.c.b16 %v7256, %v7254
      %v7393 = vpack.c.b16 %v7257, %v7255
      %v7394 = vpack.c.b16 %v7260, %v7258
      %v7395 = vpack.c.b16 %v7261, %v7259
      %v7396 = vpack.c.b16 %v7264, %v7262
      %v7397 = vpack.c.b16 %v7265, %v7263
      %v7398 = vpack.c.b16 %v7268, %v7266
      %v7399 = vpack.c.b16 %v7269, %v7267
      %v7400 = vpack.c.b16 %v7272, %v7270
      %v7401 = vpack.c.b16 %v7273, %v7271
      %7530 = vmatpush.bf16.msra.mxu0 %v7288
      %7531 = vmatpush.bf16.msra.mxu0 %v7286
      %7532 = vmatpush.bf16.msra.mxu0 %v7284
      %7533 = vmatpush.bf16.msra.mxu0 %v7282
      %7534 = vmatpush.bf16.msra.mxu0 %v7280
      %7535 = vmatpush.bf16.msra.mxu0 %v7278
      %7536 = vmatpush.bf16.msra.mxu0 %v7276
      %7537 = vmatpush.bf16.msra.mxu0 %v7274
      %7538 = vmatmul.bf16.gmra.mxu0 %v6722
      %v7539 = vpop.f32.mrf.mxu0
      %v7540 = vadd.f32 %v6886, %v7539
      %v7541 = vpop.f32.mrf.mxu0
      %v7542 = vadd.f32 %v6886, %v7541
      %7543 = vdwg.mxu0
      %7544 = vmatpush.bf16.msra.mxu0 %v7304
      %7545 = vmatpush.bf16.msra.mxu0 %v7302
      %7546 = vmatpush.bf16.msra.mxu0 %v7300
      %7547 = vmatpush.bf16.msra.mxu0 %v7298
      %7548 = vmatpush.bf16.msra.mxu0 %v7296
      %7549 = vmatpush.bf16.msra.mxu0 %v7294
      %7550 = vmatpush.bf16.msra.mxu0 %v7292
      %7551 = vmatpush.bf16.msra.mxu0 %v7290
      %7552 = vmatmul.bf16.gmra.mxu0 %v6723
      %v7553 = vpop.f32.mrf.mxu0
      %v7554 = vadd.f32 %v7540, %v7553
      %v7555 = vpop.f32.mrf.mxu0
      %v7556 = vadd.f32 %v7542, %v7555
      %7557 = vdwg.mxu0
      %7558 = vmatpush.bf16.msra.mxu0 %v7320
      %7559 = vmatpush.bf16.msra.mxu0 %v7318
      %7560 = vmatpush.bf16.msra.mxu0 %v7316
      %7561 = vmatpush.bf16.msra.mxu0 %v7314
      %7562 = vmatpush.bf16.msra.mxu0 %v7312
      %7563 = vmatpush.bf16.msra.mxu0 %v7310
      %7564 = vmatpush.bf16.msra.mxu0 %v7308
      %7565 = vmatpush.bf16.msra.mxu0 %v7306
      %7566 = vmatmul.bf16.gmra.mxu0 %v6732
      %v7567 = vpop.f32.mrf.mxu0
      %v7568 = vadd.f32 %v7554, %v7567
      %v7569 = vpop.f32.mrf.mxu0
      %v7570 = vadd.f32 %v7556, %v7569
      %7571 = vdwg.mxu0
      %7572 = vmatpush.bf16.msra.mxu0 %v7336
      %7573 = vmatpush.bf16.msra.mxu0 %v7334
      %7574 = vmatpush.bf16.msra.mxu0 %v7332
      %7575 = vmatpush.bf16.msra.mxu0 %v7330
      %7576 = vmatpush.bf16.msra.mxu0 %v7328
      %7577 = vmatpush.bf16.msra.mxu0 %v7326
      %7578 = vmatpush.bf16.msra.mxu0 %v7324
      %7579 = vmatpush.bf16.msra.mxu0 %v7322
      %7580 = vmatmul.bf16.gmra.mxu0 %v6733
      %v7581 = vpop.f32.mrf.mxu0
      %v7582 = vadd.f32 %v7568, %v7581
      %v7583 = vpop.f32.mrf.mxu0
      %v7584 = vadd.f32 %v7570, %v7583
      %7585 = vdwg.mxu0
      %7586 = vmatpush.bf16.msra.mxu0 %v7352
      %7587 = vmatpush.bf16.msra.mxu0 %v7350
      %7588 = vmatpush.bf16.msra.mxu0 %v7348
      %7589 = vmatpush.bf16.msra.mxu0 %v7346
      %7590 = vmatpush.bf16.msra.mxu0 %v7344
      %7591 = vmatpush.bf16.msra.mxu0 %v7342
      %7592 = vmatpush.bf16.msra.mxu0 %v7340
      %7593 = vmatpush.bf16.msra.mxu0 %v7338
      %7594 = vmatmul.bf16.gmra.mxu0 %v6742
      %v7595 = vpop.f32.mrf.mxu0
      %v7596 = vadd.f32 %v7582, %v7595
      %v7597 = vpop.f32.mrf.mxu0
      %v7598 = vadd.f32 %v7584, %v7597
      %7599 = vdwg.mxu0
      %7600 = vmatpush.bf16.msra.mxu0 %v7368
      %7601 = vmatpush.bf16.msra.mxu0 %v7366
      %7602 = vmatpush.bf16.msra.mxu0 %v7364
      %7603 = vmatpush.bf16.msra.mxu0 %v7362
      %7604 = vmatpush.bf16.msra.mxu0 %v7360
      %7605 = vmatpush.bf16.msra.mxu0 %v7358
      %7606 = vmatpush.bf16.msra.mxu0 %v7356
      %7607 = vmatpush.bf16.msra.mxu0 %v7354
      %7608 = vmatmul.bf16.gmra.mxu0 %v6743
      %v7609 = vpop.f32.mrf.mxu0
      %v7610 = vadd.f32 %v7596, %v7609
      %v7611 = vpop.f32.mrf.mxu0
      %v7612 = vadd.f32 %v7598, %v7611
      %7613 = vdwg.mxu0
      %7614 = vmatpush.bf16.msra.mxu0 %v7384
      %7615 = vmatpush.bf16.msra.mxu0 %v7382
      %7616 = vmatpush.bf16.msra.mxu0 %v7380
      %7617 = vmatpush.bf16.msra.mxu0 %v7378
      %7618 = vmatpush.bf16.msra.mxu0 %v7376
      %7619 = vmatpush.bf16.msra.mxu0 %v7374
      %7620 = vmatpush.bf16.msra.mxu0 %v7372
      %7621 = vmatpush.bf16.msra.mxu0 %v7370
      %7622 = vmatmul.bf16.gmra.mxu0 %v6752
      %v7623 = vpop.f32.mrf.mxu0
      %v7624 = vadd.f32 %v7610, %v7623
      %v7625 = vpop.f32.mrf.mxu0
      %v7626 = vadd.f32 %v7612, %v7625
      %7627 = vdwg.mxu0
      %7628 = vmatpush.bf16.msra.mxu0 %v7400
      %7629 = vmatpush.bf16.msra.mxu0 %v7398
      %7630 = vmatpush.bf16.msra.mxu0 %v7396
      %7631 = vmatpush.bf16.msra.mxu0 %v7394
      %7632 = vmatpush.bf16.msra.mxu0 %v7392
      %7633 = vmatpush.bf16.msra.mxu0 %v7390
      %7634 = vmatpush.bf16.msra.mxu0 %v7388
      %7635 = vmatpush.bf16.msra.mxu0 %v7386
      %7636 = vmatmul.bf16.gmra.mxu0 %v6753
      %v7637 = vpop.f32.mrf.mxu0
      %v7638 = vadd.f32 %v7624, %v7637
      %v7639 = vpop.f32.mrf.mxu0
      %v7640 = vadd.f32 %v7626, %v7639
      %7641 = vdwg.mxu0
      %7642 = vmatpush.bf16.msra.mxu0 %v7289
      %7643 = vmatpush.bf16.msra.mxu0 %v7287
      %7644 = vmatpush.bf16.msra.mxu0 %v7285
      %7645 = vmatpush.bf16.msra.mxu0 %v7283
      %7646 = vmatpush.bf16.msra.mxu0 %v7281
      %7647 = vmatpush.bf16.msra.mxu0 %v7279
      %7648 = vmatpush.bf16.msra.mxu0 %v7277
      %7649 = vmatpush.bf16.msra.mxu0 %v7275
      %7650 = vmatmul.bf16.gmra.mxu0 %v6722
      %v7651 = vpop.f32.mrf.mxu0
      %v7652 = vadd.f32 %v6887, %v7651
      %v7653 = vpop.f32.mrf.mxu0
      %v7654 = vadd.f32 %v6887, %v7653
      %7655 = vdwg.mxu0
      %7656 = vmatpush.bf16.msra.mxu0 %v7305
      %7657 = vmatpush.bf16.msra.mxu0 %v7303
      %7658 = vmatpush.bf16.msra.mxu0 %v7301
      %7659 = vmatpush.bf16.msra.mxu0 %v7299
      %7660 = vmatpush.bf16.msra.mxu0 %v7297
      %7661 = vmatpush.bf16.msra.mxu0 %v7295
      %7662 = vmatpush.bf16.msra.mxu0 %v7293
      %7663 = vmatpush.bf16.msra.mxu0 %v7291
      %7664 = vmatmul.bf16.gmra.mxu0 %v6723
      %v7665 = vpop.f32.mrf.mxu0
      %v7666 = vadd.f32 %v7652, %v7665
      %v7667 = vpop.f32.mrf.mxu0
      %v7668 = vadd.f32 %v7654, %v7667
      %7669 = vdwg.mxu0
      %7670 = vmatpush.bf16.msra.mxu0 %v7321
      %7671 = vmatpush.bf16.msra.mxu0 %v7319
      %7672 = vmatpush.bf16.msra.mxu0 %v7317
      %7673 = vmatpush.bf16.msra.mxu0 %v7315
      %7674 = vmatpush.bf16.msra.mxu0 %v7313
      %7675 = vmatpush.bf16.msra.mxu0 %v7311
      %7676 = vmatpush.bf16.msra.mxu0 %v7309
      %7677 = vmatpush.bf16.msra.mxu0 %v7307
      %7678 = vmatmul.bf16.gmra.mxu0 %v6732
      %v7679 = vpop.f32.mrf.mxu0
      %v7680 = vadd.f32 %v7666, %v7679
      %v7681 = vpop.f32.mrf.mxu0
      %v7682 = vadd.f32 %v7668, %v7681
      %7683 = vdwg.mxu0
      %7684 = vmatpush.bf16.msra.mxu0 %v7337
      %7685 = vmatpush.bf16.msra.mxu0 %v7335
      %7686 = vmatpush.bf16.msra.mxu0 %v7333
      %7687 = vmatpush.bf16.msra.mxu0 %v7331
      %7688 = vmatpush.bf16.msra.mxu0 %v7329
      %7689 = vmatpush.bf16.msra.mxu0 %v7327
      %7690 = vmatpush.bf16.msra.mxu0 %v7325
      %7691 = vmatpush.bf16.msra.mxu0 %v7323
      %7692 = vmatmul.bf16.gmra.mxu0 %v6733
      %v7693 = vpop.f32.mrf.mxu0
      %v7694 = vadd.f32 %v7680, %v7693
      %v7695 = vpop.f32.mrf.mxu0
      %v7696 = vadd.f32 %v7682, %v7695
      %7697 = vdwg.mxu0
      %7698 = vmatpush.bf16.msra.mxu0 %v7353
      %7699 = vmatpush.bf16.msra.mxu0 %v7351
      %7700 = vmatpush.bf16.msra.mxu0 %v7349
      %7701 = vmatpush.bf16.msra.mxu0 %v7347
      %7702 = vmatpush.bf16.msra.mxu0 %v7345
      %7703 = vmatpush.bf16.msra.mxu0 %v7343
      %7704 = vmatpush.bf16.msra.mxu0 %v7341
      %7705 = vmatpush.bf16.msra.mxu0 %v7339
      %7706 = vmatmul.bf16.gmra.mxu0 %v6742
      %v7707 = vpop.f32.mrf.mxu0
      %v7708 = vadd.f32 %v7694, %v7707
      %v7709 = vpop.f32.mrf.mxu0
      %v7710 = vadd.f32 %v7696, %v7709
      %7711 = vdwg.mxu0
      %7712 = vmatpush.bf16.msra.mxu0 %v7369
      %7713 = vmatpush.bf16.msra.mxu0 %v7367
      %7714 = vmatpush.bf16.msra.mxu0 %v7365
      %7715 = vmatpush.bf16.msra.mxu0 %v7363
      %7716 = vmatpush.bf16.msra.mxu0 %v7361
      %7717 = vmatpush.bf16.msra.mxu0 %v7359
      %7718 = vmatpush.bf16.msra.mxu0 %v7357
      %7719 = vmatpush.bf16.msra.mxu0 %v7355
      %7720 = vmatmul.bf16.gmra.mxu0 %v6743
      %v7721 = vpop.f32.mrf.mxu0
      %v7722 = vadd.f32 %v7708, %v7721
      %v7723 = vpop.f32.mrf.mxu0
      %v7724 = vadd.f32 %v7710, %v7723
      %7725 = vdwg.mxu0
      %7726 = vmatpush.bf16.msra.mxu0 %v7385
      %7727 = vmatpush.bf16.msra.mxu0 %v7383
      %7728 = vmatpush.bf16.msra.mxu0 %v7381
      %7729 = vmatpush.bf16.msra.mxu0 %v7379
      %7730 = vmatpush.bf16.msra.mxu0 %v7377
      %7731 = vmatpush.bf16.msra.mxu0 %v7375
      %7732 = vmatpush.bf16.msra.mxu0 %v7373
      %7733 = vmatpush.bf16.msra.mxu0 %v7371
      %7734 = vmatmul.bf16.gmra.mxu0 %v6752
      %v7735 = vpop.f32.mrf.mxu0
      %v7736 = vadd.f32 %v7722, %v7735
      %v7737 = vpop.f32.mrf.mxu0
      %v7738 = vadd.f32 %v7724, %v7737
      %7739 = vdwg.mxu0
      %7740 = vmatpush.bf16.msra.mxu0 %v7401
      %7741 = vmatpush.bf16.msra.mxu0 %v7399
      %7742 = vmatpush.bf16.msra.mxu0 %v7397
      %7743 = vmatpush.bf16.msra.mxu0 %v7395
      %7744 = vmatpush.bf16.msra.mxu0 %v7393
      %7745 = vmatpush.bf16.msra.mxu0 %v7391
      %7746 = vmatpush.bf16.msra.mxu0 %v7389
      %7747 = vmatpush.bf16.msra.mxu0 %v7387
      %7748 = vmatmul.bf16.gmra.mxu0 %v6753
      %v7749 = vpop.f32.mrf.mxu0
      %v7750 = vadd.f32 %v7736, %v7749
      %v7751 = vpop.f32.mrf.mxu0
      %v7752 = vadd.f32 %v7738, %v7751
      %7753 = vdwg.mxu0
      %vm7754 = vcmp.ge.f32.partialorder %v7638, 0.0
      %vm7755 = vcmp.ge.f32.partialorder %v7750, 0.0
      %vm7756 = vcmp.ge.f32.partialorder %v7640, 0.0
      %vm7757 = vcmp.ge.f32.partialorder %v7752, 0.0
      %v7758 = vmul.f32 %v7638, 0.2
      %v7759 = vmul.f32 %v7750, 0.2
      %v7760 = vmul.f32 %v7640, 0.2
      %v7761 = vmul.f32 %v7752, 0.2
      %v7762 = vsel %vm7754, %v7638, %v7758
      %v7763 = vsel %vm7755, %v7750, %v7759
      %v7764 = vsel %vm7756, %v7640, %v7760
      %v7765 = vsel %vm7757, %v7752, %v7761
      %v7766 = vpack.c.bf16 %v7764, %v7762
      %v7767 = vpack.c.bf16 %v7765, %v7763
      %v7768 = vld [vmem:[%s11] sm:$0xff]
      %v7769 = vld [vmem:[%s11 + $0x8] sm:$0xff]
      %v7770 = vld [vmem:[%s11 + $0x10] sm:$0xff]
      %v7771 = vld [vmem:[%s11 + $0x18] sm:$0xff]
      %v7772 = vld [vmem:[%s11 + $0x20] sm:$0xff]
      %v7773 = vld [vmem:[%s11 + $0x28] sm:$0xff]
      %v7774 = vld [vmem:[%s11 + $0x30] sm:$0xff]
      %v7775 = vld [vmem:[%s11 + $0x38] sm:$0xff]
      %v7776 = vld [vmem:[%s11 + $0x40] sm:$0xff]
      %v7777 = vld [vmem:[%s11 + $0x48] sm:$0xff]
      %v7778 = vld [vmem:[%s11 + $0x50] sm:$0xff]
      %v7779 = vld [vmem:[%s11 + $0x58] sm:$0xff]
      %v7780 = vld [vmem:[%s11 + $0x60] sm:$0xff]
      %v7781 = vld [vmem:[%s11 + $0x68] sm:$0xff]
      %v7782 = vld [vmem:[%s11 + $0x70] sm:$0xff]
      %v7783 = vld [vmem:[%s11 + $0x78] sm:$0xff]
      %v7784 = vld [vmem:[%s11 + $0x80] sm:$0xff]
      %v7785 = vld [vmem:[%s11 + $0x88] sm:$0xff]
      %v7786 = vld [vmem:[%s11 + $0x90] sm:$0xff]
      %v7787 = vld [vmem:[%s11 + $0x98] sm:$0xff]
      %v7788 = vld [vmem:[%s11 + $0xa0] sm:$0xff]
      %v7789 = vld [vmem:[%s11 + $0xa8] sm:$0xff]
      %v7790 = vld [vmem:[%s11 + $0xb0] sm:$0xff]
      %v7791 = vld [vmem:[%s11 + $0xb8] sm:$0xff]
      %v7792 = vld [vmem:[%s11 + $0xc0] sm:$0xff]
      %v7793 = vld [vmem:[%s11 + $0xc8] sm:$0xff]
      %v7794 = vld [vmem:[%s11 + $0xd0] sm:$0xff]
      %v7795 = vld [vmem:[%s11 + $0xd8] sm:$0xff]
      %v7796 = vld [vmem:[%s11 + $0xe0] sm:$0xff]
      %v7797 = vld [vmem:[%s11 + $0xe8] sm:$0xff]
      %v7798 = vld [vmem:[%s11 + $0xf0] sm:$0xff]
      %v7799 = vld [vmem:[%s11 + $0xf8] sm:$0xff]
      %v7800 = vld [vmem:[%s11 + $0x100] sm:$0xff]
      %v7801 = vld [vmem:[%s11 + $0x108] sm:$0xff]
      %v7802 = vld [vmem:[%s11 + $0x110] sm:$0xff]
      %v7803 = vld [vmem:[%s11 + $0x118] sm:$0xff]
      %v7804 = vld [vmem:[%s11 + $0x120] sm:$0xff]
      %v7805 = vld [vmem:[%s11 + $0x128] sm:$0xff]
      %v7806 = vld [vmem:[%s11 + $0x130] sm:$0xff]
      %v7807 = vld [vmem:[%s11 + $0x138] sm:$0xff]
      %v7808 = vld [vmem:[%s11 + $0x140] sm:$0xff]
      %v7809 = vld [vmem:[%s11 + $0x148] sm:$0xff]
      %v7810 = vld [vmem:[%s11 + $0x150] sm:$0xff]
      %v7811 = vld [vmem:[%s11 + $0x158] sm:$0xff]
      %v7812 = vld [vmem:[%s11 + $0x160] sm:$0xff]
      %v7813 = vld [vmem:[%s11 + $0x168] sm:$0xff]
      %v7814 = vld [vmem:[%s11 + $0x170] sm:$0xff]
      %v7815 = vld [vmem:[%s11 + $0x178] sm:$0xff]
      %v7816 = vld [vmem:[%s11 + $0x180] sm:$0xff]
      %v7817 = vld [vmem:[%s11 + $0x188] sm:$0xff]
      %v7818 = vld [vmem:[%s11 + $0x190] sm:$0xff]
      %v7819 = vld [vmem:[%s11 + $0x198] sm:$0xff]
      %v7820 = vld [vmem:[%s11 + $0x1a0] sm:$0xff]
      %v7821 = vld [vmem:[%s11 + $0x1a8] sm:$0xff]
      %v7822 = vld [vmem:[%s11 + $0x1b0] sm:$0xff]
      %v7823 = vld [vmem:[%s11 + $0x1b8] sm:$0xff]
      %v7824 = vld [vmem:[%s11 + $0x1c0] sm:$0xff]
      %v7825 = vld [vmem:[%s11 + $0x1c8] sm:$0xff]
      %v7826 = vld [vmem:[%s11 + $0x1d0] sm:$0xff]
      %v7827 = vld [vmem:[%s11 + $0x1d8] sm:$0xff]
      %v7828 = vld [vmem:[%s11 + $0x1e0] sm:$0xff]
      %v7829 = vld [vmem:[%s11 + $0x1e8] sm:$0xff]
      %v7830 = vld [vmem:[%s11 + $0x1f0] sm:$0xff]
      %v7831 = vld [vmem:[%s11 + $0x1f8] sm:$0xff]
      %v7832 = vld [vmem:[%s12] sm:$0xf]
      %v7834 = vperm.slane %v7832, 0
      %v7835 = vperm.slane %v7832, 1
      %v7836 = vperm.slane %v7832, 2
      %v7837 = vperm.slane %v7832, 3
      %v7906 = vunpack.c.l.b16 %v7768
      %v7907 = vunpack.c.h.b16 %v7768
      %v7908 = vunpack.c.l.b16 %v7769
      %v7909 = vunpack.c.h.b16 %v7769
      %v7910 = vunpack.c.l.b16 %v7770
      %v7911 = vunpack.c.h.b16 %v7770
      %v7912 = vunpack.c.l.b16 %v7771
      %v7913 = vunpack.c.h.b16 %v7771
      %v7914 = vunpack.c.l.b16 %v7772
      %v7915 = vunpack.c.h.b16 %v7772
      %v7916 = vunpack.c.l.b16 %v7773
      %v7917 = vunpack.c.h.b16 %v7773
      %v7918 = vunpack.c.l.b16 %v7774
      %v7919 = vunpack.c.h.b16 %v7774
      %v7920 = vunpack.c.l.b16 %v7775
      %v7921 = vunpack.c.h.b16 %v7775
      %v7922 = vunpack.c.l.b16 %v7776
      %v7923 = vunpack.c.h.b16 %v7776
      %v7924 = vunpack.c.l.b16 %v7777
      %v7925 = vunpack.c.h.b16 %v7777
      %v7926 = vunpack.c.l.b16 %v7778
      %v7927 = vunpack.c.h.b16 %v7778
      %v7928 = vunpack.c.l.b16 %v7779
      %v7929 = vunpack.c.h.b16 %v7779
      %v7930 = vunpack.c.l.b16 %v7780
      %v7931 = vunpack.c.h.b16 %v7780
      %v7932 = vunpack.c.l.b16 %v7781
      %v7933 = vunpack.c.h.b16 %v7781
      %v7934 = vunpack.c.l.b16 %v7782
      %v7935 = vunpack.c.h.b16 %v7782
      %v7936 = vunpack.c.l.b16 %v7783
      %v7937 = vunpack.c.h.b16 %v7783
      %v7938 = vunpack.c.l.b16 %v7784
      %v7939 = vunpack.c.h.b16 %v7784
      %v7940 = vunpack.c.l.b16 %v7785
      %v7941 = vunpack.c.h.b16 %v7785
      %v7942 = vunpack.c.l.b16 %v7786
      %v7943 = vunpack.c.h.b16 %v7786
      %v7944 = vunpack.c.l.b16 %v7787
      %v7945 = vunpack.c.h.b16 %v7787
      %v7946 = vunpack.c.l.b16 %v7788
      %v7947 = vunpack.c.h.b16 %v7788
      %v7948 = vunpack.c.l.b16 %v7789
      %v7949 = vunpack.c.h.b16 %v7789
      %v7950 = vunpack.c.l.b16 %v7790
      %v7951 = vunpack.c.h.b16 %v7790
      %v7952 = vunpack.c.l.b16 %v7791
      %v7953 = vunpack.c.h.b16 %v7791
      %v7954 = vunpack.c.l.b16 %v7792
      %v7955 = vunpack.c.h.b16 %v7792
      %v7956 = vunpack.c.l.b16 %v7793
      %v7957 = vunpack.c.h.b16 %v7793
      %v7958 = vunpack.c.l.b16 %v7794
      %v7959 = vunpack.c.h.b16 %v7794
      %v7960 = vunpack.c.l.b16 %v7795
      %v7961 = vunpack.c.h.b16 %v7795
      %v7962 = vunpack.c.l.b16 %v7796
      %v7963 = vunpack.c.h.b16 %v7796
      %v7964 = vunpack.c.l.b16 %v7797
      %v7965 = vunpack.c.h.b16 %v7797
      %v7966 = vunpack.c.l.b16 %v7798
      %v7967 = vunpack.c.h.b16 %v7798
      %v7968 = vunpack.c.l.b16 %v7799
      %v7969 = vunpack.c.h.b16 %v7799
      %v7970 = vunpack.c.l.b16 %v7800
      %v7971 = vunpack.c.h.b16 %v7800
      %v7972 = vunpack.c.l.b16 %v7801
      %v7973 = vunpack.c.h.b16 %v7801
      %v7974 = vunpack.c.l.b16 %v7802
      %v7975 = vunpack.c.h.b16 %v7802
      %v7976 = vunpack.c.l.b16 %v7803
      %v7977 = vunpack.c.h.b16 %v7803
      %v7978 = vunpack.c.l.b16 %v7804
      %v7979 = vunpack.c.h.b16 %v7804
      %v7980 = vunpack.c.l.b16 %v7805
      %v7981 = vunpack.c.h.b16 %v7805
      %v7982 = vunpack.c.l.b16 %v7806
      %v7983 = vunpack.c.h.b16 %v7806
      %v7984 = vunpack.c.l.b16 %v7807
      %v7985 = vunpack.c.h.b16 %v7807
      %v7986 = vunpack.c.l.b16 %v7808
      %v7987 = vunpack.c.h.b16 %v7808
      %v7988 = vunpack.c.l.b16 %v7809
      %v7989 = vunpack.c.h.b16 %v7809
      %v7990 = vunpack.c.l.b16 %v7810
      %v7991 = vunpack.c.h.b16 %v7810
      %v7992 = vunpack.c.l.b16 %v7811
      %v7993 = vunpack.c.h.b16 %v7811
      %v7994 = vunpack.c.l.b16 %v7812
      %v7995 = vunpack.c.h.b16 %v7812
      %v7996 = vunpack.c.l.b16 %v7813
      %v7997 = vunpack.c.h.b16 %v7813
      %v7998 = vunpack.c.l.b16 %v7814
      %v7999 = vunpack.c.h.b16 %v7814
      %v8000 = vunpack.c.l.b16 %v7815
      %v8001 = vunpack.c.h.b16 %v7815
      %v8002 = vunpack.c.l.b16 %v7816
      %v8003 = vunpack.c.h.b16 %v7816
      %v8004 = vunpack.c.l.b16 %v7817
      %v8005 = vunpack.c.h.b16 %v7817
      %v8006 = vunpack.c.l.b16 %v7818
      %v8007 = vunpack.c.h.b16 %v7818
      %v8008 = vunpack.c.l.b16 %v7819
      %v8009 = vunpack.c.h.b16 %v7819
      %v8010 = vunpack.c.l.b16 %v7820
      %v8011 = vunpack.c.h.b16 %v7820
      %v8012 = vunpack.c.l.b16 %v7821
      %v8013 = vunpack.c.h.b16 %v7821
      %v8014 = vunpack.c.l.b16 %v7822
      %v8015 = vunpack.c.h.b16 %v7822
      %v8016 = vunpack.c.l.b16 %v7823
      %v8017 = vunpack.c.h.b16 %v7823
      %v8018 = vunpack.c.l.b16 %v7824
      %v8019 = vunpack.c.h.b16 %v7824
      %v8020 = vunpack.c.l.b16 %v7825
      %v8021 = vunpack.c.h.b16 %v7825
      %v8022 = vunpack.c.l.b16 %v7826
      %v8023 = vunpack.c.h.b16 %v7826
      %v8024 = vunpack.c.l.b16 %v7827
      %v8025 = vunpack.c.h.b16 %v7827
      %v8026 = vunpack.c.l.b16 %v7828
      %v8027 = vunpack.c.h.b16 %v7828
      %v8028 = vunpack.c.l.b16 %v7829
      %v8029 = vunpack.c.h.b16 %v7829
      %v8030 = vunpack.c.l.b16 %v7830
      %v8031 = vunpack.c.h.b16 %v7830
      %v8032 = vunpack.c.l.b16 %v7831
      %v8033 = vunpack.c.h.b16 %v7831
      %v8034 = vpack.c.b16 %v7910, %v7906
      %v8035 = vpack.c.b16 %v7911, %v7907
      %v8036 = vpack.c.b16 %v7912, %v7908
      %v8037 = vpack.c.b16 %v7913, %v7909
      %v8038 = vpack.c.b16 %v7918, %v7914
      %v8039 = vpack.c.b16 %v7919, %v7915
      %v8040 = vpack.c.b16 %v7920, %v7916
      %v8041 = vpack.c.b16 %v7921, %v7917
      %v8042 = vpack.c.b16 %v7926, %v7922
      %v8043 = vpack.c.b16 %v7927, %v7923
      %v8044 = vpack.c.b16 %v7928, %v7924
      %v8045 = vpack.c.b16 %v7929, %v7925
      %v8046 = vpack.c.b16 %v7934, %v7930
      %v8047 = vpack.c.b16 %v7935, %v7931
      %v8048 = vpack.c.b16 %v7936, %v7932
      %v8049 = vpack.c.b16 %v7937, %v7933
      %v8050 = vpack.c.b16 %v7942, %v7938
      %v8051 = vpack.c.b16 %v7943, %v7939
      %v8052 = vpack.c.b16 %v7944, %v7940
      %v8053 = vpack.c.b16 %v7945, %v7941
      %v8054 = vpack.c.b16 %v7950, %v7946
      %v8055 = vpack.c.b16 %v7951, %v7947
      %v8056 = vpack.c.b16 %v7952, %v7948
      %v8057 = vpack.c.b16 %v7953, %v7949
      %v8058 = vpack.c.b16 %v7958, %v7954
      %v8059 = vpack.c.b16 %v7959, %v7955
      %v8060 = vpack.c.b16 %v7960, %v7956
      %v8061 = vpack.c.b16 %v7961, %v7957
      %v8062 = vpack.c.b16 %v7966, %v7962
      %v8063 = vpack.c.b16 %v7967, %v7963
      %v8064 = vpack.c.b16 %v7968, %v7964
      %v8065 = vpack.c.b16 %v7969, %v7965
      %v8066 = vpack.c.b16 %v7974, %v7970
      %v8067 = vpack.c.b16 %v7975, %v7971
      %v8068 = vpack.c.b16 %v7976, %v7972
      %v8069 = vpack.c.b16 %v7977, %v7973
      %v8070 = vpack.c.b16 %v7982, %v7978
      %v8071 = vpack.c.b16 %v7983, %v7979
      %v8072 = vpack.c.b16 %v7984, %v7980
      %v8073 = vpack.c.b16 %v7985, %v7981
      %v8074 = vpack.c.b16 %v7990, %v7986
      %v8075 = vpack.c.b16 %v7991, %v7987
      %v8076 = vpack.c.b16 %v7992, %v7988
      %v8077 = vpack.c.b16 %v7993, %v7989
      %v8078 = vpack.c.b16 %v7998, %v7994
      %v8079 = vpack.c.b16 %v7999, %v7995
      %v8080 = vpack.c.b16 %v8000, %v7996
      %v8081 = vpack.c.b16 %v8001, %v7997
      %v8082 = vpack.c.b16 %v8006, %v8002
      %v8083 = vpack.c.b16 %v8007, %v8003
      %v8084 = vpack.c.b16 %v8008, %v8004
      %v8085 = vpack.c.b16 %v8009, %v8005
      %v8086 = vpack.c.b16 %v8014, %v8010
      %v8087 = vpack.c.b16 %v8015, %v8011
      %v8088 = vpack.c.b16 %v8016, %v8012
      %v8089 = vpack.c.b16 %v8017, %v8013
      %v8090 = vpack.c.b16 %v8022, %v8018
      %v8091 = vpack.c.b16 %v8023, %v8019
      %v8092 = vpack.c.b16 %v8024, %v8020
      %v8093 = vpack.c.b16 %v8025, %v8021
      %v8094 = vpack.c.b16 %v8030, %v8026
      %v8095 = vpack.c.b16 %v8031, %v8027
      %v8096 = vpack.c.b16 %v8032, %v8028
      %v8097 = vpack.c.b16 %v8033, %v8029
      %8162 = vmatpush.bf16.msra.mxu0 %v8062
      %8163 = vmatpush.bf16.msra.mxu0 %v8058
      %8164 = vmatpush.bf16.msra.mxu0 %v8054
      %8165 = vmatpush.bf16.msra.mxu0 %v8050
      %8166 = vmatpush.bf16.msra.mxu0 %v8046
      %8167 = vmatpush.bf16.msra.mxu0 %v8042
      %8168 = vmatpush.bf16.msra.mxu0 %v8038
      %8169 = vmatpush.bf16.msra.mxu0 %v8034
      %8170 = vmatmul.bf16.gmra.mxu0 %v7766
      %v8171 = vpop.f32.mrf.mxu0
      %v8172 = vadd.f32 %v7834, %v8171
      %v8173 = vpop.f32.mrf.mxu0
      %v8174 = vadd.f32 %v7834, %v8173
      %8175 = vdwg.mxu0
      %8176 = vmatpush.bf16.msra.mxu0 %v8094
      %8177 = vmatpush.bf16.msra.mxu0 %v8090
      %8178 = vmatpush.bf16.msra.mxu0 %v8086
      %8179 = vmatpush.bf16.msra.mxu0 %v8082
      %8180 = vmatpush.bf16.msra.mxu0 %v8078
      %8181 = vmatpush.bf16.msra.mxu0 %v8074
      %8182 = vmatpush.bf16.msra.mxu0 %v8070
      %8183 = vmatpush.bf16.msra.mxu0 %v8066
      %8184 = vmatmul.bf16.gmra.mxu0 %v7767
      %v8185 = vpop.f32.mrf.mxu0
      %v8186 = vadd.f32 %v8172, %v8185
      %v8187 = vpop.f32.mrf.mxu0
      %v8188 = vadd.f32 %v8174, %v8187
      %8189 = vdwg.mxu0
      %8190 = vmatpush.bf16.msra.mxu0 %v8063
      %8191 = vmatpush.bf16.msra.mxu0 %v8059
      %8192 = vmatpush.bf16.msra.mxu0 %v8055
      %8193 = vmatpush.bf16.msra.mxu0 %v8051
      %8194 = vmatpush.bf16.msra.mxu0 %v8047
      %8195 = vmatpush.bf16.msra.mxu0 %v8043
      %8196 = vmatpush.bf16.msra.mxu0 %v8039
      %8197 = vmatpush.bf16.msra.mxu0 %v8035
      %8198 = vmatmul.bf16.gmra.mxu0 %v7766
      %v8199 = vpop.f32.mrf.mxu0
      %v8200 = vadd.f32 %v7835, %v8199
      %v8201 = vpop.f32.mrf.mxu0
      %v8202 = vadd.f32 %v7835, %v8201
      %8203 = vdwg.mxu0
      %8204 = vmatpush.bf16.msra.mxu0 %v8095
      %8205 = vmatpush.bf16.msra.mxu0 %v8091
      %8206 = vmatpush.bf16.msra.mxu0 %v8087
      %8207 = vmatpush.bf16.msra.mxu0 %v8083
      %8208 = vmatpush.bf16.msra.mxu0 %v8079
      %8209 = vmatpush.bf16.msra.mxu0 %v8075
      %8210 = vmatpush.bf16.msra.mxu0 %v8071
      %8211 = vmatpush.bf16.msra.mxu0 %v8067
      %8212 = vmatmul.bf16.gmra.mxu0 %v7767
      %v8213 = vpop.f32.mrf.mxu0
      %v8214 = vadd.f32 %v8200, %v8213
      %v8215 = vpop.f32.mrf.mxu0
      %v8216 = vadd.f32 %v8202, %v8215
      %8217 = vdwg.mxu0
      %8218 = vmatpush.bf16.msra.mxu0 %v8064
      %8219 = vmatpush.bf16.msra.mxu0 %v8060
      %8220 = vmatpush.bf16.msra.mxu0 %v8056
      %8221 = vmatpush.bf16.msra.mxu0 %v8052
      %8222 = vmatpush.bf16.msra.mxu0 %v8048
      %8223 = vmatpush.bf16.msra.mxu0 %v8044
      %8224 = vmatpush.bf16.msra.mxu0 %v8040
      %8225 = vmatpush.bf16.msra.mxu0 %v8036
      %8226 = vmatmul.bf16.gmra.mxu0 %v7766
      %v8227 = vpop.f32.mrf.mxu0
      %v8228 = vadd.f32 %v7836, %v8227
      %v8229 = vpop.f32.mrf.mxu0
      %v8230 = vadd.f32 %v7836, %v8229
      %8231 = vdwg.mxu0
      %8232 = vmatpush.bf16.msra.mxu0 %v8096
      %8233 = vmatpush.bf16.msra.mxu0 %v8092
      %8234 = vmatpush.bf16.msra.mxu0 %v8088
      %8235 = vmatpush.bf16.msra.mxu0 %v8084
      %8236 = vmatpush.bf16.msra.mxu0 %v8080
      %8237 = vmatpush.bf16.msra.mxu0 %v8076
      %8238 = vmatpush.bf16.msra.mxu0 %v8072
      %8239 = vmatpush.bf16.msra.mxu0 %v8068
      %8240 = vmatmul.bf16.gmra.mxu0 %v7767
      %v8241 = vpop.f32.mrf.mxu0
      %v8242 = vadd.f32 %v8228, %v8241
      %v8243 = vpop.f32.mrf.mxu0
      %v8244 = vadd.f32 %v8230, %v8243
      %8245 = vdwg.mxu0
      %8246 = vmatpush.bf16.msra.mxu0 %v8065
      %8247 = vmatpush.bf16.msra.mxu0 %v8061
      %8248 = vmatpush.bf16.msra.mxu0 %v8057
      %8249 = vmatpush.bf16.msra.mxu0 %v8053
      %8250 = vmatpush.bf16.msra.mxu0 %v8049
      %8251 = vmatpush.bf16.msra.mxu0 %v8045
      %8252 = vmatpush.bf16.msra.mxu0 %v8041
      %8253 = vmatpush.bf16.msra.mxu0 %v8037
      %8254 = vmatmul.bf16.gmra.mxu0 %v7766
      %v8255 = vpop.f32.mrf.mxu0
      %v8256 = vadd.f32 %v7837, %v8255
      %v8257 = vpop.f32.mrf.mxu0
      %v8258 = vadd.f32 %v7837, %v8257
      %8259 = vdwg.mxu0
      %8260 = vmatpush.bf16.msra.mxu0 %v8097
      %8261 = vmatpush.bf16.msra.mxu0 %v8093
      %8262 = vmatpush.bf16.msra.mxu0 %v8089
      %8263 = vmatpush.bf16.msra.mxu0 %v8085
      %8264 = vmatpush.bf16.msra.mxu0 %v8081
      %8265 = vmatpush.bf16.msra.mxu0 %v8077
      %8266 = vmatpush.bf16.msra.mxu0 %v8073
      %8267 = vmatpush.bf16.msra.mxu0 %v8069
      %8268 = vmatmul.bf16.gmra.mxu0 %v7767
      %v8269 = vpop.f32.mrf.mxu0
      %v8270 = vadd.f32 %v8256, %v8269
      %v8271 = vpop.f32.mrf.mxu0
      %v8272 = vadd.f32 %v8258, %v8271
      %8273 = vdwg.mxu0
      %vm8274 = vcmp.ge.f32.partialorder %v8186, 0.0
      %vm8275 = vcmp.ge.f32.partialorder %v8214, 0.0
      %vm8276 = vcmp.ge.f32.partialorder %v8242, 0.0
      %vm8277 = vcmp.ge.f32.partialorder %v8270, 0.0
      %vm8278 = vcmp.ge.f32.partialorder %v8188, 0.0
      %vm8279 = vcmp.ge.f32.partialorder %v8216, 0.0
      %vm8280 = vcmp.ge.f32.partialorder %v8244, 0.0
      %vm8281 = vcmp.ge.f32.partialorder %v8272, 0.0
      %v8282 = vmul.f32 %v8186, 0.2
      %v8283 = vmul.f32 %v8214, 0.2
      %v8284 = vmul.f32 %v8242, 0.2
      %v8285 = vmul.f32 %v8270, 0.2
      %v8286 = vmul.f32 %v8188, 0.2
      %v8287 = vmul.f32 %v8216, 0.2
      %v8288 = vmul.f32 %v8244, 0.2
      %v8289 = vmul.f32 %v8272, 0.2
      %v8290 = vsel %vm8274, %v8186, %v8282
      %v8291 = vsel %vm8275, %v8214, %v8283
      %v8292 = vsel %vm8276, %v8242, %v8284
      %v8293 = vsel %vm8277, %v8270, %v8285
      %v8294 = vsel %vm8278, %v8188, %v8286
      %v8295 = vsel %vm8279, %v8216, %v8287
      %v8296 = vsel %vm8280, %v8244, %v8288
      %v8297 = vsel %vm8281, %v8272, %v8289
      %v8298 = vpack.c.bf16 %v8294, %v8290
      %v8299 = vpack.c.bf16 %v8295, %v8291
      %v8300 = vpack.c.bf16 %v8296, %v8292
      %v8301 = vpack.c.bf16 %v8297, %v8293
      %v8302 = vld [vmem:[%s13] sm:$0xf]
      %v8303 = vld [vmem:[%s13 + $0x4] sm:$0xf]
      %v8304 = vld [vmem:[%s13 + $0x8] sm:$0xf]
      %v8305 = vld [vmem:[%s13 + $0xc] sm:$0xf]
      %v8306 = vld [vmem:[%s13 + $0x10] sm:$0xf]
      %v8307 = vld [vmem:[%s13 + $0x14] sm:$0xf]
      %v8308 = vld [vmem:[%s13 + $0x18] sm:$0xf]
      %v8309 = vld [vmem:[%s13 + $0x1c] sm:$0xf]
      %v8310 = vld [vmem:[%s13 + $0x20] sm:$0xf]
      %v8311 = vld [vmem:[%s13 + $0x24] sm:$0xf]
      %v8312 = vld [vmem:[%s13 + $0x28] sm:$0xf]
      %v8313 = vld [vmem:[%s13 + $0x2c] sm:$0xf]
      %v8314 = vld [vmem:[%s13 + $0x30] sm:$0xf]
      %v8315 = vld [vmem:[%s13 + $0x34] sm:$0xf]
      %v8316 = vld [vmem:[%s13 + $0x38] sm:$0xf]
      %v8317 = vld [vmem:[%s13 + $0x3c] sm:$0xf]
      %v8318 = vld [vmem:[%s13 + $0x40] sm:$0xf]
      %v8319 = vld [vmem:[%s13 + $0x44] sm:$0xf]
      %v8320 = vld [vmem:[%s13 + $0x48] sm:$0xf]
      %v8321 = vld [vmem:[%s13 + $0x4c] sm:$0xf]
      %v8322 = vld [vmem:[%s13 + $0x50] sm:$0xf]
      %v8323 = vld [vmem:[%s13 + $0x54] sm:$0xf]
      %v8324 = vld [vmem:[%s13 + $0x58] sm:$0xf]
      %v8325 = vld [vmem:[%s13 + $0x5c] sm:$0xf]
      %v8326 = vld [vmem:[%s13 + $0x60] sm:$0xf]
      %v8327 = vld [vmem:[%s13 + $0x64] sm:$0xf]
      %v8328 = vld [vmem:[%s13 + $0x68] sm:$0xf]
      %v8329 = vld [vmem:[%s13 + $0x6c] sm:$0xf]
      %v8330 = vld [vmem:[%s13 + $0x70] sm:$0xf]
      %v8331 = vld [vmem:[%s13 + $0x74] sm:$0xf]
      %v8332 = vld [vmem:[%s13 + $0x78] sm:$0xf]
      %v8333 = vld [vmem:[%s13 + $0x7c] sm:$0xf]
      %v8334 = vld [vmem:[%s13 + $0x80] sm:$0xf]
      %v8335 = vld [vmem:[%s13 + $0x84] sm:$0xf]
      %v8336 = vld [vmem:[%s13 + $0x88] sm:$0xf]
      %v8337 = vld [vmem:[%s13 + $0x8c] sm:$0xf]
      %v8338 = vld [vmem:[%s13 + $0x90] sm:$0xf]
      %v8339 = vld [vmem:[%s13 + $0x94] sm:$0xf]
      %v8340 = vld [vmem:[%s13 + $0x98] sm:$0xf]
      %v8341 = vld [vmem:[%s13 + $0x9c] sm:$0xf]
      %v8342 = vld [vmem:[%s13 + $0xa0] sm:$0xf]
      %v8343 = vld [vmem:[%s13 + $0xa4] sm:$0xf]
      %v8344 = vld [vmem:[%s13 + $0xa8] sm:$0xf]
      %v8345 = vld [vmem:[%s13 + $0xac] sm:$0xf]
      %v8346 = vld [vmem:[%s13 + $0xb0] sm:$0xf]
      %v8347 = vld [vmem:[%s13 + $0xb4] sm:$0xf]
      %v8348 = vld [vmem:[%s13 + $0xb8] sm:$0xf]
      %v8349 = vld [vmem:[%s13 + $0xbc] sm:$0xf]
      %v8350 = vld [vmem:[%s13 + $0xc0] sm:$0xf]
      %v8351 = vld [vmem:[%s13 + $0xc4] sm:$0xf]
      %v8352 = vld [vmem:[%s13 + $0xc8] sm:$0xf]
      %v8353 = vld [vmem:[%s13 + $0xcc] sm:$0xf]
      %v8354 = vld [vmem:[%s13 + $0xd0] sm:$0xf]
      %v8355 = vld [vmem:[%s13 + $0xd4] sm:$0xf]
      %v8356 = vld [vmem:[%s13 + $0xd8] sm:$0xf]
      %v8357 = vld [vmem:[%s13 + $0xdc] sm:$0xf]
      %v8358 = vld [vmem:[%s13 + $0xe0] sm:$0xf]
      %v8359 = vld [vmem:[%s13 + $0xe4] sm:$0xf]
      %v8360 = vld [vmem:[%s13 + $0xe8] sm:$0xf]
      %v8361 = vld [vmem:[%s13 + $0xec] sm:$0xf]
      %v8362 = vld [vmem:[%s13 + $0xf0] sm:$0xf]
      %v8363 = vld [vmem:[%s13 + $0xf4] sm:$0xf]
      %v8364 = vld [vmem:[%s13 + $0xf8] sm:$0xf]
      %v8365 = vld [vmem:[%s13 + $0xfc] sm:$0xf]
      %v8366 = vld [vmem:[%s14] sm:$0x1]
      %v8368 = vperm.slane %v8366, 0
      %v8434 = vunpack.c.l.b16 %v8302
      %v8435 = vunpack.c.l.b16 %v8303
      %v8436 = vunpack.c.l.b16 %v8304
      %v8437 = vunpack.c.l.b16 %v8305
      %v8438 = vunpack.c.l.b16 %v8306
      %v8439 = vunpack.c.l.b16 %v8307
      %v8440 = vunpack.c.l.b16 %v8308
      %v8441 = vunpack.c.l.b16 %v8309
      %v8442 = vunpack.c.l.b16 %v8310
      %v8443 = vunpack.c.l.b16 %v8311
      %v8444 = vunpack.c.l.b16 %v8312
      %v8445 = vunpack.c.l.b16 %v8313
      %v8446 = vunpack.c.l.b16 %v8314
      %v8447 = vunpack.c.l.b16 %v8315
      %v8448 = vunpack.c.l.b16 %v8316
      %v8449 = vunpack.c.l.b16 %v8317
      %v8450 = vunpack.c.l.b16 %v8318
      %v8451 = vunpack.c.l.b16 %v8319
      %v8452 = vunpack.c.l.b16 %v8320
      %v8453 = vunpack.c.l.b16 %v8321
      %v8454 = vunpack.c.l.b16 %v8322
      %v8455 = vunpack.c.l.b16 %v8323
      %v8456 = vunpack.c.l.b16 %v8324
      %v8457 = vunpack.c.l.b16 %v8325
      %v8458 = vunpack.c.l.b16 %v8326
      %v8459 = vunpack.c.l.b16 %v8327
      %v8460 = vunpack.c.l.b16 %v8328
      %v8461 = vunpack.c.l.b16 %v8329
      %v8462 = vunpack.c.l.b16 %v8330
      %v8463 = vunpack.c.l.b16 %v8331
      %v8464 = vunpack.c.l.b16 %v8332
      %v8465 = vunpack.c.l.b16 %v8333
      %v8466 = vunpack.c.l.b16 %v8334
      %v8467 = vunpack.c.l.b16 %v8335
      %v8468 = vunpack.c.l.b16 %v8336
      %v8469 = vunpack.c.l.b16 %v8337
      %v8470 = vunpack.c.l.b16 %v8338
      %v8471 = vunpack.c.l.b16 %v8339
      %v8472 = vunpack.c.l.b16 %v8340
      %v8473 = vunpack.c.l.b16 %v8341
      %v8474 = vunpack.c.l.b16 %v8342
      %v8475 = vunpack.c.l.b16 %v8343
      %v8476 = vunpack.c.l.b16 %v8344
      %v8477 = vunpack.c.l.b16 %v8345
      %v8478 = vunpack.c.l.b16 %v8346
      %v8479 = vunpack.c.l.b16 %v8347
      %v8480 = vunpack.c.l.b16 %v8348
      %v8481 = vunpack.c.l.b16 %v8349
      %v8482 = vunpack.c.l.b16 %v8350
      %v8483 = vunpack.c.l.b16 %v8351
      %v8484 = vunpack.c.l.b16 %v8352
      %v8485 = vunpack.c.l.b16 %v8353
      %v8486 = vunpack.c.l.b16 %v8354
      %v8487 = vunpack.c.l.b16 %v8355
      %v8488 = vunpack.c.l.b16 %v8356
      %v8489 = vunpack.c.l.b16 %v8357
      %v8490 = vunpack.c.l.b16 %v8358
      %v8491 = vunpack.c.l.b16 %v8359
      %v8492 = vunpack.c.l.b16 %v8360
      %v8493 = vunpack.c.l.b16 %v8361
      %v8494 = vunpack.c.l.b16 %v8362
      %v8495 = vunpack.c.l.b16 %v8363
      %v8496 = vunpack.c.l.b16 %v8364
      %v8497 = vunpack.c.l.b16 %v8365
      %v8498 = vpack.c.b16 %v8435, %v8434
      %v8499 = vpack.c.b16 %v8437, %v8436
      %v8500 = vpack.c.b16 %v8439, %v8438
      %v8501 = vpack.c.b16 %v8441, %v8440
      %v8502 = vpack.c.b16 %v8443, %v8442
      %v8503 = vpack.c.b16 %v8445, %v8444
      %v8504 = vpack.c.b16 %v8447, %v8446
      %v8505 = vpack.c.b16 %v8449, %v8448
      %v8506 = vpack.c.b16 %v8451, %v8450
      %v8507 = vpack.c.b16 %v8453, %v8452
      %v8508 = vpack.c.b16 %v8455, %v8454
      %v8509 = vpack.c.b16 %v8457, %v8456
      %v8510 = vpack.c.b16 %v8459, %v8458
      %v8511 = vpack.c.b16 %v8461, %v8460
      %v8512 = vpack.c.b16 %v8463, %v8462
      %v8513 = vpack.c.b16 %v8465, %v8464
      %v8514 = vpack.c.b16 %v8467, %v8466
      %v8515 = vpack.c.b16 %v8469, %v8468
      %v8516 = vpack.c.b16 %v8471, %v8470
      %v8517 = vpack.c.b16 %v8473, %v8472
      %v8518 = vpack.c.b16 %v8475, %v8474
      %v8519 = vpack.c.b16 %v8477, %v8476
      %v8520 = vpack.c.b16 %v8479, %v8478
      %v8521 = vpack.c.b16 %v8481, %v8480
      %v8522 = vpack.c.b16 %v8483, %v8482
      %v8523 = vpack.c.b16 %v8485, %v8484
      %v8524 = vpack.c.b16 %v8487, %v8486
      %v8525 = vpack.c.b16 %v8489, %v8488
      %v8526 = vpack.c.b16 %v8491, %v8490
      %v8527 = vpack.c.b16 %v8493, %v8492
      %v8528 = vpack.c.b16 %v8495, %v8494
      %v8529 = vpack.c.b16 %v8497, %v8496
      %8562 = vmatpush.bf16.msra.mxu0 %v8505
      %8563 = vmatpush.bf16.msra.mxu0 %v8504
      %8564 = vmatpush.bf16.msra.mxu0 %v8503
      %8565 = vmatpush.bf16.msra.mxu0 %v8502
      %8566 = vmatpush.bf16.msra.mxu0 %v8501
      %8567 = vmatpush.bf16.msra.mxu0 %v8500
      %8568 = vmatpush.bf16.msra.mxu0 %v8499
      %8569 = vmatpush.bf16.msra.mxu0 %v8498
      %8570 = vmatmul.bf16.gmra.mxu0 %v8298
      %v8571 = vpop.f32.mrf.mxu0
      %v8572 = vadd.f32 %v8368, %v8571
      %v8573 = vpop.f32.mrf.mxu0
      %v8574 = vadd.f32 %v8368, %v8573
      %8575 = vdwg.mxu0
      %8576 = vmatpush.bf16.msra.mxu0 %v8513
      %8577 = vmatpush.bf16.msra.mxu0 %v8512
      %8578 = vmatpush.bf16.msra.mxu0 %v8511
      %8579 = vmatpush.bf16.msra.mxu0 %v8510
      %8580 = vmatpush.bf16.msra.mxu0 %v8509
      %8581 = vmatpush.bf16.msra.mxu0 %v8508
      %8582 = vmatpush.bf16.msra.mxu0 %v8507
      %8583 = vmatpush.bf16.msra.mxu0 %v8506
      %8584 = vmatmul.bf16.gmra.mxu0 %v8299
      %v8585 = vpop.f32.mrf.mxu0
      %v8586 = vadd.f32 %v8572, %v8585
      %v8587 = vpop.f32.mrf.mxu0
      %v8588 = vadd.f32 %v8574, %v8587
      %8589 = vdwg.mxu0
      %8590 = vmatpush.bf16.msra.mxu0 %v8521
      %8591 = vmatpush.bf16.msra.mxu0 %v8520
      %8592 = vmatpush.bf16.msra.mxu0 %v8519
      %8593 = vmatpush.bf16.msra.mxu0 %v8518
      %8594 = vmatpush.bf16.msra.mxu0 %v8517
      %8595 = vmatpush.bf16.msra.mxu0 %v8516
      %8596 = vmatpush.bf16.msra.mxu0 %v8515
      %8597 = vmatpush.bf16.msra.mxu0 %v8514
      %8598 = vmatmul.bf16.gmra.mxu0 %v8300
      %v8599 = vpop.f32.mrf.mxu0
      %v8600 = vadd.f32 %v8586, %v8599
      %v8601 = vpop.f32.mrf.mxu0
      %v8602 = vadd.f32 %v8588, %v8601
      %8603 = vdwg.mxu0
      %8604 = vmatpush.bf16.msra.mxu0 %v8529
      %8605 = vmatpush.bf16.msra.mxu0 %v8528
      %8606 = vmatpush.bf16.msra.mxu0 %v8527
      %8607 = vmatpush.bf16.msra.mxu0 %v8526
      %8608 = vmatpush.bf16.msra.mxu0 %v8525
      %8609 = vmatpush.bf16.msra.mxu0 %v8524
      %8610 = vmatpush.bf16.msra.mxu0 %v8523
      %8611 = vmatpush.bf16.msra.mxu0 %v8522
      %8612 = vmatmul.bf16.gmra.mxu0 %v8301
      %v8613 = vpop.f32.mrf.mxu0
      %v8614 = vadd.f32 %v8600, %v8613
      %v8615 = vpop.f32.mrf.mxu0
      %v8616 = vadd.f32 %v8602, %v8615
      %8617 = vdwg.mxu0
      %vm8618 = vcmp.ge.f32.partialorder %v8614, 0.0
      %vm8619 = vcmp.ge.f32.partialorder %v8616, 0.0
      %v8620 = vmul.f32 %v8614, 0.2
      %v8621 = vmul.f32 %v8616, 0.2
      %v8622 = vsel %vm8618, %v8614, %v8620
      %v8623 = vsel %vm8619, %v8616, %v8621
      %v8624 = vpack.c.bf16 %v8623, %v8622
      %v8625 = vld [vmem:[%s15] sm:$0xf]
      %v8626 = vld [vmem:[%s15 + $0x4] sm:$0xf]
      %v8627 = vld [vmem:[%s15 + $0x8] sm:$0xf]
      %v8628 = vld [vmem:[%s15 + $0xc] sm:$0xf]
      %v8629 = vld [vmem:[%s15 + $0x10] sm:$0xf]
      %v8630 = vld [vmem:[%s15 + $0x14] sm:$0xf]
      %v8631 = vld [vmem:[%s15 + $0x18] sm:$0xf]
      %v8632 = vld [vmem:[%s15 + $0x1c] sm:$0xf]
      %v8633 = vld [vmem:[%s15 + $0x20] sm:$0xf]
      %v8634 = vld [vmem:[%s15 + $0x24] sm:$0xf]
      %v8635 = vld [vmem:[%s15 + $0x28] sm:$0xf]
      %v8636 = vld [vmem:[%s15 + $0x2c] sm:$0xf]
      %v8637 = vld [vmem:[%s15 + $0x30] sm:$0xf]
      %v8638 = vld [vmem:[%s15 + $0x34] sm:$0xf]
      %v8639 = vld [vmem:[%s15 + $0x38] sm:$0xf]
      %v8640 = vld [vmem:[%s15 + $0x3c] sm:$0xf]
      %v8641 = vld [vmem:[%s16] sm:$0x1]
      %v8643 = vperm.slane %v8641, 0
      %v8661 = vunpack.c.l.b16 %v8625
      %v8662 = vunpack.c.l.b16 %v8626
      %v8663 = vunpack.c.l.b16 %v8627
      %v8664 = vunpack.c.l.b16 %v8628
      %v8665 = vunpack.c.l.b16 %v8629
      %v8666 = vunpack.c.l.b16 %v8630
      %v8667 = vunpack.c.l.b16 %v8631
      %v8668 = vunpack.c.l.b16 %v8632
      %v8669 = vunpack.c.l.b16 %v8633
      %v8670 = vunpack.c.l.b16 %v8634
      %v8671 = vunpack.c.l.b16 %v8635
      %v8672 = vunpack.c.l.b16 %v8636
      %v8673 = vunpack.c.l.b16 %v8637
      %v8674 = vunpack.c.l.b16 %v8638
      %v8675 = vunpack.c.l.b16 %v8639
      %v8676 = vunpack.c.l.b16 %v8640
      %v8677 = vpack.c.b16 %v8662, %v8661
      %v8678 = vpack.c.b16 %v8664, %v8663
      %v8679 = vpack.c.b16 %v8666, %v8665
      %v8680 = vpack.c.b16 %v8668, %v8667
      %v8681 = vpack.c.b16 %v8670, %v8669
      %v8682 = vpack.c.b16 %v8672, %v8671
      %v8683 = vpack.c.b16 %v8674, %v8673
      %v8684 = vpack.c.b16 %v8676, %v8675
      %8693 = vmatpush.bf16.msra.mxu0 %v8684
      %8694 = vmatpush.bf16.msra.mxu0 %v8683
      %8695 = vmatpush.bf16.msra.mxu0 %v8682
      %8696 = vmatpush.bf16.msra.mxu0 %v8681
      %8697 = vmatpush.bf16.msra.mxu0 %v8680
      %8698 = vmatpush.bf16.msra.mxu0 %v8679
      %8699 = vmatpush.bf16.msra.mxu0 %v8678
      %8700 = vmatpush.bf16.msra.mxu0 %v8677
      %8701 = vmatmul.bf16.gmra.mxu0 %v8624
      %v8702 = vpop.f32.mrf.mxu0
      %v8703 = vadd.f32 %v8643, %v8702
      %v8704 = vpop.f32.mrf.mxu0
      %v8705 = vadd.f32 %v8643, %v8704
      %8706 = vdwg.mxu0
      %8707 = vst [vmem:[%s548] sm:$0xff] %v8703
      %8708 = vst [vmem:[%s548 + $0x8] sm:$0xff] %v8705
      %s8709 = smul.u32 2, %s28
      %p8710 = scmp.lt.s32.totalorder %s8709, 3
      %s8711 = scalar_select %p8710, %s8709, 3
      %s8712 = smul.addr %s8711, 8
      %s8713 = scalar_lea.vmem %s17, %s8712
      // Predicated region
      $region89: #{_lambda_.1} parent=87 // pred_check
        %p8714 = pneg %p408
      $region90: #{_lambda_.1} parent=87 // pred_check_branch
        %8716 = sbr.rel (%p8714) target = $region92
      $region91: #{_lambda_.1} parent=87 // pred_region
        %s8717 = smul.u32 2, %s28
      $region92: #{_lambda_.1} parent=87 // pred_fallthru
        _
    $region88: #{_lambda_.1} parent=5 // pred_fallthru
      _
    %p8718 = scmp.le.s32.totalorder 2, %s23
    // Predicated region
    $region93: #{_lambda_.1} parent=5 // pred_check
      %p8719 = pneg %p8718
    $region94: #{_lambda_.1} parent=5 // pred_check_branch
      %8721 = sbr.rel (%p8719) target = $region96
    $region95: #{_lambda_.1} parent=5 // pred_region
      %s8722 = ssub.s32 %s23, 2
      // Predicated region
      $region97: #{_lambda_.1} parent=95 // pred_check
        %p8723 = pneg %p414
      $region98: #{_lambda_.1} parent=95 // pred_check_branch
        %8725 = sbr.rel (%p8723) target = $region100
      $region99: #{_lambda_.1} parent=95 // pred_region
        %s8726 = smul.u32 2, %s29
        %p8727 = scmp.lt.s32.totalorder %s8726, 3
        %s8728 = scalar_select %p8727, %s8726, 3
        %s8729 = smul.addr %s8728, 8
        %s8730 = scalar_lea.vmem %s17, %s8729
      $region100: #{_lambda_.1} parent=95 // pred_fallthru
        _
    $region96: #{_lambda_.1} parent=5 // pred_fallthru
      _
  $region6: #{_lambda_.1} parent=0 // loop_footer
    %s27 = sadd.s32 1, %s23
  $region7: #{_lambda_.1} parent=0 // loop_footer_branch
    %22 = sbr.rel target = $region3
  $region8: #{_lambda_.1} parent=0 // loop_exit
    _

</llo_original>
